<compile_context>
chip_gen: v5e
topology: v5e:2x2
jax: 0.10.0
libtpu: 0.0.40
codegen_flags: <defaults>
</compile_context>

<pallas_src>
import functools

import jax
import jax.numpy as jnp
from jax.experimental import pallas as pl
from jax.experimental.pallas import tpu as pltpu

N_FEATURES = 3
N_WIRES = 3606
N_WIRES_PAD = 3712            # 29 * 128 : lane-dense wire axis
BN_EPS = 1e-5
NEG_BIG = -1e30               # mask value for padded wire lanes
# Sized for the actual footprint (~10 MiB incl. temporaries); leaves headroom
# on v7x's 64 MiB/TC VMEM instead of the old 48 MiB sized for 128 MiB parts.
VMEM_LIMIT = 24 * 1024 * 1024

VMEM = pltpu.MemorySpace.VMEM


# --------------------------- in-kernel helpers ------------------------------

def _bn_relu(x, gamma, beta, eps=BN_EPS):
    """Training-mode BatchNorm (stats over all rows, per channel) + ReLU."""
    mean = jnp.mean(x, axis=0, keepdims=True)
    var = jnp.maximum(jnp.mean(x * x, axis=0, keepdims=True) - mean * mean, 0.0)
    scale = gamma * jax.lax.rsqrt(var + eps)
    shift = beta - mean * scale
    return jnp.maximum(x * scale + shift, 0.0)


# --------------------------- the fused kernel --------------------------------

def _gen_kernel(gum_ref, z_ref,
                w0_ref, b0_ref, g0_ref, be0_ref,
                wu1_ref, bu1_ref, gu1_ref, beu1_ref,
                wu2_ref, bu2_ref, gu2_ref, beu2_ref,
                w1_ref, b1_ref, g1_ref, be1_ref,
                wc1_ref, bc1_ref, gc1_ref, bec1_ref,
                wc2_ref, bc2_ref, gc2_ref, bec2_ref,
                w3w_ref, w3p_ref, b3p_ref,
                p_ref, idx_ref,
                halo, *, B, L0):
    f32 = jnp.float32
    bf16 = jnp.bfloat16
    L = 16 * L0
    R = L * B            # rows of the spatial slab, row = b*L + position

    # ---- lin0 -> bn0 -> relu ------------------------------------------------
    # lin0 columns are ordered (position, channel) so a plain row-major reshape
    # yields the batch-major (b*L0 + l, channel) slab.
    h = jnp.dot(z_ref[...], w0_ref[...], preferred_element_type=f32) + b0_ref[...]
    x0 = _bn_relu(h.reshape(B * L0, 512), g0_ref[...], be0_ref[...])

    # ---- convu1 : ConvTranspose1d(512,384,4,4) == ONE stacked matmul ---------
    # taps land in lane blocks; the reshape interleaves them into spatial order
    # (row = b*(4*L0) + 4*l + k).  Bias is per-out-channel, added post-reshape.
    y1 = jnp.dot(x0.astype(bf16), wu1_ref[...], preferred_element_type=f32)
    x1 = _bn_relu(y1.reshape(B * 4 * L0, 384) + bu1_ref[...],
                  gu1_ref[...], beu1_ref[...])

    # ---- convu2 : ConvTranspose1d(384,256,4,4), same trick -------------------
    y2 = jnp.dot(x1.astype(bf16), wu2_ref[...], preferred_element_type=f32)
    x2 = _bn_relu(y2.reshape(R, 256) + bu2_ref[...], gu2_ref[...], beu2_ref[...])

    # ---- conv1 (1x1) -> bn1 -> relu -------------------------------------------
    x3 = _bn_relu(jnp.dot(x2, w1_ref[...], preferred_element_type=f32) + b1_ref[...],
                  g1_ref[...], be1_ref[...])

    # ---- merged k=3 convs (wire branch | feature branch, 128 channels) --------
    # batch-major rows: neighbours are +-1 row; the padding=1 zero borders and
    # the batch boundaries are handled with per-row masks.
    pos = jax.lax.broadcasted_iota(jnp.int32, (R, 1), 0) % L
    not_first = pos != 0
    not_last = pos != (L - 1)

    def conv3(x, w_ref, bias):
        halo[8:8 + R, :] = x
        # NOTE: the +-1 row reads (rows 7 / 9) are sublane-unaligned; accepted,
        # the retile cost is tiny at this size.  Border/stale rows are fully
        # replaced by the where-select, so no halo zero-fill is needed.
        xm = jnp.where(not_first, halo[7:7 + R, :], 0.0)
        xp = jnp.where(not_last, halo[9:9 + R, :], 0.0)
        acc = jnp.dot(xm, w_ref[0], preferred_element_type=f32)
        acc = acc + jnp.dot(x, w_ref[1], preferred_element_type=f32)
        acc = acc + jnp.dot(xp, w_ref[2], preferred_element_type=f32)
        return acc + bias

    # layer 1: [convw1 | convp1] concatenated along output channels
    x4 = _bn_relu(conv3(x3, wc1_ref, bc1_ref[...]), gc1_ref[...], bec1_ref[...])
    # layer 2: block-diagonal [convw2 0; 0 convp2]; merged per-channel BN
    x5 = _bn_relu(conv3(x4, wc2_ref, bc2_ref[...]), gc2_ref[...], bec2_ref[...])

    # ---- wire head: convw3 + hard Gumbel-softmax == argmax(logits + noise) ----
    # w3w has its feature-branch rows and padded lanes zeroed; gum_ref carries
    # -1e30 in padded lanes so no extra masking pass is needed.
    logits = jnp.dot(x5.astype(bf16), w3w_ref[...], preferred_element_type=f32)
    y = logits + gum_ref[...]
    col = jax.lax.broadcasted_iota(jnp.int32, (R, N_WIRES_PAD), 1)
    m = jnp.max(y, axis=1, keepdims=True)
    idx_ref[...] = jnp.min(jnp.where(y == m, col, N_WIRES_PAD), axis=1, keepdims=True)

    # ---- feature head: convp3 + tanh (w3p rows 0:64 are zero) ------------------
    p_ref[...] = jnp.tanh(jnp.dot(x5, w3p_ref[...], preferred_element_type=f32)
                          + b3p_ref[...])


def gen_call(params, z, gumbel, B, L0):
    L = 16 * L0
    R = L * B
    args = (gumbel, z,
            params['lin0_w'], params['lin0_b'], params['bn0_g'], params['bn0_b'],
            params['convu1_w'], params['convu1_b'], params['bnu1_g'], params['bnu1_b'],
            params['convu2_w'], params['convu2_b'], params['bnu2_g'], params['bnu2_b'],
            params['conv1_w'], params['conv1_b'], params['bn1_g'], params['bn1_b'],
            params['convwp1_w'], params['convwp1_b'], params['bnwp1_g'], params['bnwp1_b'],
            params['convwp2_w'], params['convwp2_b'], params['bnwp2_g'], params['bnwp2_b'],
            params['convw3_w'], params['convp3_w'], params['convp3_b'])
    return pl.pallas_call(
        functools.partial(_gen_kernel, B=B, L0=L0),
        out_shape=(jax.ShapeDtypeStruct((R, N_FEATURES), jnp.float32),
                   jax.ShapeDtypeStruct((R, 1), jnp.int32)),
        in_specs=[pl.BlockSpec(memory_space=VMEM)] * len(args),
        out_specs=(pl.BlockSpec(memory_space=VMEM),
                   pl.BlockSpec(memory_space=VMEM)),
        scratch_shapes=[pltpu.VMEM((R + 16, 128), jnp.float32)],   # shared conv halo
        compiler_params=pltpu.CompilerParams(vmem_limit_bytes=VMEM_LIMIT),
    )(*args)


# --------------------------- parameter init ----------------------------------

def init_params(key, latent_dims, seq_len):
    L0 = seq_len // 16
    keys = iter(jax.random.split(key, 16))

    def w(shape, scale=0.05):
        return (scale * jax.random.normal(next(keys), shape)).astype(jnp.float32)

    zeros = lambda s: jnp.zeros(s, jnp.float32)
    ones = lambda s: jnp.ones(s, jnp.float32)

    # convw3 = Conv1d(64, n_wires, 1, bias=False): zero-padded to a lane-dense
    # (128, 3712) slab; rows 64:128 (feature-branch channels) and lanes >= 3606
    # are zero so they never contribute.
    w3w = jnp.zeros((128, N_WIRES_PAD), jnp.float32)
    w3w = w3w.at[:64, :N_WIRES].set(w((64, N_WIRES)))

    # convp3 = Conv1d(64, 3, 1): applied to channels 64:128 of the merged slab.
    w3p = jnp.zeros((128, N_FEATURES), jnp.float32)
    w3p = w3p.at[64:, :].set(w((64, N_FEATURES)))

    # merged k=3 layer 1: [convw1 | convp1] along output channels
    wc1 = jnp.concatenate([w((3, 128, 64)), w((3, 128, 64))], axis=-1)
    # merged k=3 layer 2: block diagonal [convw2 0; 0 convp2]
    # (convw2 uses out_channels=64; see TODO at top about the reference bug)
    wc2 = jnp.zeros((3, 128, 128), jnp.float32)
    wc2 = wc2.at[:, :64, :64].set(w((3, 64, 64)))
    wc2 = wc2.at[:, 64:, 64:].set(w((3, 64, 64)))

    return {
        # lin0: columns ordered (position, channel) so trunk reorgs are reshapes
        'lin0_w': w((latent_dims, L0 * 512)), 'lin0_b': zeros((1, L0 * 512)),
        'bn0_g': ones((1, 512)), 'bn0_b': zeros((1, 512)),
        # ConvTranspose1d(512,384,4,4): columns ordered (tap, out channel); bf16
        'convu1_w': w((512, 4 * 384)).astype(jnp.bfloat16), 'convu1_b': zeros((1, 384)),
        'bnu1_g': ones((1, 384)), 'bnu1_b': zeros((1, 384)),
        'convu2_w': w((384, 4 * 256)).astype(jnp.bfloat16), 'convu2_b': zeros((1, 256)),
        'bnu2_g': ones((1, 256)), 'bnu2_b': zeros((1, 256)),
        # 1x1 trunk conv
        'conv1_w': w((256, 128)), 'conv1_b': zeros((1, 128)),
        'bn1_g': ones((1, 128)), 'bn1_b': zeros((1, 128)),
        # merged branch convs (tap, Cin, Cout) + merged BN params
        'convwp1_w': wc1, 'convwp1_b': zeros((1, 128)),
        'bnwp1_g': ones((1, 128)), 'bnwp1_b': zeros((1, 128)),
        'convwp2_w': wc2, 'convwp2_b': zeros((1, 128)),
        'bnwp2_g': ones((1, 128)), 'bnwp2_b': zeros((1, 128)),
        # heads
        'convw3_w': w3w.astype(jnp.bfloat16),
        'convp3_w': w3p, 'convp3_b': zeros((1, N_FEATURES)),
    }


# --------------------------- forward pass -------------------------------------

@functools.partial(jax.jit, static_argnames=("seq_len",))
def gen_forward(params, z, wire_to_xy, noise_key, seq_len):
    del wire_to_xy                       # unused in the PyTorch forward as well
    B = z.shape[0]
    L0 = seq_len // 16
    L = 16 * L0
    R = L * B

    # Gumbel(0,1) noise for F.gumbel_softmax(hard=True, tau=1), generated in
    # XLA (the in-kernel TPU PRNG has no interpret/CPU lowering).  Padded wire
    # lanes carry -1e30 so they can never win the in-kernel argmax.
    g = jax.random.gumbel(noise_key, (R, N_WIRES), dtype=jnp.float32)
    g = jnp.pad(g, ((0, 0), (0, N_WIRES_PAD - N_WIRES)), constant_values=NEG_BIG)

    p_flat, idx = gen_call(params, z, g, B, L0)

    # back to PyTorch NCW layout; the one-hot is built directly in its final
    # (B, n_wires, L) layout (no padded one-hot store / slice in the kernel).
    p = p_flat.reshape(B, L, N_FEATURES).transpose(0, 2, 1)
    wg = jax.nn.one_hot(idx.reshape(B, L), N_WIRES, dtype=jnp.float32, axis=1)
    return p, wg


# --------------------------- main ---------------------------------------------

if __name__ == "__main__":
    key = jax.random.PRNGKey(0)
    k_param, k_z, k_wxy, k_noise = jax.random.split(key, 4)

    ngf, latent_dims, seq_len, encoded_dim = 16, 32, 32, 8   # ngf/encoded_dim unused by forward
    B = 2

    params = init_params(k_param, latent_dims, seq_len)
    z = jax.random.normal(k_z, (B, latent_dims), jnp.float32)
    wire_to_xy = jax.random.normal(k_wxy, (2, N_WIRES), jnp.float32)  # signature parity; unused

    p_out, wg_out = gen_forward(params, z, wire_to_xy, k_noise, seq_len)
    jax.block_until_ready((p_out, wg_out))

    assert p_out.shape == (B, N_FEATURES, seq_len), p_out.shape
    assert wg_out.shape == (B, N_WIRES, seq_len), wg_out.shape
    # wg is a one-hot over the wire axis
    assert jnp.allclose(jnp.sum(wg_out, axis=1), 1.0)
    # tanh output bounded
    assert bool(jnp.all(jnp.abs(p_out) <= 1.0))

    print("KERNEL_OK")
</pallas_src>

<mosaic_0001>
module attributes {stable_mosaic.version = 11 : i64} {
  func.func @_gen_kernel(%arg0: memref<64x3712xf32, #tpu.memory_space<vmem>>, %arg1: memref<2x32xf32, #tpu.memory_space<vmem>>, %arg2: memref<32x1024xf32, #tpu.memory_space<vmem>>, %arg3: memref<1x1024xf32, #tpu.memory_space<vmem>>, %arg4: memref<1x512xf32, #tpu.memory_space<vmem>>, %arg5: memref<1x512xf32, #tpu.memory_space<vmem>>, %arg6: memref<512x1536xbf16, #tpu.memory_space<vmem>>, %arg7: memref<1x384xf32, #tpu.memory_space<vmem>>, %arg8: memref<1x384xf32, #tpu.memory_space<vmem>>, %arg9: memref<1x384xf32, #tpu.memory_space<vmem>>, %arg10: memref<384x1024xbf16, #tpu.memory_space<vmem>>, %arg11: memref<1x256xf32, #tpu.memory_space<vmem>>, %arg12: memref<1x256xf32, #tpu.memory_space<vmem>>, %arg13: memref<1x256xf32, #tpu.memory_space<vmem>>, %arg14: memref<256x128xf32, #tpu.memory_space<vmem>>, %arg15: memref<1x128xf32, #tpu.memory_space<vmem>>, %arg16: memref<1x128xf32, #tpu.memory_space<vmem>>, %arg17: memref<1x128xf32, #tpu.memory_space<vmem>>, %arg18: memref<3x128x128xf32, #tpu.memory_space<vmem>>, %arg19: memref<1x128xf32, #tpu.memory_space<vmem>>, %arg20: memref<1x128xf32, #tpu.memory_space<vmem>>, %arg21: memref<1x128xf32, #tpu.memory_space<vmem>>, %arg22: memref<3x128x128xf32, #tpu.memory_space<vmem>>, %arg23: memref<1x128xf32, #tpu.memory_space<vmem>>, %arg24: memref<1x128xf32, #tpu.memory_space<vmem>>, %arg25: memref<1x128xf32, #tpu.memory_space<vmem>>, %arg26: memref<128x3712xbf16, #tpu.memory_space<vmem>>, %arg27: memref<128x3xf32, #tpu.memory_space<vmem>>, %arg28: memref<1x3xf32, #tpu.memory_space<vmem>>, %arg29: memref<64x3xf32, #tpu.memory_space<vmem>>, %arg30: memref<64x1xi32, #tpu.memory_space<vmem>>, %arg31: memref<80x128xf32, #tpu.memory_space<vmem>>) attributes {dimension_semantics = [], scalar_prefetch = 0 : i64, scratch_operands = 1 : i64, tpu.core_type = #tpu.core_type<tc>} {
    %c0 = arith.constant 0 : index
    %c0_0 = arith.constant 0 : index
    %0 = vector.load %arg1[%c0, %c0_0] : memref<2x32xf32, #tpu.memory_space<vmem>>, vector<2x32xf32>
    %c0_1 = arith.constant 0 : index
    %c0_2 = arith.constant 0 : index
    %1 = vector.load %arg2[%c0_1, %c0_2] : memref<32x1024xf32, #tpu.memory_space<vmem>>, vector<32x1024xf32>
    %cst = arith.constant dense<0.000000e+00> : vector<2x1024xf32>
    %2 = tpu.matmul %0, %1, %cst {dimension_numbers = #tpu.dot_dimension_numbers<[1], [0], [0], [1], [0, 0, 1, 1], [], []>} : vector<2x32xf32>, vector<32x1024xf32>, vector<2x1024xf32> -> vector<2x1024xf32>
    %c0_3 = arith.constant 0 : index
    %c0_4 = arith.constant 0 : index
    %3 = vector.load %arg3[%c0_3, %c0_4] : memref<1x1024xf32, #tpu.memory_space<vmem>>, vector<1x1024xf32>
    %4 = vector.broadcast %3 : vector<1x1024xf32> to vector<2x1024xf32>
    %5 = arith.addf %2, %4 : vector<2x1024xf32>
    %6 = vector.shape_cast %5 : vector<2x1024xf32> to vector<4x512xf32>
    %c0_5 = arith.constant 0 : index
    %c0_6 = arith.constant 0 : index
    %7 = vector.load %arg4[%c0_5, %c0_6] : memref<1x512xf32, #tpu.memory_space<vmem>>, vector<1x512xf32>
    %c0_7 = arith.constant 0 : index
    %c0_8 = arith.constant 0 : index
    %8 = vector.load %arg5[%c0_7, %c0_8] : memref<1x512xf32, #tpu.memory_space<vmem>>, vector<1x512xf32>
    %cst_9 = arith.constant dense<0.000000e+00> : vector<512xf32>
    %9 = vector.multi_reduction <add>, %6, %cst_9 [0] : vector<4x512xf32> to vector<512xf32>
    %10 = vector.shape_cast %9 : vector<512xf32> to vector<1x512xf32>
    %cst_10 = arith.constant 4.000000e+00 : f32
    %11 = vector.broadcast %cst_10 : f32 to vector<1x512xf32>
    %12 = arith.divf %10, %11 : vector<1x512xf32>
    %13 = arith.mulf %6, %6 : vector<4x512xf32>
    %cst_11 = arith.constant dense<0.000000e+00> : vector<512xf32>
    %14 = vector.multi_reduction <add>, %13, %cst_11 [0] : vector<4x512xf32> to vector<512xf32>
    %15 = vector.shape_cast %14 : vector<512xf32> to vector<1x512xf32>
    %cst_12 = arith.constant 4.000000e+00 : f32
    %16 = vector.broadcast %cst_12 : f32 to vector<1x512xf32>
    %17 = arith.divf %15, %16 : vector<1x512xf32>
    %18 = arith.mulf %12, %12 : vector<1x512xf32>
    %19 = arith.subf %17, %18 : vector<1x512xf32>
    %cst_13 = arith.constant 0.000000e+00 : f32
    %20 = vector.broadcast %cst_13 : f32 to vector<1x512xf32>
    %21 = arith.maximumf %19, %20 : vector<1x512xf32>
    %cst_14 = arith.constant 9.99999974E-6 : f32
    %22 = vector.broadcast %cst_14 : f32 to vector<1x512xf32>
    %23 = arith.addf %21, %22 : vector<1x512xf32>
    %24 = math.rsqrt %23 : vector<1x512xf32>
    %25 = arith.mulf %7, %24 : vector<1x512xf32>
    %26 = arith.mulf %12, %25 : vector<1x512xf32>
    %27 = arith.subf %8, %26 : vector<1x512xf32>
    %28 = vector.broadcast %25 : vector<1x512xf32> to vector<4x512xf32>
    %29 = arith.mulf %6, %28 : vector<4x512xf32>
    %30 = vector.broadcast %27 : vector<1x512xf32> to vector<4x512xf32>
    %31 = arith.addf %29, %30 : vector<4x512xf32>
    %cst_15 = arith.constant 0.000000e+00 : f32
    %32 = vector.broadcast %cst_15 : f32 to vector<4x512xf32>
    %33 = arith.maximumf %31, %32 : vector<4x512xf32>
    %34 = arith.truncf %33 : vector<4x512xf32> to vector<4x512xbf16>
    %c0_16 = arith.constant 0 : index
    %c0_17 = arith.constant 0 : index
    %35 = vector.load %arg6[%c0_16, %c0_17] : memref<512x1536xbf16, #tpu.memory_space<vmem>>, vector<512x1536xbf16>
    %cst_18 = arith.constant dense<0.000000e+00> : vector<4x1536xf32>
    %36 = tpu.matmul %34, %35, %cst_18 {dimension_numbers = #tpu.dot_dimension_numbers<[1], [0], [0], [1], [0, 0, 1, 1], [], []>} : vector<4x512xbf16>, vector<512x1536xbf16>, vector<4x1536xf32> -> vector<4x1536xf32>
    %37 = vector.shape_cast %36 : vector<4x1536xf32> to vector<16x384xf32>
    %c0_19 = arith.constant 0 : index
    %c0_20 = arith.constant 0 : index
    %38 = vector.load %arg7[%c0_19, %c0_20] : memref<1x384xf32, #tpu.memory_space<vmem>>, vector<1x384xf32>
    %39 = vector.broadcast %38 : vector<1x384xf32> to vector<16x384xf32>
    %40 = arith.addf %37, %39 : vector<16x384xf32>
    %c0_21 = arith.constant 0 : index
    %c0_22 = arith.constant 0 : index
    %41 = vector.load %arg8[%c0_21, %c0_22] : memref<1x384xf32, #tpu.memory_space<vmem>>, vector<1x384xf32>
    %c0_23 = arith.constant 0 : index
    %c0_24 = arith.constant 0 : index
    %42 = vector.load %arg9[%c0_23, %c0_24] : memref<1x384xf32, #tpu.memory_space<vmem>>, vector<1x384xf32>
    %cst_25 = arith.constant dense<0.000000e+00> : vector<384xf32>
    %43 = vector.multi_reduction <add>, %40, %cst_25 [0] : vector<16x384xf32> to vector<384xf32>
    %44 = vector.shape_cast %43 : vector<384xf32> to vector<1x384xf32>
    %cst_26 = arith.constant 1.600000e+01 : f32
    %45 = vector.broadcast %cst_26 : f32 to vector<1x384xf32>
    %46 = arith.divf %44, %45 : vector<1x384xf32>
    %47 = arith.mulf %40, %40 : vector<16x384xf32>
    %cst_27 = arith.constant dense<0.000000e+00> : vector<384xf32>
    %48 = vector.multi_reduction <add>, %47, %cst_27 [0] : vector<16x384xf32> to vector<384xf32>
    %49 = vector.shape_cast %48 : vector<384xf32> to vector<1x384xf32>
    %cst_28 = arith.constant 1.600000e+01 : f32
    %50 = vector.broadcast %cst_28 : f32 to vector<1x384xf32>
    %51 = arith.divf %49, %50 : vector<1x384xf32>
    %52 = arith.mulf %46, %46 : vector<1x384xf32>
    %53 = arith.subf %51, %52 : vector<1x384xf32>
    %cst_29 = arith.constant 0.000000e+00 : f32
    %54 = vector.broadcast %cst_29 : f32 to vector<1x384xf32>
    %55 = arith.maximumf %53, %54 : vector<1x384xf32>
    %cst_30 = arith.constant 9.99999974E-6 : f32
    %56 = vector.broadcast %cst_30 : f32 to vector<1x384xf32>
    %57 = arith.addf %55, %56 : vector<1x384xf32>
    %58 = math.rsqrt %57 : vector<1x384xf32>
    %59 = arith.mulf %41, %58 : vector<1x384xf32>
    %60 = arith.mulf %46, %59 : vector<1x384xf32>
    %61 = arith.subf %42, %60 : vector<1x384xf32>
    %62 = vector.broadcast %59 : vector<1x384xf32> to vector<16x384xf32>
    %63 = arith.mulf %40, %62 : vector<16x384xf32>
    %64 = vector.broadcast %61 : vector<1x384xf32> to vector<16x384xf32>
    %65 = arith.addf %63, %64 : vector<16x384xf32>
    %cst_31 = arith.constant 0.000000e+00 : f32
    %66 = vector.broadcast %cst_31 : f32 to vector<16x384xf32>
    %67 = arith.maximumf %65, %66 : vector<16x384xf32>
    %68 = arith.truncf %67 : vector<16x384xf32> to vector<16x384xbf16>
    %c0_32 = arith.constant 0 : index
    %c0_33 = arith.constant 0 : index
    %69 = vector.load %arg10[%c0_32, %c0_33] : memref<384x1024xbf16, #tpu.memory_space<vmem>>, vector<384x1024xbf16>
    %cst_34 = arith.constant dense<0.000000e+00> : vector<16x1024xf32>
    %70 = tpu.matmul %68, %69, %cst_34 {dimension_numbers = #tpu.dot_dimension_numbers<[1], [0], [0], [1], [0, 0, 1, 1], [], []>} : vector<16x384xbf16>, vector<384x1024xbf16>, vector<16x1024xf32> -> vector<16x1024xf32>
    %71 = vector.shape_cast %70 : vector<16x1024xf32> to vector<64x256xf32>
    %c0_35 = arith.constant 0 : index
    %c0_36 = arith.constant 0 : index
    %72 = vector.load %arg11[%c0_35, %c0_36] : memref<1x256xf32, #tpu.memory_space<vmem>>, vector<1x256xf32>
    %73 = vector.broadcast %72 : vector<1x256xf32> to vector<64x256xf32>
    %74 = arith.addf %71, %73 : vector<64x256xf32>
    %c0_37 = arith.constant 0 : index
    %c0_38 = arith.constant 0 : index
    %75 = vector.load %arg12[%c0_37, %c0_38] : memref<1x256xf32, #tpu.memory_space<vmem>>, vector<1x256xf32>
    %c0_39 = arith.constant 0 : index
    %c0_40 = arith.constant 0 : index
    %76 = vector.load %arg13[%c0_39, %c0_40] : memref<1x256xf32, #tpu.memory_space<vmem>>, vector<1x256xf32>
    %cst_41 = arith.constant dense<0.000000e+00> : vector<256xf32>
    %77 = vector.multi_reduction <add>, %74, %cst_41 [0] : vector<64x256xf32> to vector<256xf32>
    %78 = vector.shape_cast %77 : vector<256xf32> to vector<1x256xf32>
    %cst_42 = arith.constant 6.400000e+01 : f32
    %79 = vector.broadcast %cst_42 : f32 to vector<1x256xf32>
    %80 = arith.divf %78, %79 : vector<1x256xf32>
    %81 = arith.mulf %74, %74 : vector<64x256xf32>
    %cst_43 = arith.constant dense<0.000000e+00> : vector<256xf32>
    %82 = vector.multi_reduction <add>, %81, %cst_43 [0] : vector<64x256xf32> to vector<256xf32>
    %83 = vector.shape_cast %82 : vector<256xf32> to vector<1x256xf32>
    %cst_44 = arith.constant 6.400000e+01 : f32
    %84 = vector.broadcast %cst_44 : f32 to vector<1x256xf32>
    %85 = arith.divf %83, %84 : vector<1x256xf32>
    %86 = arith.mulf %80, %80 : vector<1x256xf32>
    %87 = arith.subf %85, %86 : vector<1x256xf32>
    %cst_45 = arith.constant 0.000000e+00 : f32
    %88 = vector.broadcast %cst_45 : f32 to vector<1x256xf32>
    %89 = arith.maximumf %87, %88 : vector<1x256xf32>
    %cst_46 = arith.constant 9.99999974E-6 : f32
    %90 = vector.broadcast %cst_46 : f32 to vector<1x256xf32>
    %91 = arith.addf %89, %90 : vector<1x256xf32>
    %92 = math.rsqrt %91 : vector<1x256xf32>
    %93 = arith.mulf %75, %92 : vector<1x256xf32>
    %94 = arith.mulf %80, %93 : vector<1x256xf32>
    %95 = arith.subf %76, %94 : vector<1x256xf32>
    %96 = vector.broadcast %93 : vector<1x256xf32> to vector<64x256xf32>
    %97 = arith.mulf %74, %96 : vector<64x256xf32>
    %98 = vector.broadcast %95 : vector<1x256xf32> to vector<64x256xf32>
    %99 = arith.addf %97, %98 : vector<64x256xf32>
    %cst_47 = arith.constant 0.000000e+00 : f32
    %100 = vector.broadcast %cst_47 : f32 to vector<64x256xf32>
    %101 = arith.maximumf %99, %100 : vector<64x256xf32>
    %c0_48 = arith.constant 0 : index
    %c0_49 = arith.constant 0 : index
    %102 = vector.load %arg14[%c0_48, %c0_49] : memref<256x128xf32, #tpu.memory_space<vmem>>, vector<256x128xf32>
    %cst_50 = arith.constant dense<0.000000e+00> : vector<64x128xf32>
    %103 = tpu.matmul %101, %102, %cst_50 {dimension_numbers = #tpu.dot_dimension_numbers<[1], [0], [0], [1], [0, 0, 1, 1], [], []>} : vector<64x256xf32>, vector<256x128xf32>, vector<64x128xf32> -> vector<64x128xf32>
    %c0_51 = arith.constant 0 : index
    %c0_52 = arith.constant 0 : index
    %104 = vector.load %arg15[%c0_51, %c0_52] : memref<1x128xf32, #tpu.memory_space<vmem>>, vector<1x128xf32>
    %105 = vector.broadcast %104 : vector<1x128xf32> to vector<64x128xf32>
    %106 = arith.addf %103, %105 : vector<64x128xf32>
    %c0_53 = arith.constant 0 : index
    %c0_54 = arith.constant 0 : index
    %107 = vector.load %arg16[%c0_53, %c0_54] : memref<1x128xf32, #tpu.memory_space<vmem>>, vector<1x128xf32>
    %c0_55 = arith.constant 0 : index
    %c0_56 = arith.constant 0 : index
    %108 = vector.load %arg17[%c0_55, %c0_56] : memref<1x128xf32, #tpu.memory_space<vmem>>, vector<1x128xf32>
    %cst_57 = arith.constant dense<0.000000e+00> : vector<128xf32>
    %109 = vector.multi_reduction <add>, %106, %cst_57 [0] : vector<64x128xf32> to vector<128xf32>
    %110 = vector.shape_cast %109 : vector<128xf32> to vector<1x128xf32>
    %cst_58 = arith.constant 6.400000e+01 : f32
    %111 = vector.broadcast %cst_58 : f32 to vector<1x128xf32>
    %112 = arith.divf %110, %111 : vector<1x128xf32>
    %113 = arith.mulf %106, %106 : vector<64x128xf32>
    %cst_59 = arith.constant dense<0.000000e+00> : vector<128xf32>
    %114 = vector.multi_reduction <add>, %113, %cst_59 [0] : vector<64x128xf32> to vector<128xf32>
    %115 = vector.shape_cast %114 : vector<128xf32> to vector<1x128xf32>
    %cst_60 = arith.constant 6.400000e+01 : f32
    %116 = vector.broadcast %cst_60 : f32 to vector<1x128xf32>
    %117 = arith.divf %115, %116 : vector<1x128xf32>
    %118 = arith.mulf %112, %112 : vector<1x128xf32>
    %119 = arith.subf %117, %118 : vector<1x128xf32>
    %cst_61 = arith.constant 0.000000e+00 : f32
    %120 = vector.broadcast %cst_61 : f32 to vector<1x128xf32>
    %121 = arith.maximumf %119, %120 : vector<1x128xf32>
    %cst_62 = arith.constant 9.99999974E-6 : f32
    %122 = vector.broadcast %cst_62 : f32 to vector<1x128xf32>
    %123 = arith.addf %121, %122 : vector<1x128xf32>
    %124 = math.rsqrt %123 : vector<1x128xf32>
    %125 = arith.mulf %107, %124 : vector<1x128xf32>
    %126 = arith.mulf %112, %125 : vector<1x128xf32>
    %127 = arith.subf %108, %126 : vector<1x128xf32>
    %128 = vector.broadcast %125 : vector<1x128xf32> to vector<64x128xf32>
    %129 = arith.mulf %106, %128 : vector<64x128xf32>
    %130 = vector.broadcast %127 : vector<1x128xf32> to vector<64x128xf32>
    %131 = arith.addf %129, %130 : vector<64x128xf32>
    %cst_63 = arith.constant 0.000000e+00 : f32
    %132 = vector.broadcast %cst_63 : f32 to vector<64x128xf32>
    %133 = arith.maximumf %131, %132 : vector<64x128xf32>
    %134 = tpu.iota {dimensions = array<i32: 0>} : vector<64x1xi32>
    %c32_i32 = arith.constant 32 : i32
    %c0_i32 = arith.constant 0 : i32
    %135 = arith.cmpi eq, %c32_i32, %c0_i32 : i32
    %c1_i32 = arith.constant 1 : i32
    %136 = arith.select %135, %c1_i32, %c32_i32 : i32
    %137 = vector.broadcast %136 : i32 to vector<64x1xi32>
    %138 = arith.remsi %134, %137 : vector<64x1xi32>
    %c0_i32_64 = arith.constant 0 : i32
    %139 = vector.broadcast %c0_i32_64 : i32 to vector<64x1xi32>
    %140 = arith.cmpi ne, %138, %139 : vector<64x1xi32>
    %c0_i32_65 = arith.constant 0 : i32
    %141 = vector.broadcast %c0_i32_65 : i32 to vector<64x1xi32>
    %142 = arith.cmpi slt, %138, %141 : vector<64x1xi32>
    %c0_i32_66 = arith.constant 0 : i32
    %143 = arith.cmpi slt, %136, %c0_i32_66 : i32
    %144 = vector.broadcast %143 : i1 to vector<64x1xi1>
    %145 = vector.broadcast %144 : vector<64x1xi1> to vector<64x1xi1>
    %146 = arith.xori %142, %145 : vector<64x1xi1>
    %147 = arith.andi %146, %140 : vector<64x1xi1>
    %148 = vector.broadcast %136 : i32 to vector<64x1xi32>
    %149 = arith.addi %138, %148 : vector<64x1xi32>
    %150 = arith.select %147, %149, %138 : vector<64x1xi1>, vector<64x1xi32>
    %c0_i32_67 = arith.constant 0 : i32
    %151 = vector.broadcast %c0_i32_67 : i32 to vector<64x1xi32>
    %152 = arith.cmpi ne, %150, %151 : vector<64x1xi32>
    %c31_i32 = arith.constant 31 : i32
    %153 = vector.broadcast %c31_i32 : i32 to vector<64x1xi32>
    %154 = arith.cmpi ne, %150, %153 : vector<64x1xi32>
    %c0_68 = arith.constant 0 : index
    %c0_69 = arith.constant 0 : index
    %155 = vector.load %arg19[%c0_68, %c0_69] : memref<1x128xf32, #tpu.memory_space<vmem>>, vector<1x128xf32>
    %c8 = arith.constant 8 : index
    %c0_70 = arith.constant 0 : index
    %156 = vector.load %arg31[%c8, %c0_70] : memref<80x128xf32, #tpu.memory_space<vmem>>, vector<64x128xf32>
    tpu.vector_store %arg31[%c8, %c0_70], %133 {strides = array<i32>} : memref<80x128xf32, #tpu.memory_space<vmem>>, vector<64x128xf32>,
    %c7 = arith.constant 7 : index
    %c0_71 = arith.constant 0 : index
    %157 = vector.load %arg31[%c7, %c0_71] : memref<80x128xf32, #tpu.memory_space<vmem>>, vector<64x128xf32>
    %cst_72 = arith.constant 0.000000e+00 : f32
    %158 = vector.shape_cast %152 : vector<64x1xi1> to vector<64x1xi1>
    %159 = vector.broadcast %158 : vector<64x1xi1> to vector<64x128xi1>
    %160 = vector.broadcast %cst_72 : f32 to vector<64x128xf32>
    %161 = arith.select %159, %157, %160 : vector<64x128xi1>, vector<64x128xf32>
    %c9 = arith.constant 9 : index
    %c0_73 = arith.constant 0 : index
    %162 = vector.load %arg31[%c9, %c0_73] : memref<80x128xf32, #tpu.memory_space<vmem>>, vector<64x128xf32>
    %cst_74 = arith.constant 0.000000e+00 : f32
    %163 = vector.shape_cast %154 : vector<64x1xi1> to vector<64x1xi1>
    %164 = vector.broadcast %163 : vector<64x1xi1> to vector<64x128xi1>
    %165 = vector.broadcast %cst_74 : f32 to vector<64x128xf32>
    %166 = arith.select %164, %162, %165 : vector<64x128xi1>, vector<64x128xf32>
    %c0_75 = arith.constant 0 : index
    %c0_76 = arith.constant 0 : index
    %c0_77 = arith.constant 0 : index
    %167 = vector.load %arg18[%c0_75, %c0_76, %c0_77] : memref<3x128x128xf32, #tpu.memory_space<vmem>>, vector<1x128x128xf32>
    %168 = vector.shape_cast %167 : vector<1x128x128xf32> to vector<128x128xf32>
    %cst_78 = arith.constant dense<0.000000e+00> : vector<64x128xf32>
    %169 = tpu.matmul %161, %168, %cst_78 {dimension_numbers = #tpu.dot_dimension_numbers<[1], [0], [0], [1], [0, 0, 1, 1], [], []>} : vector<64x128xf32>, vector<128x128xf32>, vector<64x128xf32> -> vector<64x128xf32>
    %c1 = arith.constant 1 : index
    %c0_79 = arith.constant 0 : index
    %c0_80 = arith.constant 0 : index
    %170 = vector.load %arg18[%c1, %c0_79, %c0_80] : memref<3x128x128xf32, #tpu.memory_space<vmem>>, vector<1x128x128xf32>
    %171 = vector.shape_cast %170 : vector<1x128x128xf32> to vector<128x128xf32>
    %cst_81 = arith.constant dense<0.000000e+00> : vector<64x128xf32>
    %172 = tpu.matmul %133, %171, %cst_81 {dimension_numbers = #tpu.dot_dimension_numbers<[1], [0], [0], [1], [0, 0, 1, 1], [], []>} : vector<64x128xf32>, vector<128x128xf32>, vector<64x128xf32> -> vector<64x128xf32>
    %173 = arith.addf %169, %172 : vector<64x128xf32>
    %c2 = arith.constant 2 : index
    %c0_82 = arith.constant 0 : index
    %c0_83 = arith.constant 0 : index
    %174 = vector.load %arg18[%c2, %c0_82, %c0_83] : memref<3x128x128xf32, #tpu.memory_space<vmem>>, vector<1x128x128xf32>
    %175 = vector.shape_cast %174 : vector<1x128x128xf32> to vector<128x128xf32>
    %cst_84 = arith.constant dense<0.000000e+00> : vector<64x128xf32>
    %176 = tpu.matmul %166, %175, %cst_84 {dimension_numbers = #tpu.dot_dimension_numbers<[1], [0], [0], [1], [0, 0, 1, 1], [], []>} : vector<64x128xf32>, vector<128x128xf32>, vector<64x128xf32> -> vector<64x128xf32>
    %177 = arith.addf %173, %176 : vector<64x128xf32>
    %178 = vector.broadcast %155 : vector<1x128xf32> to vector<64x128xf32>
    %179 = arith.addf %177, %178 : vector<64x128xf32>
    %c0_85 = arith.constant 0 : index
    %c0_86 = arith.constant 0 : index
    %180 = vector.load %arg20[%c0_85, %c0_86] : memref<1x128xf32, #tpu.memory_space<vmem>>, vector<1x128xf32>
    %c0_87 = arith.constant 0 : index
    %c0_88 = arith.constant 0 : index
    %181 = vector.load %arg21[%c0_87, %c0_88] : memref<1x128xf32, #tpu.memory_space<vmem>>, vector<1x128xf32>
    %cst_89 = arith.constant dense<0.000000e+00> : vector<128xf32>
    %182 = vector.multi_reduction <add>, %179, %cst_89 [0] : vector<64x128xf32> to vector<128xf32>
    %183 = vector.shape_cast %182 : vector<128xf32> to vector<1x128xf32>
    %cst_90 = arith.constant 6.400000e+01 : f32
    %184 = vector.broadcast %cst_90 : f32 to vector<1x128xf32>
    %185 = arith.divf %183, %184 : vector<1x128xf32>
    %186 = arith.mulf %179, %179 : vector<64x128xf32>
    %cst_91 = arith.constant dense<0.000000e+00> : vector<128xf32>
    %187 = vector.multi_reduction <add>, %186, %cst_91 [0] : vector<64x128xf32> to vector<128xf32>
    %188 = vector.shape_cast %187 : vector<128xf32> to vector<1x128xf32>
    %cst_92 = arith.constant 6.400000e+01 : f32
    %189 = vector.broadcast %cst_92 : f32 to vector<1x128xf32>
    %190 = arith.divf %188, %189 : vector<1x128xf32>
    %191 = arith.mulf %185, %185 : vector<1x128xf32>
    %192 = arith.subf %190, %191 : vector<1x128xf32>
    %cst_93 = arith.constant 0.000000e+00 : f32
    %193 = vector.broadcast %cst_93 : f32 to vector<1x128xf32>
    %194 = arith.maximumf %192, %193 : vector<1x128xf32>
    %cst_94 = arith.constant 9.99999974E-6 : f32
    %195 = vector.broadcast %cst_94 : f32 to vector<1x128xf32>
    %196 = arith.addf %194, %195 : vector<1x128xf32>
    %197 = math.rsqrt %196 : vector<1x128xf32>
    %198 = arith.mulf %180, %197 : vector<1x128xf32>
    %199 = arith.mulf %185, %198 : vector<1x128xf32>
    %200 = arith.subf %181, %199 : vector<1x128xf32>
    %201 = vector.broadcast %198 : vector<1x128xf32> to vector<64x128xf32>
    %202 = arith.mulf %179, %201 : vector<64x128xf32>
    %203 = vector.broadcast %200 : vector<1x128xf32> to vector<64x128xf32>
    %204 = arith.addf %202, %203 : vector<64x128xf32>
    %cst_95 = arith.constant 0.000000e+00 : f32
    %205 = vector.broadcast %cst_95 : f32 to vector<64x128xf32>
    %206 = arith.maximumf %204, %205 : vector<64x128xf32>
    %c0_96 = arith.constant 0 : index
    %c0_97 = arith.constant 0 : index
    %207 = vector.load %arg23[%c0_96, %c0_97] : memref<1x128xf32, #tpu.memory_space<vmem>>, vector<1x128xf32>
    %c8_98 = arith.constant 8 : index
    %c0_99 = arith.constant 0 : index
    %208 = vector.load %arg31[%c8_98, %c0_99] : memref<80x128xf32, #tpu.memory_space<vmem>>, vector<64x128xf32>
    tpu.vector_store %arg31[%c8_98, %c0_99], %206 {strides = array<i32>} : memref<80x128xf32, #tpu.memory_space<vmem>>, vector<64x128xf32>,
    %c7_100 = arith.constant 7 : index
    %c0_101 = arith.constant 0 : index
    %209 = vector.load %arg31[%c7_100, %c0_101] : memref<80x128xf32, #tpu.memory_space<vmem>>, vector<64x128xf32>
    %cst_102 = arith.constant 0.000000e+00 : f32
    %210 = vector.shape_cast %152 : vector<64x1xi1> to vector<64x1xi1>
    %211 = vector.broadcast %210 : vector<64x1xi1> to vector<64x128xi1>
    %212 = vector.broadcast %cst_102 : f32 to vector<64x128xf32>
    %213 = arith.select %211, %209, %212 : vector<64x128xi1>, vector<64x128xf32>
    %c9_103 = arith.constant 9 : index
    %c0_104 = arith.constant 0 : index
    %214 = vector.load %arg31[%c9_103, %c0_104] : memref<80x128xf32, #tpu.memory_space<vmem>>, vector<64x128xf32>
    %cst_105 = arith.constant 0.000000e+00 : f32
    %215 = vector.shape_cast %154 : vector<64x1xi1> to vector<64x1xi1>
    %216 = vector.broadcast %215 : vector<64x1xi1> to vector<64x128xi1>
    %217 = vector.broadcast %cst_105 : f32 to vector<64x128xf32>
    %218 = arith.select %216, %214, %217 : vector<64x128xi1>, vector<64x128xf32>
    %c0_106 = arith.constant 0 : index
    %c0_107 = arith.constant 0 : index
    %c0_108 = arith.constant 0 : index
    %219 = vector.load %arg22[%c0_106, %c0_107, %c0_108] : memref<3x128x128xf32, #tpu.memory_space<vmem>>, vector<1x128x128xf32>
    %220 = vector.shape_cast %219 : vector<1x128x128xf32> to vector<128x128xf32>
    %cst_109 = arith.constant dense<0.000000e+00> : vector<64x128xf32>
    %221 = tpu.matmul %213, %220, %cst_109 {dimension_numbers = #tpu.dot_dimension_numbers<[1], [0], [0], [1], [0, 0, 1, 1], [], []>} : vector<64x128xf32>, vector<128x128xf32>, vector<64x128xf32> -> vector<64x128xf32>
    %c1_110 = arith.constant 1 : index
    %c0_111 = arith.constant 0 : index
    %c0_112 = arith.constant 0 : index
    %222 = vector.load %arg22[%c1_110, %c0_111, %c0_112] : memref<3x128x128xf32, #tpu.memory_space<vmem>>, vector<1x128x128xf32>
    %223 = vector.shape_cast %222 : vector<1x128x128xf32> to vector<128x128xf32>
    %cst_113 = arith.constant dense<0.000000e+00> : vector<64x128xf32>
    %224 = tpu.matmul %206, %223, %cst_113 {dimension_numbers = #tpu.dot_dimension_numbers<[1], [0], [0], [1], [0, 0, 1, 1], [], []>} : vector<64x128xf32>, vector<128x128xf32>, vector<64x128xf32> -> vector<64x128xf32>
    %225 = arith.addf %221, %224 : vector<64x128xf32>
    %c2_114 = arith.constant 2 : index
    %c0_115 = arith.constant 0 : index
    %c0_116 = arith.constant 0 : index
    %226 = vector.load %arg22[%c2_114, %c0_115, %c0_116] : memref<3x128x128xf32, #tpu.memory_space<vmem>>, vector<1x128x128xf32>
    %227 = vector.shape_cast %226 : vector<1x128x128xf32> to vector<128x128xf32>
    %cst_117 = arith.constant dense<0.000000e+00> : vector<64x128xf32>
    %228 = tpu.matmul %218, %227, %cst_117 {dimension_numbers = #tpu.dot_dimension_numbers<[1], [0], [0], [1], [0, 0, 1, 1], [], []>} : vector<64x128xf32>, vector<128x128xf32>, vector<64x128xf32> -> vector<64x128xf32>
    %229 = arith.addf %225, %228 : vector<64x128xf32>
    %230 = vector.broadcast %207 : vector<1x128xf32> to vector<64x128xf32>
    %231 = arith.addf %229, %230 : vector<64x128xf32>
    %c0_118 = arith.constant 0 : index
    %c0_119 = arith.constant 0 : index
    %232 = vector.load %arg24[%c0_118, %c0_119] : memref<1x128xf32, #tpu.memory_space<vmem>>, vector<1x128xf32>
    %c0_120 = arith.constant 0 : index
    %c0_121 = arith.constant 0 : index
    %233 = vector.load %arg25[%c0_120, %c0_121] : memref<1x128xf32, #tpu.memory_space<vmem>>, vector<1x128xf32>
    %cst_122 = arith.constant dense<0.000000e+00> : vector<128xf32>
    %234 = vector.multi_reduction <add>, %231, %cst_122 [0] : vector<64x128xf32> to vector<128xf32>
    %235 = vector.shape_cast %234 : vector<128xf32> to vector<1x128xf32>
    %cst_123 = arith.constant 6.400000e+01 : f32
    %236 = vector.broadcast %cst_123 : f32 to vector<1x128xf32>
    %237 = arith.divf %235, %236 : vector<1x128xf32>
    %238 = arith.mulf %231, %231 : vector<64x128xf32>
    %cst_124 = arith.constant dense<0.000000e+00> : vector<128xf32>
    %239 = vector.multi_reduction <add>, %238, %cst_124 [0] : vector<64x128xf32> to vector<128xf32>
    %240 = vector.shape_cast %239 : vector<128xf32> to vector<1x128xf32>
    %cst_125 = arith.constant 6.400000e+01 : f32
    %241 = vector.broadcast %cst_125 : f32 to vector<1x128xf32>
    %242 = arith.divf %240, %241 : vector<1x128xf32>
    %243 = arith.mulf %237, %237 : vector<1x128xf32>
    %244 = arith.subf %242, %243 : vector<1x128xf32>
    %cst_126 = arith.constant 0.000000e+00 : f32
    %245 = vector.broadcast %cst_126 : f32 to vector<1x128xf32>
    %246 = arith.maximumf %244, %245 : vector<1x128xf32>
    %cst_127 = arith.constant 9.99999974E-6 : f32
    %247 = vector.broadcast %cst_127 : f32 to vector<1x128xf32>
    %248 = arith.addf %246, %247 : vector<1x128xf32>
    %249 = math.rsqrt %248 : vector<1x128xf32>
    %250 = arith.mulf %232, %249 : vector<1x128xf32>
    %251 = arith.mulf %237, %250 : vector<1x128xf32>
    %252 = arith.subf %233, %251 : vector<1x128xf32>
    %253 = vector.broadcast %250 : vector<1x128xf32> to vector<64x128xf32>
    %254 = arith.mulf %231, %253 : vector<64x128xf32>
    %255 = vector.broadcast %252 : vector<1x128xf32> to vector<64x128xf32>
    %256 = arith.addf %254, %255 : vector<64x128xf32>
    %cst_128 = arith.constant 0.000000e+00 : f32
    %257 = vector.broadcast %cst_128 : f32 to vector<64x128xf32>
    %258 = arith.maximumf %256, %257 : vector<64x128xf32>
    %259 = arith.truncf %258 : vector<64x128xf32> to vector<64x128xbf16>
    %c0_129 = arith.constant 0 : index
    %c0_130 = arith.constant 0 : index
    %260 = vector.load %arg26[%c0_129, %c0_130] : memref<128x3712xbf16, #tpu.memory_space<vmem>>, vector<128x3712xbf16>
    %cst_131 = arith.constant dense<0.000000e+00> : vector<64x3712xf32>
    %261 = tpu.matmul %259, %260, %cst_131 {dimension_numbers = #tpu.dot_dimension_numbers<[1], [0], [0], [1], [0, 0, 1, 1], [], []>} : vector<64x128xbf16>, vector<128x3712xbf16>, vector<64x3712xf32> -> vector<64x3712xf32>
    %c0_132 = arith.constant 0 : index
    %c0_133 = arith.constant 0 : index
    %262 = vector.load %arg0[%c0_132, %c0_133] : memref<64x3712xf32, #tpu.memory_space<vmem>>, vector<64x3712xf32>
    %263 = arith.addf %261, %262 : vector<64x3712xf32>
    %264 = tpu.iota {dimensions = array<i32: 1>} : vector<64x3712xi32>
    %cst_134 = arith.constant dense<0xFF800000> : vector<64xf32>
    %265 = vector.multi_reduction <maximumf>, %263, %cst_134 [1] : vector<64x3712xf32> to vector<64xf32>
    %266 = vector.shape_cast %265 : vector<64xf32> to vector<64x1xf32>
    %267 = vector.broadcast %266 : vector<64x1xf32> to vector<64x3712xf32>
    %268 = arith.cmpf oeq, %263, %267 : vector<64x3712xf32>
    %c3712_i32 = arith.constant 3712 : i32
    %269 = vector.broadcast %c3712_i32 : i32 to vector<64x3712xi32>
    %270 = arith.select %268, %264, %269 : vector<64x3712xi1>, vector<64x3712xi32>
    %cst_135 = arith.constant dense<2147483647> : vector<64xi32>
    %271 = vector.multi_reduction <minsi>, %270, %cst_135 [1] : vector<64x3712xi32> to vector<64xi32>
    %272 = vector.shape_cast %271 : vector<64xi32> to vector<64x1xi32>
    %c0_136 = arith.constant 0 : index
    %c0_137 = arith.constant 0 : index
    %273 = vector.load %arg30[%c0_136, %c0_137] : memref<64x1xi32, #tpu.memory_space<vmem>>, vector<64x1xi32>
    tpu.vector_store %arg30[%c0_136, %c0_137], %272 {strides = array<i32>} : memref<64x1xi32, #tpu.memory_space<vmem>>, vector<64x1xi32>,
    %c0_138 = arith.constant 0 : index
    %c0_139 = arith.constant 0 : index
    %274 = vector.load %arg27[%c0_138, %c0_139] : memref<128x3xf32, #tpu.memory_space<vmem>>, vector<128x3xf32>
    %cst_140 = arith.constant dense<0.000000e+00> : vector<64x3xf32>
    %275 = tpu.matmul %258, %274, %cst_140 {dimension_numbers = #tpu.dot_dimension_numbers<[1], [0], [0], [1], [0, 0, 1, 1], [], []>} : vector<64x128xf32>, vector<128x3xf32>, vector<64x3xf32> -> vector<64x3xf32>
    %c0_141 = arith.constant 0 : index
    %c0_142 = arith.constant 0 : index
    %276 = vector.load %arg28[%c0_141, %c0_142] : memref<1x3xf32, #tpu.memory_space<vmem>>, vector<1x3xf32>
    %277 = vector.broadcast %276 : vector<1x3xf32> to vector<64x3xf32>
    %278 = arith.addf %275, %277 : vector<64x3xf32>
    %279 = math.tanh %278 : vector<64x3xf32>
    %c0_143 = arith.constant 0 : index
    %c0_144 = arith.constant 0 : index
    %280 = vector.load %arg29[%c0_143, %c0_144] : memref<64x3xf32, #tpu.memory_space<vmem>>, vector<64x3xf32>
    tpu.vector_store %arg29[%c0_143, %c0_144], %279 {strides = array<i32>} : memref<64x3xf32, #tpu.memory_space<vmem>>, vector<64x3xf32>,
    return
  }
}

</mosaic_0001>

<llo_original>
// kernel: eq.1
$region0: #{eq.1}
  %s0 = inlined_call_operand.vmem [shape: s32[64], index: 0, kind: input, shape index: {}]
  %s1 = inlined_call_operand.vmem [shape: s32[2,32], index: 1, kind: output, shape index: {}]
  $region1: #{eq.1} parent=0
    #allocation0 [shape = 'u8[4096]{0}', space=vmem, size = 0x1000, scoped, tag = 'scoped mem for output reshape']
    #allocation1 [shape = 'u8[4096]{0}', space=vmem, size = 0x1000, scoped, tag = 'scoped mem for input reshape']
    %s3 = ssub.s32 2, 1
    %v4 = vld [vmem:[%s0] sm:%s3]
    %5 = vst [vmem:[#allocation1] sm:%s3] %v4
    %v6 = vld [vmem:[#allocation1] sm:$0x1]
    %vm7 = vcmask 261120
    %8 = vst.msk [vmem:[#allocation0] sm:$0x1] %vm7, %v6
    %v9 = vld [vmem:[#allocation1] sm:$0x1]
    %10 = vrot.lane.b32.xlu0 %v9, 96
    %v11 = vpop.permute.xlu0 %10
    %vm12 = vcmask 261120
    %s13 = scalar_lea.vmem [#allocation0], 1
    %14 = vst.msk [vmem:[%s13] sm:$0x1] %vm12, %v11
    %s16 = ssub.s32 4, 1
    %v17 = vld [vmem:[#allocation0] sm:%s16]
    %s19 = ssub.s32 4, 1
    %20 = vst [vmem:[%s1] sm:%s19] %v17

// kernel: gen_forward.1
$region0: #{gen_forward.1}
  #allocation0 [shape = 'u32[]', space=smem, size = 0x4, offset = 0x4, fixed_abs, tag = 'smem constant byte address 0x4 - core index']
  #allocation1 [shape = 'u32[72,128]{1,0:T(1,128)}', space=vmem, size = 0x9000, scoped, tag = 'internal scratch']
  #allocation2 [shape = 'f32[80,128]{1,0:T(8,128)}', space=vmem, size = 0xa000, scoped, tag = 'scratch operand']
  %s0 = inlined_call_operand.smem [shape: u32[31], index: -1, kind: input, shape index: {}]
  %s1 = sld [smem:[%s0]]
  %s2 = scalar_lea.smem %s0, 1
  %s3 = sld [smem:[%s2]]
  %s4 = scalar_lea.smem %s0, 2
  %s5 = sld [smem:[%s4]]
  %s6 = scalar_lea.smem %s0, 3
  %s7 = sld [smem:[%s6]]
  %s8 = scalar_lea.smem %s0, 4
  %s9 = sld [smem:[%s8]]
  %s10 = scalar_lea.smem %s0, 5
  %s11 = sld [smem:[%s10]]
  %s12 = scalar_lea.smem %s0, 6
  %s13 = sld [smem:[%s12]]
  %s14 = scalar_lea.smem %s0, 7
  %s15 = sld [smem:[%s14]]
  %s16 = scalar_lea.smem %s0, 8
  %s17 = sld [smem:[%s16]]
  %s18 = scalar_lea.smem %s0, 9
  %s19 = sld [smem:[%s18]]
  %s20 = scalar_lea.smem %s0, 10
  %s21 = sld [smem:[%s20]]
  %s22 = scalar_lea.smem %s0, 11
  %s23 = sld [smem:[%s22]]
  %s24 = scalar_lea.smem %s0, 12
  %s25 = sld [smem:[%s24]]
  %s26 = scalar_lea.smem %s0, 13
  %s27 = sld [smem:[%s26]]
  %s28 = scalar_lea.smem %s0, 14
  %s29 = sld [smem:[%s28]]
  %s30 = scalar_lea.smem %s0, 15
  %s31 = sld [smem:[%s30]]
  %s32 = scalar_lea.smem %s0, 16
  %s33 = sld [smem:[%s32]]
  %s34 = scalar_lea.smem %s0, 17
  %s35 = sld [smem:[%s34]]
  %s36 = scalar_lea.smem %s0, 18
  %s37 = sld [smem:[%s36]]
  %s38 = scalar_lea.smem %s0, 19
  %s39 = sld [smem:[%s38]]
  %s40 = scalar_lea.smem %s0, 20
  %s41 = sld [smem:[%s40]]
  %s42 = scalar_lea.smem %s0, 21
  %s43 = sld [smem:[%s42]]
  %s44 = scalar_lea.smem %s0, 22
  %s45 = sld [smem:[%s44]]
  %s46 = scalar_lea.smem %s0, 23
  %s47 = sld [smem:[%s46]]
  %s48 = scalar_lea.smem %s0, 24
  %s49 = sld [smem:[%s48]]
  %s50 = scalar_lea.smem %s0, 25
  %s51 = sld [smem:[%s50]]
  %s52 = scalar_lea.smem %s0, 26
  %s53 = sld [smem:[%s52]]
  %s54 = scalar_lea.smem %s0, 27
  %s55 = sld [smem:[%s54]]
  %s56 = scalar_lea.smem %s0, 28
  %s57 = sld [smem:[%s56]]
  %s58 = scalar_lea.smem %s0, 29
  %s59 = sld [smem:[%s58]]
  %s60 = scalar_lea.smem %s0, 30
  %s61 = sld [smem:[%s60]]
  %62 = xla_tuple %s59, %s61
  %s63 = sld [smem:[#allocation0]]
  $region146: #{gen_forward.1} parent=0
    _
  %s65 = ssub.s32 1, %s63
  %s66 = scalar_select 0, %s65, %s63
  $region1: #{gen_forward.1} parent=0
    #allocation3 [shape = 'u8[131072]{0}', space=vmem, size = 0x20000, scoped, tag = 'input window, operand 2, single buffered']
    #allocation4 [shape = 's32[1]{0}', space=sflag, size = 0x4, scoped, tag = 'scoped memory for gen_forward.1']
    #allocation5 [shape = 'u8[786432]{0}', space=vmem, size = 0xc0000, scoped, tag = 'input window, operand 10, single buffered']
    #allocation6 [shape = 's32[1]{0}', space=sflag, size = 0x4, scoped, tag = 'scoped memory for gen_forward.1']
    #allocation7 [shape = 'u8[131072]{0}', space=vmem, size = 0x20000, scoped, tag = 'input window, operand 14, single buffered']
    %67 = vsyncpa [#allocation4], 0
    %68 = vsyncpa [#allocation6], 0
    // Predicated region
    $region2: #{gen_forward.1} parent=1 // pred_check
      _
    $region3: #{gen_forward.1} parent=1 // pred_check_branch
      %70 = sbr.rel (0) target = $region5
    $region4: #{gen_forward.1} parent=1 // pred_region
      _
    $region5: #{gen_forward.1} parent=1 // pred_fallthru
      _
    // Predicated region
    $region6: #{gen_forward.1} parent=1 // pred_check
      _
    $region7: #{gen_forward.1} parent=1 // pred_check_branch
      %72 = sbr.rel (0) target = $region9
    $region8: #{gen_forward.1} parent=1 // pred_region
      _
    $region9: #{gen_forward.1} parent=1 // pred_fallthru
      _
    // Predicated region
    $region10: #{gen_forward.1} parent=1 // pred_check
      _
    $region11: #{gen_forward.1} parent=1 // pred_check_branch
      %74 = sbr.rel (0) target = $region13
    $region12: #{gen_forward.1} parent=1 // pred_region
      %76 = vsyncadd [#allocation4], 0
      %s77 = sshll.u32 %s5, 4
      %s78 = int_to_ptr.hbm [resolvable:$true] %s77
      %s79 = sshll.u32 [#allocation3], 4
      %s80 = int_to_ptr.vmem [resolvable:$true] %s79
      %85 = dma.hbm_to_vmem [thread:$0]  %s78, 4096, %s80, [#allocation4], 1024, 1024, 64
    $region13: #{gen_forward.1} parent=1 // pred_fallthru
      _
    // Predicated region
    $region14: #{gen_forward.1} parent=1 // pred_check
      _
    $region15: #{gen_forward.1} parent=1 // pred_check_branch
      %87 = sbr.rel (0) target = $region17
    $region16: #{gen_forward.1} parent=1 // pred_region
      _
    $region17: #{gen_forward.1} parent=1 // pred_fallthru
      _
    // Predicated region
    $region18: #{gen_forward.1} parent=1 // pred_check
      _
    $region19: #{gen_forward.1} parent=1 // pred_check_branch
      %89 = sbr.rel (0) target = $region21
    $region20: #{gen_forward.1} parent=1 // pred_region
      _
    $region21: #{gen_forward.1} parent=1 // pred_fallthru
      _
    // Predicated region
    $region22: #{gen_forward.1} parent=1 // pred_check
      _
    $region23: #{gen_forward.1} parent=1 // pred_check_branch
      %91 = sbr.rel (0) target = $region25
    $region24: #{gen_forward.1} parent=1 // pred_region
      _
    $region25: #{gen_forward.1} parent=1 // pred_fallthru
      _
    // Predicated region
    $region26: #{gen_forward.1} parent=1 // pred_check
      _
    $region27: #{gen_forward.1} parent=1 // pred_check_branch
      %93 = sbr.rel (0) target = $region29
    $region28: #{gen_forward.1} parent=1 // pred_region
      _
    $region29: #{gen_forward.1} parent=1 // pred_fallthru
      _
    // Predicated region
    $region30: #{gen_forward.1} parent=1 // pred_check
      _
    $region31: #{gen_forward.1} parent=1 // pred_check_branch
      %95 = sbr.rel (0) target = $region33
    $region32: #{gen_forward.1} parent=1 // pred_region
      _
    $region33: #{gen_forward.1} parent=1 // pred_fallthru
      _
    // Predicated region
    $region34: #{gen_forward.1} parent=1 // pred_check
      _
    $region35: #{gen_forward.1} parent=1 // pred_check_branch
      %97 = sbr.rel (0) target = $region37
    $region36: #{gen_forward.1} parent=1 // pred_region
      _
    $region37: #{gen_forward.1} parent=1 // pred_fallthru
      _
    // Predicated region
    $region38: #{gen_forward.1} parent=1 // pred_check
      _
    $region39: #{gen_forward.1} parent=1 // pred_check_branch
      %99 = sbr.rel (0) target = $region41
    $region40: #{gen_forward.1} parent=1 // pred_region
      _
    $region41: #{gen_forward.1} parent=1 // pred_fallthru
      _
    // Predicated region
    $region42: #{gen_forward.1} parent=1 // pred_check
      _
    $region43: #{gen_forward.1} parent=1 // pred_check_branch
      %101 = sbr.rel (0) target = $region45
    $region44: #{gen_forward.1} parent=1 // pred_region
      %103 = vsyncadd [#allocation6], 0
      %s104 = sshll.u32 %s21, 4
      %s105 = int_to_ptr.hbm [resolvable:$true] %s104
      %s106 = sshll.u32 [#allocation5], 4
      %s107 = int_to_ptr.vmem [resolvable:$true] %s106
      %112 = dma.hbm_to_vmem [thread:$0]  %s105, 24576, %s107, [#allocation6], 512, 512, 32
    $region45: #{gen_forward.1} parent=1 // pred_fallthru
      _
    // Predicated region
    $region46: #{gen_forward.1} parent=1 // pred_check
      _
    $region47: #{gen_forward.1} parent=1 // pred_check_branch
      %114 = sbr.rel (0) target = $region49
    $region48: #{gen_forward.1} parent=1 // pred_region
      _
    $region49: #{gen_forward.1} parent=1 // pred_fallthru
      _
    // Predicated region
    $region50: #{gen_forward.1} parent=1 // pred_check
      _
    $region51: #{gen_forward.1} parent=1 // pred_check_branch
      %116 = sbr.rel (0) target = $region53
    $region52: #{gen_forward.1} parent=1 // pred_region
      _
    $region53: #{gen_forward.1} parent=1 // pred_fallthru
      _
    // Predicated region
    $region54: #{gen_forward.1} parent=1 // pred_check
      _
    $region55: #{gen_forward.1} parent=1 // pred_check_branch
      %118 = sbr.rel (0) target = $region57
    $region56: #{gen_forward.1} parent=1 // pred_region
      _
    $region57: #{gen_forward.1} parent=1 // pred_fallthru
      _
    // Predicated region
    $region58: #{gen_forward.1} parent=1 // pred_check
      _
    $region59: #{gen_forward.1} parent=1 // pred_check_branch
      %120 = sbr.rel (0) target = $region61
    $region60: #{gen_forward.1} parent=1 // pred_region
      %122 = vsyncadd [#allocation6], 0
      %s123 = sshll.u32 %s29, 4
      %s124 = int_to_ptr.hbm [resolvable:$true] %s123
      %s125 = sshll.u32 [#allocation7], 4
      %s126 = int_to_ptr.vmem [resolvable:$true] %s125
      %131 = dma.hbm_to_vmem [thread:$0]  %s124, 4096, %s126, [#allocation6], 128, 128, 8
    $region61: #{gen_forward.1} parent=1 // pred_fallthru
      _
    // Predicated region
    $region62: #{gen_forward.1} parent=1 // pred_check
      _
    $region63: #{gen_forward.1} parent=1 // pred_check_branch
      %133 = sbr.rel (0) target = $region65
    $region64: #{gen_forward.1} parent=1 // pred_region
      _
    $region65: #{gen_forward.1} parent=1 // pred_fallthru
      _
    // Predicated region
    $region66: #{gen_forward.1} parent=1 // pred_check
      _
    $region67: #{gen_forward.1} parent=1 // pred_check_branch
      %135 = sbr.rel (0) target = $region69
    $region68: #{gen_forward.1} parent=1 // pred_region
      _
    $region69: #{gen_forward.1} parent=1 // pred_fallthru
      _
    // Predicated region
    $region70: #{gen_forward.1} parent=1 // pred_check
      _
    $region71: #{gen_forward.1} parent=1 // pred_check_branch
      %137 = sbr.rel (0) target = $region73
    $region72: #{gen_forward.1} parent=1 // pred_region
      _
    $region73: #{gen_forward.1} parent=1 // pred_fallthru
      _
    // Predicated region
    $region74: #{gen_forward.1} parent=1 // pred_check
      _
    $region75: #{gen_forward.1} parent=1 // pred_check_branch
      %139 = sbr.rel (0) target = $region77
    $region76: #{gen_forward.1} parent=1 // pred_region
      _
    $region77: #{gen_forward.1} parent=1 // pred_fallthru
      _
    // Predicated region
    $region78: #{gen_forward.1} parent=1 // pred_check
      _
    $region79: #{gen_forward.1} parent=1 // pred_check_branch
      %141 = sbr.rel (0) target = $region81
    $region80: #{gen_forward.1} parent=1 // pred_region
      _
    $region81: #{gen_forward.1} parent=1 // pred_fallthru
      _
    // Predicated region
    $region82: #{gen_forward.1} parent=1 // pred_check
      _
    $region83: #{gen_forward.1} parent=1 // pred_check_branch
      %143 = sbr.rel (0) target = $region85
    $region84: #{gen_forward.1} parent=1 // pred_region
      _
    $region85: #{gen_forward.1} parent=1 // pred_fallthru
      _
    // Predicated region
    $region86: #{gen_forward.1} parent=1 // pred_check
      _
    $region87: #{gen_forward.1} parent=1 // pred_check_branch
      %145 = sbr.rel (0) target = $region89
    $region88: #{gen_forward.1} parent=1 // pred_region
      _
    $region89: #{gen_forward.1} parent=1 // pred_fallthru
      _
    // Predicated region
    $region90: #{gen_forward.1} parent=1 // pred_check
      _
    $region91: #{gen_forward.1} parent=1 // pred_check_branch
      %147 = sbr.rel (0) target = $region93
    $region92: #{gen_forward.1} parent=1 // pred_region
      _
    $region93: #{gen_forward.1} parent=1 // pred_fallthru
      _
    // Predicated region
    $region94: #{gen_forward.1} parent=1 // pred_check
      _
    $region95: #{gen_forward.1} parent=1 // pred_check_branch
      %149 = sbr.rel (0) target = $region97
    $region96: #{gen_forward.1} parent=1 // pred_region
      _
    $region97: #{gen_forward.1} parent=1 // pred_fallthru
      _
    // Predicated region
    $region98: #{gen_forward.1} parent=1 // pred_check
      _
    $region99: #{gen_forward.1} parent=1 // pred_check_branch
      %151 = sbr.rel (0) target = $region101
    $region100: #{gen_forward.1} parent=1 // pred_region
      _
    $region101: #{gen_forward.1} parent=1 // pred_fallthru
      _
    // Predicated region
    $region102: #{gen_forward.1} parent=1 // pred_check
      _
    $region103: #{gen_forward.1} parent=1 // pred_check_branch
      %153 = sbr.rel (0) target = $region105
    $region104: #{gen_forward.1} parent=1 // pred_region
      _
    $region105: #{gen_forward.1} parent=1 // pred_fallthru
      _
    // Predicated region
    $region106: #{gen_forward.1} parent=1 // pred_check
      _
    $region107: #{gen_forward.1} parent=1 // pred_check_branch
      %155 = sbr.rel (0) target = $region109
    $region108: #{gen_forward.1} parent=1 // pred_region
      _
    $region109: #{gen_forward.1} parent=1 // pred_fallthru
      _
    // Predicated region
    $region110: #{gen_forward.1} parent=1 // pred_check
      _
    $region111: #{gen_forward.1} parent=1 // pred_check_branch
      %157 = sbr.rel (0) target = $region113
    $region112: #{gen_forward.1} parent=1 // pred_region
      _
    $region113: #{gen_forward.1} parent=1 // pred_fallthru
      _
    // Predicated region
    $region114: #{gen_forward.1} parent=1 // pred_check
      _
    $region115: #{gen_forward.1} parent=1 // pred_check_branch
      %159 = sbr.rel (0) target = $region117
    $region116: #{gen_forward.1} parent=1 // pred_region
      _
    $region117: #{gen_forward.1} parent=1 // pred_fallthru
      _
    // Predicated region
    $region118: #{gen_forward.1} parent=1 // pred_check
      _
    $region119: #{gen_forward.1} parent=1 // pred_check_branch
      %161 = sbr.rel (0) target = $region121
    $region120: #{gen_forward.1} parent=1 // pred_region
      %163 = dma.done [#allocation4], 4096
    $region121: #{gen_forward.1} parent=1 // pred_fallthru
      _
    // Predicated region
    $region122: #{gen_forward.1} parent=1 // pred_check
      _
    $region123: #{gen_forward.1} parent=1 // pred_check_branch
      %165 = sbr.rel (0) target = $region125
    $region124: #{gen_forward.1} parent=1 // pred_region
      %167 = dma.done [#allocation6], 24576
    $region125: #{gen_forward.1} parent=1 // pred_fallthru
      _
    // Predicated region
    $region126: #{gen_forward.1} parent=1 // pred_check
      _
    $region127: #{gen_forward.1} parent=1 // pred_check_branch
      %169 = sbr.rel (0) target = $region129
    $region128: #{gen_forward.1} parent=1 // pred_region
      %171 = dma.done [#allocation6], 4096
    $region129: #{gen_forward.1} parent=1 // pred_fallthru
      _
    %v172 = vld [vmem:[%s3] sm:$0x3]
    %v173 = vld [vmem:[#allocation3] sm:$0xff]
    %v174 = vld [vmem:[#allocation3 + $0x8] sm:$0xff]
    %v175 = vld [vmem:[#allocation3 + $0x10] sm:$0xff]
    %v176 = vld [vmem:[#allocation3 + $0x18] sm:$0xff]
    %v177 = vld [vmem:[#allocation3 + $0x20] sm:$0xff]
    %v178 = vld [vmem:[#allocation3 + $0x28] sm:$0xff]
    %v179 = vld [vmem:[#allocation3 + $0x30] sm:$0xff]
    %v180 = vld [vmem:[#allocation3 + $0x38] sm:$0xff]
    %v181 = vld [vmem:[#allocation3 + $0x40] sm:$0xff]
    %v182 = vld [vmem:[#allocation3 + $0x48] sm:$0xff]
    %v183 = vld [vmem:[#allocation3 + $0x50] sm:$0xff]
    %v184 = vld [vmem:[#allocation3 + $0x58] sm:$0xff]
    %v185 = vld [vmem:[#allocation3 + $0x60] sm:$0xff]
    %v186 = vld [vmem:[#allocation3 + $0x68] sm:$0xff]
    %v187 = vld [vmem:[#allocation3 + $0x70] sm:$0xff]
    %v188 = vld [vmem:[#allocation3 + $0x78] sm:$0xff]
    %v189 = vld [vmem:[#allocation3 + $0x80] sm:$0xff]
    %v190 = vld [vmem:[#allocation3 + $0x88] sm:$0xff]
    %v191 = vld [vmem:[#allocation3 + $0x90] sm:$0xff]
    %v192 = vld [vmem:[#allocation3 + $0x98] sm:$0xff]
    %v193 = vld [vmem:[#allocation3 + $0xa0] sm:$0xff]
    %v194 = vld [vmem:[#allocation3 + $0xa8] sm:$0xff]
    %v195 = vld [vmem:[#allocation3 + $0xb0] sm:$0xff]
    %v196 = vld [vmem:[#allocation3 + $0xb8] sm:$0xff]
    %v197 = vld [vmem:[#allocation3 + $0xc0] sm:$0xff]
    %v198 = vld [vmem:[#allocation3 + $0xc8] sm:$0xff]
    %v199 = vld [vmem:[#allocation3 + $0xd0] sm:$0xff]
    %v200 = vld [vmem:[#allocation3 + $0xd8] sm:$0xff]
    %v201 = vld [vmem:[#allocation3 + $0xe0] sm:$0xff]
    %v202 = vld [vmem:[#allocation3 + $0xe8] sm:$0xff]
    %v203 = vld [vmem:[#allocation3 + $0xf0] sm:$0xff]
    %v204 = vld [vmem:[#allocation3 + $0xf8] sm:$0xff]
    %v205 = vld [vmem:[%s7] sm:$0xff]
    %v207 = vperm.slane %v205, 0
    %v208 = vperm.slane %v205, 1
    %v209 = vperm.slane %v205, 2
    %v210 = vperm.slane %v205, 3
    %v211 = vperm.slane %v205, 4
    %v212 = vperm.slane %v205, 5
    %v213 = vperm.slane %v205, 6
    %v214 = vperm.slane %v205, 7
    %vm223 = vcmask 261120
    %v225 = vsel %vm223, %v172, 0
    %227 = vmatpush.msra.mxu0 0.0
    %228 = vmatpush.msra.mxu0 0.0
    %229 = vmatpush.msra.mxu0 0.0
    %230 = vmatpush.msra.mxu0 0.0
    %231 = vmatpush.msra.mxu0 0.0
    %232 = vmatpush.msra.mxu0 0.0
    %233 = vmatpush.msra.mxu0 0.0
    %234 = vmatpush.msra.mxu0 0.0
    %235 = vmatpush.msra.mxu0 0.0
    %236 = vmatpush.msra.mxu0 0.0
    %237 = vmatpush.msra.mxu0 0.0
    %238 = vmatpush.msra.mxu0 0.0
    %239 = vmatpush.msra.mxu0 %v197
    %240 = vmatpush.msra.mxu0 %v189
    %241 = vmatpush.msra.mxu0 %v181
    %242 = vmatpush.msra.mxu0 %v173
    %243 = vmatmul.f32.gmra.mxu0 %v225
    %v244 = vpop.f32.mrf.mxu0
    %v245 = vadd.f32 %v207, %v244
    %246 = vdwg.mxu0
    %247 = vmatpush.msra.mxu0 0.0
    %248 = vmatpush.msra.mxu0 0.0
    %249 = vmatpush.msra.mxu0 0.0
    %250 = vmatpush.msra.mxu0 0.0
    %251 = vmatpush.msra.mxu0 0.0
    %252 = vmatpush.msra.mxu0 0.0
    %253 = vmatpush.msra.mxu0 0.0
    %254 = vmatpush.msra.mxu0 0.0
    %255 = vmatpush.msra.mxu0 0.0
    %256 = vmatpush.msra.mxu0 0.0
    %257 = vmatpush.msra.mxu0 0.0
    %258 = vmatpush.msra.mxu0 0.0
    %259 = vmatpush.msra.mxu0 %v198
    %260 = vmatpush.msra.mxu0 %v190
    %261 = vmatpush.msra.mxu0 %v182
    %262 = vmatpush.msra.mxu0 %v174
    %263 = vmatmul.f32.gmra.mxu0 %v225
    %v264 = vpop.f32.mrf.mxu0
    %v265 = vadd.f32 %v208, %v264
    %266 = vdwg.mxu0
    %267 = vmatpush.msra.mxu0 0.0
    %268 = vmatpush.msra.mxu0 0.0
    %269 = vmatpush.msra.mxu0 0.0
    %270 = vmatpush.msra.mxu0 0.0
    %271 = vmatpush.msra.mxu0 0.0
    %272 = vmatpush.msra.mxu0 0.0
    %273 = vmatpush.msra.mxu0 0.0
    %274 = vmatpush.msra.mxu0 0.0
    %275 = vmatpush.msra.mxu0 0.0
    %276 = vmatpush.msra.mxu0 0.0
    %277 = vmatpush.msra.mxu0 0.0
    %278 = vmatpush.msra.mxu0 0.0
    %279 = vmatpush.msra.mxu0 %v199
    %280 = vmatpush.msra.mxu0 %v191
    %281 = vmatpush.msra.mxu0 %v183
    %282 = vmatpush.msra.mxu0 %v175
    %283 = vmatmul.f32.gmra.mxu0 %v225
    %v284 = vpop.f32.mrf.mxu0
    %v285 = vadd.f32 %v209, %v284
    %286 = vdwg.mxu0
    %287 = vmatpush.msra.mxu0 0.0
    %288 = vmatpush.msra.mxu0 0.0
    %289 = vmatpush.msra.mxu0 0.0
    %290 = vmatpush.msra.mxu0 0.0
    %291 = vmatpush.msra.mxu0 0.0
    %292 = vmatpush.msra.mxu0 0.0
    %293 = vmatpush.msra.mxu0 0.0
    %294 = vmatpush.msra.mxu0 0.0
    %295 = vmatpush.msra.mxu0 0.0
    %296 = vmatpush.msra.mxu0 0.0
    %297 = vmatpush.msra.mxu0 0.0
    %298 = vmatpush.msra.mxu0 0.0
    %299 = vmatpush.msra.mxu0 %v200
    %300 = vmatpush.msra.mxu0 %v192
    %301 = vmatpush.msra.mxu0 %v184
    %302 = vmatpush.msra.mxu0 %v176
    %303 = vmatmul.f32.gmra.mxu0 %v225
    %v304 = vpop.f32.mrf.mxu0
    %v305 = vadd.f32 %v210, %v304
    %306 = vdwg.mxu0
    %307 = vmatpush.msra.mxu0 0.0
    %308 = vmatpush.msra.mxu0 0.0
    %309 = vmatpush.msra.mxu0 0.0
    %310 = vmatpush.msra.mxu0 0.0
    %311 = vmatpush.msra.mxu0 0.0
    %312 = vmatpush.msra.mxu0 0.0
    %313 = vmatpush.msra.mxu0 0.0
    %314 = vmatpush.msra.mxu0 0.0
    %315 = vmatpush.msra.mxu0 0.0
    %316 = vmatpush.msra.mxu0 0.0
    %317 = vmatpush.msra.mxu0 0.0
    %318 = vmatpush.msra.mxu0 0.0
    %319 = vmatpush.msra.mxu0 %v201
    %320 = vmatpush.msra.mxu0 %v193
    %321 = vmatpush.msra.mxu0 %v185
    %322 = vmatpush.msra.mxu0 %v177
    %323 = vmatmul.f32.gmra.mxu0 %v225
    %v324 = vpop.f32.mrf.mxu0
    %v325 = vadd.f32 %v211, %v324
    %326 = vdwg.mxu0
    %327 = vmatpush.msra.mxu0 0.0
    %328 = vmatpush.msra.mxu0 0.0
    %329 = vmatpush.msra.mxu0 0.0
    %330 = vmatpush.msra.mxu0 0.0
    %331 = vmatpush.msra.mxu0 0.0
    %332 = vmatpush.msra.mxu0 0.0
    %333 = vmatpush.msra.mxu0 0.0
    %334 = vmatpush.msra.mxu0 0.0
    %335 = vmatpush.msra.mxu0 0.0
    %336 = vmatpush.msra.mxu0 0.0
    %337 = vmatpush.msra.mxu0 0.0
    %338 = vmatpush.msra.mxu0 0.0
    %339 = vmatpush.msra.mxu0 %v202
    %340 = vmatpush.msra.mxu0 %v194
    %341 = vmatpush.msra.mxu0 %v186
    %342 = vmatpush.msra.mxu0 %v178
    %343 = vmatmul.f32.gmra.mxu0 %v225
    %v344 = vpop.f32.mrf.mxu0
    %v345 = vadd.f32 %v212, %v344
    %346 = vdwg.mxu0
    %347 = vmatpush.msra.mxu0 0.0
    %348 = vmatpush.msra.mxu0 0.0
    %349 = vmatpush.msra.mxu0 0.0
    %350 = vmatpush.msra.mxu0 0.0
    %351 = vmatpush.msra.mxu0 0.0
    %352 = vmatpush.msra.mxu0 0.0
    %353 = vmatpush.msra.mxu0 0.0
    %354 = vmatpush.msra.mxu0 0.0
    %355 = vmatpush.msra.mxu0 0.0
    %356 = vmatpush.msra.mxu0 0.0
    %357 = vmatpush.msra.mxu0 0.0
    %358 = vmatpush.msra.mxu0 0.0
    %359 = vmatpush.msra.mxu0 %v203
    %360 = vmatpush.msra.mxu0 %v195
    %361 = vmatpush.msra.mxu0 %v187
    %362 = vmatpush.msra.mxu0 %v179
    %363 = vmatmul.f32.gmra.mxu0 %v225
    %v364 = vpop.f32.mrf.mxu0
    %v365 = vadd.f32 %v213, %v364
    %366 = vdwg.mxu0
    %367 = vmatpush.msra.mxu0 0.0
    %368 = vmatpush.msra.mxu0 0.0
    %369 = vmatpush.msra.mxu0 0.0
    %370 = vmatpush.msra.mxu0 0.0
    %371 = vmatpush.msra.mxu0 0.0
    %372 = vmatpush.msra.mxu0 0.0
    %373 = vmatpush.msra.mxu0 0.0
    %374 = vmatpush.msra.mxu0 0.0
    %375 = vmatpush.msra.mxu0 0.0
    %376 = vmatpush.msra.mxu0 0.0
    %377 = vmatpush.msra.mxu0 0.0
    %378 = vmatpush.msra.mxu0 0.0
    %379 = vmatpush.msra.mxu0 %v204
    %380 = vmatpush.msra.mxu0 %v196
    %381 = vmatpush.msra.mxu0 %v188
    %382 = vmatpush.msra.mxu0 %v180
    %383 = vmatmul.f32.gmra.mxu0 %v225
    %v384 = vpop.f32.mrf.mxu0
    %v385 = vadd.f32 %v214, %v384
    %386 = vdwg.mxu0
    %v395 = vrot.slane %v265, 7
    %v396 = vrot.slane %v285, 6
    %v397 = vrot.slane %v305, 5
    %v398 = vrot.slane %v325, 4
    %v399 = vrot.slane %v345, 3
    %v400 = vrot.slane %v365, 2
    %v401 = vrot.slane %v385, 1
    %vm402 = vcmask 1040384
    %v403 = vsel %vm402, %v245, %v395
    %vm404 = vcmask 1042434
    %v405 = vsel %vm404, %v396, %v397
    %vm406 = vcmask 1041408
    %v407 = vsel %vm406, %v403, %v405
    %vm408 = vcmask 1044484
    %v409 = vsel %vm408, %v398, %v399
    %vm410 = vcmask 1046534
    %v411 = vsel %vm410, %v400, %v401
    %vm412 = vcmask 1045508
    %v413 = vsel %vm412, %v409, %v411
    %vm414 = vcmask 1043456
    %v415 = vsel %vm414, %v407, %v413
    %vm416 = vcmask 1041409
    %v417 = vsel %vm416, %v245, %v395
    %vm418 = vcmask 1043459
    %v419 = vsel %vm418, %v396, %v397
    %vm420 = vcmask 1042433
    %v421 = vsel %vm420, %v417, %v419
    %vm422 = vcmask 1045509
    %v423 = vsel %vm422, %v398, %v399
    %vm424 = vcmask 1046528
    %v425 = vsel %vm424, %v401, %v400
    %vm426 = vcmask 1046533
    %v427 = vsel %vm426, %v423, %v425
    %vm428 = vcmask 1044481
    %v429 = vsel %vm428, %v421, %v427
    %v430 = vrot.slane %v429, 1
    %v434 = vunpack.c.l.s4 1935823168
    %v435 = vunpack.c.0.s8 %v434
    %v436 = vperm.slane %v415, %v435
    %v438 = vunpack.c.l.s4 1935823168
    %v439 = vunpack.c.0.s8 %v438
    %v440 = vperm.slane %v430, %v439
    %v441 = vld [vmem:[%s9] sm:$0xf]
    %v442 = vld [vmem:[%s11] sm:$0xf]
    %445 = vst [vmem:[#allocation1] ss:$4 sm:$0xff] %v436
    %s446 = scalar_lea.vmem [#allocation1], 1
    %447 = vst [vmem:[%s446] ss:$4 sm:$0xff] %v440
    %v448 = vld.sshfl [vmem:[#allocation1] sm:$0xff pattern:$0x73625140]
    %v449 = vld.sshfl [vmem:[#allocation1 + $0x8] sm:$0xff pattern:$0x73625140]
    %v450 = vld.sshfl [vmem:[#allocation1 + $0x10] sm:$0xff pattern:$0x73625140]
    %v451 = vld.sshfl [vmem:[#allocation1 + $0x18] sm:$0xff pattern:$0x73625140]
    %v456 = vsel %vm414, %v448, 0.0
    %v457 = vrot.slane %v456, 4
    %v458 = vadd.f32 %v456, %v457
    %v459 = vrot.slane %v458, 2
    %v460 = vadd.f32 %v458, %v459
    %v461 = vrot.slane %v460, 1
    %v462 = vadd.f32 %v460, %v461
    %v463 = vsel %vm414, %v449, 0.0
    %v464 = vrot.slane %v463, 4
    %v465 = vadd.f32 %v463, %v464
    %v466 = vrot.slane %v465, 2
    %v467 = vadd.f32 %v465, %v466
    %v468 = vrot.slane %v467, 1
    %v469 = vadd.f32 %v467, %v468
    %v470 = vsel %vm414, %v450, 0.0
    %v471 = vrot.slane %v470, 4
    %v472 = vadd.f32 %v470, %v471
    %v473 = vrot.slane %v472, 2
    %v474 = vadd.f32 %v472, %v473
    %v475 = vrot.slane %v474, 1
    %v476 = vadd.f32 %v474, %v475
    %v477 = vsel %vm414, %v451, 0.0
    %v478 = vrot.slane %v477, 4
    %v479 = vadd.f32 %v477, %v478
    %v480 = vrot.slane %v479, 2
    %v481 = vadd.f32 %v479, %v480
    %v482 = vrot.slane %v481, 1
    %v483 = vadd.f32 %v481, %v482
    %v484 = vrcp.pop 4.0
    %v485 = vmul.f32 4.0, %v484
    %v486 = vsub.f32 1.0, %v485
    %v487 = vmul.f32 %v484, %v486
    %v488 = vadd.f32 %v484, %v487
    %vm489 = vweird.f32 %v484
    %v490 = vsel %vm489, %v484, %v488
    %v491 = vmul.f32 %v462, %v490
    %v492 = vmul.f32 %v469, %v490
    %v493 = vmul.f32 %v476, %v490
    %v494 = vmul.f32 %v483, %v490
    %v495 = vmul.f32 %v436, %v436
    %v496 = vmul.f32 %v440, %v440
    %499 = vst [vmem:[#allocation1] ss:$4 sm:$0xff] %v495
    %s500 = scalar_lea.vmem [#allocation1], 1
    %501 = vst [vmem:[%s500] ss:$4 sm:$0xff] %v496
    %v502 = vld.sshfl [vmem:[#allocation1] sm:$0xff pattern:$0x73625140]
    %v503 = vld.sshfl [vmem:[#allocation1 + $0x8] sm:$0xff pattern:$0x73625140]
    %v504 = vld.sshfl [vmem:[#allocation1 + $0x10] sm:$0xff pattern:$0x73625140]
    %v505 = vld.sshfl [vmem:[#allocation1 + $0x18] sm:$0xff pattern:$0x73625140]
    %v510 = vsel %vm414, %v502, 0.0
    %v511 = vrot.slane %v510, 4
    %v512 = vadd.f32 %v510, %v511
    %v513 = vrot.slane %v512, 2
    %v514 = vadd.f32 %v512, %v513
    %v515 = vrot.slane %v514, 1
    %v516 = vadd.f32 %v514, %v515
    %v517 = vsel %vm414, %v503, 0.0
    %v518 = vrot.slane %v517, 4
    %v519 = vadd.f32 %v517, %v518
    %v520 = vrot.slane %v519, 2
    %v521 = vadd.f32 %v519, %v520
    %v522 = vrot.slane %v521, 1
    %v523 = vadd.f32 %v521, %v522
    %v524 = vsel %vm414, %v504, 0.0
    %v525 = vrot.slane %v524, 4
    %v526 = vadd.f32 %v524, %v525
    %v527 = vrot.slane %v526, 2
    %v528 = vadd.f32 %v526, %v527
    %v529 = vrot.slane %v528, 1
    %v530 = vadd.f32 %v528, %v529
    %v531 = vsel %vm414, %v505, 0.0
    %v532 = vrot.slane %v531, 4
    %v533 = vadd.f32 %v531, %v532
    %v534 = vrot.slane %v533, 2
    %v535 = vadd.f32 %v533, %v534
    %v536 = vrot.slane %v535, 1
    %v537 = vadd.f32 %v535, %v536
    %v538 = vmul.f32 %v516, %v490
    %v539 = vmul.f32 %v523, %v490
    %v540 = vmul.f32 %v530, %v490
    %v541 = vmul.f32 %v537, %v490
    %v542 = vmul.f32 %v491, %v491
    %v543 = vmul.f32 %v492, %v492
    %v544 = vmul.f32 %v493, %v493
    %v545 = vmul.f32 %v494, %v494
    %v546 = vsub.f32 %v538, %v542
    %v547 = vsub.f32 %v539, %v543
    %v548 = vsub.f32 %v540, %v544
    %v549 = vsub.f32 %v541, %v545
    %v550 = vmax.f32 %v546, 0.0
    %v551 = vmax.f32 %v547, 0.0
    %v552 = vmax.f32 %v548, 0.0
    %v553 = vmax.f32 %v549, 0.0
    %v554 = vadd.f32 %v550, 1e-05
    %v555 = vadd.f32 %v551, 1e-05
    %v556 = vadd.f32 %v552, 1e-05
    %v557 = vadd.f32 %v553, 1e-05
    %v558 = vrsqrt.pop %v554
    %v559 = vmul.f32 %v558, %v554
    %v560 = vmul.f32 %v559, %v558
    %v561 = vmul.f32 0.5, %v560
    %v562 = vsub.f32 1.5, %v561
    %v563 = vmul.f32 %v558, %v562
    %vm564 = vweird.f32 %v554
    %vm565 = vweird.f32 %v558
    %vm566 = vmor %vm564, %vm565
    %v567 = vsel %vm566, %v558, %v563
    %v568 = vrsqrt.pop %v555
    %v569 = vmul.f32 %v568, %v555
    %v570 = vmul.f32 %v569, %v568
    %v571 = vmul.f32 0.5, %v570
    %v572 = vsub.f32 1.5, %v571
    %v573 = vmul.f32 %v568, %v572
    %vm574 = vweird.f32 %v555
    %vm575 = vweird.f32 %v568
    %vm576 = vmor %vm574, %vm575
    %v577 = vsel %vm576, %v568, %v573
    %v578 = vrsqrt.pop %v556
    %v579 = vmul.f32 %v578, %v556
    %v580 = vmul.f32 %v579, %v578
    %v581 = vmul.f32 0.5, %v580
    %v582 = vsub.f32 1.5, %v581
    %v583 = vmul.f32 %v578, %v582
    %vm584 = vweird.f32 %v556
    %vm585 = vweird.f32 %v578
    %vm586 = vmor %vm584, %vm585
    %v587 = vsel %vm586, %v578, %v583
    %v588 = vrsqrt.pop %v557
    %v589 = vmul.f32 %v588, %v557
    %v590 = vmul.f32 %v589, %v588
    %v591 = vmul.f32 0.5, %v590
    %v592 = vsub.f32 1.5, %v591
    %v593 = vmul.f32 %v588, %v592
    %vm594 = vweird.f32 %v557
    %vm595 = vweird.f32 %v588
    %vm596 = vmor %vm594, %vm595
    %v597 = vsel %vm596, %v588, %v593
    %v602 = vrot.slane %v577, 7
    %v603 = vrot.slane %v587, 6
    %v604 = vrot.slane %v597, 5
    %v605 = vsel %vm402, %v567, %v602
    %v606 = vsel %vm404, %v603, %v604
    %v607 = vsel %vm406, %v605, %v606
    %v609 = vmul.f32 %v441, %v607
    %v611 = vperm.slane %v609, 0
    %v612 = vperm.slane %v609, 1
    %v613 = vperm.slane %v609, 2
    %v614 = vperm.slane %v609, 3
    %v619 = vmul.f32 %v491, %v611
    %v620 = vmul.f32 %v492, %v612
    %v621 = vmul.f32 %v493, %v613
    %v622 = vmul.f32 %v494, %v614
    %v627 = vrot.slane %v620, 7
    %v628 = vrot.slane %v621, 6
    %v629 = vrot.slane %v622, 5
    %v630 = vsel %vm402, %v619, %v627
    %v631 = vsel %vm404, %v628, %v629
    %v632 = vsel %vm406, %v630, %v631
    %v634 = vsub.f32 %v442, %v632
    %v635 = vrot.slane %v612, 6
    %v636 = vrot.slane %v613, 4
    %v637 = vrot.slane %v614, 2
    %v638 = vsel %vm406, %v611, %v635
    %v639 = vsel %vm412, %v636, %v637
    %v640 = vsel %vm414, %v638, %v639
    %vm641 = vcmask 1043458
    %v642 = vsel %vm641, %v611, %v635
    %vm643 = vcmask 1045504
    %v644 = vsel %vm643, %v637, %v636
    %vm645 = vcmask 1045506
    %v646 = vsel %vm645, %v642, %v644
    %v647 = vrot.slane %v646, 2
    %v650 = vmul.f32 %v436, %v640
    %v651 = vmul.f32 %v440, %v647
    %v653 = vperm.slane %v634, 0
    %v654 = vperm.slane %v634, 1
    %v655 = vperm.slane %v634, 2
    %v656 = vperm.slane %v634, 3
    %v657 = vrot.slane %v654, 6
    %v658 = vrot.slane %v655, 4
    %v659 = vrot.slane %v656, 2
    %v660 = vsel %vm406, %v653, %v657
    %v661 = vsel %vm412, %v658, %v659
    %v662 = vsel %vm414, %v660, %v661
    %v663 = vsel %vm641, %v653, %v657
    %v664 = vsel %vm643, %v659, %v658
    %v665 = vsel %vm645, %v663, %v664
    %v666 = vrot.slane %v665, 2
    %v669 = vadd.f32 %v650, %v662
    %v670 = vadd.f32 %v651, %v666
    %v671 = vmax.f32 %v669, 0.0
    %v672 = vmax.f32 %v670, 0.0
    %675 = vst [vmem:[#allocation1] ss:$4 sm:$0xff] %v671
    %s676 = scalar_lea.vmem [#allocation1], 1
    %677 = vst [vmem:[%s676] ss:$4 sm:$0xff] %v672
    %v678 = vld.sshfl [vmem:[#allocation1] sm:$0xff pattern:$0x73625140]
    %v679 = vld.sshfl [vmem:[#allocation1 + $0x8] sm:$0xff pattern:$0x73625140]
    %v680 = vld.sshfl [vmem:[#allocation1 + $0x10] sm:$0xff pattern:$0x73625140]
    %v681 = vld.sshfl [vmem:[#allocation1 + $0x18] sm:$0xff pattern:$0x73625140]
    %v686 = vpack.c.bf16 %v678, %v678
    %v687 = vpack.c.bf16 %v679, %v679
    %v688 = vpack.c.bf16 %v680, %v680
    %v689 = vpack.c.bf16 %v681, %v681
    %v690 = vld [vmem:[%s13] sm:$0xff]
    %v691 = vld [vmem:[%s13 + $0x8] sm:$0xff]
    %v692 = vld [vmem:[%s13 + $0x10] sm:$0xff]
    %v693 = vld [vmem:[%s13 + $0x18] sm:$0xff]
    %v694 = vld [vmem:[%s13 + $0x20] sm:$0xff]
    %v695 = vld [vmem:[%s13 + $0x28] sm:$0xff]
    %v696 = vld [vmem:[%s13 + $0x30] sm:$0xff]
    %v697 = vld [vmem:[%s13 + $0x38] sm:$0xff]
    %v698 = vld [vmem:[%s13 + $0x40] sm:$0xff]
    %v699 = vld [vmem:[%s13 + $0x48] sm:$0xff]
    %v700 = vld [vmem:[%s13 + $0x50] sm:$0xff]
    %v701 = vld [vmem:[%s13 + $0x58] sm:$0xff]
    %v702 = vld [vmem:[%s13 + $0x60] sm:$0xff]
    %v703 = vld [vmem:[%s13 + $0x68] sm:$0xff]
    %v704 = vld [vmem:[%s13 + $0x70] sm:$0xff]
    %v705 = vld [vmem:[%s13 + $0x78] sm:$0xff]
    %v706 = vld [vmem:[%s13 + $0x80] sm:$0xff]
    %v707 = vld [vmem:[%s13 + $0x88] sm:$0xff]
    %v708 = vld [vmem:[%s13 + $0x90] sm:$0xff]
    %v709 = vld [vmem:[%s13 + $0x98] sm:$0xff]
    %v710 = vld [vmem:[%s13 + $0xa0] sm:$0xff]
    %v711 = vld [vmem:[%s13 + $0xa8] sm:$0xff]
    %v712 = vld [vmem:[%s13 + $0xb0] sm:$0xff]
    %v713 = vld [vmem:[%s13 + $0xb8] sm:$0xff]
    %v714 = vld [vmem:[%s13 + $0xc0] sm:$0xff]
    %v715 = vld [vmem:[%s13 + $0xc8] sm:$0xff]
    %v716 = vld [vmem:[%s13 + $0xd0] sm:$0xff]
    %v717 = vld [vmem:[%s13 + $0xd8] sm:$0xff]
    %v718 = vld [vmem:[%s13 + $0xe0] sm:$0xff]
    %v719 = vld [vmem:[%s13 + $0xe8] sm:$0xff]
    %v720 = vld [vmem:[%s13 + $0xf0] sm:$0xff]
    %v721 = vld [vmem:[%s13 + $0xf8] sm:$0xff]
    %v722 = vld [vmem:[%s13 + $0x100] sm:$0xff]
    %v723 = vld [vmem:[%s13 + $0x108] sm:$0xff]
    %v724 = vld [vmem:[%s13 + $0x110] sm:$0xff]
    %v725 = vld [vmem:[%s13 + $0x118] sm:$0xff]
    %v726 = vld [vmem:[%s13 + $0x120] sm:$0xff]
    %v727 = vld [vmem:[%s13 + $0x128] sm:$0xff]
    %v728 = vld [vmem:[%s13 + $0x130] sm:$0xff]
    %v729 = vld [vmem:[%s13 + $0x138] sm:$0xff]
    %v730 = vld [vmem:[%s13 + $0x140] sm:$0xff]
    %v731 = vld [vmem:[%s13 + $0x148] sm:$0xff]
    %v732 = vld [vmem:[%s13 + $0x150] sm:$0xff]
    %v733 = vld [vmem:[%s13 + $0x158] sm:$0xff]
    %v734 = vld [vmem:[%s13 + $0x160] sm:$0xff]
    %v735 = vld [vmem:[%s13 + $0x168] sm:$0xff]
    %v736 = vld [vmem:[%s13 + $0x170] sm:$0xff]
    %v737 = vld [vmem:[%s13 + $0x178] sm:$0xff]
    %v738 = vld [vmem:[%s13 + $0x180] sm:$0xff]
    %v739 = vld [vmem:[%s13 + $0x188] sm:$0xff]
    %v740 = vld [vmem:[%s13 + $0x190] sm:$0xff]
    %v741 = vld [vmem:[%s13 + $0x198] sm:$0xff]
    %v742 = vld [vmem:[%s13 + $0x1a0] sm:$0xff]
    %v743 = vld [vmem:[%s13 + $0x1a8] sm:$0xff]
    %v744 = vld [vmem:[%s13 + $0x1b0] sm:$0xff]
    %v745 = vld [vmem:[%s13 + $0x1b8] sm:$0xff]
    %v746 = vld [vmem:[%s13 + $0x1c0] sm:$0xff]
    %v747 = vld [vmem:[%s13 + $0x1c8] sm:$0xff]
    %v748 = vld [vmem:[%s13 + $0x1d0] sm:$0xff]
    %v749 = vld [vmem:[%s13 + $0x1d8] sm:$0xff]
    %v750 = vld [vmem:[%s13 + $0x1e0] sm:$0xff]
    %v751 = vld [vmem:[%s13 + $0x1e8] sm:$0xff]
    %v752 = vld [vmem:[%s13 + $0x1f0] sm:$0xff]
    %v753 = vld [vmem:[%s13 + $0x1f8] sm:$0xff]
    %v754 = vld [vmem:[%s13 + $0x200] sm:$0xff]
    %v755 = vld [vmem:[%s13 + $0x208] sm:$0xff]
    %v756 = vld [vmem:[%s13 + $0x210] sm:$0xff]
    %v757 = vld [vmem:[%s13 + $0x218] sm:$0xff]
    %v758 = vld [vmem:[%s13 + $0x220] sm:$0xff]
    %v759 = vld [vmem:[%s13 + $0x228] sm:$0xff]
    %v760 = vld [vmem:[%s13 + $0x230] sm:$0xff]
    %v761 = vld [vmem:[%s13 + $0x238] sm:$0xff]
    %v762 = vld [vmem:[%s13 + $0x240] sm:$0xff]
    %v763 = vld [vmem:[%s13 + $0x248] sm:$0xff]
    %v764 = vld [vmem:[%s13 + $0x250] sm:$0xff]
    %v765 = vld [vmem:[%s13 + $0x258] sm:$0xff]
    %v766 = vld [vmem:[%s13 + $0x260] sm:$0xff]
    %v767 = vld [vmem:[%s13 + $0x268] sm:$0xff]
    %v768 = vld [vmem:[%s13 + $0x270] sm:$0xff]
    %v769 = vld [vmem:[%s13 + $0x278] sm:$0xff]
    %v770 = vld [vmem:[%s13 + $0x280] sm:$0xff]
    %v771 = vld [vmem:[%s13 + $0x288] sm:$0xff]
    %v772 = vld [vmem:[%s13 + $0x290] sm:$0xff]
    %v773 = vld [vmem:[%s13 + $0x298] sm:$0xff]
    %v774 = vld [vmem:[%s13 + $0x2a0] sm:$0xff]
    %v775 = vld [vmem:[%s13 + $0x2a8] sm:$0xff]
    %v776 = vld [vmem:[%s13 + $0x2b0] sm:$0xff]
    %v777 = vld [vmem:[%s13 + $0x2b8] sm:$0xff]
    %v778 = vld [vmem:[%s13 + $0x2c0] sm:$0xff]
    %v779 = vld [vmem:[%s13 + $0x2c8] sm:$0xff]
    %v780 = vld [vmem:[%s13 + $0x2d0] sm:$0xff]
    %v781 = vld [vmem:[%s13 + $0x2d8] sm:$0xff]
    %v782 = vld [vmem:[%s13 + $0x2e0] sm:$0xff]
    %v783 = vld [vmem:[%s13 + $0x2e8] sm:$0xff]
    %v784 = vld [vmem:[%s13 + $0x2f0] sm:$0xff]
    %v785 = vld [vmem:[%s13 + $0x2f8] sm:$0xff]
    %v786 = vld [vmem:[%s13 + $0x300] sm:$0xff]
    %v787 = vld [vmem:[%s13 + $0x308] sm:$0xff]
    %v788 = vld [vmem:[%s13 + $0x310] sm:$0xff]
    %v789 = vld [vmem:[%s13 + $0x318] sm:$0xff]
    %v790 = vld [vmem:[%s13 + $0x320] sm:$0xff]
    %v791 = vld [vmem:[%s13 + $0x328] sm:$0xff]
    %v792 = vld [vmem:[%s13 + $0x330] sm:$0xff]
    %v793 = vld [vmem:[%s13 + $0x338] sm:$0xff]
    %v794 = vld [vmem:[%s13 + $0x340] sm:$0xff]
    %v795 = vld [vmem:[%s13 + $0x348] sm:$0xff]
    %v796 = vld [vmem:[%s13 + $0x350] sm:$0xff]
    %v797 = vld [vmem:[%s13 + $0x358] sm:$0xff]
    %v798 = vld [vmem:[%s13 + $0x360] sm:$0xff]
    %v799 = vld [vmem:[%s13 + $0x368] sm:$0xff]
    %v800 = vld [vmem:[%s13 + $0x370] sm:$0xff]
    %v801 = vld [vmem:[%s13 + $0x378] sm:$0xff]
    %v802 = vld [vmem:[%s13 + $0x380] sm:$0xff]
    %v803 = vld [vmem:[%s13 + $0x388] sm:$0xff]
    %v804 = vld [vmem:[%s13 + $0x390] sm:$0xff]
    %v805 = vld [vmem:[%s13 + $0x398] sm:$0xff]
    %v806 = vld [vmem:[%s13 + $0x3a0] sm:$0xff]
    %v807 = vld [vmem:[%s13 + $0x3a8] sm:$0xff]
    %v808 = vld [vmem:[%s13 + $0x3b0] sm:$0xff]
    %v809 = vld [vmem:[%s13 + $0x3b8] sm:$0xff]
    %v810 = vld [vmem:[%s13 + $0x3c0] sm:$0xff]
    %v811 = vld [vmem:[%s13 + $0x3c8] sm:$0xff]
    %v812 = vld [vmem:[%s13 + $0x3d0] sm:$0xff]
    %v813 = vld [vmem:[%s13 + $0x3d8] sm:$0xff]
    %v814 = vld [vmem:[%s13 + $0x3e0] sm:$0xff]
    %v815 = vld [vmem:[%s13 + $0x3e8] sm:$0xff]
    %v816 = vld [vmem:[%s13 + $0x3f0] sm:$0xff]
    %v817 = vld [vmem:[%s13 + $0x3f8] sm:$0xff]
    %v818 = vld [vmem:[%s13 + $0x400] sm:$0xff]
    %v819 = vld [vmem:[%s13 + $0x408] sm:$0xff]
    %v820 = vld [vmem:[%s13 + $0x410] sm:$0xff]
    %v821 = vld [vmem:[%s13 + $0x418] sm:$0xff]
    %v822 = vld [vmem:[%s13 + $0x420] sm:$0xff]
    %v823 = vld [vmem:[%s13 + $0x428] sm:$0xff]
    %v824 = vld [vmem:[%s13 + $0x430] sm:$0xff]
    %v825 = vld [vmem:[%s13 + $0x438] sm:$0xff]
    %v826 = vld [vmem:[%s13 + $0x440] sm:$0xff]
    %v827 = vld [vmem:[%s13 + $0x448] sm:$0xff]
    %v828 = vld [vmem:[%s13 + $0x450] sm:$0xff]
    %v829 = vld [vmem:[%s13 + $0x458] sm:$0xff]
    %v830 = vld [vmem:[%s13 + $0x460] sm:$0xff]
    %v831 = vld [vmem:[%s13 + $0x468] sm:$0xff]
    %v832 = vld [vmem:[%s13 + $0x470] sm:$0xff]
    %v833 = vld [vmem:[%s13 + $0x478] sm:$0xff]
    %v834 = vld [vmem:[%s13 + $0x480] sm:$0xff]
    %v835 = vld [vmem:[%s13 + $0x488] sm:$0xff]
    %v836 = vld [vmem:[%s13 + $0x490] sm:$0xff]
    %v837 = vld [vmem:[%s13 + $0x498] sm:$0xff]
    %v838 = vld [vmem:[%s13 + $0x4a0] sm:$0xff]
    %v839 = vld [vmem:[%s13 + $0x4a8] sm:$0xff]
    %v840 = vld [vmem:[%s13 + $0x4b0] sm:$0xff]
    %v841 = vld [vmem:[%s13 + $0x4b8] sm:$0xff]
    %v842 = vld [vmem:[%s13 + $0x4c0] sm:$0xff]
    %v843 = vld [vmem:[%s13 + $0x4c8] sm:$0xff]
    %v844 = vld [vmem:[%s13 + $0x4d0] sm:$0xff]
    %v845 = vld [vmem:[%s13 + $0x4d8] sm:$0xff]
    %v846 = vld [vmem:[%s13 + $0x4e0] sm:$0xff]
    %v847 = vld [vmem:[%s13 + $0x4e8] sm:$0xff]
    %v848 = vld [vmem:[%s13 + $0x4f0] sm:$0xff]
    %v849 = vld [vmem:[%s13 + $0x4f8] sm:$0xff]
    %v850 = vld [vmem:[%s13 + $0x500] sm:$0xff]
    %v851 = vld [vmem:[%s13 + $0x508] sm:$0xff]
    %v852 = vld [vmem:[%s13 + $0x510] sm:$0xff]
    %v853 = vld [vmem:[%s13 + $0x518] sm:$0xff]
    %v854 = vld [vmem:[%s13 + $0x520] sm:$0xff]
    %v855 = vld [vmem:[%s13 + $0x528] sm:$0xff]
    %v856 = vld [vmem:[%s13 + $0x530] sm:$0xff]
    %v857 = vld [vmem:[%s13 + $0x538] sm:$0xff]
    %v858 = vld [vmem:[%s13 + $0x540] sm:$0xff]
    %v859 = vld [vmem:[%s13 + $0x548] sm:$0xff]
    %v860 = vld [vmem:[%s13 + $0x550] sm:$0xff]
    %v861 = vld [vmem:[%s13 + $0x558] sm:$0xff]
    %v862 = vld [vmem:[%s13 + $0x560] sm:$0xff]
    %v863 = vld [vmem:[%s13 + $0x568] sm:$0xff]
    %v864 = vld [vmem:[%s13 + $0x570] sm:$0xff]
    %v865 = vld [vmem:[%s13 + $0x578] sm:$0xff]
    %v866 = vld [vmem:[%s13 + $0x580] sm:$0xff]
    %v867 = vld [vmem:[%s13 + $0x588] sm:$0xff]
    %v868 = vld [vmem:[%s13 + $0x590] sm:$0xff]
    %v869 = vld [vmem:[%s13 + $0x598] sm:$0xff]
    %v870 = vld [vmem:[%s13 + $0x5a0] sm:$0xff]
    %v871 = vld [vmem:[%s13 + $0x5a8] sm:$0xff]
    %v872 = vld [vmem:[%s13 + $0x5b0] sm:$0xff]
    %v873 = vld [vmem:[%s13 + $0x5b8] sm:$0xff]
    %v874 = vld [vmem:[%s13 + $0x5c0] sm:$0xff]
    %v875 = vld [vmem:[%s13 + $0x5c8] sm:$0xff]
    %v876 = vld [vmem:[%s13 + $0x5d0] sm:$0xff]
    %v877 = vld [vmem:[%s13 + $0x5d8] sm:$0xff]
    %v878 = vld [vmem:[%s13 + $0x5e0] sm:$0xff]
    %v879 = vld [vmem:[%s13 + $0x5e8] sm:$0xff]
    %v880 = vld [vmem:[%s13 + $0x5f0] sm:$0xff]
    %v881 = vld [vmem:[%s13 + $0x5f8] sm:$0xff]
    %v882 = vld [vmem:[%s13 + $0x600] sm:$0xff]
    %v883 = vld [vmem:[%s13 + $0x608] sm:$0xff]
    %v884 = vld [vmem:[%s13 + $0x610] sm:$0xff]
    %v885 = vld [vmem:[%s13 + $0x618] sm:$0xff]
    %v886 = vld [vmem:[%s13 + $0x620] sm:$0xff]
    %v887 = vld [vmem:[%s13 + $0x628] sm:$0xff]
    %v888 = vld [vmem:[%s13 + $0x630] sm:$0xff]
    %v889 = vld [vmem:[%s13 + $0x638] sm:$0xff]
    %v890 = vld [vmem:[%s13 + $0x640] sm:$0xff]
    %v891 = vld [vmem:[%s13 + $0x648] sm:$0xff]
    %v892 = vld [vmem:[%s13 + $0x650] sm:$0xff]
    %v893 = vld [vmem:[%s13 + $0x658] sm:$0xff]
    %v894 = vld [vmem:[%s13 + $0x660] sm:$0xff]
    %v895 = vld [vmem:[%s13 + $0x668] sm:$0xff]
    %v896 = vld [vmem:[%s13 + $0x670] sm:$0xff]
    %v897 = vld [vmem:[%s13 + $0x678] sm:$0xff]
    %v898 = vld [vmem:[%s13 + $0x680] sm:$0xff]
    %v899 = vld [vmem:[%s13 + $0x688] sm:$0xff]
    %v900 = vld [vmem:[%s13 + $0x690] sm:$0xff]
    %v901 = vld [vmem:[%s13 + $0x698] sm:$0xff]
    %v902 = vld [vmem:[%s13 + $0x6a0] sm:$0xff]
    %v903 = vld [vmem:[%s13 + $0x6a8] sm:$0xff]
    %v904 = vld [vmem:[%s13 + $0x6b0] sm:$0xff]
    %v905 = vld [vmem:[%s13 + $0x6b8] sm:$0xff]
    %v906 = vld [vmem:[%s13 + $0x6c0] sm:$0xff]
    %v907 = vld [vmem:[%s13 + $0x6c8] sm:$0xff]
    %v908 = vld [vmem:[%s13 + $0x6d0] sm:$0xff]
    %v909 = vld [vmem:[%s13 + $0x6d8] sm:$0xff]
    %v910 = vld [vmem:[%s13 + $0x6e0] sm:$0xff]
    %v911 = vld [vmem:[%s13 + $0x6e8] sm:$0xff]
    %v912 = vld [vmem:[%s13 + $0x6f0] sm:$0xff]
    %v913 = vld [vmem:[%s13 + $0x6f8] sm:$0xff]
    %v914 = vld [vmem:[%s13 + $0x700] sm:$0xff]
    %v915 = vld [vmem:[%s13 + $0x708] sm:$0xff]
    %v916 = vld [vmem:[%s13 + $0x710] sm:$0xff]
    %v917 = vld [vmem:[%s13 + $0x718] sm:$0xff]
    %v918 = vld [vmem:[%s13 + $0x720] sm:$0xff]
    %v919 = vld [vmem:[%s13 + $0x728] sm:$0xff]
    %v920 = vld [vmem:[%s13 + $0x730] sm:$0xff]
    %v921 = vld [vmem:[%s13 + $0x738] sm:$0xff]
    %v922 = vld [vmem:[%s13 + $0x740] sm:$0xff]
    %v923 = vld [vmem:[%s13 + $0x748] sm:$0xff]
    %v924 = vld [vmem:[%s13 + $0x750] sm:$0xff]
    %v925 = vld [vmem:[%s13 + $0x758] sm:$0xff]
    %v926 = vld [vmem:[%s13 + $0x760] sm:$0xff]
    %v927 = vld [vmem:[%s13 + $0x768] sm:$0xff]
    %v928 = vld [vmem:[%s13 + $0x770] sm:$0xff]
    %v929 = vld [vmem:[%s13 + $0x778] sm:$0xff]
    %v930 = vld [vmem:[%s13 + $0x780] sm:$0xff]
    %v931 = vld [vmem:[%s13 + $0x788] sm:$0xff]
    %v932 = vld [vmem:[%s13 + $0x790] sm:$0xff]
    %v933 = vld [vmem:[%s13 + $0x798] sm:$0xff]
    %v934 = vld [vmem:[%s13 + $0x7a0] sm:$0xff]
    %v935 = vld [vmem:[%s13 + $0x7a8] sm:$0xff]
    %v936 = vld [vmem:[%s13 + $0x7b0] sm:$0xff]
    %v937 = vld [vmem:[%s13 + $0x7b8] sm:$0xff]
    %v938 = vld [vmem:[%s13 + $0x7c0] sm:$0xff]
    %v939 = vld [vmem:[%s13 + $0x7c8] sm:$0xff]
    %v940 = vld [vmem:[%s13 + $0x7d0] sm:$0xff]
    %v941 = vld [vmem:[%s13 + $0x7d8] sm:$0xff]
    %v942 = vld [vmem:[%s13 + $0x7e0] sm:$0xff]
    %v943 = vld [vmem:[%s13 + $0x7e8] sm:$0xff]
    %v944 = vld [vmem:[%s13 + $0x7f0] sm:$0xff]
    %v945 = vld [vmem:[%s13 + $0x7f8] sm:$0xff]
    %v946 = vld [vmem:[%s13 + $0x800] sm:$0xff]
    %v947 = vld [vmem:[%s13 + $0x808] sm:$0xff]
    %v948 = vld [vmem:[%s13 + $0x810] sm:$0xff]
    %v949 = vld [vmem:[%s13 + $0x818] sm:$0xff]
    %v950 = vld [vmem:[%s13 + $0x820] sm:$0xff]
    %v951 = vld [vmem:[%s13 + $0x828] sm:$0xff]
    %v952 = vld [vmem:[%s13 + $0x830] sm:$0xff]
    %v953 = vld [vmem:[%s13 + $0x838] sm:$0xff]
    %v954 = vld [vmem:[%s13 + $0x840] sm:$0xff]
    %v955 = vld [vmem:[%s13 + $0x848] sm:$0xff]
    %v956 = vld [vmem:[%s13 + $0x850] sm:$0xff]
    %v957 = vld [vmem:[%s13 + $0x858] sm:$0xff]
    %v958 = vld [vmem:[%s13 + $0x860] sm:$0xff]
    %v959 = vld [vmem:[%s13 + $0x868] sm:$0xff]
    %v960 = vld [vmem:[%s13 + $0x870] sm:$0xff]
    %v961 = vld [vmem:[%s13 + $0x878] sm:$0xff]
    %v962 = vld [vmem:[%s13 + $0x880] sm:$0xff]
    %v963 = vld [vmem:[%s13 + $0x888] sm:$0xff]
    %v964 = vld [vmem:[%s13 + $0x890] sm:$0xff]
    %v965 = vld [vmem:[%s13 + $0x898] sm:$0xff]
    %v966 = vld [vmem:[%s13 + $0x8a0] sm:$0xff]
    %v967 = vld [vmem:[%s13 + $0x8a8] sm:$0xff]
    %v968 = vld [vmem:[%s13 + $0x8b0] sm:$0xff]
    %v969 = vld [vmem:[%s13 + $0x8b8] sm:$0xff]
    %v970 = vld [vmem:[%s13 + $0x8c0] sm:$0xff]
    %v971 = vld [vmem:[%s13 + $0x8c8] sm:$0xff]
    %v972 = vld [vmem:[%s13 + $0x8d0] sm:$0xff]
    %v973 = vld [vmem:[%s13 + $0x8d8] sm:$0xff]
    %v974 = vld [vmem:[%s13 + $0x8e0] sm:$0xff]
    %v975 = vld [vmem:[%s13 + $0x8e8] sm:$0xff]
    %v976 = vld [vmem:[%s13 + $0x8f0] sm:$0xff]
    %v977 = vld [vmem:[%s13 + $0x8f8] sm:$0xff]
    %v978 = vld [vmem:[%s13 + $0x900] sm:$0xff]
    %v979 = vld [vmem:[%s13 + $0x908] sm:$0xff]
    %v980 = vld [vmem:[%s13 + $0x910] sm:$0xff]
    %v981 = vld [vmem:[%s13 + $0x918] sm:$0xff]
    %v982 = vld [vmem:[%s13 + $0x920] sm:$0xff]
    %v983 = vld [vmem:[%s13 + $0x928] sm:$0xff]
    %v984 = vld [vmem:[%s13 + $0x930] sm:$0xff]
    %v985 = vld [vmem:[%s13 + $0x938] sm:$0xff]
    %v986 = vld [vmem:[%s13 + $0x940] sm:$0xff]
    %v987 = vld [vmem:[%s13 + $0x948] sm:$0xff]
    %v988 = vld [vmem:[%s13 + $0x950] sm:$0xff]
    %v989 = vld [vmem:[%s13 + $0x958] sm:$0xff]
    %v990 = vld [vmem:[%s13 + $0x960] sm:$0xff]
    %v991 = vld [vmem:[%s13 + $0x968] sm:$0xff]
    %v992 = vld [vmem:[%s13 + $0x970] sm:$0xff]
    %v993 = vld [vmem:[%s13 + $0x978] sm:$0xff]
    %v994 = vld [vmem:[%s13 + $0x980] sm:$0xff]
    %v995 = vld [vmem:[%s13 + $0x988] sm:$0xff]
    %v996 = vld [vmem:[%s13 + $0x990] sm:$0xff]
    %v997 = vld [vmem:[%s13 + $0x998] sm:$0xff]
    %v998 = vld [vmem:[%s13 + $0x9a0] sm:$0xff]
    %v999 = vld [vmem:[%s13 + $0x9a8] sm:$0xff]
    %v1000 = vld [vmem:[%s13 + $0x9b0] sm:$0xff]
    %v1001 = vld [vmem:[%s13 + $0x9b8] sm:$0xff]
    %v1002 = vld [vmem:[%s13 + $0x9c0] sm:$0xff]
    %v1003 = vld [vmem:[%s13 + $0x9c8] sm:$0xff]
    %v1004 = vld [vmem:[%s13 + $0x9d0] sm:$0xff]
    %v1005 = vld [vmem:[%s13 + $0x9d8] sm:$0xff]
    %v1006 = vld [vmem:[%s13 + $0x9e0] sm:$0xff]
    %v1007 = vld [vmem:[%s13 + $0x9e8] sm:$0xff]
    %v1008 = vld [vmem:[%s13 + $0x9f0] sm:$0xff]
    %v1009 = vld [vmem:[%s13 + $0x9f8] sm:$0xff]
    %v1010 = vld [vmem:[%s13 + $0xa00] sm:$0xff]
    %v1011 = vld [vmem:[%s13 + $0xa08] sm:$0xff]
    %v1012 = vld [vmem:[%s13 + $0xa10] sm:$0xff]
    %v1013 = vld [vmem:[%s13 + $0xa18] sm:$0xff]
    %v1014 = vld [vmem:[%s13 + $0xa20] sm:$0xff]
    %v1015 = vld [vmem:[%s13 + $0xa28] sm:$0xff]
    %v1016 = vld [vmem:[%s13 + $0xa30] sm:$0xff]
    %v1017 = vld [vmem:[%s13 + $0xa38] sm:$0xff]
    %v1018 = vld [vmem:[%s13 + $0xa40] sm:$0xff]
    %v1019 = vld [vmem:[%s13 + $0xa48] sm:$0xff]
    %v1020 = vld [vmem:[%s13 + $0xa50] sm:$0xff]
    %v1021 = vld [vmem:[%s13 + $0xa58] sm:$0xff]
    %v1022 = vld [vmem:[%s13 + $0xa60] sm:$0xff]
    %v1023 = vld [vmem:[%s13 + $0xa68] sm:$0xff]
    %v1024 = vld [vmem:[%s13 + $0xa70] sm:$0xff]
    %v1025 = vld [vmem:[%s13 + $0xa78] sm:$0xff]
    %v1026 = vld [vmem:[%s13 + $0xa80] sm:$0xff]
    %v1027 = vld [vmem:[%s13 + $0xa88] sm:$0xff]
    %v1028 = vld [vmem:[%s13 + $0xa90] sm:$0xff]
    %v1029 = vld [vmem:[%s13 + $0xa98] sm:$0xff]
    %v1030 = vld [vmem:[%s13 + $0xaa0] sm:$0xff]
    %v1031 = vld [vmem:[%s13 + $0xaa8] sm:$0xff]
    %v1032 = vld [vmem:[%s13 + $0xab0] sm:$0xff]
    %v1033 = vld [vmem:[%s13 + $0xab8] sm:$0xff]
    %v1034 = vld [vmem:[%s13 + $0xac0] sm:$0xff]
    %v1035 = vld [vmem:[%s13 + $0xac8] sm:$0xff]
    %v1036 = vld [vmem:[%s13 + $0xad0] sm:$0xff]
    %v1037 = vld [vmem:[%s13 + $0xad8] sm:$0xff]
    %v1038 = vld [vmem:[%s13 + $0xae0] sm:$0xff]
    %v1039 = vld [vmem:[%s13 + $0xae8] sm:$0xff]
    %v1040 = vld [vmem:[%s13 + $0xaf0] sm:$0xff]
    %v1041 = vld [vmem:[%s13 + $0xaf8] sm:$0xff]
    %v1042 = vld [vmem:[%s13 + $0xb00] sm:$0xff]
    %v1043 = vld [vmem:[%s13 + $0xb08] sm:$0xff]
    %v1044 = vld [vmem:[%s13 + $0xb10] sm:$0xff]
    %v1045 = vld [vmem:[%s13 + $0xb18] sm:$0xff]
    %v1046 = vld [vmem:[%s13 + $0xb20] sm:$0xff]
    %v1047 = vld [vmem:[%s13 + $0xb28] sm:$0xff]
    %v1048 = vld [vmem:[%s13 + $0xb30] sm:$0xff]
    %v1049 = vld [vmem:[%s13 + $0xb38] sm:$0xff]
    %v1050 = vld [vmem:[%s13 + $0xb40] sm:$0xff]
    %v1051 = vld [vmem:[%s13 + $0xb48] sm:$0xff]
    %v1052 = vld [vmem:[%s13 + $0xb50] sm:$0xff]
    %v1053 = vld [vmem:[%s13 + $0xb58] sm:$0xff]
    %v1054 = vld [vmem:[%s13 + $0xb60] sm:$0xff]
    %v1055 = vld [vmem:[%s13 + $0xb68] sm:$0xff]
    %v1056 = vld [vmem:[%s13 + $0xb70] sm:$0xff]
    %v1057 = vld [vmem:[%s13 + $0xb78] sm:$0xff]
    %v1058 = vld [vmem:[%s13 + $0xb80] sm:$0xff]
    %v1059 = vld [vmem:[%s13 + $0xb88] sm:$0xff]
    %v1060 = vld [vmem:[%s13 + $0xb90] sm:$0xff]
    %v1061 = vld [vmem:[%s13 + $0xb98] sm:$0xff]
    %v1062 = vld [vmem:[%s13 + $0xba0] sm:$0xff]
    %v1063 = vld [vmem:[%s13 + $0xba8] sm:$0xff]
    %v1064 = vld [vmem:[%s13 + $0xbb0] sm:$0xff]
    %v1065 = vld [vmem:[%s13 + $0xbb8] sm:$0xff]
    %v1066 = vld [vmem:[%s13 + $0xbc0] sm:$0xff]
    %v1067 = vld [vmem:[%s13 + $0xbc8] sm:$0xff]
    %v1068 = vld [vmem:[%s13 + $0xbd0] sm:$0xff]
    %v1069 = vld [vmem:[%s13 + $0xbd8] sm:$0xff]
    %v1070 = vld [vmem:[%s13 + $0xbe0] sm:$0xff]
    %v1071 = vld [vmem:[%s13 + $0xbe8] sm:$0xff]
    %v1072 = vld [vmem:[%s13 + $0xbf0] sm:$0xff]
    %v1073 = vld [vmem:[%s13 + $0xbf8] sm:$0xff]
    %v1458 = vunpack.c.l.b16 %v690
    %v1459 = vunpack.c.h.b16 %v690
    %v1460 = vunpack.c.l.b16 %v691
    %v1461 = vunpack.c.h.b16 %v691
    %v1462 = vunpack.c.l.b16 %v692
    %v1463 = vunpack.c.h.b16 %v692
    %v1464 = vunpack.c.l.b16 %v693
    %v1465 = vunpack.c.h.b16 %v693
    %v1466 = vunpack.c.l.b16 %v694
    %v1467 = vunpack.c.h.b16 %v694
    %v1468 = vunpack.c.l.b16 %v695
    %v1469 = vunpack.c.h.b16 %v695
    %v1470 = vunpack.c.l.b16 %v696
    %v1471 = vunpack.c.h.b16 %v696
    %v1472 = vunpack.c.l.b16 %v697
    %v1473 = vunpack.c.h.b16 %v697
    %v1474 = vunpack.c.l.b16 %v698
    %v1475 = vunpack.c.h.b16 %v698
    %v1476 = vunpack.c.l.b16 %v699
    %v1477 = vunpack.c.h.b16 %v699
    %v1478 = vunpack.c.l.b16 %v700
    %v1479 = vunpack.c.h.b16 %v700
    %v1480 = vunpack.c.l.b16 %v701
    %v1481 = vunpack.c.h.b16 %v701
    %v1482 = vunpack.c.l.b16 %v702
    %v1483 = vunpack.c.h.b16 %v702
    %v1484 = vunpack.c.l.b16 %v703
    %v1485 = vunpack.c.h.b16 %v703
    %v1486 = vunpack.c.l.b16 %v704
    %v1487 = vunpack.c.h.b16 %v704
    %v1488 = vunpack.c.l.b16 %v705
    %v1489 = vunpack.c.h.b16 %v705
    %v1490 = vunpack.c.l.b16 %v706
    %v1491 = vunpack.c.h.b16 %v706
    %v1492 = vunpack.c.l.b16 %v707
    %v1493 = vunpack.c.h.b16 %v707
    %v1494 = vunpack.c.l.b16 %v708
    %v1495 = vunpack.c.h.b16 %v708
    %v1496 = vunpack.c.l.b16 %v709
    %v1497 = vunpack.c.h.b16 %v709
    %v1498 = vunpack.c.l.b16 %v710
    %v1499 = vunpack.c.h.b16 %v710
    %v1500 = vunpack.c.l.b16 %v711
    %v1501 = vunpack.c.h.b16 %v711
    %v1502 = vunpack.c.l.b16 %v712
    %v1503 = vunpack.c.h.b16 %v712
    %v1504 = vunpack.c.l.b16 %v713
    %v1505 = vunpack.c.h.b16 %v713
    %v1506 = vunpack.c.l.b16 %v714
    %v1507 = vunpack.c.h.b16 %v714
    %v1508 = vunpack.c.l.b16 %v715
    %v1509 = vunpack.c.h.b16 %v715
    %v1510 = vunpack.c.l.b16 %v716
    %v1511 = vunpack.c.h.b16 %v716
    %v1512 = vunpack.c.l.b16 %v717
    %v1513 = vunpack.c.h.b16 %v717
    %v1514 = vunpack.c.l.b16 %v718
    %v1515 = vunpack.c.h.b16 %v718
    %v1516 = vunpack.c.l.b16 %v719
    %v1517 = vunpack.c.h.b16 %v719
    %v1518 = vunpack.c.l.b16 %v720
    %v1519 = vunpack.c.h.b16 %v720
    %v1520 = vunpack.c.l.b16 %v721
    %v1521 = vunpack.c.h.b16 %v721
    %v1522 = vunpack.c.l.b16 %v722
    %v1523 = vunpack.c.h.b16 %v722
    %v1524 = vunpack.c.l.b16 %v723
    %v1525 = vunpack.c.h.b16 %v723
    %v1526 = vunpack.c.l.b16 %v724
    %v1527 = vunpack.c.h.b16 %v724
    %v1528 = vunpack.c.l.b16 %v725
    %v1529 = vunpack.c.h.b16 %v725
    %v1530 = vunpack.c.l.b16 %v726
    %v1531 = vunpack.c.h.b16 %v726
    %v1532 = vunpack.c.l.b16 %v727
    %v1533 = vunpack.c.h.b16 %v727
    %v1534 = vunpack.c.l.b16 %v728
    %v1535 = vunpack.c.h.b16 %v728
    %v1536 = vunpack.c.l.b16 %v729
    %v1537 = vunpack.c.h.b16 %v729
    %v1538 = vunpack.c.l.b16 %v730
    %v1539 = vunpack.c.h.b16 %v730
    %v1540 = vunpack.c.l.b16 %v731
    %v1541 = vunpack.c.h.b16 %v731
    %v1542 = vunpack.c.l.b16 %v732
    %v1543 = vunpack.c.h.b16 %v732
    %v1544 = vunpack.c.l.b16 %v733
    %v1545 = vunpack.c.h.b16 %v733
    %v1546 = vunpack.c.l.b16 %v734
    %v1547 = vunpack.c.h.b16 %v734
    %v1548 = vunpack.c.l.b16 %v735
    %v1549 = vunpack.c.h.b16 %v735
    %v1550 = vunpack.c.l.b16 %v736
    %v1551 = vunpack.c.h.b16 %v736
    %v1552 = vunpack.c.l.b16 %v737
    %v1553 = vunpack.c.h.b16 %v737
    %v1554 = vunpack.c.l.b16 %v738
    %v1555 = vunpack.c.h.b16 %v738
    %v1556 = vunpack.c.l.b16 %v739
    %v1557 = vunpack.c.h.b16 %v739
    %v1558 = vunpack.c.l.b16 %v740
    %v1559 = vunpack.c.h.b16 %v740
    %v1560 = vunpack.c.l.b16 %v741
    %v1561 = vunpack.c.h.b16 %v741
    %v1562 = vunpack.c.l.b16 %v742
    %v1563 = vunpack.c.h.b16 %v742
    %v1564 = vunpack.c.l.b16 %v743
    %v1565 = vunpack.c.h.b16 %v743
    %v1566 = vunpack.c.l.b16 %v744
    %v1567 = vunpack.c.h.b16 %v744
    %v1568 = vunpack.c.l.b16 %v745
    %v1569 = vunpack.c.h.b16 %v745
    %v1570 = vunpack.c.l.b16 %v746
    %v1571 = vunpack.c.h.b16 %v746
    %v1572 = vunpack.c.l.b16 %v747
    %v1573 = vunpack.c.h.b16 %v747
    %v1574 = vunpack.c.l.b16 %v748
    %v1575 = vunpack.c.h.b16 %v748
    %v1576 = vunpack.c.l.b16 %v749
    %v1577 = vunpack.c.h.b16 %v749
    %v1578 = vunpack.c.l.b16 %v750
    %v1579 = vunpack.c.h.b16 %v750
    %v1580 = vunpack.c.l.b16 %v751
    %v1581 = vunpack.c.h.b16 %v751
    %v1582 = vunpack.c.l.b16 %v752
    %v1583 = vunpack.c.h.b16 %v752
    %v1584 = vunpack.c.l.b16 %v753
    %v1585 = vunpack.c.h.b16 %v753
    %v1586 = vunpack.c.l.b16 %v754
    %v1587 = vunpack.c.h.b16 %v754
    %v1588 = vunpack.c.l.b16 %v755
    %v1589 = vunpack.c.h.b16 %v755
    %v1590 = vunpack.c.l.b16 %v756
    %v1591 = vunpack.c.h.b16 %v756
    %v1592 = vunpack.c.l.b16 %v757
    %v1593 = vunpack.c.h.b16 %v757
    %v1594 = vunpack.c.l.b16 %v758
    %v1595 = vunpack.c.h.b16 %v758
    %v1596 = vunpack.c.l.b16 %v759
    %v1597 = vunpack.c.h.b16 %v759
    %v1598 = vunpack.c.l.b16 %v760
    %v1599 = vunpack.c.h.b16 %v760
    %v1600 = vunpack.c.l.b16 %v761
    %v1601 = vunpack.c.h.b16 %v761
    %v1602 = vunpack.c.l.b16 %v762
    %v1603 = vunpack.c.h.b16 %v762
    %v1604 = vunpack.c.l.b16 %v763
    %v1605 = vunpack.c.h.b16 %v763
    %v1606 = vunpack.c.l.b16 %v764
    %v1607 = vunpack.c.h.b16 %v764
    %v1608 = vunpack.c.l.b16 %v765
    %v1609 = vunpack.c.h.b16 %v765
    %v1610 = vunpack.c.l.b16 %v766
    %v1611 = vunpack.c.h.b16 %v766
    %v1612 = vunpack.c.l.b16 %v767
    %v1613 = vunpack.c.h.b16 %v767
    %v1614 = vunpack.c.l.b16 %v768
    %v1615 = vunpack.c.h.b16 %v768
    %v1616 = vunpack.c.l.b16 %v769
    %v1617 = vunpack.c.h.b16 %v769
    %v1618 = vunpack.c.l.b16 %v770
    %v1619 = vunpack.c.h.b16 %v770
    %v1620 = vunpack.c.l.b16 %v771
    %v1621 = vunpack.c.h.b16 %v771
    %v1622 = vunpack.c.l.b16 %v772
    %v1623 = vunpack.c.h.b16 %v772
    %v1624 = vunpack.c.l.b16 %v773
    %v1625 = vunpack.c.h.b16 %v773
    %v1626 = vunpack.c.l.b16 %v774
    %v1627 = vunpack.c.h.b16 %v774
    %v1628 = vunpack.c.l.b16 %v775
    %v1629 = vunpack.c.h.b16 %v775
    %v1630 = vunpack.c.l.b16 %v776
    %v1631 = vunpack.c.h.b16 %v776
    %v1632 = vunpack.c.l.b16 %v777
    %v1633 = vunpack.c.h.b16 %v777
    %v1634 = vunpack.c.l.b16 %v778
    %v1635 = vunpack.c.h.b16 %v778
    %v1636 = vunpack.c.l.b16 %v779
    %v1637 = vunpack.c.h.b16 %v779
    %v1638 = vunpack.c.l.b16 %v780
    %v1639 = vunpack.c.h.b16 %v780
    %v1640 = vunpack.c.l.b16 %v781
    %v1641 = vunpack.c.h.b16 %v781
    %v1642 = vunpack.c.l.b16 %v782
    %v1643 = vunpack.c.h.b16 %v782
    %v1644 = vunpack.c.l.b16 %v783
    %v1645 = vunpack.c.h.b16 %v783
    %v1646 = vunpack.c.l.b16 %v784
    %v1647 = vunpack.c.h.b16 %v784
    %v1648 = vunpack.c.l.b16 %v785
    %v1649 = vunpack.c.h.b16 %v785
    %v1650 = vunpack.c.l.b16 %v786
    %v1651 = vunpack.c.h.b16 %v786
    %v1652 = vunpack.c.l.b16 %v787
    %v1653 = vunpack.c.h.b16 %v787
    %v1654 = vunpack.c.l.b16 %v788
    %v1655 = vunpack.c.h.b16 %v788
    %v1656 = vunpack.c.l.b16 %v789
    %v1657 = vunpack.c.h.b16 %v789
    %v1658 = vunpack.c.l.b16 %v790
    %v1659 = vunpack.c.h.b16 %v790
    %v1660 = vunpack.c.l.b16 %v791
    %v1661 = vunpack.c.h.b16 %v791
    %v1662 = vunpack.c.l.b16 %v792
    %v1663 = vunpack.c.h.b16 %v792
    %v1664 = vunpack.c.l.b16 %v793
    %v1665 = vunpack.c.h.b16 %v793
    %v1666 = vunpack.c.l.b16 %v794
    %v1667 = vunpack.c.h.b16 %v794
    %v1668 = vunpack.c.l.b16 %v795
    %v1669 = vunpack.c.h.b16 %v795
    %v1670 = vunpack.c.l.b16 %v796
    %v1671 = vunpack.c.h.b16 %v796
    %v1672 = vunpack.c.l.b16 %v797
    %v1673 = vunpack.c.h.b16 %v797
    %v1674 = vunpack.c.l.b16 %v798
    %v1675 = vunpack.c.h.b16 %v798
    %v1676 = vunpack.c.l.b16 %v799
    %v1677 = vunpack.c.h.b16 %v799
    %v1678 = vunpack.c.l.b16 %v800
    %v1679 = vunpack.c.h.b16 %v800
    %v1680 = vunpack.c.l.b16 %v801
    %v1681 = vunpack.c.h.b16 %v801
    %v1682 = vunpack.c.l.b16 %v802
    %v1683 = vunpack.c.h.b16 %v802
    %v1684 = vunpack.c.l.b16 %v803
    %v1685 = vunpack.c.h.b16 %v803
    %v1686 = vunpack.c.l.b16 %v804
    %v1687 = vunpack.c.h.b16 %v804
    %v1688 = vunpack.c.l.b16 %v805
    %v1689 = vunpack.c.h.b16 %v805
    %v1690 = vunpack.c.l.b16 %v806
    %v1691 = vunpack.c.h.b16 %v806
    %v1692 = vunpack.c.l.b16 %v807
    %v1693 = vunpack.c.h.b16 %v807
    %v1694 = vunpack.c.l.b16 %v808
    %v1695 = vunpack.c.h.b16 %v808
    %v1696 = vunpack.c.l.b16 %v809
    %v1697 = vunpack.c.h.b16 %v809
    %v1698 = vunpack.c.l.b16 %v810
    %v1699 = vunpack.c.h.b16 %v810
    %v1700 = vunpack.c.l.b16 %v811
    %v1701 = vunpack.c.h.b16 %v811
    %v1702 = vunpack.c.l.b16 %v812
    %v1703 = vunpack.c.h.b16 %v812
    %v1704 = vunpack.c.l.b16 %v813
    %v1705 = vunpack.c.h.b16 %v813
    %v1706 = vunpack.c.l.b16 %v814
    %v1707 = vunpack.c.h.b16 %v814
    %v1708 = vunpack.c.l.b16 %v815
    %v1709 = vunpack.c.h.b16 %v815
    %v1710 = vunpack.c.l.b16 %v816
    %v1711 = vunpack.c.h.b16 %v816
    %v1712 = vunpack.c.l.b16 %v817
    %v1713 = vunpack.c.h.b16 %v817
    %v1714 = vunpack.c.l.b16 %v818
    %v1715 = vunpack.c.h.b16 %v818
    %v1716 = vunpack.c.l.b16 %v819
    %v1717 = vunpack.c.h.b16 %v819
    %v1718 = vunpack.c.l.b16 %v820
    %v1719 = vunpack.c.h.b16 %v820
    %v1720 = vunpack.c.l.b16 %v821
    %v1721 = vunpack.c.h.b16 %v821
    %v1722 = vunpack.c.l.b16 %v822
    %v1723 = vunpack.c.h.b16 %v822
    %v1724 = vunpack.c.l.b16 %v823
    %v1725 = vunpack.c.h.b16 %v823
    %v1726 = vunpack.c.l.b16 %v824
    %v1727 = vunpack.c.h.b16 %v824
    %v1728 = vunpack.c.l.b16 %v825
    %v1729 = vunpack.c.h.b16 %v825
    %v1730 = vunpack.c.l.b16 %v826
    %v1731 = vunpack.c.h.b16 %v826
    %v1732 = vunpack.c.l.b16 %v827
    %v1733 = vunpack.c.h.b16 %v827
    %v1734 = vunpack.c.l.b16 %v828
    %v1735 = vunpack.c.h.b16 %v828
    %v1736 = vunpack.c.l.b16 %v829
    %v1737 = vunpack.c.h.b16 %v829
    %v1738 = vunpack.c.l.b16 %v830
    %v1739 = vunpack.c.h.b16 %v830
    %v1740 = vunpack.c.l.b16 %v831
    %v1741 = vunpack.c.h.b16 %v831
    %v1742 = vunpack.c.l.b16 %v832
    %v1743 = vunpack.c.h.b16 %v832
    %v1744 = vunpack.c.l.b16 %v833
    %v1745 = vunpack.c.h.b16 %v833
    %v1746 = vunpack.c.l.b16 %v834
    %v1747 = vunpack.c.h.b16 %v834
    %v1748 = vunpack.c.l.b16 %v835
    %v1749 = vunpack.c.h.b16 %v835
    %v1750 = vunpack.c.l.b16 %v836
    %v1751 = vunpack.c.h.b16 %v836
    %v1752 = vunpack.c.l.b16 %v837
    %v1753 = vunpack.c.h.b16 %v837
    %v1754 = vunpack.c.l.b16 %v838
    %v1755 = vunpack.c.h.b16 %v838
    %v1756 = vunpack.c.l.b16 %v839
    %v1757 = vunpack.c.h.b16 %v839
    %v1758 = vunpack.c.l.b16 %v840
    %v1759 = vunpack.c.h.b16 %v840
    %v1760 = vunpack.c.l.b16 %v841
    %v1761 = vunpack.c.h.b16 %v841
    %v1762 = vunpack.c.l.b16 %v842
    %v1763 = vunpack.c.h.b16 %v842
    %v1764 = vunpack.c.l.b16 %v843
    %v1765 = vunpack.c.h.b16 %v843
    %v1766 = vunpack.c.l.b16 %v844
    %v1767 = vunpack.c.h.b16 %v844
    %v1768 = vunpack.c.l.b16 %v845
    %v1769 = vunpack.c.h.b16 %v845
    %v1770 = vunpack.c.l.b16 %v846
    %v1771 = vunpack.c.h.b16 %v846
    %v1772 = vunpack.c.l.b16 %v847
    %v1773 = vunpack.c.h.b16 %v847
    %v1774 = vunpack.c.l.b16 %v848
    %v1775 = vunpack.c.h.b16 %v848
    %v1776 = vunpack.c.l.b16 %v849
    %v1777 = vunpack.c.h.b16 %v849
    %v1778 = vunpack.c.l.b16 %v850
    %v1779 = vunpack.c.h.b16 %v850
    %v1780 = vunpack.c.l.b16 %v851
    %v1781 = vunpack.c.h.b16 %v851
    %v1782 = vunpack.c.l.b16 %v852
    %v1783 = vunpack.c.h.b16 %v852
    %v1784 = vunpack.c.l.b16 %v853
    %v1785 = vunpack.c.h.b16 %v853
    %v1786 = vunpack.c.l.b16 %v854
    %v1787 = vunpack.c.h.b16 %v854
    %v1788 = vunpack.c.l.b16 %v855
    %v1789 = vunpack.c.h.b16 %v855
    %v1790 = vunpack.c.l.b16 %v856
    %v1791 = vunpack.c.h.b16 %v856
    %v1792 = vunpack.c.l.b16 %v857
    %v1793 = vunpack.c.h.b16 %v857
    %v1794 = vunpack.c.l.b16 %v858
    %v1795 = vunpack.c.h.b16 %v858
    %v1796 = vunpack.c.l.b16 %v859
    %v1797 = vunpack.c.h.b16 %v859
    %v1798 = vunpack.c.l.b16 %v860
    %v1799 = vunpack.c.h.b16 %v860
    %v1800 = vunpack.c.l.b16 %v861
    %v1801 = vunpack.c.h.b16 %v861
    %v1802 = vunpack.c.l.b16 %v862
    %v1803 = vunpack.c.h.b16 %v862
    %v1804 = vunpack.c.l.b16 %v863
    %v1805 = vunpack.c.h.b16 %v863
    %v1806 = vunpack.c.l.b16 %v864
    %v1807 = vunpack.c.h.b16 %v864
    %v1808 = vunpack.c.l.b16 %v865
    %v1809 = vunpack.c.h.b16 %v865
    %v1810 = vunpack.c.l.b16 %v866
    %v1811 = vunpack.c.h.b16 %v866
    %v1812 = vunpack.c.l.b16 %v867
    %v1813 = vunpack.c.h.b16 %v867
    %v1814 = vunpack.c.l.b16 %v868
    %v1815 = vunpack.c.h.b16 %v868
    %v1816 = vunpack.c.l.b16 %v869
    %v1817 = vunpack.c.h.b16 %v869
    %v1818 = vunpack.c.l.b16 %v870
    %v1819 = vunpack.c.h.b16 %v870
    %v1820 = vunpack.c.l.b16 %v871
    %v1821 = vunpack.c.h.b16 %v871
    %v1822 = vunpack.c.l.b16 %v872
    %v1823 = vunpack.c.h.b16 %v872
    %v1824 = vunpack.c.l.b16 %v873
    %v1825 = vunpack.c.h.b16 %v873
    %v1826 = vunpack.c.l.b16 %v874
    %v1827 = vunpack.c.h.b16 %v874
    %v1828 = vunpack.c.l.b16 %v875
    %v1829 = vunpack.c.h.b16 %v875
    %v1830 = vunpack.c.l.b16 %v876
    %v1831 = vunpack.c.h.b16 %v876
    %v1832 = vunpack.c.l.b16 %v877
    %v1833 = vunpack.c.h.b16 %v877
    %v1834 = vunpack.c.l.b16 %v878
    %v1835 = vunpack.c.h.b16 %v878
    %v1836 = vunpack.c.l.b16 %v879
    %v1837 = vunpack.c.h.b16 %v879
    %v1838 = vunpack.c.l.b16 %v880
    %v1839 = vunpack.c.h.b16 %v880
    %v1840 = vunpack.c.l.b16 %v881
    %v1841 = vunpack.c.h.b16 %v881
    %v1842 = vunpack.c.l.b16 %v882
    %v1843 = vunpack.c.h.b16 %v882
    %v1844 = vunpack.c.l.b16 %v883
    %v1845 = vunpack.c.h.b16 %v883
    %v1846 = vunpack.c.l.b16 %v884
    %v1847 = vunpack.c.h.b16 %v884
    %v1848 = vunpack.c.l.b16 %v885
    %v1849 = vunpack.c.h.b16 %v885
    %v1850 = vunpack.c.l.b16 %v886
    %v1851 = vunpack.c.h.b16 %v886
    %v1852 = vunpack.c.l.b16 %v887
    %v1853 = vunpack.c.h.b16 %v887
    %v1854 = vunpack.c.l.b16 %v888
    %v1855 = vunpack.c.h.b16 %v888
    %v1856 = vunpack.c.l.b16 %v889
    %v1857 = vunpack.c.h.b16 %v889
    %v1858 = vunpack.c.l.b16 %v890
    %v1859 = vunpack.c.h.b16 %v890
    %v1860 = vunpack.c.l.b16 %v891
    %v1861 = vunpack.c.h.b16 %v891
    %v1862 = vunpack.c.l.b16 %v892
    %v1863 = vunpack.c.h.b16 %v892
    %v1864 = vunpack.c.l.b16 %v893
    %v1865 = vunpack.c.h.b16 %v893
    %v1866 = vunpack.c.l.b16 %v894
    %v1867 = vunpack.c.h.b16 %v894
    %v1868 = vunpack.c.l.b16 %v895
    %v1869 = vunpack.c.h.b16 %v895
    %v1870 = vunpack.c.l.b16 %v896
    %v1871 = vunpack.c.h.b16 %v896
    %v1872 = vunpack.c.l.b16 %v897
    %v1873 = vunpack.c.h.b16 %v897
    %v1874 = vunpack.c.l.b16 %v898
    %v1875 = vunpack.c.h.b16 %v898
    %v1876 = vunpack.c.l.b16 %v899
    %v1877 = vunpack.c.h.b16 %v899
    %v1878 = vunpack.c.l.b16 %v900
    %v1879 = vunpack.c.h.b16 %v900
    %v1880 = vunpack.c.l.b16 %v901
    %v1881 = vunpack.c.h.b16 %v901
    %v1882 = vunpack.c.l.b16 %v902
    %v1883 = vunpack.c.h.b16 %v902
    %v1884 = vunpack.c.l.b16 %v903
    %v1885 = vunpack.c.h.b16 %v903
    %v1886 = vunpack.c.l.b16 %v904
    %v1887 = vunpack.c.h.b16 %v904
    %v1888 = vunpack.c.l.b16 %v905
    %v1889 = vunpack.c.h.b16 %v905
    %v1890 = vunpack.c.l.b16 %v906
    %v1891 = vunpack.c.h.b16 %v906
    %v1892 = vunpack.c.l.b16 %v907
    %v1893 = vunpack.c.h.b16 %v907
    %v1894 = vunpack.c.l.b16 %v908
    %v1895 = vunpack.c.h.b16 %v908
    %v1896 = vunpack.c.l.b16 %v909
    %v1897 = vunpack.c.h.b16 %v909
    %v1898 = vunpack.c.l.b16 %v910
    %v1899 = vunpack.c.h.b16 %v910
    %v1900 = vunpack.c.l.b16 %v911
    %v1901 = vunpack.c.h.b16 %v911
    %v1902 = vunpack.c.l.b16 %v912
    %v1903 = vunpack.c.h.b16 %v912
    %v1904 = vunpack.c.l.b16 %v913
    %v1905 = vunpack.c.h.b16 %v913
    %v1906 = vunpack.c.l.b16 %v914
    %v1907 = vunpack.c.h.b16 %v914
    %v1908 = vunpack.c.l.b16 %v915
    %v1909 = vunpack.c.h.b16 %v915
    %v1910 = vunpack.c.l.b16 %v916
    %v1911 = vunpack.c.h.b16 %v916
    %v1912 = vunpack.c.l.b16 %v917
    %v1913 = vunpack.c.h.b16 %v917
    %v1914 = vunpack.c.l.b16 %v918
    %v1915 = vunpack.c.h.b16 %v918
    %v1916 = vunpack.c.l.b16 %v919
    %v1917 = vunpack.c.h.b16 %v919
    %v1918 = vunpack.c.l.b16 %v920
    %v1919 = vunpack.c.h.b16 %v920
    %v1920 = vunpack.c.l.b16 %v921
    %v1921 = vunpack.c.h.b16 %v921
    %v1922 = vunpack.c.l.b16 %v922
    %v1923 = vunpack.c.h.b16 %v922
    %v1924 = vunpack.c.l.b16 %v923
    %v1925 = vunpack.c.h.b16 %v923
    %v1926 = vunpack.c.l.b16 %v924
    %v1927 = vunpack.c.h.b16 %v924
    %v1928 = vunpack.c.l.b16 %v925
    %v1929 = vunpack.c.h.b16 %v925
    %v1930 = vunpack.c.l.b16 %v926
    %v1931 = vunpack.c.h.b16 %v926
    %v1932 = vunpack.c.l.b16 %v927
    %v1933 = vunpack.c.h.b16 %v927
    %v1934 = vunpack.c.l.b16 %v928
    %v1935 = vunpack.c.h.b16 %v928
    %v1936 = vunpack.c.l.b16 %v929
    %v1937 = vunpack.c.h.b16 %v929
    %v1938 = vunpack.c.l.b16 %v930
    %v1939 = vunpack.c.h.b16 %v930
    %v1940 = vunpack.c.l.b16 %v931
    %v1941 = vunpack.c.h.b16 %v931
    %v1942 = vunpack.c.l.b16 %v932
    %v1943 = vunpack.c.h.b16 %v932
    %v1944 = vunpack.c.l.b16 %v933
    %v1945 = vunpack.c.h.b16 %v933
    %v1946 = vunpack.c.l.b16 %v934
    %v1947 = vunpack.c.h.b16 %v934
    %v1948 = vunpack.c.l.b16 %v935
    %v1949 = vunpack.c.h.b16 %v935
    %v1950 = vunpack.c.l.b16 %v936
    %v1951 = vunpack.c.h.b16 %v936
    %v1952 = vunpack.c.l.b16 %v937
    %v1953 = vunpack.c.h.b16 %v937
    %v1954 = vunpack.c.l.b16 %v938
    %v1955 = vunpack.c.h.b16 %v938
    %v1956 = vunpack.c.l.b16 %v939
    %v1957 = vunpack.c.h.b16 %v939
    %v1958 = vunpack.c.l.b16 %v940
    %v1959 = vunpack.c.h.b16 %v940
    %v1960 = vunpack.c.l.b16 %v941
    %v1961 = vunpack.c.h.b16 %v941
    %v1962 = vunpack.c.l.b16 %v942
    %v1963 = vunpack.c.h.b16 %v942
    %v1964 = vunpack.c.l.b16 %v943
    %v1965 = vunpack.c.h.b16 %v943
    %v1966 = vunpack.c.l.b16 %v944
    %v1967 = vunpack.c.h.b16 %v944
    %v1968 = vunpack.c.l.b16 %v945
    %v1969 = vunpack.c.h.b16 %v945
    %v1970 = vunpack.c.l.b16 %v946
    %v1971 = vunpack.c.h.b16 %v946
    %v1972 = vunpack.c.l.b16 %v947
    %v1973 = vunpack.c.h.b16 %v947
    %v1974 = vunpack.c.l.b16 %v948
    %v1975 = vunpack.c.h.b16 %v948
    %v1976 = vunpack.c.l.b16 %v949
    %v1977 = vunpack.c.h.b16 %v949
    %v1978 = vunpack.c.l.b16 %v950
    %v1979 = vunpack.c.h.b16 %v950
    %v1980 = vunpack.c.l.b16 %v951
    %v1981 = vunpack.c.h.b16 %v951
    %v1982 = vunpack.c.l.b16 %v952
    %v1983 = vunpack.c.h.b16 %v952
    %v1984 = vunpack.c.l.b16 %v953
    %v1985 = vunpack.c.h.b16 %v953
    %v1986 = vunpack.c.l.b16 %v954
    %v1987 = vunpack.c.h.b16 %v954
    %v1988 = vunpack.c.l.b16 %v955
    %v1989 = vunpack.c.h.b16 %v955
    %v1990 = vunpack.c.l.b16 %v956
    %v1991 = vunpack.c.h.b16 %v956
    %v1992 = vunpack.c.l.b16 %v957
    %v1993 = vunpack.c.h.b16 %v957
    %v1994 = vunpack.c.l.b16 %v958
    %v1995 = vunpack.c.h.b16 %v958
    %v1996 = vunpack.c.l.b16 %v959
    %v1997 = vunpack.c.h.b16 %v959
    %v1998 = vunpack.c.l.b16 %v960
    %v1999 = vunpack.c.h.b16 %v960
    %v2000 = vunpack.c.l.b16 %v961
    %v2001 = vunpack.c.h.b16 %v961
    %v2002 = vunpack.c.l.b16 %v962
    %v2003 = vunpack.c.h.b16 %v962
    %v2004 = vunpack.c.l.b16 %v963
    %v2005 = vunpack.c.h.b16 %v963
    %v2006 = vunpack.c.l.b16 %v964
    %v2007 = vunpack.c.h.b16 %v964
    %v2008 = vunpack.c.l.b16 %v965
    %v2009 = vunpack.c.h.b16 %v965
    %v2010 = vunpack.c.l.b16 %v966
    %v2011 = vunpack.c.h.b16 %v966
    %v2012 = vunpack.c.l.b16 %v967
    %v2013 = vunpack.c.h.b16 %v967
    %v2014 = vunpack.c.l.b16 %v968
    %v2015 = vunpack.c.h.b16 %v968
    %v2016 = vunpack.c.l.b16 %v969
    %v2017 = vunpack.c.h.b16 %v969
    %v2018 = vunpack.c.l.b16 %v970
    %v2019 = vunpack.c.h.b16 %v970
    %v2020 = vunpack.c.l.b16 %v971
    %v2021 = vunpack.c.h.b16 %v971
    %v2022 = vunpack.c.l.b16 %v972
    %v2023 = vunpack.c.h.b16 %v972
    %v2024 = vunpack.c.l.b16 %v973
    %v2025 = vunpack.c.h.b16 %v973
    %v2026 = vunpack.c.l.b16 %v974
    %v2027 = vunpack.c.h.b16 %v974
    %v2028 = vunpack.c.l.b16 %v975
    %v2029 = vunpack.c.h.b16 %v975
    %v2030 = vunpack.c.l.b16 %v976
    %v2031 = vunpack.c.h.b16 %v976
    %v2032 = vunpack.c.l.b16 %v977
    %v2033 = vunpack.c.h.b16 %v977
    %v2034 = vunpack.c.l.b16 %v978
    %v2035 = vunpack.c.h.b16 %v978
    %v2036 = vunpack.c.l.b16 %v979
    %v2037 = vunpack.c.h.b16 %v979
    %v2038 = vunpack.c.l.b16 %v980
    %v2039 = vunpack.c.h.b16 %v980
    %v2040 = vunpack.c.l.b16 %v981
    %v2041 = vunpack.c.h.b16 %v981
    %v2042 = vunpack.c.l.b16 %v982
    %v2043 = vunpack.c.h.b16 %v982
    %v2044 = vunpack.c.l.b16 %v983
    %v2045 = vunpack.c.h.b16 %v983
    %v2046 = vunpack.c.l.b16 %v984
    %v2047 = vunpack.c.h.b16 %v984
    %v2048 = vunpack.c.l.b16 %v985
    %v2049 = vunpack.c.h.b16 %v985
    %v2050 = vunpack.c.l.b16 %v986
    %v2051 = vunpack.c.h.b16 %v986
    %v2052 = vunpack.c.l.b16 %v987
    %v2053 = vunpack.c.h.b16 %v987
    %v2054 = vunpack.c.l.b16 %v988
    %v2055 = vunpack.c.h.b16 %v988
    %v2056 = vunpack.c.l.b16 %v989
    %v2057 = vunpack.c.h.b16 %v989
    %v2058 = vunpack.c.l.b16 %v990
    %v2059 = vunpack.c.h.b16 %v990
    %v2060 = vunpack.c.l.b16 %v991
    %v2061 = vunpack.c.h.b16 %v991
    %v2062 = vunpack.c.l.b16 %v992
    %v2063 = vunpack.c.h.b16 %v992
    %v2064 = vunpack.c.l.b16 %v993
    %v2065 = vunpack.c.h.b16 %v993
    %v2066 = vunpack.c.l.b16 %v994
    %v2067 = vunpack.c.h.b16 %v994
    %v2068 = vunpack.c.l.b16 %v995
    %v2069 = vunpack.c.h.b16 %v995
    %v2070 = vunpack.c.l.b16 %v996
    %v2071 = vunpack.c.h.b16 %v996
    %v2072 = vunpack.c.l.b16 %v997
    %v2073 = vunpack.c.h.b16 %v997
    %v2074 = vunpack.c.l.b16 %v998
    %v2075 = vunpack.c.h.b16 %v998
    %v2076 = vunpack.c.l.b16 %v999
    %v2077 = vunpack.c.h.b16 %v999
    %v2078 = vunpack.c.l.b16 %v1000
    %v2079 = vunpack.c.h.b16 %v1000
    %v2080 = vunpack.c.l.b16 %v1001
    %v2081 = vunpack.c.h.b16 %v1001
    %v2082 = vunpack.c.l.b16 %v1002
    %v2083 = vunpack.c.h.b16 %v1002
    %v2084 = vunpack.c.l.b16 %v1003
    %v2085 = vunpack.c.h.b16 %v1003
    %v2086 = vunpack.c.l.b16 %v1004
    %v2087 = vunpack.c.h.b16 %v1004
    %v2088 = vunpack.c.l.b16 %v1005
    %v2089 = vunpack.c.h.b16 %v1005
    %v2090 = vunpack.c.l.b16 %v1006
    %v2091 = vunpack.c.h.b16 %v1006
    %v2092 = vunpack.c.l.b16 %v1007
    %v2093 = vunpack.c.h.b16 %v1007
    %v2094 = vunpack.c.l.b16 %v1008
    %v2095 = vunpack.c.h.b16 %v1008
    %v2096 = vunpack.c.l.b16 %v1009
    %v2097 = vunpack.c.h.b16 %v1009
    %v2098 = vunpack.c.l.b16 %v1010
    %v2099 = vunpack.c.h.b16 %v1010
    %v2100 = vunpack.c.l.b16 %v1011
    %v2101 = vunpack.c.h.b16 %v1011
    %v2102 = vunpack.c.l.b16 %v1012
    %v2103 = vunpack.c.h.b16 %v1012
    %v2104 = vunpack.c.l.b16 %v1013
    %v2105 = vunpack.c.h.b16 %v1013
    %v2106 = vunpack.c.l.b16 %v1014
    %v2107 = vunpack.c.h.b16 %v1014
    %v2108 = vunpack.c.l.b16 %v1015
    %v2109 = vunpack.c.h.b16 %v1015
    %v2110 = vunpack.c.l.b16 %v1016
    %v2111 = vunpack.c.h.b16 %v1016
    %v2112 = vunpack.c.l.b16 %v1017
    %v2113 = vunpack.c.h.b16 %v1017
    %v2114 = vunpack.c.l.b16 %v1018
    %v2115 = vunpack.c.h.b16 %v1018
    %v2116 = vunpack.c.l.b16 %v1019
    %v2117 = vunpack.c.h.b16 %v1019
    %v2118 = vunpack.c.l.b16 %v1020
    %v2119 = vunpack.c.h.b16 %v1020
    %v2120 = vunpack.c.l.b16 %v1021
    %v2121 = vunpack.c.h.b16 %v1021
    %v2122 = vunpack.c.l.b16 %v1022
    %v2123 = vunpack.c.h.b16 %v1022
    %v2124 = vunpack.c.l.b16 %v1023
    %v2125 = vunpack.c.h.b16 %v1023
    %v2126 = vunpack.c.l.b16 %v1024
    %v2127 = vunpack.c.h.b16 %v1024
    %v2128 = vunpack.c.l.b16 %v1025
    %v2129 = vunpack.c.h.b16 %v1025
    %v2130 = vunpack.c.l.b16 %v1026
    %v2131 = vunpack.c.h.b16 %v1026
    %v2132 = vunpack.c.l.b16 %v1027
    %v2133 = vunpack.c.h.b16 %v1027
    %v2134 = vunpack.c.l.b16 %v1028
    %v2135 = vunpack.c.h.b16 %v1028
    %v2136 = vunpack.c.l.b16 %v1029
    %v2137 = vunpack.c.h.b16 %v1029
    %v2138 = vunpack.c.l.b16 %v1030
    %v2139 = vunpack.c.h.b16 %v1030
    %v2140 = vunpack.c.l.b16 %v1031
    %v2141 = vunpack.c.h.b16 %v1031
    %v2142 = vunpack.c.l.b16 %v1032
    %v2143 = vunpack.c.h.b16 %v1032
    %v2144 = vunpack.c.l.b16 %v1033
    %v2145 = vunpack.c.h.b16 %v1033
    %v2146 = vunpack.c.l.b16 %v1034
    %v2147 = vunpack.c.h.b16 %v1034
    %v2148 = vunpack.c.l.b16 %v1035
    %v2149 = vunpack.c.h.b16 %v1035
    %v2150 = vunpack.c.l.b16 %v1036
    %v2151 = vunpack.c.h.b16 %v1036
    %v2152 = vunpack.c.l.b16 %v1037
    %v2153 = vunpack.c.h.b16 %v1037
    %v2154 = vunpack.c.l.b16 %v1038
    %v2155 = vunpack.c.h.b16 %v1038
    %v2156 = vunpack.c.l.b16 %v1039
    %v2157 = vunpack.c.h.b16 %v1039
    %v2158 = vunpack.c.l.b16 %v1040
    %v2159 = vunpack.c.h.b16 %v1040
    %v2160 = vunpack.c.l.b16 %v1041
    %v2161 = vunpack.c.h.b16 %v1041
    %v2162 = vunpack.c.l.b16 %v1042
    %v2163 = vunpack.c.h.b16 %v1042
    %v2164 = vunpack.c.l.b16 %v1043
    %v2165 = vunpack.c.h.b16 %v1043
    %v2166 = vunpack.c.l.b16 %v1044
    %v2167 = vunpack.c.h.b16 %v1044
    %v2168 = vunpack.c.l.b16 %v1045
    %v2169 = vunpack.c.h.b16 %v1045
    %v2170 = vunpack.c.l.b16 %v1046
    %v2171 = vunpack.c.h.b16 %v1046
    %v2172 = vunpack.c.l.b16 %v1047
    %v2173 = vunpack.c.h.b16 %v1047
    %v2174 = vunpack.c.l.b16 %v1048
    %v2175 = vunpack.c.h.b16 %v1048
    %v2176 = vunpack.c.l.b16 %v1049
    %v2177 = vunpack.c.h.b16 %v1049
    %v2178 = vunpack.c.l.b16 %v1050
    %v2179 = vunpack.c.h.b16 %v1050
    %v2180 = vunpack.c.l.b16 %v1051
    %v2181 = vunpack.c.h.b16 %v1051
    %v2182 = vunpack.c.l.b16 %v1052
    %v2183 = vunpack.c.h.b16 %v1052
    %v2184 = vunpack.c.l.b16 %v1053
    %v2185 = vunpack.c.h.b16 %v1053
    %v2186 = vunpack.c.l.b16 %v1054
    %v2187 = vunpack.c.h.b16 %v1054
    %v2188 = vunpack.c.l.b16 %v1055
    %v2189 = vunpack.c.h.b16 %v1055
    %v2190 = vunpack.c.l.b16 %v1056
    %v2191 = vunpack.c.h.b16 %v1056
    %v2192 = vunpack.c.l.b16 %v1057
    %v2193 = vunpack.c.h.b16 %v1057
    %v2194 = vunpack.c.l.b16 %v1058
    %v2195 = vunpack.c.h.b16 %v1058
    %v2196 = vunpack.c.l.b16 %v1059
    %v2197 = vunpack.c.h.b16 %v1059
    %v2198 = vunpack.c.l.b16 %v1060
    %v2199 = vunpack.c.h.b16 %v1060
    %v2200 = vunpack.c.l.b16 %v1061
    %v2201 = vunpack.c.h.b16 %v1061
    %v2202 = vunpack.c.l.b16 %v1062
    %v2203 = vunpack.c.h.b16 %v1062
    %v2204 = vunpack.c.l.b16 %v1063
    %v2205 = vunpack.c.h.b16 %v1063
    %v2206 = vunpack.c.l.b16 %v1064
    %v2207 = vunpack.c.h.b16 %v1064
    %v2208 = vunpack.c.l.b16 %v1065
    %v2209 = vunpack.c.h.b16 %v1065
    %v2210 = vunpack.c.l.b16 %v1066
    %v2211 = vunpack.c.h.b16 %v1066
    %v2212 = vunpack.c.l.b16 %v1067
    %v2213 = vunpack.c.h.b16 %v1067
    %v2214 = vunpack.c.l.b16 %v1068
    %v2215 = vunpack.c.h.b16 %v1068
    %v2216 = vunpack.c.l.b16 %v1069
    %v2217 = vunpack.c.h.b16 %v1069
    %v2218 = vunpack.c.l.b16 %v1070
    %v2219 = vunpack.c.h.b16 %v1070
    %v2220 = vunpack.c.l.b16 %v1071
    %v2221 = vunpack.c.h.b16 %v1071
    %v2222 = vunpack.c.l.b16 %v1072
    %v2223 = vunpack.c.h.b16 %v1072
    %v2224 = vunpack.c.l.b16 %v1073
    %v2225 = vunpack.c.h.b16 %v1073
    %v2226 = vpack.c.b16 %v1470, %v1458
    %v2227 = vpack.c.b16 %v1471, %v1459
    %v2228 = vpack.c.b16 %v1472, %v1460
    %v2229 = vpack.c.b16 %v1473, %v1461
    %v2230 = vpack.c.b16 %v1474, %v1462
    %v2231 = vpack.c.b16 %v1475, %v1463
    %v2232 = vpack.c.b16 %v1476, %v1464
    %v2233 = vpack.c.b16 %v1477, %v1465
    %v2234 = vpack.c.b16 %v1478, %v1466
    %v2235 = vpack.c.b16 %v1479, %v1467
    %v2236 = vpack.c.b16 %v1480, %v1468
    %v2237 = vpack.c.b16 %v1481, %v1469
    %v2238 = vpack.c.b16 %v1494, %v1482
    %v2239 = vpack.c.b16 %v1495, %v1483
    %v2240 = vpack.c.b16 %v1496, %v1484
    %v2241 = vpack.c.b16 %v1497, %v1485
    %v2242 = vpack.c.b16 %v1498, %v1486
    %v2243 = vpack.c.b16 %v1499, %v1487
    %v2244 = vpack.c.b16 %v1500, %v1488
    %v2245 = vpack.c.b16 %v1501, %v1489
    %v2246 = vpack.c.b16 %v1502, %v1490
    %v2247 = vpack.c.b16 %v1503, %v1491
    %v2248 = vpack.c.b16 %v1504, %v1492
    %v2249 = vpack.c.b16 %v1505, %v1493
    %v2250 = vpack.c.b16 %v1518, %v1506
    %v2251 = vpack.c.b16 %v1519, %v1507
    %v2252 = vpack.c.b16 %v1520, %v1508
    %v2253 = vpack.c.b16 %v1521, %v1509
    %v2254 = vpack.c.b16 %v1522, %v1510
    %v2255 = vpack.c.b16 %v1523, %v1511
    %v2256 = vpack.c.b16 %v1524, %v1512
    %v2257 = vpack.c.b16 %v1525, %v1513
    %v2258 = vpack.c.b16 %v1526, %v1514
    %v2259 = vpack.c.b16 %v1527, %v1515
    %v2260 = vpack.c.b16 %v1528, %v1516
    %v2261 = vpack.c.b16 %v1529, %v1517
    %v2262 = vpack.c.b16 %v1542, %v1530
    %v2263 = vpack.c.b16 %v1543, %v1531
    %v2264 = vpack.c.b16 %v1544, %v1532
    %v2265 = vpack.c.b16 %v1545, %v1533
    %v2266 = vpack.c.b16 %v1546, %v1534
    %v2267 = vpack.c.b16 %v1547, %v1535
    %v2268 = vpack.c.b16 %v1548, %v1536
    %v2269 = vpack.c.b16 %v1549, %v1537
    %v2270 = vpack.c.b16 %v1550, %v1538
    %v2271 = vpack.c.b16 %v1551, %v1539
    %v2272 = vpack.c.b16 %v1552, %v1540
    %v2273 = vpack.c.b16 %v1553, %v1541
    %v2274 = vpack.c.b16 %v1566, %v1554
    %v2275 = vpack.c.b16 %v1567, %v1555
    %v2276 = vpack.c.b16 %v1568, %v1556
    %v2277 = vpack.c.b16 %v1569, %v1557
    %v2278 = vpack.c.b16 %v1570, %v1558
    %v2279 = vpack.c.b16 %v1571, %v1559
    %v2280 = vpack.c.b16 %v1572, %v1560
    %v2281 = vpack.c.b16 %v1573, %v1561
    %v2282 = vpack.c.b16 %v1574, %v1562
    %v2283 = vpack.c.b16 %v1575, %v1563
    %v2284 = vpack.c.b16 %v1576, %v1564
    %v2285 = vpack.c.b16 %v1577, %v1565
    %v2286 = vpack.c.b16 %v1590, %v1578
    %v2287 = vpack.c.b16 %v1591, %v1579
    %v2288 = vpack.c.b16 %v1592, %v1580
    %v2289 = vpack.c.b16 %v1593, %v1581
    %v2290 = vpack.c.b16 %v1594, %v1582
    %v2291 = vpack.c.b16 %v1595, %v1583
    %v2292 = vpack.c.b16 %v1596, %v1584
    %v2293 = vpack.c.b16 %v1597, %v1585
    %v2294 = vpack.c.b16 %v1598, %v1586
    %v2295 = vpack.c.b16 %v1599, %v1587
    %v2296 = vpack.c.b16 %v1600, %v1588
    %v2297 = vpack.c.b16 %v1601, %v1589
    %v2298 = vpack.c.b16 %v1614, %v1602
    %v2299 = vpack.c.b16 %v1615, %v1603
    %v2300 = vpack.c.b16 %v1616, %v1604
    %v2301 = vpack.c.b16 %v1617, %v1605
    %v2302 = vpack.c.b16 %v1618, %v1606
    %v2303 = vpack.c.b16 %v1619, %v1607
    %v2304 = vpack.c.b16 %v1620, %v1608
    %v2305 = vpack.c.b16 %v1621, %v1609
    %v2306 = vpack.c.b16 %v1622, %v1610
    %v2307 = vpack.c.b16 %v1623, %v1611
    %v2308 = vpack.c.b16 %v1624, %v1612
    %v2309 = vpack.c.b16 %v1625, %v1613
    %v2310 = vpack.c.b16 %v1638, %v1626
    %v2311 = vpack.c.b16 %v1639, %v1627
    %v2312 = vpack.c.b16 %v1640, %v1628
    %v2313 = vpack.c.b16 %v1641, %v1629
    %v2314 = vpack.c.b16 %v1642, %v1630
    %v2315 = vpack.c.b16 %v1643, %v1631
    %v2316 = vpack.c.b16 %v1644, %v1632
    %v2317 = vpack.c.b16 %v1645, %v1633
    %v2318 = vpack.c.b16 %v1646, %v1634
    %v2319 = vpack.c.b16 %v1647, %v1635
    %v2320 = vpack.c.b16 %v1648, %v1636
    %v2321 = vpack.c.b16 %v1649, %v1637
    %v2322 = vpack.c.b16 %v1662, %v1650
    %v2323 = vpack.c.b16 %v1663, %v1651
    %v2324 = vpack.c.b16 %v1664, %v1652
    %v2325 = vpack.c.b16 %v1665, %v1653
    %v2326 = vpack.c.b16 %v1666, %v1654
    %v2327 = vpack.c.b16 %v1667, %v1655
    %v2328 = vpack.c.b16 %v1668, %v1656
    %v2329 = vpack.c.b16 %v1669, %v1657
    %v2330 = vpack.c.b16 %v1670, %v1658
    %v2331 = vpack.c.b16 %v1671, %v1659
    %v2332 = vpack.c.b16 %v1672, %v1660
    %v2333 = vpack.c.b16 %v1673, %v1661
    %v2334 = vpack.c.b16 %v1686, %v1674
    %v2335 = vpack.c.b16 %v1687, %v1675
    %v2336 = vpack.c.b16 %v1688, %v1676
    %v2337 = vpack.c.b16 %v1689, %v1677
    %v2338 = vpack.c.b16 %v1690, %v1678
    %v2339 = vpack.c.b16 %v1691, %v1679
    %v2340 = vpack.c.b16 %v1692, %v1680
    %v2341 = vpack.c.b16 %v1693, %v1681
    %v2342 = vpack.c.b16 %v1694, %v1682
    %v2343 = vpack.c.b16 %v1695, %v1683
    %v2344 = vpack.c.b16 %v1696, %v1684
    %v2345 = vpack.c.b16 %v1697, %v1685
    %v2346 = vpack.c.b16 %v1710, %v1698
    %v2347 = vpack.c.b16 %v1711, %v1699
    %v2348 = vpack.c.b16 %v1712, %v1700
    %v2349 = vpack.c.b16 %v1713, %v1701
    %v2350 = vpack.c.b16 %v1714, %v1702
    %v2351 = vpack.c.b16 %v1715, %v1703
    %v2352 = vpack.c.b16 %v1716, %v1704
    %v2353 = vpack.c.b16 %v1717, %v1705
    %v2354 = vpack.c.b16 %v1718, %v1706
    %v2355 = vpack.c.b16 %v1719, %v1707
    %v2356 = vpack.c.b16 %v1720, %v1708
    %v2357 = vpack.c.b16 %v1721, %v1709
    %v2358 = vpack.c.b16 %v1734, %v1722
    %v2359 = vpack.c.b16 %v1735, %v1723
    %v2360 = vpack.c.b16 %v1736, %v1724
    %v2361 = vpack.c.b16 %v1737, %v1725
    %v2362 = vpack.c.b16 %v1738, %v1726
    %v2363 = vpack.c.b16 %v1739, %v1727
    %v2364 = vpack.c.b16 %v1740, %v1728
    %v2365 = vpack.c.b16 %v1741, %v1729
    %v2366 = vpack.c.b16 %v1742, %v1730
    %v2367 = vpack.c.b16 %v1743, %v1731
    %v2368 = vpack.c.b16 %v1744, %v1732
    %v2369 = vpack.c.b16 %v1745, %v1733
    %v2370 = vpack.c.b16 %v1758, %v1746
    %v2371 = vpack.c.b16 %v1759, %v1747
    %v2372 = vpack.c.b16 %v1760, %v1748
    %v2373 = vpack.c.b16 %v1761, %v1749
    %v2374 = vpack.c.b16 %v1762, %v1750
    %v2375 = vpack.c.b16 %v1763, %v1751
    %v2376 = vpack.c.b16 %v1764, %v1752
    %v2377 = vpack.c.b16 %v1765, %v1753
    %v2378 = vpack.c.b16 %v1766, %v1754
    %v2379 = vpack.c.b16 %v1767, %v1755
    %v2380 = vpack.c.b16 %v1768, %v1756
    %v2381 = vpack.c.b16 %v1769, %v1757
    %v2382 = vpack.c.b16 %v1782, %v1770
    %v2383 = vpack.c.b16 %v1783, %v1771
    %v2384 = vpack.c.b16 %v1784, %v1772
    %v2385 = vpack.c.b16 %v1785, %v1773
    %v2386 = vpack.c.b16 %v1786, %v1774
    %v2387 = vpack.c.b16 %v1787, %v1775
    %v2388 = vpack.c.b16 %v1788, %v1776
    %v2389 = vpack.c.b16 %v1789, %v1777
    %v2390 = vpack.c.b16 %v1790, %v1778
    %v2391 = vpack.c.b16 %v1791, %v1779
    %v2392 = vpack.c.b16 %v1792, %v1780
    %v2393 = vpack.c.b16 %v1793, %v1781
    %v2394 = vpack.c.b16 %v1806, %v1794
    %v2395 = vpack.c.b16 %v1807, %v1795
    %v2396 = vpack.c.b16 %v1808, %v1796
    %v2397 = vpack.c.b16 %v1809, %v1797
    %v2398 = vpack.c.b16 %v1810, %v1798
    %v2399 = vpack.c.b16 %v1811, %v1799
    %v2400 = vpack.c.b16 %v1812, %v1800
    %v2401 = vpack.c.b16 %v1813, %v1801
    %v2402 = vpack.c.b16 %v1814, %v1802
    %v2403 = vpack.c.b16 %v1815, %v1803
    %v2404 = vpack.c.b16 %v1816, %v1804
    %v2405 = vpack.c.b16 %v1817, %v1805
    %v2406 = vpack.c.b16 %v1830, %v1818
    %v2407 = vpack.c.b16 %v1831, %v1819
    %v2408 = vpack.c.b16 %v1832, %v1820
    %v2409 = vpack.c.b16 %v1833, %v1821
    %v2410 = vpack.c.b16 %v1834, %v1822
    %v2411 = vpack.c.b16 %v1835, %v1823
    %v2412 = vpack.c.b16 %v1836, %v1824
    %v2413 = vpack.c.b16 %v1837, %v1825
    %v2414 = vpack.c.b16 %v1838, %v1826
    %v2415 = vpack.c.b16 %v1839, %v1827
    %v2416 = vpack.c.b16 %v1840, %v1828
    %v2417 = vpack.c.b16 %v1841, %v1829
    %v2418 = vpack.c.b16 %v1854, %v1842
    %v2419 = vpack.c.b16 %v1855, %v1843
    %v2420 = vpack.c.b16 %v1856, %v1844
    %v2421 = vpack.c.b16 %v1857, %v1845
    %v2422 = vpack.c.b16 %v1858, %v1846
    %v2423 = vpack.c.b16 %v1859, %v1847
    %v2424 = vpack.c.b16 %v1860, %v1848
    %v2425 = vpack.c.b16 %v1861, %v1849
    %v2426 = vpack.c.b16 %v1862, %v1850
    %v2427 = vpack.c.b16 %v1863, %v1851
    %v2428 = vpack.c.b16 %v1864, %v1852
    %v2429 = vpack.c.b16 %v1865, %v1853
    %v2430 = vpack.c.b16 %v1878, %v1866
    %v2431 = vpack.c.b16 %v1879, %v1867
    %v2432 = vpack.c.b16 %v1880, %v1868
    %v2433 = vpack.c.b16 %v1881, %v1869
    %v2434 = vpack.c.b16 %v1882, %v1870
    %v2435 = vpack.c.b16 %v1883, %v1871
    %v2436 = vpack.c.b16 %v1884, %v1872
    %v2437 = vpack.c.b16 %v1885, %v1873
    %v2438 = vpack.c.b16 %v1886, %v1874
    %v2439 = vpack.c.b16 %v1887, %v1875
    %v2440 = vpack.c.b16 %v1888, %v1876
    %v2441 = vpack.c.b16 %v1889, %v1877
    %v2442 = vpack.c.b16 %v1902, %v1890
    %v2443 = vpack.c.b16 %v1903, %v1891
    %v2444 = vpack.c.b16 %v1904, %v1892
    %v2445 = vpack.c.b16 %v1905, %v1893
    %v2446 = vpack.c.b16 %v1906, %v1894
    %v2447 = vpack.c.b16 %v1907, %v1895
    %v2448 = vpack.c.b16 %v1908, %v1896
    %v2449 = vpack.c.b16 %v1909, %v1897
    %v2450 = vpack.c.b16 %v1910, %v1898
    %v2451 = vpack.c.b16 %v1911, %v1899
    %v2452 = vpack.c.b16 %v1912, %v1900
    %v2453 = vpack.c.b16 %v1913, %v1901
    %v2454 = vpack.c.b16 %v1926, %v1914
    %v2455 = vpack.c.b16 %v1927, %v1915
    %v2456 = vpack.c.b16 %v1928, %v1916
    %v2457 = vpack.c.b16 %v1929, %v1917
    %v2458 = vpack.c.b16 %v1930, %v1918
    %v2459 = vpack.c.b16 %v1931, %v1919
    %v2460 = vpack.c.b16 %v1932, %v1920
    %v2461 = vpack.c.b16 %v1933, %v1921
    %v2462 = vpack.c.b16 %v1934, %v1922
    %v2463 = vpack.c.b16 %v1935, %v1923
    %v2464 = vpack.c.b16 %v1936, %v1924
    %v2465 = vpack.c.b16 %v1937, %v1925
    %v2466 = vpack.c.b16 %v1950, %v1938
    %v2467 = vpack.c.b16 %v1951, %v1939
    %v2468 = vpack.c.b16 %v1952, %v1940
    %v2469 = vpack.c.b16 %v1953, %v1941
    %v2470 = vpack.c.b16 %v1954, %v1942
    %v2471 = vpack.c.b16 %v1955, %v1943
    %v2472 = vpack.c.b16 %v1956, %v1944
    %v2473 = vpack.c.b16 %v1957, %v1945
    %v2474 = vpack.c.b16 %v1958, %v1946
    %v2475 = vpack.c.b16 %v1959, %v1947
    %v2476 = vpack.c.b16 %v1960, %v1948
    %v2477 = vpack.c.b16 %v1961, %v1949
    %v2478 = vpack.c.b16 %v1974, %v1962
    %v2479 = vpack.c.b16 %v1975, %v1963
    %v2480 = vpack.c.b16 %v1976, %v1964
    %v2481 = vpack.c.b16 %v1977, %v1965
    %v2482 = vpack.c.b16 %v1978, %v1966
    %v2483 = vpack.c.b16 %v1979, %v1967
    %v2484 = vpack.c.b16 %v1980, %v1968
    %v2485 = vpack.c.b16 %v1981, %v1969
    %v2486 = vpack.c.b16 %v1982, %v1970
    %v2487 = vpack.c.b16 %v1983, %v1971
    %v2488 = vpack.c.b16 %v1984, %v1972
    %v2489 = vpack.c.b16 %v1985, %v1973
    %v2490 = vpack.c.b16 %v1998, %v1986
    %v2491 = vpack.c.b16 %v1999, %v1987
    %v2492 = vpack.c.b16 %v2000, %v1988
    %v2493 = vpack.c.b16 %v2001, %v1989
    %v2494 = vpack.c.b16 %v2002, %v1990
    %v2495 = vpack.c.b16 %v2003, %v1991
    %v2496 = vpack.c.b16 %v2004, %v1992
    %v2497 = vpack.c.b16 %v2005, %v1993
    %v2498 = vpack.c.b16 %v2006, %v1994
    %v2499 = vpack.c.b16 %v2007, %v1995
    %v2500 = vpack.c.b16 %v2008, %v1996
    %v2501 = vpack.c.b16 %v2009, %v1997
    %v2502 = vpack.c.b16 %v2022, %v2010
    %v2503 = vpack.c.b16 %v2023, %v2011
    %v2504 = vpack.c.b16 %v2024, %v2012
    %v2505 = vpack.c.b16 %v2025, %v2013
    %v2506 = vpack.c.b16 %v2026, %v2014
    %v2507 = vpack.c.b16 %v2027, %v2015
    %v2508 = vpack.c.b16 %v2028, %v2016
    %v2509 = vpack.c.b16 %v2029, %v2017
    %v2510 = vpack.c.b16 %v2030, %v2018
    %v2511 = vpack.c.b16 %v2031, %v2019
    %v2512 = vpack.c.b16 %v2032, %v2020
    %v2513 = vpack.c.b16 %v2033, %v2021
    %v2514 = vpack.c.b16 %v2046, %v2034
    %v2515 = vpack.c.b16 %v2047, %v2035
    %v2516 = vpack.c.b16 %v2048, %v2036
    %v2517 = vpack.c.b16 %v2049, %v2037
    %v2518 = vpack.c.b16 %v2050, %v2038
    %v2519 = vpack.c.b16 %v2051, %v2039
    %v2520 = vpack.c.b16 %v2052, %v2040
    %v2521 = vpack.c.b16 %v2053, %v2041
    %v2522 = vpack.c.b16 %v2054, %v2042
    %v2523 = vpack.c.b16 %v2055, %v2043
    %v2524 = vpack.c.b16 %v2056, %v2044
    %v2525 = vpack.c.b16 %v2057, %v2045
    %v2526 = vpack.c.b16 %v2070, %v2058
    %v2527 = vpack.c.b16 %v2071, %v2059
    %v2528 = vpack.c.b16 %v2072, %v2060
    %v2529 = vpack.c.b16 %v2073, %v2061
    %v2530 = vpack.c.b16 %v2074, %v2062
    %v2531 = vpack.c.b16 %v2075, %v2063
    %v2532 = vpack.c.b16 %v2076, %v2064
    %v2533 = vpack.c.b16 %v2077, %v2065
    %v2534 = vpack.c.b16 %v2078, %v2066
    %v2535 = vpack.c.b16 %v2079, %v2067
    %v2536 = vpack.c.b16 %v2080, %v2068
    %v2537 = vpack.c.b16 %v2081, %v2069
    %v2538 = vpack.c.b16 %v2094, %v2082
    %v2539 = vpack.c.b16 %v2095, %v2083
    %v2540 = vpack.c.b16 %v2096, %v2084
    %v2541 = vpack.c.b16 %v2097, %v2085
    %v2542 = vpack.c.b16 %v2098, %v2086
    %v2543 = vpack.c.b16 %v2099, %v2087
    %v2544 = vpack.c.b16 %v2100, %v2088
    %v2545 = vpack.c.b16 %v2101, %v2089
    %v2546 = vpack.c.b16 %v2102, %v2090
    %v2547 = vpack.c.b16 %v2103, %v2091
    %v2548 = vpack.c.b16 %v2104, %v2092
    %v2549 = vpack.c.b16 %v2105, %v2093
    %v2550 = vpack.c.b16 %v2118, %v2106
    %v2551 = vpack.c.b16 %v2119, %v2107
    %v2552 = vpack.c.b16 %v2120, %v2108
    %v2553 = vpack.c.b16 %v2121, %v2109
    %v2554 = vpack.c.b16 %v2122, %v2110
    %v2555 = vpack.c.b16 %v2123, %v2111
    %v2556 = vpack.c.b16 %v2124, %v2112
    %v2557 = vpack.c.b16 %v2125, %v2113
    %v2558 = vpack.c.b16 %v2126, %v2114
    %v2559 = vpack.c.b16 %v2127, %v2115
    %v2560 = vpack.c.b16 %v2128, %v2116
    %v2561 = vpack.c.b16 %v2129, %v2117
    %v2562 = vpack.c.b16 %v2142, %v2130
    %v2563 = vpack.c.b16 %v2143, %v2131
    %v2564 = vpack.c.b16 %v2144, %v2132
    %v2565 = vpack.c.b16 %v2145, %v2133
    %v2566 = vpack.c.b16 %v2146, %v2134
    %v2567 = vpack.c.b16 %v2147, %v2135
    %v2568 = vpack.c.b16 %v2148, %v2136
    %v2569 = vpack.c.b16 %v2149, %v2137
    %v2570 = vpack.c.b16 %v2150, %v2138
    %v2571 = vpack.c.b16 %v2151, %v2139
    %v2572 = vpack.c.b16 %v2152, %v2140
    %v2573 = vpack.c.b16 %v2153, %v2141
    %v2574 = vpack.c.b16 %v2166, %v2154
    %v2575 = vpack.c.b16 %v2167, %v2155
    %v2576 = vpack.c.b16 %v2168, %v2156
    %v2577 = vpack.c.b16 %v2169, %v2157
    %v2578 = vpack.c.b16 %v2170, %v2158
    %v2579 = vpack.c.b16 %v2171, %v2159
    %v2580 = vpack.c.b16 %v2172, %v2160
    %v2581 = vpack.c.b16 %v2173, %v2161
    %v2582 = vpack.c.b16 %v2174, %v2162
    %v2583 = vpack.c.b16 %v2175, %v2163
    %v2584 = vpack.c.b16 %v2176, %v2164
    %v2585 = vpack.c.b16 %v2177, %v2165
    %v2586 = vpack.c.b16 %v2190, %v2178
    %v2587 = vpack.c.b16 %v2191, %v2179
    %v2588 = vpack.c.b16 %v2192, %v2180
    %v2589 = vpack.c.b16 %v2193, %v2181
    %v2590 = vpack.c.b16 %v2194, %v2182
    %v2591 = vpack.c.b16 %v2195, %v2183
    %v2592 = vpack.c.b16 %v2196, %v2184
    %v2593 = vpack.c.b16 %v2197, %v2185
    %v2594 = vpack.c.b16 %v2198, %v2186
    %v2595 = vpack.c.b16 %v2199, %v2187
    %v2596 = vpack.c.b16 %v2200, %v2188
    %v2597 = vpack.c.b16 %v2201, %v2189
    %v2598 = vpack.c.b16 %v2214, %v2202
    %v2599 = vpack.c.b16 %v2215, %v2203
    %v2600 = vpack.c.b16 %v2216, %v2204
    %v2601 = vpack.c.b16 %v2217, %v2205
    %v2602 = vpack.c.b16 %v2218, %v2206
    %v2603 = vpack.c.b16 %v2219, %v2207
    %v2604 = vpack.c.b16 %v2220, %v2208
    %v2605 = vpack.c.b16 %v2221, %v2209
    %v2606 = vpack.c.b16 %v2222, %v2210
    %v2607 = vpack.c.b16 %v2223, %v2211
    %v2608 = vpack.c.b16 %v2224, %v2212
    %v2609 = vpack.c.b16 %v2225, %v2213
    %2994 = vmatpush.bf16.msra.mxu0 %v2310
    %2995 = vmatpush.bf16.msra.mxu0 %v2298
    %2996 = vmatpush.bf16.msra.mxu0 %v2286
    %2997 = vmatpush.bf16.msra.mxu0 %v2274
    %2998 = vmatpush.bf16.msra.mxu0 %v2262
    %2999 = vmatpush.bf16.msra.mxu0 %v2250
    %3000 = vmatpush.bf16.msra.mxu0 %v2238
    %3001 = vmatpush.bf16.msra.mxu0 %v2226
    %3002 = vmatmul.bf16.gmra.mxu0 %v686
    %v3003 = vpop.f32.mrf.mxu0
    %v3004 = vadd.f32 0.0, %v3003
    %v3005 = vpop.f32.mrf.mxu0
    %3006 = vdwg.mxu0
    %3007 = vmatpush.bf16.msra.mxu0 %v2406
    %3008 = vmatpush.bf16.msra.mxu0 %v2394
    %3009 = vmatpush.bf16.msra.mxu0 %v2382
    %3010 = vmatpush.bf16.msra.mxu0 %v2370
    %3011 = vmatpush.bf16.msra.mxu0 %v2358
    %3012 = vmatpush.bf16.msra.mxu0 %v2346
    %3013 = vmatpush.bf16.msra.mxu0 %v2334
    %3014 = vmatpush.bf16.msra.mxu0 %v2322
    %3015 = vmatmul.bf16.gmra.mxu0 %v687
    %v3016 = vpop.f32.mrf.mxu0
    %v3017 = vadd.f32 %v3004, %v3016
    %v3018 = vpop.f32.mrf.mxu0
    %3019 = vdwg.mxu0
    %3020 = vmatpush.bf16.msra.mxu0 %v2502
    %3021 = vmatpush.bf16.msra.mxu0 %v2490
    %3022 = vmatpush.bf16.msra.mxu0 %v2478
    %3023 = vmatpush.bf16.msra.mxu0 %v2466
    %3024 = vmatpush.bf16.msra.mxu0 %v2454
    %3025 = vmatpush.bf16.msra.mxu0 %v2442
    %3026 = vmatpush.bf16.msra.mxu0 %v2430
    %3027 = vmatpush.bf16.msra.mxu0 %v2418
    %3028 = vmatmul.bf16.gmra.mxu0 %v688
    %v3029 = vpop.f32.mrf.mxu0
    %v3030 = vadd.f32 %v3017, %v3029
    %v3031 = vpop.f32.mrf.mxu0
    %3032 = vdwg.mxu0
    %3033 = vmatpush.bf16.msra.mxu0 %v2598
    %3034 = vmatpush.bf16.msra.mxu0 %v2586
    %3035 = vmatpush.bf16.msra.mxu0 %v2574
    %3036 = vmatpush.bf16.msra.mxu0 %v2562
    %3037 = vmatpush.bf16.msra.mxu0 %v2550
    %3038 = vmatpush.bf16.msra.mxu0 %v2538
    %3039 = vmatpush.bf16.msra.mxu0 %v2526
    %3040 = vmatpush.bf16.msra.mxu0 %v2514
    %3041 = vmatmul.bf16.gmra.mxu0 %v689
    %v3042 = vpop.f32.mrf.mxu0
    %v3043 = vadd.f32 %v3030, %v3042
    %v3044 = vpop.f32.mrf.mxu0
    %3045 = vdwg.mxu0
    %3046 = vmatpush.bf16.msra.mxu0 %v2311
    %3047 = vmatpush.bf16.msra.mxu0 %v2299
    %3048 = vmatpush.bf16.msra.mxu0 %v2287
    %3049 = vmatpush.bf16.msra.mxu0 %v2275
    %3050 = vmatpush.bf16.msra.mxu0 %v2263
    %3051 = vmatpush.bf16.msra.mxu0 %v2251
    %3052 = vmatpush.bf16.msra.mxu0 %v2239
    %3053 = vmatpush.bf16.msra.mxu0 %v2227
    %3054 = vmatmul.bf16.gmra.mxu0 %v686
    %v3055 = vpop.f32.mrf.mxu0
    %v3056 = vadd.f32 0.0, %v3055
    %v3057 = vpop.f32.mrf.mxu0
    %3058 = vdwg.mxu0
    %3059 = vmatpush.bf16.msra.mxu0 %v2407
    %3060 = vmatpush.bf16.msra.mxu0 %v2395
    %3061 = vmatpush.bf16.msra.mxu0 %v2383
    %3062 = vmatpush.bf16.msra.mxu0 %v2371
    %3063 = vmatpush.bf16.msra.mxu0 %v2359
    %3064 = vmatpush.bf16.msra.mxu0 %v2347
    %3065 = vmatpush.bf16.msra.mxu0 %v2335
    %3066 = vmatpush.bf16.msra.mxu0 %v2323
    %3067 = vmatmul.bf16.gmra.mxu0 %v687
    %v3068 = vpop.f32.mrf.mxu0
    %v3069 = vadd.f32 %v3056, %v3068
    %v3070 = vpop.f32.mrf.mxu0
    %3071 = vdwg.mxu0
    %3072 = vmatpush.bf16.msra.mxu0 %v2503
    %3073 = vmatpush.bf16.msra.mxu0 %v2491
    %3074 = vmatpush.bf16.msra.mxu0 %v2479
    %3075 = vmatpush.bf16.msra.mxu0 %v2467
    %3076 = vmatpush.bf16.msra.mxu0 %v2455
    %3077 = vmatpush.bf16.msra.mxu0 %v2443
    %3078 = vmatpush.bf16.msra.mxu0 %v2431
    %3079 = vmatpush.bf16.msra.mxu0 %v2419
    %3080 = vmatmul.bf16.gmra.mxu0 %v688
    %v3081 = vpop.f32.mrf.mxu0
    %v3082 = vadd.f32 %v3069, %v3081
    %v3083 = vpop.f32.mrf.mxu0
    %3084 = vdwg.mxu0
    %3085 = vmatpush.bf16.msra.mxu0 %v2599
    %3086 = vmatpush.bf16.msra.mxu0 %v2587
    %3087 = vmatpush.bf16.msra.mxu0 %v2575
    %3088 = vmatpush.bf16.msra.mxu0 %v2563
    %3089 = vmatpush.bf16.msra.mxu0 %v2551
    %3090 = vmatpush.bf16.msra.mxu0 %v2539
    %3091 = vmatpush.bf16.msra.mxu0 %v2527
    %3092 = vmatpush.bf16.msra.mxu0 %v2515
    %3093 = vmatmul.bf16.gmra.mxu0 %v689
    %v3094 = vpop.f32.mrf.mxu0
    %v3095 = vadd.f32 %v3082, %v3094
    %v3096 = vpop.f32.mrf.mxu0
    %3097 = vdwg.mxu0
    %3098 = vmatpush.bf16.msra.mxu0 %v2312
    %3099 = vmatpush.bf16.msra.mxu0 %v2300
    %3100 = vmatpush.bf16.msra.mxu0 %v2288
    %3101 = vmatpush.bf16.msra.mxu0 %v2276
    %3102 = vmatpush.bf16.msra.mxu0 %v2264
    %3103 = vmatpush.bf16.msra.mxu0 %v2252
    %3104 = vmatpush.bf16.msra.mxu0 %v2240
    %3105 = vmatpush.bf16.msra.mxu0 %v2228
    %3106 = vmatmul.bf16.gmra.mxu0 %v686
    %v3107 = vpop.f32.mrf.mxu0
    %v3108 = vadd.f32 0.0, %v3107
    %v3109 = vpop.f32.mrf.mxu0
    %3110 = vdwg.mxu0
    %3111 = vmatpush.bf16.msra.mxu0 %v2408
    %3112 = vmatpush.bf16.msra.mxu0 %v2396
    %3113 = vmatpush.bf16.msra.mxu0 %v2384
    %3114 = vmatpush.bf16.msra.mxu0 %v2372
    %3115 = vmatpush.bf16.msra.mxu0 %v2360
    %3116 = vmatpush.bf16.msra.mxu0 %v2348
    %3117 = vmatpush.bf16.msra.mxu0 %v2336
    %3118 = vmatpush.bf16.msra.mxu0 %v2324
    %3119 = vmatmul.bf16.gmra.mxu0 %v687
    %v3120 = vpop.f32.mrf.mxu0
    %v3121 = vadd.f32 %v3108, %v3120
    %v3122 = vpop.f32.mrf.mxu0
    %3123 = vdwg.mxu0
    %3124 = vmatpush.bf16.msra.mxu0 %v2504
    %3125 = vmatpush.bf16.msra.mxu0 %v2492
    %3126 = vmatpush.bf16.msra.mxu0 %v2480
    %3127 = vmatpush.bf16.msra.mxu0 %v2468
    %3128 = vmatpush.bf16.msra.mxu0 %v2456
    %3129 = vmatpush.bf16.msra.mxu0 %v2444
    %3130 = vmatpush.bf16.msra.mxu0 %v2432
    %3131 = vmatpush.bf16.msra.mxu0 %v2420
    %3132 = vmatmul.bf16.gmra.mxu0 %v688
    %v3133 = vpop.f32.mrf.mxu0
    %v3134 = vadd.f32 %v3121, %v3133
    %v3135 = vpop.f32.mrf.mxu0
    %3136 = vdwg.mxu0
    %3137 = vmatpush.bf16.msra.mxu0 %v2600
    %3138 = vmatpush.bf16.msra.mxu0 %v2588
    %3139 = vmatpush.bf16.msra.mxu0 %v2576
    %3140 = vmatpush.bf16.msra.mxu0 %v2564
    %3141 = vmatpush.bf16.msra.mxu0 %v2552
    %3142 = vmatpush.bf16.msra.mxu0 %v2540
    %3143 = vmatpush.bf16.msra.mxu0 %v2528
    %3144 = vmatpush.bf16.msra.mxu0 %v2516
    %3145 = vmatmul.bf16.gmra.mxu0 %v689
    %v3146 = vpop.f32.mrf.mxu0
    %v3147 = vadd.f32 %v3134, %v3146
    %v3148 = vpop.f32.mrf.mxu0
    %3149 = vdwg.mxu0
    %3150 = vmatpush.bf16.msra.mxu0 %v2313
    %3151 = vmatpush.bf16.msra.mxu0 %v2301
    %3152 = vmatpush.bf16.msra.mxu0 %v2289
    %3153 = vmatpush.bf16.msra.mxu0 %v2277
    %3154 = vmatpush.bf16.msra.mxu0 %v2265
    %3155 = vmatpush.bf16.msra.mxu0 %v2253
    %3156 = vmatpush.bf16.msra.mxu0 %v2241
    %3157 = vmatpush.bf16.msra.mxu0 %v2229
    %3158 = vmatmul.bf16.gmra.mxu0 %v686
    %v3159 = vpop.f32.mrf.mxu0
    %v3160 = vadd.f32 0.0, %v3159
    %v3161 = vpop.f32.mrf.mxu0
    %3162 = vdwg.mxu0
    %3163 = vmatpush.bf16.msra.mxu0 %v2409
    %3164 = vmatpush.bf16.msra.mxu0 %v2397
    %3165 = vmatpush.bf16.msra.mxu0 %v2385
    %3166 = vmatpush.bf16.msra.mxu0 %v2373
    %3167 = vmatpush.bf16.msra.mxu0 %v2361
    %3168 = vmatpush.bf16.msra.mxu0 %v2349
    %3169 = vmatpush.bf16.msra.mxu0 %v2337
    %3170 = vmatpush.bf16.msra.mxu0 %v2325
    %3171 = vmatmul.bf16.gmra.mxu0 %v687
    %v3172 = vpop.f32.mrf.mxu0
    %v3173 = vadd.f32 %v3160, %v3172
    %v3174 = vpop.f32.mrf.mxu0
    %3175 = vdwg.mxu0
    %3176 = vmatpush.bf16.msra.mxu0 %v2505
    %3177 = vmatpush.bf16.msra.mxu0 %v2493
    %3178 = vmatpush.bf16.msra.mxu0 %v2481
    %3179 = vmatpush.bf16.msra.mxu0 %v2469
    %3180 = vmatpush.bf16.msra.mxu0 %v2457
    %3181 = vmatpush.bf16.msra.mxu0 %v2445
    %3182 = vmatpush.bf16.msra.mxu0 %v2433
    %3183 = vmatpush.bf16.msra.mxu0 %v2421
    %3184 = vmatmul.bf16.gmra.mxu0 %v688
    %v3185 = vpop.f32.mrf.mxu0
    %v3186 = vadd.f32 %v3173, %v3185
    %v3187 = vpop.f32.mrf.mxu0
    %3188 = vdwg.mxu0
    %3189 = vmatpush.bf16.msra.mxu0 %v2601
    %3190 = vmatpush.bf16.msra.mxu0 %v2589
    %3191 = vmatpush.bf16.msra.mxu0 %v2577
    %3192 = vmatpush.bf16.msra.mxu0 %v2565
    %3193 = vmatpush.bf16.msra.mxu0 %v2553
    %3194 = vmatpush.bf16.msra.mxu0 %v2541
    %3195 = vmatpush.bf16.msra.mxu0 %v2529
    %3196 = vmatpush.bf16.msra.mxu0 %v2517
    %3197 = vmatmul.bf16.gmra.mxu0 %v689
    %v3198 = vpop.f32.mrf.mxu0
    %v3199 = vadd.f32 %v3186, %v3198
    %v3200 = vpop.f32.mrf.mxu0
    %3201 = vdwg.mxu0
    %3202 = vmatpush.bf16.msra.mxu0 %v2314
    %3203 = vmatpush.bf16.msra.mxu0 %v2302
    %3204 = vmatpush.bf16.msra.mxu0 %v2290
    %3205 = vmatpush.bf16.msra.mxu0 %v2278
    %3206 = vmatpush.bf16.msra.mxu0 %v2266
    %3207 = vmatpush.bf16.msra.mxu0 %v2254
    %3208 = vmatpush.bf16.msra.mxu0 %v2242
    %3209 = vmatpush.bf16.msra.mxu0 %v2230
    %3210 = vmatmul.bf16.gmra.mxu0 %v686
    %v3211 = vpop.f32.mrf.mxu0
    %v3212 = vadd.f32 0.0, %v3211
    %v3213 = vpop.f32.mrf.mxu0
    %3214 = vdwg.mxu0
    %3215 = vmatpush.bf16.msra.mxu0 %v2410
    %3216 = vmatpush.bf16.msra.mxu0 %v2398
    %3217 = vmatpush.bf16.msra.mxu0 %v2386
    %3218 = vmatpush.bf16.msra.mxu0 %v2374
    %3219 = vmatpush.bf16.msra.mxu0 %v2362
    %3220 = vmatpush.bf16.msra.mxu0 %v2350
    %3221 = vmatpush.bf16.msra.mxu0 %v2338
    %3222 = vmatpush.bf16.msra.mxu0 %v2326
    %3223 = vmatmul.bf16.gmra.mxu0 %v687
    %v3224 = vpop.f32.mrf.mxu0
    %v3225 = vadd.f32 %v3212, %v3224
    %v3226 = vpop.f32.mrf.mxu0
    %3227 = vdwg.mxu0
    %3228 = vmatpush.bf16.msra.mxu0 %v2506
    %3229 = vmatpush.bf16.msra.mxu0 %v2494
    %3230 = vmatpush.bf16.msra.mxu0 %v2482
    %3231 = vmatpush.bf16.msra.mxu0 %v2470
    %3232 = vmatpush.bf16.msra.mxu0 %v2458
    %3233 = vmatpush.bf16.msra.mxu0 %v2446
    %3234 = vmatpush.bf16.msra.mxu0 %v2434
    %3235 = vmatpush.bf16.msra.mxu0 %v2422
    %3236 = vmatmul.bf16.gmra.mxu0 %v688
    %v3237 = vpop.f32.mrf.mxu0
    %v3238 = vadd.f32 %v3225, %v3237
    %v3239 = vpop.f32.mrf.mxu0
    %3240 = vdwg.mxu0
    %3241 = vmatpush.bf16.msra.mxu0 %v2602
    %3242 = vmatpush.bf16.msra.mxu0 %v2590
    %3243 = vmatpush.bf16.msra.mxu0 %v2578
    %3244 = vmatpush.bf16.msra.mxu0 %v2566
    %3245 = vmatpush.bf16.msra.mxu0 %v2554
    %3246 = vmatpush.bf16.msra.mxu0 %v2542
    %3247 = vmatpush.bf16.msra.mxu0 %v2530
    %3248 = vmatpush.bf16.msra.mxu0 %v2518
    %3249 = vmatmul.bf16.gmra.mxu0 %v689
    %v3250 = vpop.f32.mrf.mxu0
    %v3251 = vadd.f32 %v3238, %v3250
    %v3252 = vpop.f32.mrf.mxu0
    %3253 = vdwg.mxu0
    %3254 = vmatpush.bf16.msra.mxu0 %v2315
    %3255 = vmatpush.bf16.msra.mxu0 %v2303
    %3256 = vmatpush.bf16.msra.mxu0 %v2291
    %3257 = vmatpush.bf16.msra.mxu0 %v2279
    %3258 = vmatpush.bf16.msra.mxu0 %v2267
    %3259 = vmatpush.bf16.msra.mxu0 %v2255
    %3260 = vmatpush.bf16.msra.mxu0 %v2243
    %3261 = vmatpush.bf16.msra.mxu0 %v2231
    %3262 = vmatmul.bf16.gmra.mxu0 %v686
    %v3263 = vpop.f32.mrf.mxu0
    %v3264 = vadd.f32 0.0, %v3263
    %v3265 = vpop.f32.mrf.mxu0
    %3266 = vdwg.mxu0
    %3267 = vmatpush.bf16.msra.mxu0 %v2411
    %3268 = vmatpush.bf16.msra.mxu0 %v2399
    %3269 = vmatpush.bf16.msra.mxu0 %v2387
    %3270 = vmatpush.bf16.msra.mxu0 %v2375
    %3271 = vmatpush.bf16.msra.mxu0 %v2363
    %3272 = vmatpush.bf16.msra.mxu0 %v2351
    %3273 = vmatpush.bf16.msra.mxu0 %v2339
    %3274 = vmatpush.bf16.msra.mxu0 %v2327
    %3275 = vmatmul.bf16.gmra.mxu0 %v687
    %v3276 = vpop.f32.mrf.mxu0
    %v3277 = vadd.f32 %v3264, %v3276
    %v3278 = vpop.f32.mrf.mxu0
    %3279 = vdwg.mxu0
    %3280 = vmatpush.bf16.msra.mxu0 %v2507
    %3281 = vmatpush.bf16.msra.mxu0 %v2495
    %3282 = vmatpush.bf16.msra.mxu0 %v2483
    %3283 = vmatpush.bf16.msra.mxu0 %v2471
    %3284 = vmatpush.bf16.msra.mxu0 %v2459
    %3285 = vmatpush.bf16.msra.mxu0 %v2447
    %3286 = vmatpush.bf16.msra.mxu0 %v2435
    %3287 = vmatpush.bf16.msra.mxu0 %v2423
    %3288 = vmatmul.bf16.gmra.mxu0 %v688
    %v3289 = vpop.f32.mrf.mxu0
    %v3290 = vadd.f32 %v3277, %v3289
    %v3291 = vpop.f32.mrf.mxu0
    %3292 = vdwg.mxu0
    %3293 = vmatpush.bf16.msra.mxu0 %v2603
    %3294 = vmatpush.bf16.msra.mxu0 %v2591
    %3295 = vmatpush.bf16.msra.mxu0 %v2579
    %3296 = vmatpush.bf16.msra.mxu0 %v2567
    %3297 = vmatpush.bf16.msra.mxu0 %v2555
    %3298 = vmatpush.bf16.msra.mxu0 %v2543
    %3299 = vmatpush.bf16.msra.mxu0 %v2531
    %3300 = vmatpush.bf16.msra.mxu0 %v2519
    %3301 = vmatmul.bf16.gmra.mxu0 %v689
    %v3302 = vpop.f32.mrf.mxu0
    %v3303 = vadd.f32 %v3290, %v3302
    %v3304 = vpop.f32.mrf.mxu0
    %3305 = vdwg.mxu0
    %3306 = vmatpush.bf16.msra.mxu0 %v2316
    %3307 = vmatpush.bf16.msra.mxu0 %v2304
    %3308 = vmatpush.bf16.msra.mxu0 %v2292
    %3309 = vmatpush.bf16.msra.mxu0 %v2280
    %3310 = vmatpush.bf16.msra.mxu0 %v2268
    %3311 = vmatpush.bf16.msra.mxu0 %v2256
    %3312 = vmatpush.bf16.msra.mxu0 %v2244
    %3313 = vmatpush.bf16.msra.mxu0 %v2232
    %3314 = vmatmul.bf16.gmra.mxu0 %v686
    %v3315 = vpop.f32.mrf.mxu0
    %v3316 = vadd.f32 0.0, %v3315
    %v3317 = vpop.f32.mrf.mxu0
    %3318 = vdwg.mxu0
    %3319 = vmatpush.bf16.msra.mxu0 %v2412
    %3320 = vmatpush.bf16.msra.mxu0 %v2400
    %3321 = vmatpush.bf16.msra.mxu0 %v2388
    %3322 = vmatpush.bf16.msra.mxu0 %v2376
    %3323 = vmatpush.bf16.msra.mxu0 %v2364
    %3324 = vmatpush.bf16.msra.mxu0 %v2352
    %3325 = vmatpush.bf16.msra.mxu0 %v2340
    %3326 = vmatpush.bf16.msra.mxu0 %v2328
    %3327 = vmatmul.bf16.gmra.mxu0 %v687
    %v3328 = vpop.f32.mrf.mxu0
    %v3329 = vadd.f32 %v3316, %v3328
    %v3330 = vpop.f32.mrf.mxu0
    %3331 = vdwg.mxu0
    %3332 = vmatpush.bf16.msra.mxu0 %v2508
    %3333 = vmatpush.bf16.msra.mxu0 %v2496
    %3334 = vmatpush.bf16.msra.mxu0 %v2484
    %3335 = vmatpush.bf16.msra.mxu0 %v2472
    %3336 = vmatpush.bf16.msra.mxu0 %v2460
    %3337 = vmatpush.bf16.msra.mxu0 %v2448
    %3338 = vmatpush.bf16.msra.mxu0 %v2436
    %3339 = vmatpush.bf16.msra.mxu0 %v2424
    %3340 = vmatmul.bf16.gmra.mxu0 %v688
    %v3341 = vpop.f32.mrf.mxu0
    %v3342 = vadd.f32 %v3329, %v3341
    %v3343 = vpop.f32.mrf.mxu0
    %3344 = vdwg.mxu0
    %3345 = vmatpush.bf16.msra.mxu0 %v2604
    %3346 = vmatpush.bf16.msra.mxu0 %v2592
    %3347 = vmatpush.bf16.msra.mxu0 %v2580
    %3348 = vmatpush.bf16.msra.mxu0 %v2568
    %3349 = vmatpush.bf16.msra.mxu0 %v2556
    %3350 = vmatpush.bf16.msra.mxu0 %v2544
    %3351 = vmatpush.bf16.msra.mxu0 %v2532
    %3352 = vmatpush.bf16.msra.mxu0 %v2520
    %3353 = vmatmul.bf16.gmra.mxu0 %v689
    %v3354 = vpop.f32.mrf.mxu0
    %v3355 = vadd.f32 %v3342, %v3354
    %v3356 = vpop.f32.mrf.mxu0
    %3357 = vdwg.mxu0
    %3358 = vmatpush.bf16.msra.mxu0 %v2317
    %3359 = vmatpush.bf16.msra.mxu0 %v2305
    %3360 = vmatpush.bf16.msra.mxu0 %v2293
    %3361 = vmatpush.bf16.msra.mxu0 %v2281
    %3362 = vmatpush.bf16.msra.mxu0 %v2269
    %3363 = vmatpush.bf16.msra.mxu0 %v2257
    %3364 = vmatpush.bf16.msra.mxu0 %v2245
    %3365 = vmatpush.bf16.msra.mxu0 %v2233
    %3366 = vmatmul.bf16.gmra.mxu0 %v686
    %v3367 = vpop.f32.mrf.mxu0
    %v3368 = vadd.f32 0.0, %v3367
    %v3369 = vpop.f32.mrf.mxu0
    %3370 = vdwg.mxu0
    %3371 = vmatpush.bf16.msra.mxu0 %v2413
    %3372 = vmatpush.bf16.msra.mxu0 %v2401
    %3373 = vmatpush.bf16.msra.mxu0 %v2389
    %3374 = vmatpush.bf16.msra.mxu0 %v2377
    %3375 = vmatpush.bf16.msra.mxu0 %v2365
    %3376 = vmatpush.bf16.msra.mxu0 %v2353
    %3377 = vmatpush.bf16.msra.mxu0 %v2341
    %3378 = vmatpush.bf16.msra.mxu0 %v2329
    %3379 = vmatmul.bf16.gmra.mxu0 %v687
    %v3380 = vpop.f32.mrf.mxu0
    %v3381 = vadd.f32 %v3368, %v3380
    %v3382 = vpop.f32.mrf.mxu0
    %3383 = vdwg.mxu0
    %3384 = vmatpush.bf16.msra.mxu0 %v2509
    %3385 = vmatpush.bf16.msra.mxu0 %v2497
    %3386 = vmatpush.bf16.msra.mxu0 %v2485
    %3387 = vmatpush.bf16.msra.mxu0 %v2473
    %3388 = vmatpush.bf16.msra.mxu0 %v2461
    %3389 = vmatpush.bf16.msra.mxu0 %v2449
    %3390 = vmatpush.bf16.msra.mxu0 %v2437
    %3391 = vmatpush.bf16.msra.mxu0 %v2425
    %3392 = vmatmul.bf16.gmra.mxu0 %v688
    %v3393 = vpop.f32.mrf.mxu0
    %v3394 = vadd.f32 %v3381, %v3393
    %v3395 = vpop.f32.mrf.mxu0
    %3396 = vdwg.mxu0
    %3397 = vmatpush.bf16.msra.mxu0 %v2605
    %3398 = vmatpush.bf16.msra.mxu0 %v2593
    %3399 = vmatpush.bf16.msra.mxu0 %v2581
    %3400 = vmatpush.bf16.msra.mxu0 %v2569
    %3401 = vmatpush.bf16.msra.mxu0 %v2557
    %3402 = vmatpush.bf16.msra.mxu0 %v2545
    %3403 = vmatpush.bf16.msra.mxu0 %v2533
    %3404 = vmatpush.bf16.msra.mxu0 %v2521
    %3405 = vmatmul.bf16.gmra.mxu0 %v689
    %v3406 = vpop.f32.mrf.mxu0
    %v3407 = vadd.f32 %v3394, %v3406
    %v3408 = vpop.f32.mrf.mxu0
    %3409 = vdwg.mxu0
    %3410 = vmatpush.bf16.msra.mxu0 %v2318
    %3411 = vmatpush.bf16.msra.mxu0 %v2306
    %3412 = vmatpush.bf16.msra.mxu0 %v2294
    %3413 = vmatpush.bf16.msra.mxu0 %v2282
    %3414 = vmatpush.bf16.msra.mxu0 %v2270
    %3415 = vmatpush.bf16.msra.mxu0 %v2258
    %3416 = vmatpush.bf16.msra.mxu0 %v2246
    %3417 = vmatpush.bf16.msra.mxu0 %v2234
    %3418 = vmatmul.bf16.gmra.mxu0 %v686
    %v3419 = vpop.f32.mrf.mxu0
    %v3420 = vadd.f32 0.0, %v3419
    %v3421 = vpop.f32.mrf.mxu0
    %3422 = vdwg.mxu0
    %3423 = vmatpush.bf16.msra.mxu0 %v2414
    %3424 = vmatpush.bf16.msra.mxu0 %v2402
    %3425 = vmatpush.bf16.msra.mxu0 %v2390
    %3426 = vmatpush.bf16.msra.mxu0 %v2378
    %3427 = vmatpush.bf16.msra.mxu0 %v2366
    %3428 = vmatpush.bf16.msra.mxu0 %v2354
    %3429 = vmatpush.bf16.msra.mxu0 %v2342
    %3430 = vmatpush.bf16.msra.mxu0 %v2330
    %3431 = vmatmul.bf16.gmra.mxu0 %v687
    %v3432 = vpop.f32.mrf.mxu0
    %v3433 = vadd.f32 %v3420, %v3432
    %v3434 = vpop.f32.mrf.mxu0
    %3435 = vdwg.mxu0
    %3436 = vmatpush.bf16.msra.mxu0 %v2510
    %3437 = vmatpush.bf16.msra.mxu0 %v2498
    %3438 = vmatpush.bf16.msra.mxu0 %v2486
    %3439 = vmatpush.bf16.msra.mxu0 %v2474
    %3440 = vmatpush.bf16.msra.mxu0 %v2462
    %3441 = vmatpush.bf16.msra.mxu0 %v2450
    %3442 = vmatpush.bf16.msra.mxu0 %v2438
    %3443 = vmatpush.bf16.msra.mxu0 %v2426
    %3444 = vmatmul.bf16.gmra.mxu0 %v688
    %v3445 = vpop.f32.mrf.mxu0
    %v3446 = vadd.f32 %v3433, %v3445
    %v3447 = vpop.f32.mrf.mxu0
    %3448 = vdwg.mxu0
    %3449 = vmatpush.bf16.msra.mxu0 %v2606
    %3450 = vmatpush.bf16.msra.mxu0 %v2594
    %3451 = vmatpush.bf16.msra.mxu0 %v2582
    %3452 = vmatpush.bf16.msra.mxu0 %v2570
    %3453 = vmatpush.bf16.msra.mxu0 %v2558
    %3454 = vmatpush.bf16.msra.mxu0 %v2546
    %3455 = vmatpush.bf16.msra.mxu0 %v2534
    %3456 = vmatpush.bf16.msra.mxu0 %v2522
    %3457 = vmatmul.bf16.gmra.mxu0 %v689
    %v3458 = vpop.f32.mrf.mxu0
    %v3459 = vadd.f32 %v3446, %v3458
    %v3460 = vpop.f32.mrf.mxu0
    %3461 = vdwg.mxu0
    %3462 = vmatpush.bf16.msra.mxu0 %v2319
    %3463 = vmatpush.bf16.msra.mxu0 %v2307
    %3464 = vmatpush.bf16.msra.mxu0 %v2295
    %3465 = vmatpush.bf16.msra.mxu0 %v2283
    %3466 = vmatpush.bf16.msra.mxu0 %v2271
    %3467 = vmatpush.bf16.msra.mxu0 %v2259
    %3468 = vmatpush.bf16.msra.mxu0 %v2247
    %3469 = vmatpush.bf16.msra.mxu0 %v2235
    %3470 = vmatmul.bf16.gmra.mxu0 %v686
    %v3471 = vpop.f32.mrf.mxu0
    %v3472 = vadd.f32 0.0, %v3471
    %v3473 = vpop.f32.mrf.mxu0
    %3474 = vdwg.mxu0
    %3475 = vmatpush.bf16.msra.mxu0 %v2415
    %3476 = vmatpush.bf16.msra.mxu0 %v2403
    %3477 = vmatpush.bf16.msra.mxu0 %v2391
    %3478 = vmatpush.bf16.msra.mxu0 %v2379
    %3479 = vmatpush.bf16.msra.mxu0 %v2367
    %3480 = vmatpush.bf16.msra.mxu0 %v2355
    %3481 = vmatpush.bf16.msra.mxu0 %v2343
    %3482 = vmatpush.bf16.msra.mxu0 %v2331
    %3483 = vmatmul.bf16.gmra.mxu0 %v687
    %v3484 = vpop.f32.mrf.mxu0
    %v3485 = vadd.f32 %v3472, %v3484
    %v3486 = vpop.f32.mrf.mxu0
    %3487 = vdwg.mxu0
    %3488 = vmatpush.bf16.msra.mxu0 %v2511
    %3489 = vmatpush.bf16.msra.mxu0 %v2499
    %3490 = vmatpush.bf16.msra.mxu0 %v2487
    %3491 = vmatpush.bf16.msra.mxu0 %v2475
    %3492 = vmatpush.bf16.msra.mxu0 %v2463
    %3493 = vmatpush.bf16.msra.mxu0 %v2451
    %3494 = vmatpush.bf16.msra.mxu0 %v2439
    %3495 = vmatpush.bf16.msra.mxu0 %v2427
    %3496 = vmatmul.bf16.gmra.mxu0 %v688
    %v3497 = vpop.f32.mrf.mxu0
    %v3498 = vadd.f32 %v3485, %v3497
    %v3499 = vpop.f32.mrf.mxu0
    %3500 = vdwg.mxu0
    %3501 = vmatpush.bf16.msra.mxu0 %v2607
    %3502 = vmatpush.bf16.msra.mxu0 %v2595
    %3503 = vmatpush.bf16.msra.mxu0 %v2583
    %3504 = vmatpush.bf16.msra.mxu0 %v2571
    %3505 = vmatpush.bf16.msra.mxu0 %v2559
    %3506 = vmatpush.bf16.msra.mxu0 %v2547
    %3507 = vmatpush.bf16.msra.mxu0 %v2535
    %3508 = vmatpush.bf16.msra.mxu0 %v2523
    %3509 = vmatmul.bf16.gmra.mxu0 %v689
    %v3510 = vpop.f32.mrf.mxu0
    %v3511 = vadd.f32 %v3498, %v3510
    %v3512 = vpop.f32.mrf.mxu0
    %3513 = vdwg.mxu0
    %3514 = vmatpush.bf16.msra.mxu0 %v2320
    %3515 = vmatpush.bf16.msra.mxu0 %v2308
    %3516 = vmatpush.bf16.msra.mxu0 %v2296
    %3517 = vmatpush.bf16.msra.mxu0 %v2284
    %3518 = vmatpush.bf16.msra.mxu0 %v2272
    %3519 = vmatpush.bf16.msra.mxu0 %v2260
    %3520 = vmatpush.bf16.msra.mxu0 %v2248
    %3521 = vmatpush.bf16.msra.mxu0 %v2236
    %3522 = vmatmul.bf16.gmra.mxu0 %v686
    %v3523 = vpop.f32.mrf.mxu0
    %v3524 = vadd.f32 0.0, %v3523
    %v3525 = vpop.f32.mrf.mxu0
    %3526 = vdwg.mxu0
    %3527 = vmatpush.bf16.msra.mxu0 %v2416
    %3528 = vmatpush.bf16.msra.mxu0 %v2404
    %3529 = vmatpush.bf16.msra.mxu0 %v2392
    %3530 = vmatpush.bf16.msra.mxu0 %v2380
    %3531 = vmatpush.bf16.msra.mxu0 %v2368
    %3532 = vmatpush.bf16.msra.mxu0 %v2356
    %3533 = vmatpush.bf16.msra.mxu0 %v2344
    %3534 = vmatpush.bf16.msra.mxu0 %v2332
    %3535 = vmatmul.bf16.gmra.mxu0 %v687
    %v3536 = vpop.f32.mrf.mxu0
    %v3537 = vadd.f32 %v3524, %v3536
    %v3538 = vpop.f32.mrf.mxu0
    %3539 = vdwg.mxu0
    %3540 = vmatpush.bf16.msra.mxu0 %v2512
    %3541 = vmatpush.bf16.msra.mxu0 %v2500
    %3542 = vmatpush.bf16.msra.mxu0 %v2488
    %3543 = vmatpush.bf16.msra.mxu0 %v2476
    %3544 = vmatpush.bf16.msra.mxu0 %v2464
    %3545 = vmatpush.bf16.msra.mxu0 %v2452
    %3546 = vmatpush.bf16.msra.mxu0 %v2440
    %3547 = vmatpush.bf16.msra.mxu0 %v2428
    %3548 = vmatmul.bf16.gmra.mxu0 %v688
    %v3549 = vpop.f32.mrf.mxu0
    %v3550 = vadd.f32 %v3537, %v3549
    %v3551 = vpop.f32.mrf.mxu0
    %3552 = vdwg.mxu0
    %3553 = vmatpush.bf16.msra.mxu0 %v2608
    %3554 = vmatpush.bf16.msra.mxu0 %v2596
    %3555 = vmatpush.bf16.msra.mxu0 %v2584
    %3556 = vmatpush.bf16.msra.mxu0 %v2572
    %3557 = vmatpush.bf16.msra.mxu0 %v2560
    %3558 = vmatpush.bf16.msra.mxu0 %v2548
    %3559 = vmatpush.bf16.msra.mxu0 %v2536
    %3560 = vmatpush.bf16.msra.mxu0 %v2524
    %3561 = vmatmul.bf16.gmra.mxu0 %v689
    %v3562 = vpop.f32.mrf.mxu0
    %v3563 = vadd.f32 %v3550, %v3562
    %v3564 = vpop.f32.mrf.mxu0
    %3565 = vdwg.mxu0
    %3566 = vmatpush.bf16.msra.mxu0 %v2321
    %3567 = vmatpush.bf16.msra.mxu0 %v2309
    %3568 = vmatpush.bf16.msra.mxu0 %v2297
    %3569 = vmatpush.bf16.msra.mxu0 %v2285
    %3570 = vmatpush.bf16.msra.mxu0 %v2273
    %3571 = vmatpush.bf16.msra.mxu0 %v2261
    %3572 = vmatpush.bf16.msra.mxu0 %v2249
    %3573 = vmatpush.bf16.msra.mxu0 %v2237
    %3574 = vmatmul.bf16.gmra.mxu0 %v686
    %v3575 = vpop.f32.mrf.mxu0
    %v3576 = vadd.f32 0.0, %v3575
    %v3577 = vpop.f32.mrf.mxu0
    %3578 = vdwg.mxu0
    %3579 = vmatpush.bf16.msra.mxu0 %v2417
    %3580 = vmatpush.bf16.msra.mxu0 %v2405
    %3581 = vmatpush.bf16.msra.mxu0 %v2393
    %3582 = vmatpush.bf16.msra.mxu0 %v2381
    %3583 = vmatpush.bf16.msra.mxu0 %v2369
    %3584 = vmatpush.bf16.msra.mxu0 %v2357
    %3585 = vmatpush.bf16.msra.mxu0 %v2345
    %3586 = vmatpush.bf16.msra.mxu0 %v2333
    %3587 = vmatmul.bf16.gmra.mxu0 %v687
    %v3588 = vpop.f32.mrf.mxu0
    %v3589 = vadd.f32 %v3576, %v3588
    %v3590 = vpop.f32.mrf.mxu0
    %3591 = vdwg.mxu0
    %3592 = vmatpush.bf16.msra.mxu0 %v2513
    %3593 = vmatpush.bf16.msra.mxu0 %v2501
    %3594 = vmatpush.bf16.msra.mxu0 %v2489
    %3595 = vmatpush.bf16.msra.mxu0 %v2477
    %3596 = vmatpush.bf16.msra.mxu0 %v2465
    %3597 = vmatpush.bf16.msra.mxu0 %v2453
    %3598 = vmatpush.bf16.msra.mxu0 %v2441
    %3599 = vmatpush.bf16.msra.mxu0 %v2429
    %3600 = vmatmul.bf16.gmra.mxu0 %v688
    %v3601 = vpop.f32.mrf.mxu0
    %v3602 = vadd.f32 %v3589, %v3601
    %v3603 = vpop.f32.mrf.mxu0
    %3604 = vdwg.mxu0
    %3605 = vmatpush.bf16.msra.mxu0 %v2609
    %3606 = vmatpush.bf16.msra.mxu0 %v2597
    %3607 = vmatpush.bf16.msra.mxu0 %v2585
    %3608 = vmatpush.bf16.msra.mxu0 %v2573
    %3609 = vmatpush.bf16.msra.mxu0 %v2561
    %3610 = vmatpush.bf16.msra.mxu0 %v2549
    %3611 = vmatpush.bf16.msra.mxu0 %v2537
    %3612 = vmatpush.bf16.msra.mxu0 %v2525
    %3613 = vmatmul.bf16.gmra.mxu0 %v689
    %v3614 = vpop.f32.mrf.mxu0
    %v3615 = vadd.f32 %v3602, %v3614
    %v3616 = vpop.f32.mrf.mxu0
    %3617 = vdwg.mxu0
    %v3618 = vsel %vm402, %v3043, 0.0
    %v3619 = vrot.slane %v3199, 7
    %v3620 = vsel %vm416, %v3619, %v3618
    %v3621 = vrot.slane %v3355, 6
    %v3622 = vsel %vm404, %v3621, %v3620
    %v3623 = vrot.slane %v3511, 5
    %v3624 = vsel %vm418, %v3623, %v3622
    %v3625 = vrot.slane %v3043, 5
    %v3626 = vsel %vm408, %v3625, %v3624
    %v3627 = vrot.slane %v3199, 4
    %v3628 = vsel %vm422, %v3627, %v3626
    %v3629 = vrot.slane %v3355, 3
    %v3630 = vsel %vm410, %v3629, %v3628
    %v3631 = vrot.slane %v3511, 2
    %vm3632 = vcmask 1047559
    %v3633 = vsel %vm3632, %v3631, %v3630
    %v3634 = vsel %vm402, %v3095, 0.0
    %v3635 = vrot.slane %v3251, 7
    %v3636 = vsel %vm416, %v3635, %v3634
    %v3637 = vrot.slane %v3407, 6
    %v3638 = vsel %vm404, %v3637, %v3636
    %v3639 = vrot.slane %v3563, 5
    %v3640 = vsel %vm418, %v3639, %v3638
    %v3641 = vrot.slane %v3095, 5
    %v3642 = vsel %vm408, %v3641, %v3640
    %v3643 = vrot.slane %v3251, 4
    %v3644 = vsel %vm422, %v3643, %v3642
    %v3645 = vrot.slane %v3407, 3
    %v3646 = vsel %vm410, %v3645, %v3644
    %v3647 = vrot.slane %v3563, 2
    %v3648 = vsel %vm3632, %v3647, %v3646
    %v3649 = vsel %vm402, %v3147, 0.0
    %v3650 = vrot.slane %v3303, 7
    %v3651 = vsel %vm416, %v3650, %v3649
    %v3652 = vrot.slane %v3459, 6
    %v3653 = vsel %vm404, %v3652, %v3651
    %v3654 = vrot.slane %v3615, 5
    %v3655 = vsel %vm418, %v3654, %v3653
    %v3656 = vrot.slane %v3147, 5
    %v3657 = vsel %vm408, %v3656, %v3655
    %v3658 = vrot.slane %v3303, 4
    %v3659 = vsel %vm422, %v3658, %v3657
    %v3660 = vrot.slane %v3459, 3
    %v3661 = vsel %vm410, %v3660, %v3659
    %v3662 = vrot.slane %v3615, 2
    %v3663 = vsel %vm3632, %v3662, %v3661
    %v3664 = vrot.slane %v3043, 2
    %v3665 = vsel %vm402, %v3664, 0.0
    %v3666 = vrot.slane %v3199, 1
    %v3667 = vsel %vm416, %v3666, %v3665
    %v3668 = vsel %vm404, %v3355, %v3667
    %v3669 = vrot.slane %v3511, 7
    %v3670 = vsel %vm418, %v3669, %v3668
    %v3671 = vrot.slane %v3043, 7
    %v3672 = vsel %vm408, %v3671, %v3670
    %v3673 = vrot.slane %v3199, 6
    %v3674 = vsel %vm422, %v3673, %v3672
    %v3675 = vrot.slane %v3355, 5
    %v3676 = vsel %vm410, %v3675, %v3674
    %v3677 = vrot.slane %v3511, 4
    %v3678 = vsel %vm3632, %v3677, %v3676
    %v3679 = vrot.slane %v3095, 2
    %v3680 = vsel %vm402, %v3679, 0.0
    %v3681 = vrot.slane %v3251, 1
    %v3682 = vsel %vm416, %v3681, %v3680
    %v3683 = vsel %vm404, %v3407, %v3682
    %v3684 = vrot.slane %v3563, 7
    %v3685 = vsel %vm418, %v3684, %v3683
    %v3686 = vrot.slane %v3095, 7
    %v3687 = vsel %vm408, %v3686, %v3685
    %v3688 = vrot.slane %v3251, 6
    %v3689 = vsel %vm422, %v3688, %v3687
    %v3690 = vrot.slane %v3407, 5
    %v3691 = vsel %vm410, %v3690, %v3689
    %v3692 = vrot.slane %v3563, 4
    %v3693 = vsel %vm3632, %v3692, %v3691
    %v3694 = vrot.slane %v3147, 2
    %v3695 = vsel %vm402, %v3694, 0.0
    %v3696 = vrot.slane %v3303, 1
    %v3697 = vsel %vm416, %v3696, %v3695
    %v3698 = vsel %vm404, %v3459, %v3697
    %v3699 = vrot.slane %v3615, 7
    %v3700 = vsel %vm418, %v3699, %v3698
    %v3701 = vrot.slane %v3147, 7
    %v3702 = vsel %vm408, %v3701, %v3700
    %v3703 = vrot.slane %v3303, 6
    %v3704 = vsel %vm422, %v3703, %v3702
    %v3705 = vrot.slane %v3459, 5
    %v3706 = vsel %vm410, %v3705, %v3704
    %v3707 = vrot.slane %v3615, 4
    %v3708 = vsel %vm3632, %v3707, %v3706
    %v3709 = vld [vmem:[%s15] sm:$0x7]
    %v3711 = vperm.slane %v3709, 0
    %v3712 = vperm.slane %v3709, 1
    %v3713 = vperm.slane %v3709, 2
    %v3717 = vadd.f32 %v3633, %v3711
    %v3718 = vadd.f32 %v3648, %v3712
    %v3719 = vadd.f32 %v3663, %v3713
    %v3720 = vadd.f32 %v3678, %v3711
    %v3721 = vadd.f32 %v3693, %v3712
    %v3722 = vadd.f32 %v3708, %v3713
    %v3723 = vld [vmem:[%s17] sm:$0x7]
    %v3724 = vld [vmem:[%s19] sm:$0x7]
    %v3725 = vadd.f32 %v3717, %v3720
    %v3726 = vrot.slane %v3725, 4
    %v3727 = vadd.f32 %v3725, %v3726
    %v3728 = vrot.slane %v3727, 2
    %v3729 = vadd.f32 %v3727, %v3728
    %v3730 = vrot.slane %v3729, 1
    %v3731 = vadd.f32 %v3729, %v3730
    %v3732 = vadd.f32 %v3718, %v3721
    %v3733 = vrot.slane %v3732, 4
    %v3734 = vadd.f32 %v3732, %v3733
    %v3735 = vrot.slane %v3734, 2
    %v3736 = vadd.f32 %v3734, %v3735
    %v3737 = vrot.slane %v3736, 1
    %v3738 = vadd.f32 %v3736, %v3737
    %v3739 = vadd.f32 %v3719, %v3722
    %v3740 = vrot.slane %v3739, 4
    %v3741 = vadd.f32 %v3739, %v3740
    %v3742 = vrot.slane %v3741, 2
    %v3743 = vadd.f32 %v3741, %v3742
    %v3744 = vrot.slane %v3743, 1
    %v3745 = vadd.f32 %v3743, %v3744
    %v3746 = vrcp.pop 16.0
    %v3747 = vmul.f32 16.0, %v3746
    %v3748 = vsub.f32 1.0, %v3747
    %v3749 = vmul.f32 %v3746, %v3748
    %v3750 = vadd.f32 %v3746, %v3749
    %vm3751 = vweird.f32 %v3746
    %v3752 = vsel %vm3751, %v3746, %v3750
    %v3753 = vmul.f32 %v3731, %v3752
    %v3754 = vmul.f32 %v3738, %v3752
    %v3755 = vmul.f32 %v3745, %v3752
    %v3756 = vmul.f32 %v3717, %v3717
    %v3757 = vmul.f32 %v3718, %v3718
    %v3758 = vmul.f32 %v3719, %v3719
    %v3759 = vmul.f32 %v3720, %v3720
    %v3760 = vmul.f32 %v3721, %v3721
    %v3761 = vmul.f32 %v3722, %v3722
    %v3762 = vadd.f32 %v3756, %v3759
    %v3763 = vrot.slane %v3762, 4
    %v3764 = vadd.f32 %v3762, %v3763
    %v3765 = vrot.slane %v3764, 2
    %v3766 = vadd.f32 %v3764, %v3765
    %v3767 = vrot.slane %v3766, 1
    %v3768 = vadd.f32 %v3766, %v3767
    %v3769 = vadd.f32 %v3757, %v3760
    %v3770 = vrot.slane %v3769, 4
    %v3771 = vadd.f32 %v3769, %v3770
    %v3772 = vrot.slane %v3771, 2
    %v3773 = vadd.f32 %v3771, %v3772
    %v3774 = vrot.slane %v3773, 1
    %v3775 = vadd.f32 %v3773, %v3774
    %v3776 = vadd.f32 %v3758, %v3761
    %v3777 = vrot.slane %v3776, 4
    %v3778 = vadd.f32 %v3776, %v3777
    %v3779 = vrot.slane %v3778, 2
    %v3780 = vadd.f32 %v3778, %v3779
    %v3781 = vrot.slane %v3780, 1
    %v3782 = vadd.f32 %v3780, %v3781
    %v3783 = vmul.f32 %v3768, %v3752
    %v3784 = vmul.f32 %v3775, %v3752
    %v3785 = vmul.f32 %v3782, %v3752
    %v3786 = vmul.f32 %v3753, %v3753
    %v3787 = vmul.f32 %v3754, %v3754
    %v3788 = vmul.f32 %v3755, %v3755
    %v3789 = vsub.f32 %v3783, %v3786
    %v3790 = vsub.f32 %v3784, %v3787
    %v3791 = vsub.f32 %v3785, %v3788
    %v3792 = vmax.f32 %v3789, 0.0
    %v3793 = vmax.f32 %v3790, 0.0
    %v3794 = vmax.f32 %v3791, 0.0
    %v3795 = vadd.f32 %v3792, 1e-05
    %v3796 = vadd.f32 %v3793, 1e-05
    %v3797 = vadd.f32 %v3794, 1e-05
    %v3798 = vrsqrt.pop %v3795
    %v3799 = vmul.f32 %v3798, %v3795
    %v3800 = vmul.f32 %v3799, %v3798
    %v3801 = vmul.f32 0.5, %v3800
    %v3802 = vsub.f32 1.5, %v3801
    %v3803 = vmul.f32 %v3798, %v3802
    %vm3804 = vweird.f32 %v3795
    %vm3805 = vweird.f32 %v3798
    %vm3806 = vmor %vm3804, %vm3805
    %v3807 = vsel %vm3806, %v3798, %v3803
    %v3808 = vrsqrt.pop %v3796
    %v3809 = vmul.f32 %v3808, %v3796
    %v3810 = vmul.f32 %v3809, %v3808
    %v3811 = vmul.f32 0.5, %v3810
    %v3812 = vsub.f32 1.5, %v3811
    %v3813 = vmul.f32 %v3808, %v3812
    %vm3814 = vweird.f32 %v3796
    %vm3815 = vweird.f32 %v3808
    %vm3816 = vmor %vm3814, %vm3815
    %v3817 = vsel %vm3816, %v3808, %v3813
    %v3818 = vrsqrt.pop %v3797
    %v3819 = vmul.f32 %v3818, %v3797
    %v3820 = vmul.f32 %v3819, %v3818
    %v3821 = vmul.f32 0.5, %v3820
    %v3822 = vsub.f32 1.5, %v3821
    %v3823 = vmul.f32 %v3818, %v3822
    %vm3824 = vweird.f32 %v3797
    %vm3825 = vweird.f32 %v3818
    %vm3826 = vmor %vm3824, %vm3825
    %v3827 = vsel %vm3826, %v3818, %v3823
    %v3831 = vrot.slane %v3817, 7
    %v3832 = vrot.slane %v3827, 6
    %v3833 = vsel %vm402, %v3807, %v3831
    %v3834 = vsel %vm406, %v3833, %v3832
    %v3836 = vmul.f32 %v3723, %v3834
    %v3838 = vperm.slane %v3836, 0
    %v3839 = vperm.slane %v3836, 1
    %v3840 = vperm.slane %v3836, 2
    %v3844 = vmul.f32 %v3753, %v3838
    %v3845 = vmul.f32 %v3754, %v3839
    %v3846 = vmul.f32 %v3755, %v3840
    %v3850 = vrot.slane %v3845, 7
    %v3851 = vrot.slane %v3846, 6
    %v3852 = vsel %vm402, %v3844, %v3850
    %v3853 = vsel %vm406, %v3852, %v3851
    %v3855 = vsub.f32 %v3724, %v3853
    %v3856 = vmul.f32 %v3717, %v3838
    %v3857 = vmul.f32 %v3718, %v3839
    %v3858 = vmul.f32 %v3719, %v3840
    %v3859 = vmul.f32 %v3720, %v3838
    %v3860 = vmul.f32 %v3721, %v3839
    %v3861 = vmul.f32 %v3722, %v3840
    %v3863 = vperm.slane %v3855, 0
    %v3864 = vperm.slane %v3855, 1
    %v3865 = vperm.slane %v3855, 2
    %v3869 = vadd.f32 %v3856, %v3863
    %v3870 = vadd.f32 %v3857, %v3864
    %v3871 = vadd.f32 %v3858, %v3865
    %v3872 = vadd.f32 %v3859, %v3863
    %v3873 = vadd.f32 %v3860, %v3864
    %v3874 = vadd.f32 %v3861, %v3865
    %v3875 = vmax.f32 %v3869, 0.0
    %v3876 = vmax.f32 %v3870, 0.0
    %v3877 = vmax.f32 %v3871, 0.0
    %v3878 = vmax.f32 %v3872, 0.0
    %v3879 = vmax.f32 %v3873, 0.0
    %v3880 = vmax.f32 %v3874, 0.0
    %v3881 = vpack.c.bf16 %v3878, %v3875
    %v3882 = vpack.c.bf16 %v3879, %v3876
    %v3883 = vpack.c.bf16 %v3880, %v3877
    %v3884 = vld [vmem:[#allocation5] sm:$0xff]
    %v3885 = vld [vmem:[#allocation5 + $0x8] sm:$0xff]
    %v3886 = vld [vmem:[#allocation5 + $0x10] sm:$0xff]
    %v3887 = vld [vmem:[#allocation5 + $0x18] sm:$0xff]
    %v3888 = vld [vmem:[#allocation5 + $0x20] sm:$0xff]
    %v3889 = vld [vmem:[#allocation5 + $0x28] sm:$0xff]
    %v3890 = vld [vmem:[#allocation5 + $0x30] sm:$0xff]
    %v3891 = vld [vmem:[#allocation5 + $0x38] sm:$0xff]
    %v3892 = vld [vmem:[#allocation5 + $0x40] sm:$0xff]
    %v3893 = vld [vmem:[#allocation5 + $0x48] sm:$0xff]
    %v3894 = vld [vmem:[#allocation5 + $0x50] sm:$0xff]
    %v3895 = vld [vmem:[#allocation5 + $0x58] sm:$0xff]
    %v3896 = vld [vmem:[#allocation5 + $0x60] sm:$0xff]
    %v3897 = vld [vmem:[#allocation5 + $0x68] sm:$0xff]
    %v3898 = vld [vmem:[#allocation5 + $0x70] sm:$0xff]
    %v3899 = vld [vmem:[#allocation5 + $0x78] sm:$0xff]
    %v3900 = vld [vmem:[#allocation5 + $0x80] sm:$0xff]
    %v3901 = vld [vmem:[#allocation5 + $0x88] sm:$0xff]
    %v3902 = vld [vmem:[#allocation5 + $0x90] sm:$0xff]
    %v3903 = vld [vmem:[#allocation5 + $0x98] sm:$0xff]
    %v3904 = vld [vmem:[#allocation5 + $0xa0] sm:$0xff]
    %v3905 = vld [vmem:[#allocation5 + $0xa8] sm:$0xff]
    %v3906 = vld [vmem:[#allocation5 + $0xb0] sm:$0xff]
    %v3907 = vld [vmem:[#allocation5 + $0xb8] sm:$0xff]
    %v3908 = vld [vmem:[#allocation5 + $0xc0] sm:$0xff]
    %v3909 = vld [vmem:[#allocation5 + $0xc8] sm:$0xff]
    %v3910 = vld [vmem:[#allocation5 + $0xd0] sm:$0xff]
    %v3911 = vld [vmem:[#allocation5 + $0xd8] sm:$0xff]
    %v3912 = vld [vmem:[#allocation5 + $0xe0] sm:$0xff]
    %v3913 = vld [vmem:[#allocation5 + $0xe8] sm:$0xff]
    %v3914 = vld [vmem:[#allocation5 + $0xf0] sm:$0xff]
    %v3915 = vld [vmem:[#allocation5 + $0xf8] sm:$0xff]
    %v3916 = vld [vmem:[#allocation5 + $0x100] sm:$0xff]
    %v3917 = vld [vmem:[#allocation5 + $0x108] sm:$0xff]
    %v3918 = vld [vmem:[#allocation5 + $0x110] sm:$0xff]
    %v3919 = vld [vmem:[#allocation5 + $0x118] sm:$0xff]
    %v3920 = vld [vmem:[#allocation5 + $0x120] sm:$0xff]
    %v3921 = vld [vmem:[#allocation5 + $0x128] sm:$0xff]
    %v3922 = vld [vmem:[#allocation5 + $0x130] sm:$0xff]
    %v3923 = vld [vmem:[#allocation5 + $0x138] sm:$0xff]
    %v3924 = vld [vmem:[#allocation5 + $0x140] sm:$0xff]
    %v3925 = vld [vmem:[#allocation5 + $0x148] sm:$0xff]
    %v3926 = vld [vmem:[#allocation5 + $0x150] sm:$0xff]
    %v3927 = vld [vmem:[#allocation5 + $0x158] sm:$0xff]
    %v3928 = vld [vmem:[#allocation5 + $0x160] sm:$0xff]
    %v3929 = vld [vmem:[#allocation5 + $0x168] sm:$0xff]
    %v3930 = vld [vmem:[#allocation5 + $0x170] sm:$0xff]
    %v3931 = vld [vmem:[#allocation5 + $0x178] sm:$0xff]
    %v3932 = vld [vmem:[#allocation5 + $0x180] sm:$0xff]
    %v3933 = vld [vmem:[#allocation5 + $0x188] sm:$0xff]
    %v3934 = vld [vmem:[#allocation5 + $0x190] sm:$0xff]
    %v3935 = vld [vmem:[#allocation5 + $0x198] sm:$0xff]
    %v3936 = vld [vmem:[#allocation5 + $0x1a0] sm:$0xff]
    %v3937 = vld [vmem:[#allocation5 + $0x1a8] sm:$0xff]
    %v3938 = vld [vmem:[#allocation5 + $0x1b0] sm:$0xff]
    %v3939 = vld [vmem:[#allocation5 + $0x1b8] sm:$0xff]
    %v3940 = vld [vmem:[#allocation5 + $0x1c0] sm:$0xff]
    %v3941 = vld [vmem:[#allocation5 + $0x1c8] sm:$0xff]
    %v3942 = vld [vmem:[#allocation5 + $0x1d0] sm:$0xff]
    %v3943 = vld [vmem:[#allocation5 + $0x1d8] sm:$0xff]
    %v3944 = vld [vmem:[#allocation5 + $0x1e0] sm:$0xff]
    %v3945 = vld [vmem:[#allocation5 + $0x1e8] sm:$0xff]
    %v3946 = vld [vmem:[#allocation5 + $0x1f0] sm:$0xff]
    %v3947 = vld [vmem:[#allocation5 + $0x1f8] sm:$0xff]
    %v3948 = vld [vmem:[#allocation5 + $0x200] sm:$0xff]
    %v3949 = vld [vmem:[#allocation5 + $0x208] sm:$0xff]
    %v3950 = vld [vmem:[#allocation5 + $0x210] sm:$0xff]
    %v3951 = vld [vmem:[#allocation5 + $0x218] sm:$0xff]
    %v3952 = vld [vmem:[#allocation5 + $0x220] sm:$0xff]
    %v3953 = vld [vmem:[#allocation5 + $0x228] sm:$0xff]
    %v3954 = vld [vmem:[#allocation5 + $0x230] sm:$0xff]
    %v3955 = vld [vmem:[#allocation5 + $0x238] sm:$0xff]
    %v3956 = vld [vmem:[#allocation5 + $0x240] sm:$0xff]
    %v3957 = vld [vmem:[#allocation5 + $0x248] sm:$0xff]
    %v3958 = vld [vmem:[#allocation5 + $0x250] sm:$0xff]
    %v3959 = vld [vmem:[#allocation5 + $0x258] sm:$0xff]
    %v3960 = vld [vmem:[#allocation5 + $0x260] sm:$0xff]
    %v3961 = vld [vmem:[#allocation5 + $0x268] sm:$0xff]
    %v3962 = vld [vmem:[#allocation5 + $0x270] sm:$0xff]
    %v3963 = vld [vmem:[#allocation5 + $0x278] sm:$0xff]
    %v3964 = vld [vmem:[#allocation5 + $0x280] sm:$0xff]
    %v3965 = vld [vmem:[#allocation5 + $0x288] sm:$0xff]
    %v3966 = vld [vmem:[#allocation5 + $0x290] sm:$0xff]
    %v3967 = vld [vmem:[#allocation5 + $0x298] sm:$0xff]
    %v3968 = vld [vmem:[#allocation5 + $0x2a0] sm:$0xff]
    %v3969 = vld [vmem:[#allocation5 + $0x2a8] sm:$0xff]
    %v3970 = vld [vmem:[#allocation5 + $0x2b0] sm:$0xff]
    %v3971 = vld [vmem:[#allocation5 + $0x2b8] sm:$0xff]
    %v3972 = vld [vmem:[#allocation5 + $0x2c0] sm:$0xff]
    %v3973 = vld [vmem:[#allocation5 + $0x2c8] sm:$0xff]
    %v3974 = vld [vmem:[#allocation5 + $0x2d0] sm:$0xff]
    %v3975 = vld [vmem:[#allocation5 + $0x2d8] sm:$0xff]
    %v3976 = vld [vmem:[#allocation5 + $0x2e0] sm:$0xff]
    %v3977 = vld [vmem:[#allocation5 + $0x2e8] sm:$0xff]
    %v3978 = vld [vmem:[#allocation5 + $0x2f0] sm:$0xff]
    %v3979 = vld [vmem:[#allocation5 + $0x2f8] sm:$0xff]
    %v3980 = vld [vmem:[#allocation5 + $0x300] sm:$0xff]
    %v3981 = vld [vmem:[#allocation5 + $0x308] sm:$0xff]
    %v3982 = vld [vmem:[#allocation5 + $0x310] sm:$0xff]
    %v3983 = vld [vmem:[#allocation5 + $0x318] sm:$0xff]
    %v3984 = vld [vmem:[#allocation5 + $0x320] sm:$0xff]
    %v3985 = vld [vmem:[#allocation5 + $0x328] sm:$0xff]
    %v3986 = vld [vmem:[#allocation5 + $0x330] sm:$0xff]
    %v3987 = vld [vmem:[#allocation5 + $0x338] sm:$0xff]
    %v3988 = vld [vmem:[#allocation5 + $0x340] sm:$0xff]
    %v3989 = vld [vmem:[#allocation5 + $0x348] sm:$0xff]
    %v3990 = vld [vmem:[#allocation5 + $0x350] sm:$0xff]
    %v3991 = vld [vmem:[#allocation5 + $0x358] sm:$0xff]
    %v3992 = vld [vmem:[#allocation5 + $0x360] sm:$0xff]
    %v3993 = vld [vmem:[#allocation5 + $0x368] sm:$0xff]
    %v3994 = vld [vmem:[#allocation5 + $0x370] sm:$0xff]
    %v3995 = vld [vmem:[#allocation5 + $0x378] sm:$0xff]
    %v3996 = vld [vmem:[#allocation5 + $0x380] sm:$0xff]
    %v3997 = vld [vmem:[#allocation5 + $0x388] sm:$0xff]
    %v3998 = vld [vmem:[#allocation5 + $0x390] sm:$0xff]
    %v3999 = vld [vmem:[#allocation5 + $0x398] sm:$0xff]
    %v4000 = vld [vmem:[#allocation5 + $0x3a0] sm:$0xff]
    %v4001 = vld [vmem:[#allocation5 + $0x3a8] sm:$0xff]
    %v4002 = vld [vmem:[#allocation5 + $0x3b0] sm:$0xff]
    %v4003 = vld [vmem:[#allocation5 + $0x3b8] sm:$0xff]
    %v4004 = vld [vmem:[#allocation5 + $0x3c0] sm:$0xff]
    %v4005 = vld [vmem:[#allocation5 + $0x3c8] sm:$0xff]
    %v4006 = vld [vmem:[#allocation5 + $0x3d0] sm:$0xff]
    %v4007 = vld [vmem:[#allocation5 + $0x3d8] sm:$0xff]
    %v4008 = vld [vmem:[#allocation5 + $0x3e0] sm:$0xff]
    %v4009 = vld [vmem:[#allocation5 + $0x3e8] sm:$0xff]
    %v4010 = vld [vmem:[#allocation5 + $0x3f0] sm:$0xff]
    %v4011 = vld [vmem:[#allocation5 + $0x3f8] sm:$0xff]
    %v4012 = vld [vmem:[#allocation5 + $0x400] sm:$0xff]
    %v4013 = vld [vmem:[#allocation5 + $0x408] sm:$0xff]
    %v4014 = vld [vmem:[#allocation5 + $0x410] sm:$0xff]
    %v4015 = vld [vmem:[#allocation5 + $0x418] sm:$0xff]
    %v4016 = vld [vmem:[#allocation5 + $0x420] sm:$0xff]
    %v4017 = vld [vmem:[#allocation5 + $0x428] sm:$0xff]
    %v4018 = vld [vmem:[#allocation5 + $0x430] sm:$0xff]
    %v4019 = vld [vmem:[#allocation5 + $0x438] sm:$0xff]
    %v4020 = vld [vmem:[#allocation5 + $0x440] sm:$0xff]
    %v4021 = vld [vmem:[#allocation5 + $0x448] sm:$0xff]
    %v4022 = vld [vmem:[#allocation5 + $0x450] sm:$0xff]
    %v4023 = vld [vmem:[#allocation5 + $0x458] sm:$0xff]
    %v4024 = vld [vmem:[#allocation5 + $0x460] sm:$0xff]
    %v4025 = vld [vmem:[#allocation5 + $0x468] sm:$0xff]
    %v4026 = vld [vmem:[#allocation5 + $0x470] sm:$0xff]
    %v4027 = vld [vmem:[#allocation5 + $0x478] sm:$0xff]
    %v4028 = vld [vmem:[#allocation5 + $0x480] sm:$0xff]
    %v4029 = vld [vmem:[#allocation5 + $0x488] sm:$0xff]
    %v4030 = vld [vmem:[#allocation5 + $0x490] sm:$0xff]
    %v4031 = vld [vmem:[#allocation5 + $0x498] sm:$0xff]
    %v4032 = vld [vmem:[#allocation5 + $0x4a0] sm:$0xff]
    %v4033 = vld [vmem:[#allocation5 + $0x4a8] sm:$0xff]
    %v4034 = vld [vmem:[#allocation5 + $0x4b0] sm:$0xff]
    %v4035 = vld [vmem:[#allocation5 + $0x4b8] sm:$0xff]
    %v4036 = vld [vmem:[#allocation5 + $0x4c0] sm:$0xff]
    %v4037 = vld [vmem:[#allocation5 + $0x4c8] sm:$0xff]
    %v4038 = vld [vmem:[#allocation5 + $0x4d0] sm:$0xff]
    %v4039 = vld [vmem:[#allocation5 + $0x4d8] sm:$0xff]
    %v4040 = vld [vmem:[#allocation5 + $0x4e0] sm:$0xff]
    %v4041 = vld [vmem:[#allocation5 + $0x4e8] sm:$0xff]
    %v4042 = vld [vmem:[#allocation5 + $0x4f0] sm:$0xff]
    %v4043 = vld [vmem:[#allocation5 + $0x4f8] sm:$0xff]
    %v4044 = vld [vmem:[#allocation5 + $0x500] sm:$0xff]
    %v4045 = vld [vmem:[#allocation5 + $0x508] sm:$0xff]
    %v4046 = vld [vmem:[#allocation5 + $0x510] sm:$0xff]
    %v4047 = vld [vmem:[#allocation5 + $0x518] sm:$0xff]
    %v4048 = vld [vmem:[#allocation5 + $0x520] sm:$0xff]
    %v4049 = vld [vmem:[#allocation5 + $0x528] sm:$0xff]
    %v4050 = vld [vmem:[#allocation5 + $0x530] sm:$0xff]
    %v4051 = vld [vmem:[#allocation5 + $0x538] sm:$0xff]
    %v4052 = vld [vmem:[#allocation5 + $0x540] sm:$0xff]
    %v4053 = vld [vmem:[#allocation5 + $0x548] sm:$0xff]
    %v4054 = vld [vmem:[#allocation5 + $0x550] sm:$0xff]
    %v4055 = vld [vmem:[#allocation5 + $0x558] sm:$0xff]
    %v4056 = vld [vmem:[#allocation5 + $0x560] sm:$0xff]
    %v4057 = vld [vmem:[#allocation5 + $0x568] sm:$0xff]
    %v4058 = vld [vmem:[#allocation5 + $0x570] sm:$0xff]
    %v4059 = vld [vmem:[#allocation5 + $0x578] sm:$0xff]
    %v4060 = vld [vmem:[#allocation5 + $0x580] sm:$0xff]
    %v4061 = vld [vmem:[#allocation5 + $0x588] sm:$0xff]
    %v4062 = vld [vmem:[#allocation5 + $0x590] sm:$0xff]
    %v4063 = vld [vmem:[#allocation5 + $0x598] sm:$0xff]
    %v4064 = vld [vmem:[#allocation5 + $0x5a0] sm:$0xff]
    %v4065 = vld [vmem:[#allocation5 + $0x5a8] sm:$0xff]
    %v4066 = vld [vmem:[#allocation5 + $0x5b0] sm:$0xff]
    %v4067 = vld [vmem:[#allocation5 + $0x5b8] sm:$0xff]
    %v4068 = vld [vmem:[#allocation5 + $0x5c0] sm:$0xff]
    %v4069 = vld [vmem:[#allocation5 + $0x5c8] sm:$0xff]
    %v4070 = vld [vmem:[#allocation5 + $0x5d0] sm:$0xff]
    %v4071 = vld [vmem:[#allocation5 + $0x5d8] sm:$0xff]
    %v4072 = vld [vmem:[#allocation5 + $0x5e0] sm:$0xff]
    %v4073 = vld [vmem:[#allocation5 + $0x5e8] sm:$0xff]
    %v4074 = vld [vmem:[#allocation5 + $0x5f0] sm:$0xff]
    %v4075 = vld [vmem:[#allocation5 + $0x5f8] sm:$0xff]
    %v4268 = vunpack.c.l.b16 %v3884
    %v4269 = vunpack.c.h.b16 %v3884
    %v4270 = vunpack.c.l.b16 %v3885
    %v4271 = vunpack.c.h.b16 %v3885
    %v4272 = vunpack.c.l.b16 %v3886
    %v4273 = vunpack.c.h.b16 %v3886
    %v4274 = vunpack.c.l.b16 %v3887
    %v4275 = vunpack.c.h.b16 %v3887
    %v4276 = vunpack.c.l.b16 %v3888
    %v4277 = vunpack.c.h.b16 %v3888
    %v4278 = vunpack.c.l.b16 %v3889
    %v4279 = vunpack.c.h.b16 %v3889
    %v4280 = vunpack.c.l.b16 %v3890
    %v4281 = vunpack.c.h.b16 %v3890
    %v4282 = vunpack.c.l.b16 %v3891
    %v4283 = vunpack.c.h.b16 %v3891
    %v4284 = vunpack.c.l.b16 %v3892
    %v4285 = vunpack.c.h.b16 %v3892
    %v4286 = vunpack.c.l.b16 %v3893
    %v4287 = vunpack.c.h.b16 %v3893
    %v4288 = vunpack.c.l.b16 %v3894
    %v4289 = vunpack.c.h.b16 %v3894
    %v4290 = vunpack.c.l.b16 %v3895
    %v4291 = vunpack.c.h.b16 %v3895
    %v4292 = vunpack.c.l.b16 %v3896
    %v4293 = vunpack.c.h.b16 %v3896
    %v4294 = vunpack.c.l.b16 %v3897
    %v4295 = vunpack.c.h.b16 %v3897
    %v4296 = vunpack.c.l.b16 %v3898
    %v4297 = vunpack.c.h.b16 %v3898
    %v4298 = vunpack.c.l.b16 %v3899
    %v4299 = vunpack.c.h.b16 %v3899
    %v4300 = vunpack.c.l.b16 %v3900
    %v4301 = vunpack.c.h.b16 %v3900
    %v4302 = vunpack.c.l.b16 %v3901
    %v4303 = vunpack.c.h.b16 %v3901
    %v4304 = vunpack.c.l.b16 %v3902
    %v4305 = vunpack.c.h.b16 %v3902
    %v4306 = vunpack.c.l.b16 %v3903
    %v4307 = vunpack.c.h.b16 %v3903
    %v4308 = vunpack.c.l.b16 %v3904
    %v4309 = vunpack.c.h.b16 %v3904
    %v4310 = vunpack.c.l.b16 %v3905
    %v4311 = vunpack.c.h.b16 %v3905
    %v4312 = vunpack.c.l.b16 %v3906
    %v4313 = vunpack.c.h.b16 %v3906
    %v4314 = vunpack.c.l.b16 %v3907
    %v4315 = vunpack.c.h.b16 %v3907
    %v4316 = vunpack.c.l.b16 %v3908
    %v4317 = vunpack.c.h.b16 %v3908
    %v4318 = vunpack.c.l.b16 %v3909
    %v4319 = vunpack.c.h.b16 %v3909
    %v4320 = vunpack.c.l.b16 %v3910
    %v4321 = vunpack.c.h.b16 %v3910
    %v4322 = vunpack.c.l.b16 %v3911
    %v4323 = vunpack.c.h.b16 %v3911
    %v4324 = vunpack.c.l.b16 %v3912
    %v4325 = vunpack.c.h.b16 %v3912
    %v4326 = vunpack.c.l.b16 %v3913
    %v4327 = vunpack.c.h.b16 %v3913
    %v4328 = vunpack.c.l.b16 %v3914
    %v4329 = vunpack.c.h.b16 %v3914
    %v4330 = vunpack.c.l.b16 %v3915
    %v4331 = vunpack.c.h.b16 %v3915
    %v4332 = vunpack.c.l.b16 %v3916
    %v4333 = vunpack.c.h.b16 %v3916
    %v4334 = vunpack.c.l.b16 %v3917
    %v4335 = vunpack.c.h.b16 %v3917
    %v4336 = vunpack.c.l.b16 %v3918
    %v4337 = vunpack.c.h.b16 %v3918
    %v4338 = vunpack.c.l.b16 %v3919
    %v4339 = vunpack.c.h.b16 %v3919
    %v4340 = vunpack.c.l.b16 %v3920
    %v4341 = vunpack.c.h.b16 %v3920
    %v4342 = vunpack.c.l.b16 %v3921
    %v4343 = vunpack.c.h.b16 %v3921
    %v4344 = vunpack.c.l.b16 %v3922
    %v4345 = vunpack.c.h.b16 %v3922
    %v4346 = vunpack.c.l.b16 %v3923
    %v4347 = vunpack.c.h.b16 %v3923
    %v4348 = vunpack.c.l.b16 %v3924
    %v4349 = vunpack.c.h.b16 %v3924
    %v4350 = vunpack.c.l.b16 %v3925
    %v4351 = vunpack.c.h.b16 %v3925
    %v4352 = vunpack.c.l.b16 %v3926
    %v4353 = vunpack.c.h.b16 %v3926
    %v4354 = vunpack.c.l.b16 %v3927
    %v4355 = vunpack.c.h.b16 %v3927
    %v4356 = vunpack.c.l.b16 %v3928
    %v4357 = vunpack.c.h.b16 %v3928
    %v4358 = vunpack.c.l.b16 %v3929
    %v4359 = vunpack.c.h.b16 %v3929
    %v4360 = vunpack.c.l.b16 %v3930
    %v4361 = vunpack.c.h.b16 %v3930
    %v4362 = vunpack.c.l.b16 %v3931
    %v4363 = vunpack.c.h.b16 %v3931
    %v4364 = vunpack.c.l.b16 %v3932
    %v4365 = vunpack.c.h.b16 %v3932
    %v4366 = vunpack.c.l.b16 %v3933
    %v4367 = vunpack.c.h.b16 %v3933
    %v4368 = vunpack.c.l.b16 %v3934
    %v4369 = vunpack.c.h.b16 %v3934
    %v4370 = vunpack.c.l.b16 %v3935
    %v4371 = vunpack.c.h.b16 %v3935
    %v4372 = vunpack.c.l.b16 %v3936
    %v4373 = vunpack.c.h.b16 %v3936
    %v4374 = vunpack.c.l.b16 %v3937
    %v4375 = vunpack.c.h.b16 %v3937
    %v4376 = vunpack.c.l.b16 %v3938
    %v4377 = vunpack.c.h.b16 %v3938
    %v4378 = vunpack.c.l.b16 %v3939
    %v4379 = vunpack.c.h.b16 %v3939
    %v4380 = vunpack.c.l.b16 %v3940
    %v4381 = vunpack.c.h.b16 %v3940
    %v4382 = vunpack.c.l.b16 %v3941
    %v4383 = vunpack.c.h.b16 %v3941
    %v4384 = vunpack.c.l.b16 %v3942
    %v4385 = vunpack.c.h.b16 %v3942
    %v4386 = vunpack.c.l.b16 %v3943
    %v4387 = vunpack.c.h.b16 %v3943
    %v4388 = vunpack.c.l.b16 %v3944
    %v4389 = vunpack.c.h.b16 %v3944
    %v4390 = vunpack.c.l.b16 %v3945
    %v4391 = vunpack.c.h.b16 %v3945
    %v4392 = vunpack.c.l.b16 %v3946
    %v4393 = vunpack.c.h.b16 %v3946
    %v4394 = vunpack.c.l.b16 %v3947
    %v4395 = vunpack.c.h.b16 %v3947
    %v4396 = vunpack.c.l.b16 %v3948
    %v4397 = vunpack.c.h.b16 %v3948
    %v4398 = vunpack.c.l.b16 %v3949
    %v4399 = vunpack.c.h.b16 %v3949
    %v4400 = vunpack.c.l.b16 %v3950
    %v4401 = vunpack.c.h.b16 %v3950
    %v4402 = vunpack.c.l.b16 %v3951
    %v4403 = vunpack.c.h.b16 %v3951
    %v4404 = vunpack.c.l.b16 %v3952
    %v4405 = vunpack.c.h.b16 %v3952
    %v4406 = vunpack.c.l.b16 %v3953
    %v4407 = vunpack.c.h.b16 %v3953
    %v4408 = vunpack.c.l.b16 %v3954
    %v4409 = vunpack.c.h.b16 %v3954
    %v4410 = vunpack.c.l.b16 %v3955
    %v4411 = vunpack.c.h.b16 %v3955
    %v4412 = vunpack.c.l.b16 %v3956
    %v4413 = vunpack.c.h.b16 %v3956
    %v4414 = vunpack.c.l.b16 %v3957
    %v4415 = vunpack.c.h.b16 %v3957
    %v4416 = vunpack.c.l.b16 %v3958
    %v4417 = vunpack.c.h.b16 %v3958
    %v4418 = vunpack.c.l.b16 %v3959
    %v4419 = vunpack.c.h.b16 %v3959
    %v4420 = vunpack.c.l.b16 %v3960
    %v4421 = vunpack.c.h.b16 %v3960
    %v4422 = vunpack.c.l.b16 %v3961
    %v4423 = vunpack.c.h.b16 %v3961
    %v4424 = vunpack.c.l.b16 %v3962
    %v4425 = vunpack.c.h.b16 %v3962
    %v4426 = vunpack.c.l.b16 %v3963
    %v4427 = vunpack.c.h.b16 %v3963
    %v4428 = vunpack.c.l.b16 %v3964
    %v4429 = vunpack.c.h.b16 %v3964
    %v4430 = vunpack.c.l.b16 %v3965
    %v4431 = vunpack.c.h.b16 %v3965
    %v4432 = vunpack.c.l.b16 %v3966
    %v4433 = vunpack.c.h.b16 %v3966
    %v4434 = vunpack.c.l.b16 %v3967
    %v4435 = vunpack.c.h.b16 %v3967
    %v4436 = vunpack.c.l.b16 %v3968
    %v4437 = vunpack.c.h.b16 %v3968
    %v4438 = vunpack.c.l.b16 %v3969
    %v4439 = vunpack.c.h.b16 %v3969
    %v4440 = vunpack.c.l.b16 %v3970
    %v4441 = vunpack.c.h.b16 %v3970
    %v4442 = vunpack.c.l.b16 %v3971
    %v4443 = vunpack.c.h.b16 %v3971
    %v4444 = vunpack.c.l.b16 %v3972
    %v4445 = vunpack.c.h.b16 %v3972
    %v4446 = vunpack.c.l.b16 %v3973
    %v4447 = vunpack.c.h.b16 %v3973
    %v4448 = vunpack.c.l.b16 %v3974
    %v4449 = vunpack.c.h.b16 %v3974
    %v4450 = vunpack.c.l.b16 %v3975
    %v4451 = vunpack.c.h.b16 %v3975
    %v4452 = vunpack.c.l.b16 %v3976
    %v4453 = vunpack.c.h.b16 %v3976
    %v4454 = vunpack.c.l.b16 %v3977
    %v4455 = vunpack.c.h.b16 %v3977
    %v4456 = vunpack.c.l.b16 %v3978
    %v4457 = vunpack.c.h.b16 %v3978
    %v4458 = vunpack.c.l.b16 %v3979
    %v4459 = vunpack.c.h.b16 %v3979
    %v4460 = vunpack.c.l.b16 %v3980
    %v4461 = vunpack.c.h.b16 %v3980
    %v4462 = vunpack.c.l.b16 %v3981
    %v4463 = vunpack.c.h.b16 %v3981
    %v4464 = vunpack.c.l.b16 %v3982
    %v4465 = vunpack.c.h.b16 %v3982
    %v4466 = vunpack.c.l.b16 %v3983
    %v4467 = vunpack.c.h.b16 %v3983
    %v4468 = vunpack.c.l.b16 %v3984
    %v4469 = vunpack.c.h.b16 %v3984
    %v4470 = vunpack.c.l.b16 %v3985
    %v4471 = vunpack.c.h.b16 %v3985
    %v4472 = vunpack.c.l.b16 %v3986
    %v4473 = vunpack.c.h.b16 %v3986
    %v4474 = vunpack.c.l.b16 %v3987
    %v4475 = vunpack.c.h.b16 %v3987
    %v4476 = vunpack.c.l.b16 %v3988
    %v4477 = vunpack.c.h.b16 %v3988
    %v4478 = vunpack.c.l.b16 %v3989
    %v4479 = vunpack.c.h.b16 %v3989
    %v4480 = vunpack.c.l.b16 %v3990
    %v4481 = vunpack.c.h.b16 %v3990
    %v4482 = vunpack.c.l.b16 %v3991
    %v4483 = vunpack.c.h.b16 %v3991
    %v4484 = vunpack.c.l.b16 %v3992
    %v4485 = vunpack.c.h.b16 %v3992
    %v4486 = vunpack.c.l.b16 %v3993
    %v4487 = vunpack.c.h.b16 %v3993
    %v4488 = vunpack.c.l.b16 %v3994
    %v4489 = vunpack.c.h.b16 %v3994
    %v4490 = vunpack.c.l.b16 %v3995
    %v4491 = vunpack.c.h.b16 %v3995
    %v4492 = vunpack.c.l.b16 %v3996
    %v4493 = vunpack.c.h.b16 %v3996
    %v4494 = vunpack.c.l.b16 %v3997
    %v4495 = vunpack.c.h.b16 %v3997
    %v4496 = vunpack.c.l.b16 %v3998
    %v4497 = vunpack.c.h.b16 %v3998
    %v4498 = vunpack.c.l.b16 %v3999
    %v4499 = vunpack.c.h.b16 %v3999
    %v4500 = vunpack.c.l.b16 %v4000
    %v4501 = vunpack.c.h.b16 %v4000
    %v4502 = vunpack.c.l.b16 %v4001
    %v4503 = vunpack.c.h.b16 %v4001
    %v4504 = vunpack.c.l.b16 %v4002
    %v4505 = vunpack.c.h.b16 %v4002
    %v4506 = vunpack.c.l.b16 %v4003
    %v4507 = vunpack.c.h.b16 %v4003
    %v4508 = vunpack.c.l.b16 %v4004
    %v4509 = vunpack.c.h.b16 %v4004
    %v4510 = vunpack.c.l.b16 %v4005
    %v4511 = vunpack.c.h.b16 %v4005
    %v4512 = vunpack.c.l.b16 %v4006
    %v4513 = vunpack.c.h.b16 %v4006
    %v4514 = vunpack.c.l.b16 %v4007
    %v4515 = vunpack.c.h.b16 %v4007
    %v4516 = vunpack.c.l.b16 %v4008
    %v4517 = vunpack.c.h.b16 %v4008
    %v4518 = vunpack.c.l.b16 %v4009
    %v4519 = vunpack.c.h.b16 %v4009
    %v4520 = vunpack.c.l.b16 %v4010
    %v4521 = vunpack.c.h.b16 %v4010
    %v4522 = vunpack.c.l.b16 %v4011
    %v4523 = vunpack.c.h.b16 %v4011
    %v4524 = vunpack.c.l.b16 %v4012
    %v4525 = vunpack.c.h.b16 %v4012
    %v4526 = vunpack.c.l.b16 %v4013
    %v4527 = vunpack.c.h.b16 %v4013
    %v4528 = vunpack.c.l.b16 %v4014
    %v4529 = vunpack.c.h.b16 %v4014
    %v4530 = vunpack.c.l.b16 %v4015
    %v4531 = vunpack.c.h.b16 %v4015
    %v4532 = vunpack.c.l.b16 %v4016
    %v4533 = vunpack.c.h.b16 %v4016
    %v4534 = vunpack.c.l.b16 %v4017
    %v4535 = vunpack.c.h.b16 %v4017
    %v4536 = vunpack.c.l.b16 %v4018
    %v4537 = vunpack.c.h.b16 %v4018
    %v4538 = vunpack.c.l.b16 %v4019
    %v4539 = vunpack.c.h.b16 %v4019
    %v4540 = vunpack.c.l.b16 %v4020
    %v4541 = vunpack.c.h.b16 %v4020
    %v4542 = vunpack.c.l.b16 %v4021
    %v4543 = vunpack.c.h.b16 %v4021
    %v4544 = vunpack.c.l.b16 %v4022
    %v4545 = vunpack.c.h.b16 %v4022
    %v4546 = vunpack.c.l.b16 %v4023
    %v4547 = vunpack.c.h.b16 %v4023
    %v4548 = vunpack.c.l.b16 %v4024
    %v4549 = vunpack.c.h.b16 %v4024
    %v4550 = vunpack.c.l.b16 %v4025
    %v4551 = vunpack.c.h.b16 %v4025
    %v4552 = vunpack.c.l.b16 %v4026
    %v4553 = vunpack.c.h.b16 %v4026
    %v4554 = vunpack.c.l.b16 %v4027
    %v4555 = vunpack.c.h.b16 %v4027
    %v4556 = vunpack.c.l.b16 %v4028
    %v4557 = vunpack.c.h.b16 %v4028
    %v4558 = vunpack.c.l.b16 %v4029
    %v4559 = vunpack.c.h.b16 %v4029
    %v4560 = vunpack.c.l.b16 %v4030
    %v4561 = vunpack.c.h.b16 %v4030
    %v4562 = vunpack.c.l.b16 %v4031
    %v4563 = vunpack.c.h.b16 %v4031
    %v4564 = vunpack.c.l.b16 %v4032
    %v4565 = vunpack.c.h.b16 %v4032
    %v4566 = vunpack.c.l.b16 %v4033
    %v4567 = vunpack.c.h.b16 %v4033
    %v4568 = vunpack.c.l.b16 %v4034
    %v4569 = vunpack.c.h.b16 %v4034
    %v4570 = vunpack.c.l.b16 %v4035
    %v4571 = vunpack.c.h.b16 %v4035
    %v4572 = vunpack.c.l.b16 %v4036
    %v4573 = vunpack.c.h.b16 %v4036
    %v4574 = vunpack.c.l.b16 %v4037
    %v4575 = vunpack.c.h.b16 %v4037
    %v4576 = vunpack.c.l.b16 %v4038
    %v4577 = vunpack.c.h.b16 %v4038
    %v4578 = vunpack.c.l.b16 %v4039
    %v4579 = vunpack.c.h.b16 %v4039
    %v4580 = vunpack.c.l.b16 %v4040
    %v4581 = vunpack.c.h.b16 %v4040
    %v4582 = vunpack.c.l.b16 %v4041
    %v4583 = vunpack.c.h.b16 %v4041
    %v4584 = vunpack.c.l.b16 %v4042
    %v4585 = vunpack.c.h.b16 %v4042
    %v4586 = vunpack.c.l.b16 %v4043
    %v4587 = vunpack.c.h.b16 %v4043
    %v4588 = vunpack.c.l.b16 %v4044
    %v4589 = vunpack.c.h.b16 %v4044
    %v4590 = vunpack.c.l.b16 %v4045
    %v4591 = vunpack.c.h.b16 %v4045
    %v4592 = vunpack.c.l.b16 %v4046
    %v4593 = vunpack.c.h.b16 %v4046
    %v4594 = vunpack.c.l.b16 %v4047
    %v4595 = vunpack.c.h.b16 %v4047
    %v4596 = vunpack.c.l.b16 %v4048
    %v4597 = vunpack.c.h.b16 %v4048
    %v4598 = vunpack.c.l.b16 %v4049
    %v4599 = vunpack.c.h.b16 %v4049
    %v4600 = vunpack.c.l.b16 %v4050
    %v4601 = vunpack.c.h.b16 %v4050
    %v4602 = vunpack.c.l.b16 %v4051
    %v4603 = vunpack.c.h.b16 %v4051
    %v4604 = vunpack.c.l.b16 %v4052
    %v4605 = vunpack.c.h.b16 %v4052
    %v4606 = vunpack.c.l.b16 %v4053
    %v4607 = vunpack.c.h.b16 %v4053
    %v4608 = vunpack.c.l.b16 %v4054
    %v4609 = vunpack.c.h.b16 %v4054
    %v4610 = vunpack.c.l.b16 %v4055
    %v4611 = vunpack.c.h.b16 %v4055
    %v4612 = vunpack.c.l.b16 %v4056
    %v4613 = vunpack.c.h.b16 %v4056
    %v4614 = vunpack.c.l.b16 %v4057
    %v4615 = vunpack.c.h.b16 %v4057
    %v4616 = vunpack.c.l.b16 %v4058
    %v4617 = vunpack.c.h.b16 %v4058
    %v4618 = vunpack.c.l.b16 %v4059
    %v4619 = vunpack.c.h.b16 %v4059
    %v4620 = vunpack.c.l.b16 %v4060
    %v4621 = vunpack.c.h.b16 %v4060
    %v4622 = vunpack.c.l.b16 %v4061
    %v4623 = vunpack.c.h.b16 %v4061
    %v4624 = vunpack.c.l.b16 %v4062
    %v4625 = vunpack.c.h.b16 %v4062
    %v4626 = vunpack.c.l.b16 %v4063
    %v4627 = vunpack.c.h.b16 %v4063
    %v4628 = vunpack.c.l.b16 %v4064
    %v4629 = vunpack.c.h.b16 %v4064
    %v4630 = vunpack.c.l.b16 %v4065
    %v4631 = vunpack.c.h.b16 %v4065
    %v4632 = vunpack.c.l.b16 %v4066
    %v4633 = vunpack.c.h.b16 %v4066
    %v4634 = vunpack.c.l.b16 %v4067
    %v4635 = vunpack.c.h.b16 %v4067
    %v4636 = vunpack.c.l.b16 %v4068
    %v4637 = vunpack.c.h.b16 %v4068
    %v4638 = vunpack.c.l.b16 %v4069
    %v4639 = vunpack.c.h.b16 %v4069
    %v4640 = vunpack.c.l.b16 %v4070
    %v4641 = vunpack.c.h.b16 %v4070
    %v4642 = vunpack.c.l.b16 %v4071
    %v4643 = vunpack.c.h.b16 %v4071
    %v4644 = vunpack.c.l.b16 %v4072
    %v4645 = vunpack.c.h.b16 %v4072
    %v4646 = vunpack.c.l.b16 %v4073
    %v4647 = vunpack.c.h.b16 %v4073
    %v4648 = vunpack.c.l.b16 %v4074
    %v4649 = vunpack.c.h.b16 %v4074
    %v4650 = vunpack.c.l.b16 %v4075
    %v4651 = vunpack.c.h.b16 %v4075
    %v4652 = vpack.c.b16 %v4276, %v4268
    %v4653 = vpack.c.b16 %v4277, %v4269
    %v4654 = vpack.c.b16 %v4278, %v4270
    %v4655 = vpack.c.b16 %v4279, %v4271
    %v4656 = vpack.c.b16 %v4280, %v4272
    %v4657 = vpack.c.b16 %v4281, %v4273
    %v4658 = vpack.c.b16 %v4282, %v4274
    %v4659 = vpack.c.b16 %v4283, %v4275
    %v4660 = vpack.c.b16 %v4292, %v4284
    %v4661 = vpack.c.b16 %v4293, %v4285
    %v4662 = vpack.c.b16 %v4294, %v4286
    %v4663 = vpack.c.b16 %v4295, %v4287
    %v4664 = vpack.c.b16 %v4296, %v4288
    %v4665 = vpack.c.b16 %v4297, %v4289
    %v4666 = vpack.c.b16 %v4298, %v4290
    %v4667 = vpack.c.b16 %v4299, %v4291
    %v4668 = vpack.c.b16 %v4308, %v4300
    %v4669 = vpack.c.b16 %v4309, %v4301
    %v4670 = vpack.c.b16 %v4310, %v4302
    %v4671 = vpack.c.b16 %v4311, %v4303
    %v4672 = vpack.c.b16 %v4312, %v4304
    %v4673 = vpack.c.b16 %v4313, %v4305
    %v4674 = vpack.c.b16 %v4314, %v4306
    %v4675 = vpack.c.b16 %v4315, %v4307
    %v4676 = vpack.c.b16 %v4324, %v4316
    %v4677 = vpack.c.b16 %v4325, %v4317
    %v4678 = vpack.c.b16 %v4326, %v4318
    %v4679 = vpack.c.b16 %v4327, %v4319
    %v4680 = vpack.c.b16 %v4328, %v4320
    %v4681 = vpack.c.b16 %v4329, %v4321
    %v4682 = vpack.c.b16 %v4330, %v4322
    %v4683 = vpack.c.b16 %v4331, %v4323
    %v4684 = vpack.c.b16 %v4340, %v4332
    %v4685 = vpack.c.b16 %v4341, %v4333
    %v4686 = vpack.c.b16 %v4342, %v4334
    %v4687 = vpack.c.b16 %v4343, %v4335
    %v4688 = vpack.c.b16 %v4344, %v4336
    %v4689 = vpack.c.b16 %v4345, %v4337
    %v4690 = vpack.c.b16 %v4346, %v4338
    %v4691 = vpack.c.b16 %v4347, %v4339
    %v4692 = vpack.c.b16 %v4356, %v4348
    %v4693 = vpack.c.b16 %v4357, %v4349
    %v4694 = vpack.c.b16 %v4358, %v4350
    %v4695 = vpack.c.b16 %v4359, %v4351
    %v4696 = vpack.c.b16 %v4360, %v4352
    %v4697 = vpack.c.b16 %v4361, %v4353
    %v4698 = vpack.c.b16 %v4362, %v4354
    %v4699 = vpack.c.b16 %v4363, %v4355
    %v4700 = vpack.c.b16 %v4372, %v4364
    %v4701 = vpack.c.b16 %v4373, %v4365
    %v4702 = vpack.c.b16 %v4374, %v4366
    %v4703 = vpack.c.b16 %v4375, %v4367
    %v4704 = vpack.c.b16 %v4376, %v4368
    %v4705 = vpack.c.b16 %v4377, %v4369
    %v4706 = vpack.c.b16 %v4378, %v4370
    %v4707 = vpack.c.b16 %v4379, %v4371
    %v4708 = vpack.c.b16 %v4388, %v4380
    %v4709 = vpack.c.b16 %v4389, %v4381
    %v4710 = vpack.c.b16 %v4390, %v4382
    %v4711 = vpack.c.b16 %v4391, %v4383
    %v4712 = vpack.c.b16 %v4392, %v4384
    %v4713 = vpack.c.b16 %v4393, %v4385
    %v4714 = vpack.c.b16 %v4394, %v4386
    %v4715 = vpack.c.b16 %v4395, %v4387
    %v4716 = vpack.c.b16 %v4404, %v4396
    %v4717 = vpack.c.b16 %v4405, %v4397
    %v4718 = vpack.c.b16 %v4406, %v4398
    %v4719 = vpack.c.b16 %v4407, %v4399
    %v4720 = vpack.c.b16 %v4408, %v4400
    %v4721 = vpack.c.b16 %v4409, %v4401
    %v4722 = vpack.c.b16 %v4410, %v4402
    %v4723 = vpack.c.b16 %v4411, %v4403
    %v4724 = vpack.c.b16 %v4420, %v4412
    %v4725 = vpack.c.b16 %v4421, %v4413
    %v4726 = vpack.c.b16 %v4422, %v4414
    %v4727 = vpack.c.b16 %v4423, %v4415
    %v4728 = vpack.c.b16 %v4424, %v4416
    %v4729 = vpack.c.b16 %v4425, %v4417
    %v4730 = vpack.c.b16 %v4426, %v4418
    %v4731 = vpack.c.b16 %v4427, %v4419
    %v4732 = vpack.c.b16 %v4436, %v4428
    %v4733 = vpack.c.b16 %v4437, %v4429
    %v4734 = vpack.c.b16 %v4438, %v4430
    %v4735 = vpack.c.b16 %v4439, %v4431
    %v4736 = vpack.c.b16 %v4440, %v4432
    %v4737 = vpack.c.b16 %v4441, %v4433
    %v4738 = vpack.c.b16 %v4442, %v4434
    %v4739 = vpack.c.b16 %v4443, %v4435
    %v4740 = vpack.c.b16 %v4452, %v4444
    %v4741 = vpack.c.b16 %v4453, %v4445
    %v4742 = vpack.c.b16 %v4454, %v4446
    %v4743 = vpack.c.b16 %v4455, %v4447
    %v4744 = vpack.c.b16 %v4456, %v4448
    %v4745 = vpack.c.b16 %v4457, %v4449
    %v4746 = vpack.c.b16 %v4458, %v4450
    %v4747 = vpack.c.b16 %v4459, %v4451
    %v4748 = vpack.c.b16 %v4468, %v4460
    %v4749 = vpack.c.b16 %v4469, %v4461
    %v4750 = vpack.c.b16 %v4470, %v4462
    %v4751 = vpack.c.b16 %v4471, %v4463
    %v4752 = vpack.c.b16 %v4472, %v4464
    %v4753 = vpack.c.b16 %v4473, %v4465
    %v4754 = vpack.c.b16 %v4474, %v4466
    %v4755 = vpack.c.b16 %v4475, %v4467
    %v4756 = vpack.c.b16 %v4484, %v4476
    %v4757 = vpack.c.b16 %v4485, %v4477
    %v4758 = vpack.c.b16 %v4486, %v4478
    %v4759 = vpack.c.b16 %v4487, %v4479
    %v4760 = vpack.c.b16 %v4488, %v4480
    %v4761 = vpack.c.b16 %v4489, %v4481
    %v4762 = vpack.c.b16 %v4490, %v4482
    %v4763 = vpack.c.b16 %v4491, %v4483
    %v4764 = vpack.c.b16 %v4500, %v4492
    %v4765 = vpack.c.b16 %v4501, %v4493
    %v4766 = vpack.c.b16 %v4502, %v4494
    %v4767 = vpack.c.b16 %v4503, %v4495
    %v4768 = vpack.c.b16 %v4504, %v4496
    %v4769 = vpack.c.b16 %v4505, %v4497
    %v4770 = vpack.c.b16 %v4506, %v4498
    %v4771 = vpack.c.b16 %v4507, %v4499
    %v4772 = vpack.c.b16 %v4516, %v4508
    %v4773 = vpack.c.b16 %v4517, %v4509
    %v4774 = vpack.c.b16 %v4518, %v4510
    %v4775 = vpack.c.b16 %v4519, %v4511
    %v4776 = vpack.c.b16 %v4520, %v4512
    %v4777 = vpack.c.b16 %v4521, %v4513
    %v4778 = vpack.c.b16 %v4522, %v4514
    %v4779 = vpack.c.b16 %v4523, %v4515
    %v4780 = vpack.c.b16 %v4532, %v4524
    %v4781 = vpack.c.b16 %v4533, %v4525
    %v4782 = vpack.c.b16 %v4534, %v4526
    %v4783 = vpack.c.b16 %v4535, %v4527
    %v4784 = vpack.c.b16 %v4536, %v4528
    %v4785 = vpack.c.b16 %v4537, %v4529
    %v4786 = vpack.c.b16 %v4538, %v4530
    %v4787 = vpack.c.b16 %v4539, %v4531
    %v4788 = vpack.c.b16 %v4548, %v4540
    %v4789 = vpack.c.b16 %v4549, %v4541
    %v4790 = vpack.c.b16 %v4550, %v4542
    %v4791 = vpack.c.b16 %v4551, %v4543
    %v4792 = vpack.c.b16 %v4552, %v4544
    %v4793 = vpack.c.b16 %v4553, %v4545
    %v4794 = vpack.c.b16 %v4554, %v4546
    %v4795 = vpack.c.b16 %v4555, %v4547
    %v4796 = vpack.c.b16 %v4564, %v4556
    %v4797 = vpack.c.b16 %v4565, %v4557
    %v4798 = vpack.c.b16 %v4566, %v4558
    %v4799 = vpack.c.b16 %v4567, %v4559
    %v4800 = vpack.c.b16 %v4568, %v4560
    %v4801 = vpack.c.b16 %v4569, %v4561
    %v4802 = vpack.c.b16 %v4570, %v4562
    %v4803 = vpack.c.b16 %v4571, %v4563
    %v4804 = vpack.c.b16 %v4580, %v4572
    %v4805 = vpack.c.b16 %v4581, %v4573
    %v4806 = vpack.c.b16 %v4582, %v4574
    %v4807 = vpack.c.b16 %v4583, %v4575
    %v4808 = vpack.c.b16 %v4584, %v4576
    %v4809 = vpack.c.b16 %v4585, %v4577
    %v4810 = vpack.c.b16 %v4586, %v4578
    %v4811 = vpack.c.b16 %v4587, %v4579
    %v4812 = vpack.c.b16 %v4596, %v4588
    %v4813 = vpack.c.b16 %v4597, %v4589
    %v4814 = vpack.c.b16 %v4598, %v4590
    %v4815 = vpack.c.b16 %v4599, %v4591
    %v4816 = vpack.c.b16 %v4600, %v4592
    %v4817 = vpack.c.b16 %v4601, %v4593
    %v4818 = vpack.c.b16 %v4602, %v4594
    %v4819 = vpack.c.b16 %v4603, %v4595
    %v4820 = vpack.c.b16 %v4612, %v4604
    %v4821 = vpack.c.b16 %v4613, %v4605
    %v4822 = vpack.c.b16 %v4614, %v4606
    %v4823 = vpack.c.b16 %v4615, %v4607
    %v4824 = vpack.c.b16 %v4616, %v4608
    %v4825 = vpack.c.b16 %v4617, %v4609
    %v4826 = vpack.c.b16 %v4618, %v4610
    %v4827 = vpack.c.b16 %v4619, %v4611
    %v4828 = vpack.c.b16 %v4628, %v4620
    %v4829 = vpack.c.b16 %v4629, %v4621
    %v4830 = vpack.c.b16 %v4630, %v4622
    %v4831 = vpack.c.b16 %v4631, %v4623
    %v4832 = vpack.c.b16 %v4632, %v4624
    %v4833 = vpack.c.b16 %v4633, %v4625
    %v4834 = vpack.c.b16 %v4634, %v4626
    %v4835 = vpack.c.b16 %v4635, %v4627
    %v4836 = vpack.c.b16 %v4644, %v4636
    %v4837 = vpack.c.b16 %v4645, %v4637
    %v4838 = vpack.c.b16 %v4646, %v4638
    %v4839 = vpack.c.b16 %v4647, %v4639
    %v4840 = vpack.c.b16 %v4648, %v4640
    %v4841 = vpack.c.b16 %v4649, %v4641
    %v4842 = vpack.c.b16 %v4650, %v4642
    %v4843 = vpack.c.b16 %v4651, %v4643
    %5036 = vmatpush.bf16.msra.mxu0 %v4708
    %5037 = vmatpush.bf16.msra.mxu0 %v4700
    %5038 = vmatpush.bf16.msra.mxu0 %v4692
    %5039 = vmatpush.bf16.msra.mxu0 %v4684
    %5040 = vmatpush.bf16.msra.mxu0 %v4676
    %5041 = vmatpush.bf16.msra.mxu0 %v4668
    %5042 = vmatpush.bf16.msra.mxu0 %v4660
    %5043 = vmatpush.bf16.msra.mxu0 %v4652
    %5044 = vmatmul.bf16.gmra.mxu0 %v3881
    %v5045 = vpop.f32.mrf.mxu0
    %v5046 = vadd.f32 0.0, %v5045
    %v5047 = vpop.f32.mrf.mxu0
    %v5048 = vadd.f32 0.0, %v5047
    %5049 = vdwg.mxu0
    %5050 = vmatpush.bf16.msra.mxu0 %v4772
    %5051 = vmatpush.bf16.msra.mxu0 %v4764
    %5052 = vmatpush.bf16.msra.mxu0 %v4756
    %5053 = vmatpush.bf16.msra.mxu0 %v4748
    %5054 = vmatpush.bf16.msra.mxu0 %v4740
    %5055 = vmatpush.bf16.msra.mxu0 %v4732
    %5056 = vmatpush.bf16.msra.mxu0 %v4724
    %5057 = vmatpush.bf16.msra.mxu0 %v4716
    %5058 = vmatmul.bf16.gmra.mxu0 %v3882
    %v5059 = vpop.f32.mrf.mxu0
    %v5060 = vadd.f32 %v5046, %v5059
    %v5061 = vpop.f32.mrf.mxu0
    %v5062 = vadd.f32 %v5048, %v5061
    %5063 = vdwg.mxu0
    %5064 = vmatpush.bf16.msra.mxu0 %v4836
    %5065 = vmatpush.bf16.msra.mxu0 %v4828
    %5066 = vmatpush.bf16.msra.mxu0 %v4820
    %5067 = vmatpush.bf16.msra.mxu0 %v4812
    %5068 = vmatpush.bf16.msra.mxu0 %v4804
    %5069 = vmatpush.bf16.msra.mxu0 %v4796
    %5070 = vmatpush.bf16.msra.mxu0 %v4788
    %5071 = vmatpush.bf16.msra.mxu0 %v4780
    %5072 = vmatmul.bf16.gmra.mxu0 %v3883
    %v5073 = vpop.f32.mrf.mxu0
    %v5074 = vadd.f32 %v5060, %v5073
    %v5075 = vpop.f32.mrf.mxu0
    %v5076 = vadd.f32 %v5062, %v5075
    %5077 = vdwg.mxu0
    %5078 = vmatpush.bf16.msra.mxu0 %v4709
    %5079 = vmatpush.bf16.msra.mxu0 %v4701
    %5080 = vmatpush.bf16.msra.mxu0 %v4693
    %5081 = vmatpush.bf16.msra.mxu0 %v4685
    %5082 = vmatpush.bf16.msra.mxu0 %v4677
    %5083 = vmatpush.bf16.msra.mxu0 %v4669
    %5084 = vmatpush.bf16.msra.mxu0 %v4661
    %5085 = vmatpush.bf16.msra.mxu0 %v4653
    %5086 = vmatmul.bf16.gmra.mxu0 %v3881
    %v5087 = vpop.f32.mrf.mxu0
    %v5088 = vadd.f32 0.0, %v5087
    %v5089 = vpop.f32.mrf.mxu0
    %v5090 = vadd.f32 0.0, %v5089
    %5091 = vdwg.mxu0
    %5092 = vmatpush.bf16.msra.mxu0 %v4773
    %5093 = vmatpush.bf16.msra.mxu0 %v4765
    %5094 = vmatpush.bf16.msra.mxu0 %v4757
    %5095 = vmatpush.bf16.msra.mxu0 %v4749
    %5096 = vmatpush.bf16.msra.mxu0 %v4741
    %5097 = vmatpush.bf16.msra.mxu0 %v4733
    %5098 = vmatpush.bf16.msra.mxu0 %v4725
    %5099 = vmatpush.bf16.msra.mxu0 %v4717
    %5100 = vmatmul.bf16.gmra.mxu0 %v3882
    %v5101 = vpop.f32.mrf.mxu0
    %v5102 = vadd.f32 %v5088, %v5101
    %v5103 = vpop.f32.mrf.mxu0
    %v5104 = vadd.f32 %v5090, %v5103
    %5105 = vdwg.mxu0
    %5106 = vmatpush.bf16.msra.mxu0 %v4837
    %5107 = vmatpush.bf16.msra.mxu0 %v4829
    %5108 = vmatpush.bf16.msra.mxu0 %v4821
    %5109 = vmatpush.bf16.msra.mxu0 %v4813
    %5110 = vmatpush.bf16.msra.mxu0 %v4805
    %5111 = vmatpush.bf16.msra.mxu0 %v4797
    %5112 = vmatpush.bf16.msra.mxu0 %v4789
    %5113 = vmatpush.bf16.msra.mxu0 %v4781
    %5114 = vmatmul.bf16.gmra.mxu0 %v3883
    %v5115 = vpop.f32.mrf.mxu0
    %v5116 = vadd.f32 %v5102, %v5115
    %v5117 = vpop.f32.mrf.mxu0
    %v5118 = vadd.f32 %v5104, %v5117
    %5119 = vdwg.mxu0
    %5120 = vmatpush.bf16.msra.mxu0 %v4710
    %5121 = vmatpush.bf16.msra.mxu0 %v4702
    %5122 = vmatpush.bf16.msra.mxu0 %v4694
    %5123 = vmatpush.bf16.msra.mxu0 %v4686
    %5124 = vmatpush.bf16.msra.mxu0 %v4678
    %5125 = vmatpush.bf16.msra.mxu0 %v4670
    %5126 = vmatpush.bf16.msra.mxu0 %v4662
    %5127 = vmatpush.bf16.msra.mxu0 %v4654
    %5128 = vmatmul.bf16.gmra.mxu0 %v3881
    %v5129 = vpop.f32.mrf.mxu0
    %v5130 = vadd.f32 0.0, %v5129
    %v5131 = vpop.f32.mrf.mxu0
    %v5132 = vadd.f32 0.0, %v5131
    %5133 = vdwg.mxu0
    %5134 = vmatpush.bf16.msra.mxu0 %v4774
    %5135 = vmatpush.bf16.msra.mxu0 %v4766
    %5136 = vmatpush.bf16.msra.mxu0 %v4758
    %5137 = vmatpush.bf16.msra.mxu0 %v4750
    %5138 = vmatpush.bf16.msra.mxu0 %v4742
    %5139 = vmatpush.bf16.msra.mxu0 %v4734
    %5140 = vmatpush.bf16.msra.mxu0 %v4726
    %5141 = vmatpush.bf16.msra.mxu0 %v4718
    %5142 = vmatmul.bf16.gmra.mxu0 %v3882
    %v5143 = vpop.f32.mrf.mxu0
    %v5144 = vadd.f32 %v5130, %v5143
    %v5145 = vpop.f32.mrf.mxu0
    %v5146 = vadd.f32 %v5132, %v5145
    %5147 = vdwg.mxu0
    %5148 = vmatpush.bf16.msra.mxu0 %v4838
    %5149 = vmatpush.bf16.msra.mxu0 %v4830
    %5150 = vmatpush.bf16.msra.mxu0 %v4822
    %5151 = vmatpush.bf16.msra.mxu0 %v4814
    %5152 = vmatpush.bf16.msra.mxu0 %v4806
    %5153 = vmatpush.bf16.msra.mxu0 %v4798
    %5154 = vmatpush.bf16.msra.mxu0 %v4790
    %5155 = vmatpush.bf16.msra.mxu0 %v4782
    %5156 = vmatmul.bf16.gmra.mxu0 %v3883
    %v5157 = vpop.f32.mrf.mxu0
    %v5158 = vadd.f32 %v5144, %v5157
    %v5159 = vpop.f32.mrf.mxu0
    %v5160 = vadd.f32 %v5146, %v5159
    %5161 = vdwg.mxu0
    %5162 = vmatpush.bf16.msra.mxu0 %v4711
    %5163 = vmatpush.bf16.msra.mxu0 %v4703
    %5164 = vmatpush.bf16.msra.mxu0 %v4695
    %5165 = vmatpush.bf16.msra.mxu0 %v4687
    %5166 = vmatpush.bf16.msra.mxu0 %v4679
    %5167 = vmatpush.bf16.msra.mxu0 %v4671
    %5168 = vmatpush.bf16.msra.mxu0 %v4663
    %5169 = vmatpush.bf16.msra.mxu0 %v4655
    %5170 = vmatmul.bf16.gmra.mxu0 %v3881
    %v5171 = vpop.f32.mrf.mxu0
    %v5172 = vadd.f32 0.0, %v5171
    %v5173 = vpop.f32.mrf.mxu0
    %v5174 = vadd.f32 0.0, %v5173
    %5175 = vdwg.mxu0
    %5176 = vmatpush.bf16.msra.mxu0 %v4775
    %5177 = vmatpush.bf16.msra.mxu0 %v4767
    %5178 = vmatpush.bf16.msra.mxu0 %v4759
    %5179 = vmatpush.bf16.msra.mxu0 %v4751
    %5180 = vmatpush.bf16.msra.mxu0 %v4743
    %5181 = vmatpush.bf16.msra.mxu0 %v4735
    %5182 = vmatpush.bf16.msra.mxu0 %v4727
    %5183 = vmatpush.bf16.msra.mxu0 %v4719
    %5184 = vmatmul.bf16.gmra.mxu0 %v3882
    %v5185 = vpop.f32.mrf.mxu0
    %v5186 = vadd.f32 %v5172, %v5185
    %v5187 = vpop.f32.mrf.mxu0
    %v5188 = vadd.f32 %v5174, %v5187
    %5189 = vdwg.mxu0
    %5190 = vmatpush.bf16.msra.mxu0 %v4839
    %5191 = vmatpush.bf16.msra.mxu0 %v4831
    %5192 = vmatpush.bf16.msra.mxu0 %v4823
    %5193 = vmatpush.bf16.msra.mxu0 %v4815
    %5194 = vmatpush.bf16.msra.mxu0 %v4807
    %5195 = vmatpush.bf16.msra.mxu0 %v4799
    %5196 = vmatpush.bf16.msra.mxu0 %v4791
    %5197 = vmatpush.bf16.msra.mxu0 %v4783
    %5198 = vmatmul.bf16.gmra.mxu0 %v3883
    %v5199 = vpop.f32.mrf.mxu0
    %v5200 = vadd.f32 %v5186, %v5199
    %v5201 = vpop.f32.mrf.mxu0
    %v5202 = vadd.f32 %v5188, %v5201
    %5203 = vdwg.mxu0
    %5204 = vmatpush.bf16.msra.mxu0 %v4712
    %5205 = vmatpush.bf16.msra.mxu0 %v4704
    %5206 = vmatpush.bf16.msra.mxu0 %v4696
    %5207 = vmatpush.bf16.msra.mxu0 %v4688
    %5208 = vmatpush.bf16.msra.mxu0 %v4680
    %5209 = vmatpush.bf16.msra.mxu0 %v4672
    %5210 = vmatpush.bf16.msra.mxu0 %v4664
    %5211 = vmatpush.bf16.msra.mxu0 %v4656
    %5212 = vmatmul.bf16.gmra.mxu0 %v3881
    %v5213 = vpop.f32.mrf.mxu0
    %v5214 = vadd.f32 0.0, %v5213
    %v5215 = vpop.f32.mrf.mxu0
    %v5216 = vadd.f32 0.0, %v5215
    %5217 = vdwg.mxu0
    %5218 = vmatpush.bf16.msra.mxu0 %v4776
    %5219 = vmatpush.bf16.msra.mxu0 %v4768
    %5220 = vmatpush.bf16.msra.mxu0 %v4760
    %5221 = vmatpush.bf16.msra.mxu0 %v4752
    %5222 = vmatpush.bf16.msra.mxu0 %v4744
    %5223 = vmatpush.bf16.msra.mxu0 %v4736
    %5224 = vmatpush.bf16.msra.mxu0 %v4728
    %5225 = vmatpush.bf16.msra.mxu0 %v4720
    %5226 = vmatmul.bf16.gmra.mxu0 %v3882
    %v5227 = vpop.f32.mrf.mxu0
    %v5228 = vadd.f32 %v5214, %v5227
    %v5229 = vpop.f32.mrf.mxu0
    %v5230 = vadd.f32 %v5216, %v5229
    %5231 = vdwg.mxu0
    %5232 = vmatpush.bf16.msra.mxu0 %v4840
    %5233 = vmatpush.bf16.msra.mxu0 %v4832
    %5234 = vmatpush.bf16.msra.mxu0 %v4824
    %5235 = vmatpush.bf16.msra.mxu0 %v4816
    %5236 = vmatpush.bf16.msra.mxu0 %v4808
    %5237 = vmatpush.bf16.msra.mxu0 %v4800
    %5238 = vmatpush.bf16.msra.mxu0 %v4792
    %5239 = vmatpush.bf16.msra.mxu0 %v4784
    %5240 = vmatmul.bf16.gmra.mxu0 %v3883
    %v5241 = vpop.f32.mrf.mxu0
    %v5242 = vadd.f32 %v5228, %v5241
    %v5243 = vpop.f32.mrf.mxu0
    %v5244 = vadd.f32 %v5230, %v5243
    %5245 = vdwg.mxu0
    %5246 = vmatpush.bf16.msra.mxu0 %v4713
    %5247 = vmatpush.bf16.msra.mxu0 %v4705
    %5248 = vmatpush.bf16.msra.mxu0 %v4697
    %5249 = vmatpush.bf16.msra.mxu0 %v4689
    %5250 = vmatpush.bf16.msra.mxu0 %v4681
    %5251 = vmatpush.bf16.msra.mxu0 %v4673
    %5252 = vmatpush.bf16.msra.mxu0 %v4665
    %5253 = vmatpush.bf16.msra.mxu0 %v4657
    %5254 = vmatmul.bf16.gmra.mxu0 %v3881
    %v5255 = vpop.f32.mrf.mxu0
    %v5256 = vadd.f32 0.0, %v5255
    %v5257 = vpop.f32.mrf.mxu0
    %v5258 = vadd.f32 0.0, %v5257
    %5259 = vdwg.mxu0
    %5260 = vmatpush.bf16.msra.mxu0 %v4777
    %5261 = vmatpush.bf16.msra.mxu0 %v4769
    %5262 = vmatpush.bf16.msra.mxu0 %v4761
    %5263 = vmatpush.bf16.msra.mxu0 %v4753
    %5264 = vmatpush.bf16.msra.mxu0 %v4745
    %5265 = vmatpush.bf16.msra.mxu0 %v4737
    %5266 = vmatpush.bf16.msra.mxu0 %v4729
    %5267 = vmatpush.bf16.msra.mxu0 %v4721
    %5268 = vmatmul.bf16.gmra.mxu0 %v3882
    %v5269 = vpop.f32.mrf.mxu0
    %v5270 = vadd.f32 %v5256, %v5269
    %v5271 = vpop.f32.mrf.mxu0
    %v5272 = vadd.f32 %v5258, %v5271
    %5273 = vdwg.mxu0
    %5274 = vmatpush.bf16.msra.mxu0 %v4841
    %5275 = vmatpush.bf16.msra.mxu0 %v4833
    %5276 = vmatpush.bf16.msra.mxu0 %v4825
    %5277 = vmatpush.bf16.msra.mxu0 %v4817
    %5278 = vmatpush.bf16.msra.mxu0 %v4809
    %5279 = vmatpush.bf16.msra.mxu0 %v4801
    %5280 = vmatpush.bf16.msra.mxu0 %v4793
    %5281 = vmatpush.bf16.msra.mxu0 %v4785
    %5282 = vmatmul.bf16.gmra.mxu0 %v3883
    %v5283 = vpop.f32.mrf.mxu0
    %v5284 = vadd.f32 %v5270, %v5283
    %v5285 = vpop.f32.mrf.mxu0
    %v5286 = vadd.f32 %v5272, %v5285
    %5287 = vdwg.mxu0
    %5288 = vmatpush.bf16.msra.mxu0 %v4714
    %5289 = vmatpush.bf16.msra.mxu0 %v4706
    %5290 = vmatpush.bf16.msra.mxu0 %v4698
    %5291 = vmatpush.bf16.msra.mxu0 %v4690
    %5292 = vmatpush.bf16.msra.mxu0 %v4682
    %5293 = vmatpush.bf16.msra.mxu0 %v4674
    %5294 = vmatpush.bf16.msra.mxu0 %v4666
    %5295 = vmatpush.bf16.msra.mxu0 %v4658
    %5296 = vmatmul.bf16.gmra.mxu0 %v3881
    %v5297 = vpop.f32.mrf.mxu0
    %v5298 = vadd.f32 0.0, %v5297
    %v5299 = vpop.f32.mrf.mxu0
    %v5300 = vadd.f32 0.0, %v5299
    %5301 = vdwg.mxu0
    %5302 = vmatpush.bf16.msra.mxu0 %v4778
    %5303 = vmatpush.bf16.msra.mxu0 %v4770
    %5304 = vmatpush.bf16.msra.mxu0 %v4762
    %5305 = vmatpush.bf16.msra.mxu0 %v4754
    %5306 = vmatpush.bf16.msra.mxu0 %v4746
    %5307 = vmatpush.bf16.msra.mxu0 %v4738
    %5308 = vmatpush.bf16.msra.mxu0 %v4730
    %5309 = vmatpush.bf16.msra.mxu0 %v4722
    %5310 = vmatmul.bf16.gmra.mxu0 %v3882
    %v5311 = vpop.f32.mrf.mxu0
    %v5312 = vadd.f32 %v5298, %v5311
    %v5313 = vpop.f32.mrf.mxu0
    %v5314 = vadd.f32 %v5300, %v5313
    %5315 = vdwg.mxu0
    %5316 = vmatpush.bf16.msra.mxu0 %v4842
    %5317 = vmatpush.bf16.msra.mxu0 %v4834
    %5318 = vmatpush.bf16.msra.mxu0 %v4826
    %5319 = vmatpush.bf16.msra.mxu0 %v4818
    %5320 = vmatpush.bf16.msra.mxu0 %v4810
    %5321 = vmatpush.bf16.msra.mxu0 %v4802
    %5322 = vmatpush.bf16.msra.mxu0 %v4794
    %5323 = vmatpush.bf16.msra.mxu0 %v4786
    %5324 = vmatmul.bf16.gmra.mxu0 %v3883
    %v5325 = vpop.f32.mrf.mxu0
    %v5326 = vadd.f32 %v5312, %v5325
    %v5327 = vpop.f32.mrf.mxu0
    %v5328 = vadd.f32 %v5314, %v5327
    %5329 = vdwg.mxu0
    %5330 = vmatpush.bf16.msra.mxu0 %v4715
    %5331 = vmatpush.bf16.msra.mxu0 %v4707
    %5332 = vmatpush.bf16.msra.mxu0 %v4699
    %5333 = vmatpush.bf16.msra.mxu0 %v4691
    %5334 = vmatpush.bf16.msra.mxu0 %v4683
    %5335 = vmatpush.bf16.msra.mxu0 %v4675
    %5336 = vmatpush.bf16.msra.mxu0 %v4667
    %5337 = vmatpush.bf16.msra.mxu0 %v4659
    %5338 = vmatmul.bf16.gmra.mxu0 %v3881
    %v5339 = vpop.f32.mrf.mxu0
    %v5340 = vadd.f32 0.0, %v5339
    %v5341 = vpop.f32.mrf.mxu0
    %v5342 = vadd.f32 0.0, %v5341
    %5343 = vdwg.mxu0
    %5344 = vmatpush.bf16.msra.mxu0 %v4779
    %5345 = vmatpush.bf16.msra.mxu0 %v4771
    %5346 = vmatpush.bf16.msra.mxu0 %v4763
    %5347 = vmatpush.bf16.msra.mxu0 %v4755
    %5348 = vmatpush.bf16.msra.mxu0 %v4747
    %5349 = vmatpush.bf16.msra.mxu0 %v4739
    %5350 = vmatpush.bf16.msra.mxu0 %v4731
    %5351 = vmatpush.bf16.msra.mxu0 %v4723
    %5352 = vmatmul.bf16.gmra.mxu0 %v3882
    %v5353 = vpop.f32.mrf.mxu0
    %v5354 = vadd.f32 %v5340, %v5353
    %v5355 = vpop.f32.mrf.mxu0
    %v5356 = vadd.f32 %v5342, %v5355
    %5357 = vdwg.mxu0
    %5358 = vmatpush.bf16.msra.mxu0 %v4843
    %5359 = vmatpush.bf16.msra.mxu0 %v4835
    %5360 = vmatpush.bf16.msra.mxu0 %v4827
    %5361 = vmatpush.bf16.msra.mxu0 %v4819
    %5362 = vmatpush.bf16.msra.mxu0 %v4811
    %5363 = vmatpush.bf16.msra.mxu0 %v4803
    %5364 = vmatpush.bf16.msra.mxu0 %v4795
    %5365 = vmatpush.bf16.msra.mxu0 %v4787
    %5366 = vmatmul.bf16.gmra.mxu0 %v3883
    %v5367 = vpop.f32.mrf.mxu0
    %v5368 = vadd.f32 %v5354, %v5367
    %v5369 = vpop.f32.mrf.mxu0
    %v5370 = vadd.f32 %v5356, %v5369
    %5371 = vdwg.mxu0
    %v5388 = vrot.slane %v5116, 7
    %v5389 = vrot.slane %v5158, 6
    %v5390 = vrot.slane %v5200, 5
    %v5391 = vrot.slane %v5242, 4
    %v5392 = vrot.slane %v5284, 3
    %v5393 = vrot.slane %v5326, 2
    %v5394 = vrot.slane %v5368, 1
    %v5395 = vrot.slane %v5118, 7
    %v5396 = vrot.slane %v5160, 6
    %v5397 = vrot.slane %v5202, 5
    %v5398 = vrot.slane %v5244, 4
    %v5399 = vrot.slane %v5286, 3
    %v5400 = vrot.slane %v5328, 2
    %v5401 = vrot.slane %v5370, 1
    %v5402 = vsel %vm402, %v5074, %v5388
    %v5403 = vsel %vm404, %v5389, %v5390
    %v5404 = vsel %vm406, %v5402, %v5403
    %v5405 = vsel %vm408, %v5391, %v5392
    %v5406 = vsel %vm410, %v5393, %v5394
    %v5407 = vsel %vm412, %v5405, %v5406
    %v5408 = vsel %vm414, %v5404, %v5407
    %v5409 = vsel %vm416, %v5074, %v5388
    %v5410 = vsel %vm418, %v5389, %v5390
    %v5411 = vsel %vm420, %v5409, %v5410
    %v5412 = vsel %vm422, %v5391, %v5392
    %v5413 = vsel %vm424, %v5394, %v5393
    %v5414 = vsel %vm426, %v5412, %v5413
    %v5415 = vsel %vm428, %v5411, %v5414
    %v5416 = vrot.slane %v5415, 1
    %v5417 = vsel %vm404, %v5074, %v5388
    %v5418 = vsel %vm408, %v5389, %v5390
    %v5419 = vsel %vm641, %v5417, %v5418
    %v5420 = vsel %vm410, %v5391, %v5392
    %v5421 = vsel %vm402, %v5393, %v5394
    %v5422 = vsel %vm643, %v5421, %v5420
    %v5423 = vsel %vm645, %v5419, %v5422
    %v5424 = vrot.slane %v5423, 2
    %v5425 = vsel %vm418, %v5074, %v5388
    %v5426 = vsel %vm422, %v5389, %v5390
    %vm5427 = vcmask 1044483
    %v5428 = vsel %vm5427, %v5425, %v5426
    %v5429 = vsel %vm424, %v5392, %v5391
    %v5430 = vsel %vm416, %v5393, %v5394
    %vm5431 = vcmask 1046529
    %v5432 = vsel %vm5431, %v5430, %v5429
    %vm5433 = vcmask 1046531
    %v5434 = vsel %vm5433, %v5428, %v5432
    %v5435 = vrot.slane %v5434, 3
    %v5436 = vsel %vm408, %v5074, %v5388
    %v5437 = vsel %vm410, %v5389, %v5390
    %v5438 = vsel %vm412, %v5436, %v5437
    %v5439 = vsel %vm402, %v5391, %v5392
    %v5440 = vsel %vm404, %v5393, %v5394
    %v5441 = vsel %vm406, %v5439, %v5440
    %v5442 = vsel %vm414, %v5441, %v5438
    %v5443 = vrot.slane %v5442, 4
    %v5444 = vsel %vm422, %v5074, %v5388
    %v5445 = vsel %vm424, %v5390, %v5389
    %v5446 = vsel %vm426, %v5444, %v5445
    %v5447 = vsel %vm416, %v5391, %v5392
    %v5448 = vsel %vm418, %v5393, %v5394
    %v5449 = vsel %vm420, %v5447, %v5448
    %v5450 = vsel %vm428, %v5449, %v5446
    %v5451 = vrot.slane %v5450, 5
    %v5452 = vsel %vm410, %v5074, %v5388
    %v5453 = vsel %vm402, %v5389, %v5390
    %v5454 = vsel %vm643, %v5453, %v5452
    %v5455 = vsel %vm404, %v5391, %v5392
    %v5456 = vsel %vm408, %v5393, %v5394
    %v5457 = vsel %vm641, %v5455, %v5456
    %v5458 = vsel %vm645, %v5457, %v5454
    %v5459 = vrot.slane %v5458, 6
    %v5460 = vsel %vm424, %v5388, %v5074
    %v5461 = vsel %vm416, %v5389, %v5390
    %v5462 = vsel %vm5431, %v5461, %v5460
    %v5463 = vsel %vm418, %v5391, %v5392
    %v5464 = vsel %vm422, %v5393, %v5394
    %v5465 = vsel %vm5427, %v5463, %v5464
    %v5466 = vsel %vm5433, %v5465, %v5462
    %v5467 = vrot.slane %v5466, 7
    %v5468 = vsel %vm402, %v5076, %v5395
    %v5469 = vsel %vm404, %v5396, %v5397
    %v5470 = vsel %vm406, %v5468, %v5469
    %v5471 = vsel %vm408, %v5398, %v5399
    %v5472 = vsel %vm410, %v5400, %v5401
    %v5473 = vsel %vm412, %v5471, %v5472
    %v5474 = vsel %vm414, %v5470, %v5473
    %v5475 = vsel %vm416, %v5076, %v5395
    %v5476 = vsel %vm418, %v5396, %v5397
    %v5477 = vsel %vm420, %v5475, %v5476
    %v5478 = vsel %vm422, %v5398, %v5399
    %v5479 = vsel %vm424, %v5401, %v5400
    %v5480 = vsel %vm426, %v5478, %v5479
    %v5481 = vsel %vm428, %v5477, %v5480
    %v5482 = vrot.slane %v5481, 1
    %v5483 = vsel %vm404, %v5076, %v5395
    %v5484 = vsel %vm408, %v5396, %v5397
    %v5485 = vsel %vm641, %v5483, %v5484
    %v5486 = vsel %vm410, %v5398, %v5399
    %v5487 = vsel %vm402, %v5400, %v5401
    %v5488 = vsel %vm643, %v5487, %v5486
    %v5489 = vsel %vm645, %v5485, %v5488
    %v5490 = vrot.slane %v5489, 2
    %v5491 = vsel %vm418, %v5076, %v5395
    %v5492 = vsel %vm422, %v5396, %v5397
    %v5493 = vsel %vm5427, %v5491, %v5492
    %v5494 = vsel %vm424, %v5399, %v5398
    %v5495 = vsel %vm416, %v5400, %v5401
    %v5496 = vsel %vm5431, %v5495, %v5494
    %v5497 = vsel %vm5433, %v5493, %v5496
    %v5498 = vrot.slane %v5497, 3
    %v5499 = vsel %vm408, %v5076, %v5395
    %v5500 = vsel %vm410, %v5396, %v5397
    %v5501 = vsel %vm412, %v5499, %v5500
    %v5502 = vsel %vm402, %v5398, %v5399
    %v5503 = vsel %vm404, %v5400, %v5401
    %v5504 = vsel %vm406, %v5502, %v5503
    %v5505 = vsel %vm414, %v5504, %v5501
    %v5506 = vrot.slane %v5505, 4
    %v5507 = vsel %vm422, %v5076, %v5395
    %v5508 = vsel %vm424, %v5397, %v5396
    %v5509 = vsel %vm426, %v5507, %v5508
    %v5510 = vsel %vm416, %v5398, %v5399
    %v5511 = vsel %vm418, %v5400, %v5401
    %v5512 = vsel %vm420, %v5510, %v5511
    %v5513 = vsel %vm428, %v5512, %v5509
    %v5514 = vrot.slane %v5513, 5
    %v5515 = vsel %vm410, %v5076, %v5395
    %v5516 = vsel %vm402, %v5396, %v5397
    %v5517 = vsel %vm643, %v5516, %v5515
    %v5518 = vsel %vm404, %v5398, %v5399
    %v5519 = vsel %vm408, %v5400, %v5401
    %v5520 = vsel %vm641, %v5518, %v5519
    %v5521 = vsel %vm645, %v5520, %v5517
    %v5522 = vrot.slane %v5521, 6
    %v5523 = vsel %vm424, %v5395, %v5076
    %v5524 = vsel %vm416, %v5396, %v5397
    %v5525 = vsel %vm5431, %v5524, %v5523
    %v5526 = vsel %vm418, %v5398, %v5399
    %v5527 = vsel %vm422, %v5400, %v5401
    %v5528 = vsel %vm5427, %v5526, %v5527
    %v5529 = vsel %vm5433, %v5528, %v5525
    %v5530 = vrot.slane %v5529, 7
    %v5548 = vunpack.c.l.s4 1966171168
    %v5549 = vunpack.c.0.s8 %v5548
    %v5550 = vperm.slane %v5408, %v5549
    %v5552 = vunpack.c.l.s4 1966171168
    %v5553 = vunpack.c.0.s8 %v5552
    %v5554 = vperm.slane %v5416, %v5553
    %v5556 = vunpack.c.l.s4 1966171168
    %v5557 = vunpack.c.0.s8 %v5556
    %v5558 = vperm.slane %v5424, %v5557
    %v5560 = vunpack.c.l.s4 1966171168
    %v5561 = vunpack.c.0.s8 %v5560
    %v5562 = vperm.slane %v5435, %v5561
    %v5564 = vunpack.c.l.s4 1966171168
    %v5565 = vunpack.c.0.s8 %v5564
    %v5566 = vperm.slane %v5443, %v5565
    %v5568 = vunpack.c.l.s4 1966171168
    %v5569 = vunpack.c.0.s8 %v5568
    %v5570 = vperm.slane %v5451, %v5569
    %v5572 = vunpack.c.l.s4 1966171168
    %v5573 = vunpack.c.0.s8 %v5572
    %v5574 = vperm.slane %v5459, %v5573
    %v5576 = vunpack.c.l.s4 1966171168
    %v5577 = vunpack.c.0.s8 %v5576
    %v5578 = vperm.slane %v5467, %v5577
    %v5580 = vunpack.c.l.s4 1966171168
    %v5581 = vunpack.c.0.s8 %v5580
    %v5582 = vperm.slane %v5474, %v5581
    %v5584 = vunpack.c.l.s4 1966171168
    %v5585 = vunpack.c.0.s8 %v5584
    %v5586 = vperm.slane %v5482, %v5585
    %v5588 = vunpack.c.l.s4 1966171168
    %v5589 = vunpack.c.0.s8 %v5588
    %v5590 = vperm.slane %v5490, %v5589
    %v5592 = vunpack.c.l.s4 1966171168
    %v5593 = vunpack.c.0.s8 %v5592
    %v5594 = vperm.slane %v5498, %v5593
    %v5596 = vunpack.c.l.s4 1966171168
    %v5597 = vunpack.c.0.s8 %v5596
    %v5598 = vperm.slane %v5506, %v5597
    %v5600 = vunpack.c.l.s4 1966171168
    %v5601 = vunpack.c.0.s8 %v5600
    %v5602 = vperm.slane %v5514, %v5601
    %v5604 = vunpack.c.l.s4 1966171168
    %v5605 = vunpack.c.0.s8 %v5604
    %v5606 = vperm.slane %v5522, %v5605
    %v5608 = vunpack.c.l.s4 1966171168
    %v5609 = vunpack.c.0.s8 %v5608
    %v5610 = vperm.slane %v5530, %v5609
    %v5611 = vld [vmem:[%s23] sm:$0x3]
    %v5613 = vperm.slane %v5611, 0
    %v5614 = vperm.slane %v5611, 1
    %v5615 = vrot.slane %v5614, 4
    %v5616 = vsel %vm414, %v5613, %v5615
    %v5617 = vsel %vm414, %v5615, %v5613
    %v5618 = vrot.slane %v5617, 4
    %v5621 = vadd.f32 %v5550, %v5616
    %v5622 = vadd.f32 %v5554, %v5618
    %v5623 = vadd.f32 %v5558, %v5616
    %v5624 = vadd.f32 %v5562, %v5618
    %v5625 = vadd.f32 %v5566, %v5616
    %v5626 = vadd.f32 %v5570, %v5618
    %v5627 = vadd.f32 %v5574, %v5616
    %v5628 = vadd.f32 %v5578, %v5618
    %v5629 = vadd.f32 %v5582, %v5616
    %v5630 = vadd.f32 %v5586, %v5618
    %v5631 = vadd.f32 %v5590, %v5616
    %v5632 = vadd.f32 %v5594, %v5618
    %v5633 = vadd.f32 %v5598, %v5616
    %v5634 = vadd.f32 %v5602, %v5618
    %v5635 = vadd.f32 %v5606, %v5616
    %v5636 = vadd.f32 %v5610, %v5618
    %v5637 = vld [vmem:[%s25] sm:$0x3]
    %v5638 = vld [vmem:[%s27] sm:$0x3]
    %5655 = vst [vmem:[#allocation1] ss:$2 sm:$0xff] %v5621
    %s5656 = scalar_lea.vmem [#allocation1], 1
    %5657 = vst [vmem:[%s5656] ss:$2 sm:$0xff] %v5622
    %s5658 = scalar_lea.vmem [#allocation1], 16
    %5659 = vst [vmem:[%s5658] ss:$2 sm:$0xff] %v5623
    %s5660 = scalar_lea.vmem [#allocation1], 17
    %5661 = vst [vmem:[%s5660] ss:$2 sm:$0xff] %v5624
    %s5662 = scalar_lea.vmem [#allocation1], 32
    %5663 = vst [vmem:[%s5662] ss:$2 sm:$0xff] %v5625
    %s5664 = scalar_lea.vmem [#allocation1], 33
    %5665 = vst [vmem:[%s5664] ss:$2 sm:$0xff] %v5626
    %s5666 = scalar_lea.vmem [#allocation1], 48
    %5667 = vst [vmem:[%s5666] ss:$2 sm:$0xff] %v5627
    %s5668 = scalar_lea.vmem [#allocation1], 49
    %5669 = vst [vmem:[%s5668] ss:$2 sm:$0xff] %v5628
    %v5670 = vld.sshfl [vmem:[#allocation1] sm:$0xff pattern:$0x75316420]
    %v5671 = vld.sshfl [vmem:[#allocation1 + $0x8] sm:$0xff pattern:$0x75316420]
    %v5672 = vld.sshfl [vmem:[#allocation1 + $0x10] sm:$0xff pattern:$0x75316420]
    %v5673 = vld.sshfl [vmem:[#allocation1 + $0x18] sm:$0xff pattern:$0x75316420]
    %v5674 = vld.sshfl [vmem:[#allocation1 + $0x20] sm:$0xff pattern:$0x75316420]
    %v5675 = vld.sshfl [vmem:[#allocation1 + $0x28] sm:$0xff pattern:$0x75316420]
    %v5676 = vld.sshfl [vmem:[#allocation1 + $0x30] sm:$0xff pattern:$0x75316420]
    %v5677 = vld.sshfl [vmem:[#allocation1 + $0x38] sm:$0xff pattern:$0x75316420]
    %5678 = vst [vmem:[#allocation1] ss:$2 sm:$0xff] %v5629
    %5679 = vst [vmem:[%s5656] ss:$2 sm:$0xff] %v5630
    %5680 = vst [vmem:[%s5658] ss:$2 sm:$0xff] %v5631
    %5681 = vst [vmem:[%s5660] ss:$2 sm:$0xff] %v5632
    %5682 = vst [vmem:[%s5662] ss:$2 sm:$0xff] %v5633
    %5683 = vst [vmem:[%s5664] ss:$2 sm:$0xff] %v5634
    %5684 = vst [vmem:[%s5666] ss:$2 sm:$0xff] %v5635
    %5685 = vst [vmem:[%s5668] ss:$2 sm:$0xff] %v5636
    %v5686 = vld.sshfl [vmem:[#allocation1] sm:$0xff pattern:$0x75316420]
    %v5687 = vld.sshfl [vmem:[#allocation1 + $0x8] sm:$0xff pattern:$0x75316420]
    %v5688 = vld.sshfl [vmem:[#allocation1 + $0x10] sm:$0xff pattern:$0x75316420]
    %v5689 = vld.sshfl [vmem:[#allocation1 + $0x18] sm:$0xff pattern:$0x75316420]
    %v5690 = vld.sshfl [vmem:[#allocation1 + $0x20] sm:$0xff pattern:$0x75316420]
    %v5691 = vld.sshfl [vmem:[#allocation1 + $0x28] sm:$0xff pattern:$0x75316420]
    %v5692 = vld.sshfl [vmem:[#allocation1 + $0x30] sm:$0xff pattern:$0x75316420]
    %v5693 = vld.sshfl [vmem:[#allocation1 + $0x38] sm:$0xff pattern:$0x75316420]
    %v5710 = vadd.f32 %v5670, %v5672
    %v5711 = vadd.f32 %v5710, %v5674
    %v5712 = vadd.f32 %v5711, %v5676
    %v5713 = vadd.f32 %v5712, %v5686
    %v5714 = vadd.f32 %v5713, %v5688
    %v5715 = vadd.f32 %v5714, %v5690
    %v5716 = vadd.f32 %v5715, %v5692
    %v5717 = vrot.slane %v5716, 4
    %v5718 = vadd.f32 %v5716, %v5717
    %v5719 = vrot.slane %v5718, 2
    %v5720 = vadd.f32 %v5718, %v5719
    %v5721 = vrot.slane %v5720, 1
    %v5722 = vadd.f32 %v5720, %v5721
    %v5723 = vadd.f32 %v5671, %v5673
    %v5724 = vadd.f32 %v5723, %v5675
    %v5725 = vadd.f32 %v5724, %v5677
    %v5726 = vadd.f32 %v5725, %v5687
    %v5727 = vadd.f32 %v5726, %v5689
    %v5728 = vadd.f32 %v5727, %v5691
    %v5729 = vadd.f32 %v5728, %v5693
    %v5730 = vrot.slane %v5729, 4
    %v5731 = vadd.f32 %v5729, %v5730
    %v5732 = vrot.slane %v5731, 2
    %v5733 = vadd.f32 %v5731, %v5732
    %v5734 = vrot.slane %v5733, 1
    %v5735 = vadd.f32 %v5733, %v5734
    %v5736 = vrcp.pop 64.0
    %v5737 = vmul.f32 64.0, %v5736
    %v5738 = vsub.f32 1.0, %v5737
    %v5739 = vmul.f32 %v5736, %v5738
    %v5740 = vadd.f32 %v5736, %v5739
    %vm5741 = vweird.f32 %v5736
    %v5742 = vsel %vm5741, %v5736, %v5740
    %v5743 = vmul.f32 %v5722, %v5742
    %v5744 = vmul.f32 %v5735, %v5742
    %v5745 = vmul.f32 %v5621, %v5621
    %v5746 = vmul.f32 %v5622, %v5622
    %v5747 = vmul.f32 %v5623, %v5623
    %v5748 = vmul.f32 %v5624, %v5624
    %v5749 = vmul.f32 %v5625, %v5625
    %v5750 = vmul.f32 %v5626, %v5626
    %v5751 = vmul.f32 %v5627, %v5627
    %v5752 = vmul.f32 %v5628, %v5628
    %v5753 = vmul.f32 %v5629, %v5629
    %v5754 = vmul.f32 %v5630, %v5630
    %v5755 = vmul.f32 %v5631, %v5631
    %v5756 = vmul.f32 %v5632, %v5632
    %v5757 = vmul.f32 %v5633, %v5633
    %v5758 = vmul.f32 %v5634, %v5634
    %v5759 = vmul.f32 %v5635, %v5635
    %v5760 = vmul.f32 %v5636, %v5636
    %5777 = vst [vmem:[#allocation1] ss:$2 sm:$0xff] %v5745
    %s5778 = scalar_lea.vmem [#allocation1], 1
    %5779 = vst [vmem:[%s5778] ss:$2 sm:$0xff] %v5746
    %s5780 = scalar_lea.vmem [#allocation1], 16
    %5781 = vst [vmem:[%s5780] ss:$2 sm:$0xff] %v5747
    %s5782 = scalar_lea.vmem [#allocation1], 17
    %5783 = vst [vmem:[%s5782] ss:$2 sm:$0xff] %v5748
    %s5784 = scalar_lea.vmem [#allocation1], 32
    %5785 = vst [vmem:[%s5784] ss:$2 sm:$0xff] %v5749
    %s5786 = scalar_lea.vmem [#allocation1], 33
    %5787 = vst [vmem:[%s5786] ss:$2 sm:$0xff] %v5750
    %s5788 = scalar_lea.vmem [#allocation1], 48
    %5789 = vst [vmem:[%s5788] ss:$2 sm:$0xff] %v5751
    %s5790 = scalar_lea.vmem [#allocation1], 49
    %5791 = vst [vmem:[%s5790] ss:$2 sm:$0xff] %v5752
    %v5792 = vld.sshfl [vmem:[#allocation1] sm:$0xff pattern:$0x75316420]
    %v5793 = vld.sshfl [vmem:[#allocation1 + $0x8] sm:$0xff pattern:$0x75316420]
    %v5794 = vld.sshfl [vmem:[#allocation1 + $0x10] sm:$0xff pattern:$0x75316420]
    %v5795 = vld.sshfl [vmem:[#allocation1 + $0x18] sm:$0xff pattern:$0x75316420]
    %v5796 = vld.sshfl [vmem:[#allocation1 + $0x20] sm:$0xff pattern:$0x75316420]
    %v5797 = vld.sshfl [vmem:[#allocation1 + $0x28] sm:$0xff pattern:$0x75316420]
    %v5798 = vld.sshfl [vmem:[#allocation1 + $0x30] sm:$0xff pattern:$0x75316420]
    %v5799 = vld.sshfl [vmem:[#allocation1 + $0x38] sm:$0xff pattern:$0x75316420]
    %5800 = vst [vmem:[#allocation1] ss:$2 sm:$0xff] %v5753
    %5801 = vst [vmem:[%s5778] ss:$2 sm:$0xff] %v5754
    %5802 = vst [vmem:[%s5780] ss:$2 sm:$0xff] %v5755
    %5803 = vst [vmem:[%s5782] ss:$2 sm:$0xff] %v5756
    %5804 = vst [vmem:[%s5784] ss:$2 sm:$0xff] %v5757
    %5805 = vst [vmem:[%s5786] ss:$2 sm:$0xff] %v5758
    %5806 = vst [vmem:[%s5788] ss:$2 sm:$0xff] %v5759
    %5807 = vst [vmem:[%s5790] ss:$2 sm:$0xff] %v5760
    %v5808 = vld.sshfl [vmem:[#allocation1] sm:$0xff pattern:$0x75316420]
    %v5809 = vld.sshfl [vmem:[#allocation1 + $0x8] sm:$0xff pattern:$0x75316420]
    %v5810 = vld.sshfl [vmem:[#allocation1 + $0x10] sm:$0xff pattern:$0x75316420]
    %v5811 = vld.sshfl [vmem:[#allocation1 + $0x18] sm:$0xff pattern:$0x75316420]
    %v5812 = vld.sshfl [vmem:[#allocation1 + $0x20] sm:$0xff pattern:$0x75316420]
    %v5813 = vld.sshfl [vmem:[#allocation1 + $0x28] sm:$0xff pattern:$0x75316420]
    %v5814 = vld.sshfl [vmem:[#allocation1 + $0x30] sm:$0xff pattern:$0x75316420]
    %v5815 = vld.sshfl [vmem:[#allocation1 + $0x38] sm:$0xff pattern:$0x75316420]
    %v5832 = vadd.f32 %v5792, %v5794
    %v5833 = vadd.f32 %v5832, %v5796
    %v5834 = vadd.f32 %v5833, %v5798
    %v5835 = vadd.f32 %v5834, %v5808
    %v5836 = vadd.f32 %v5835, %v5810
    %v5837 = vadd.f32 %v5836, %v5812
    %v5838 = vadd.f32 %v5837, %v5814
    %v5839 = vrot.slane %v5838, 4
    %v5840 = vadd.f32 %v5838, %v5839
    %v5841 = vrot.slane %v5840, 2
    %v5842 = vadd.f32 %v5840, %v5841
    %v5843 = vrot.slane %v5842, 1
    %v5844 = vadd.f32 %v5842, %v5843
    %v5845 = vadd.f32 %v5793, %v5795
    %v5846 = vadd.f32 %v5845, %v5797
    %v5847 = vadd.f32 %v5846, %v5799
    %v5848 = vadd.f32 %v5847, %v5809
    %v5849 = vadd.f32 %v5848, %v5811
    %v5850 = vadd.f32 %v5849, %v5813
    %v5851 = vadd.f32 %v5850, %v5815
    %v5852 = vrot.slane %v5851, 4
    %v5853 = vadd.f32 %v5851, %v5852
    %v5854 = vrot.slane %v5853, 2
    %v5855 = vadd.f32 %v5853, %v5854
    %v5856 = vrot.slane %v5855, 1
    %v5857 = vadd.f32 %v5855, %v5856
    %v5858 = vmul.f32 %v5844, %v5742
    %v5859 = vmul.f32 %v5857, %v5742
    %v5860 = vmul.f32 %v5743, %v5743
    %v5861 = vmul.f32 %v5744, %v5744
    %v5862 = vsub.f32 %v5858, %v5860
    %v5863 = vsub.f32 %v5859, %v5861
    %v5864 = vmax.f32 %v5862, 0.0
    %v5865 = vmax.f32 %v5863, 0.0
    %v5866 = vadd.f32 %v5864, 1e-05
    %v5867 = vadd.f32 %v5865, 1e-05
    %v5868 = vrsqrt.pop %v5866
    %v5869 = vmul.f32 %v5868, %v5866
    %v5870 = vmul.f32 %v5869, %v5868
    %v5871 = vmul.f32 0.5, %v5870
    %v5872 = vsub.f32 1.5, %v5871
    %v5873 = vmul.f32 %v5868, %v5872
    %vm5874 = vweird.f32 %v5866
    %vm5875 = vweird.f32 %v5868
    %vm5876 = vmor %vm5874, %vm5875
    %v5877 = vsel %vm5876, %v5868, %v5873
    %v5878 = vrsqrt.pop %v5867
    %v5879 = vmul.f32 %v5878, %v5867
    %v5880 = vmul.f32 %v5879, %v5878
    %v5881 = vmul.f32 0.5, %v5880
    %v5882 = vsub.f32 1.5, %v5881
    %v5883 = vmul.f32 %v5878, %v5882
    %vm5884 = vweird.f32 %v5867
    %vm5885 = vweird.f32 %v5878
    %vm5886 = vmor %vm5884, %vm5885
    %v5887 = vsel %vm5886, %v5878, %v5883
    %v5890 = vrot.slane %v5887, 7
    %v5891 = vsel %vm402, %v5877, %v5890
    %v5893 = vmul.f32 %v5637, %v5891
    %v5895 = vperm.slane %v5893, 0
    %v5896 = vperm.slane %v5893, 1
    %v5899 = vmul.f32 %v5743, %v5895
    %v5900 = vmul.f32 %v5744, %v5896
    %v5903 = vrot.slane %v5900, 7
    %v5904 = vsel %vm402, %v5899, %v5903
    %v5906 = vsub.f32 %v5638, %v5904
    %v5907 = vrot.slane %v5896, 4
    %v5908 = vsel %vm414, %v5895, %v5907
    %v5909 = vsel %vm414, %v5907, %v5895
    %v5910 = vrot.slane %v5909, 4
    %v5913 = vmul.f32 %v5621, %v5908
    %v5914 = vmul.f32 %v5622, %v5910
    %v5915 = vmul.f32 %v5623, %v5908
    %v5916 = vmul.f32 %v5624, %v5910
    %v5917 = vmul.f32 %v5625, %v5908
    %v5918 = vmul.f32 %v5626, %v5910
    %v5919 = vmul.f32 %v5627, %v5908
    %v5920 = vmul.f32 %v5628, %v5910
    %v5921 = vmul.f32 %v5629, %v5908
    %v5922 = vmul.f32 %v5630, %v5910
    %v5923 = vmul.f32 %v5631, %v5908
    %v5924 = vmul.f32 %v5632, %v5910
    %v5925 = vmul.f32 %v5633, %v5908
    %v5926 = vmul.f32 %v5634, %v5910
    %v5927 = vmul.f32 %v5635, %v5908
    %v5928 = vmul.f32 %v5636, %v5910
    %v5930 = vperm.slane %v5906, 0
    %v5931 = vperm.slane %v5906, 1
    %v5932 = vrot.slane %v5931, 4
    %v5933 = vsel %vm414, %v5930, %v5932
    %v5934 = vsel %vm414, %v5932, %v5930
    %v5935 = vrot.slane %v5934, 4
    %v5938 = vadd.f32 %v5913, %v5933
    %v5939 = vadd.f32 %v5914, %v5935
    %v5940 = vadd.f32 %v5915, %v5933
    %v5941 = vadd.f32 %v5916, %v5935
    %v5942 = vadd.f32 %v5917, %v5933
    %v5943 = vadd.f32 %v5918, %v5935
    %v5944 = vadd.f32 %v5919, %v5933
    %v5945 = vadd.f32 %v5920, %v5935
    %v5946 = vadd.f32 %v5921, %v5933
    %v5947 = vadd.f32 %v5922, %v5935
    %v5948 = vadd.f32 %v5923, %v5933
    %v5949 = vadd.f32 %v5924, %v5935
    %v5950 = vadd.f32 %v5925, %v5933
    %v5951 = vadd.f32 %v5926, %v5935
    %v5952 = vadd.f32 %v5927, %v5933
    %v5953 = vadd.f32 %v5928, %v5935
    %v5954 = vmax.f32 %v5938, 0.0
    %v5955 = vmax.f32 %v5939, 0.0
    %v5956 = vmax.f32 %v5940, 0.0
    %v5957 = vmax.f32 %v5941, 0.0
    %v5958 = vmax.f32 %v5942, 0.0
    %v5959 = vmax.f32 %v5943, 0.0
    %v5960 = vmax.f32 %v5944, 0.0
    %v5961 = vmax.f32 %v5945, 0.0
    %v5962 = vmax.f32 %v5946, 0.0
    %v5963 = vmax.f32 %v5947, 0.0
    %v5964 = vmax.f32 %v5948, 0.0
    %v5965 = vmax.f32 %v5949, 0.0
    %v5966 = vmax.f32 %v5950, 0.0
    %v5967 = vmax.f32 %v5951, 0.0
    %v5968 = vmax.f32 %v5952, 0.0
    %v5969 = vmax.f32 %v5953, 0.0
    %v5970 = vld [vmem:[#allocation7] sm:$0xff]
    %v5971 = vld [vmem:[#allocation7 + $0x8] sm:$0xff]
    %v5972 = vld [vmem:[#allocation7 + $0x10] sm:$0xff]
    %v5973 = vld [vmem:[#allocation7 + $0x18] sm:$0xff]
    %v5974 = vld [vmem:[#allocation7 + $0x20] sm:$0xff]
    %v5975 = vld [vmem:[#allocation7 + $0x28] sm:$0xff]
    %v5976 = vld [vmem:[#allocation7 + $0x30] sm:$0xff]
    %v5977 = vld [vmem:[#allocation7 + $0x38] sm:$0xff]
    %v5978 = vld [vmem:[#allocation7 + $0x40] sm:$0xff]
    %v5979 = vld [vmem:[#allocation7 + $0x48] sm:$0xff]
    %v5980 = vld [vmem:[#allocation7 + $0x50] sm:$0xff]
    %v5981 = vld [vmem:[#allocation7 + $0x58] sm:$0xff]
    %v5982 = vld [vmem:[#allocation7 + $0x60] sm:$0xff]
    %v5983 = vld [vmem:[#allocation7 + $0x68] sm:$0xff]
    %v5984 = vld [vmem:[#allocation7 + $0x70] sm:$0xff]
    %v5985 = vld [vmem:[#allocation7 + $0x78] sm:$0xff]
    %v5986 = vld [vmem:[#allocation7 + $0x80] sm:$0xff]
    %v5987 = vld [vmem:[#allocation7 + $0x88] sm:$0xff]
    %v5988 = vld [vmem:[#allocation7 + $0x90] sm:$0xff]
    %v5989 = vld [vmem:[#allocation7 + $0x98] sm:$0xff]
    %v5990 = vld [vmem:[#allocation7 + $0xa0] sm:$0xff]
    %v5991 = vld [vmem:[#allocation7 + $0xa8] sm:$0xff]
    %v5992 = vld [vmem:[#allocation7 + $0xb0] sm:$0xff]
    %v5993 = vld [vmem:[#allocation7 + $0xb8] sm:$0xff]
    %v5994 = vld [vmem:[#allocation7 + $0xc0] sm:$0xff]
    %v5995 = vld [vmem:[#allocation7 + $0xc8] sm:$0xff]
    %v5996 = vld [vmem:[#allocation7 + $0xd0] sm:$0xff]
    %v5997 = vld [vmem:[#allocation7 + $0xd8] sm:$0xff]
    %v5998 = vld [vmem:[#allocation7 + $0xe0] sm:$0xff]
    %v5999 = vld [vmem:[#allocation7 + $0xe8] sm:$0xff]
    %v6000 = vld [vmem:[#allocation7 + $0xf0] sm:$0xff]
    %v6001 = vld [vmem:[#allocation7 + $0xf8] sm:$0xff]
    %v6002 = vld [vmem:[%s31] sm:$0x1]
    %v6004 = vperm.slane %v6002, 0
    %6022 = vst [vmem:[#allocation1] ss:$2 sm:$0xff] %v5954
    %s6023 = scalar_lea.vmem [#allocation1], 1
    %6024 = vst [vmem:[%s6023] ss:$2 sm:$0xff] %v5955
    %s6025 = scalar_lea.vmem [#allocation1], 16
    %6026 = vst [vmem:[%s6025] ss:$2 sm:$0xff] %v5956
    %s6027 = scalar_lea.vmem [#allocation1], 17
    %6028 = vst [vmem:[%s6027] ss:$2 sm:$0xff] %v5957
    %s6029 = scalar_lea.vmem [#allocation1], 32
    %6030 = vst [vmem:[%s6029] ss:$2 sm:$0xff] %v5958
    %s6031 = scalar_lea.vmem [#allocation1], 33
    %6032 = vst [vmem:[%s6031] ss:$2 sm:$0xff] %v5959
    %s6033 = scalar_lea.vmem [#allocation1], 48
    %6034 = vst [vmem:[%s6033] ss:$2 sm:$0xff] %v5960
    %s6035 = scalar_lea.vmem [#allocation1], 49
    %6036 = vst [vmem:[%s6035] ss:$2 sm:$0xff] %v5961
    %v6037 = vld.sshfl [vmem:[#allocation1] sm:$0xff pattern:$0x75316420]
    %v6038 = vld.sshfl [vmem:[#allocation1 + $0x8] sm:$0xff pattern:$0x75316420]
    %v6039 = vld.sshfl [vmem:[#allocation1 + $0x10] sm:$0xff pattern:$0x75316420]
    %v6040 = vld.sshfl [vmem:[#allocation1 + $0x18] sm:$0xff pattern:$0x75316420]
    %v6041 = vld.sshfl [vmem:[#allocation1 + $0x20] sm:$0xff pattern:$0x75316420]
    %v6042 = vld.sshfl [vmem:[#allocation1 + $0x28] sm:$0xff pattern:$0x75316420]
    %v6043 = vld.sshfl [vmem:[#allocation1 + $0x30] sm:$0xff pattern:$0x75316420]
    %v6044 = vld.sshfl [vmem:[#allocation1 + $0x38] sm:$0xff pattern:$0x75316420]
    %6045 = vst [vmem:[#allocation1] ss:$2 sm:$0xff] %v5962
    %6046 = vst [vmem:[%s6023] ss:$2 sm:$0xff] %v5963
    %6047 = vst [vmem:[%s6025] ss:$2 sm:$0xff] %v5964
    %6048 = vst [vmem:[%s6027] ss:$2 sm:$0xff] %v5965
    %6049 = vst [vmem:[%s6029] ss:$2 sm:$0xff] %v5966
    %6050 = vst [vmem:[%s6031] ss:$2 sm:$0xff] %v5967
    %6051 = vst [vmem:[%s6033] ss:$2 sm:$0xff] %v5968
    %6052 = vst [vmem:[%s6035] ss:$2 sm:$0xff] %v5969
    %v6053 = vld.sshfl [vmem:[#allocation1] sm:$0xff pattern:$0x75316420]
    %v6054 = vld.sshfl [vmem:[#allocation1 + $0x8] sm:$0xff pattern:$0x75316420]
    %v6055 = vld.sshfl [vmem:[#allocation1 + $0x10] sm:$0xff pattern:$0x75316420]
    %v6056 = vld.sshfl [vmem:[#allocation1 + $0x18] sm:$0xff pattern:$0x75316420]
    %v6057 = vld.sshfl [vmem:[#allocation1 + $0x20] sm:$0xff pattern:$0x75316420]
    %v6058 = vld.sshfl [vmem:[#allocation1 + $0x28] sm:$0xff pattern:$0x75316420]
    %v6059 = vld.sshfl [vmem:[#allocation1 + $0x30] sm:$0xff pattern:$0x75316420]
    %v6060 = vld.sshfl [vmem:[#allocation1 + $0x38] sm:$0xff pattern:$0x75316420]
    %6077 = vmatpush.msra.mxu0 %v5985
    %6078 = vmatpush.msra.mxu0 %v5984
    %6079 = vmatpush.msra.mxu0 %v5983
    %6080 = vmatpush.msra.mxu0 %v5982
    %6081 = vmatpush.msra.mxu0 %v5981
    %6082 = vmatpush.msra.mxu0 %v5980
    %6083 = vmatpush.msra.mxu0 %v5979
    %6084 = vmatpush.msra.mxu0 %v5978
    %6085 = vmatpush.msra.mxu0 %v5977
    %6086 = vmatpush.msra.mxu0 %v5976
    %6087 = vmatpush.msra.mxu0 %v5975
    %6088 = vmatpush.msra.mxu0 %v5974
    %6089 = vmatpush.msra.mxu0 %v5973
    %6090 = vmatpush.msra.mxu0 %v5972
    %6091 = vmatpush.msra.mxu0 %v5971
    %6092 = vmatpush.msra.mxu0 %v5970
    %6093 = vmatmul.f32.gmra.mxu0 %v6037
    %v6094 = vpop.f32.mrf.mxu0
    %v6095 = vadd.f32 %v6004, %v6094
    %6096 = vmatmul.f32.gmra.mxu0 %v6039
    %v6097 = vpop.f32.mrf.mxu0
    %v6098 = vadd.f32 %v6004, %v6097
    %6099 = vmatmul.f32.gmra.mxu0 %v6041
    %v6100 = vpop.f32.mrf.mxu0
    %v6101 = vadd.f32 %v6004, %v6100
    %6102 = vmatmul.f32.gmra.mxu0 %v6043
    %v6103 = vpop.f32.mrf.mxu0
    %v6104 = vadd.f32 %v6004, %v6103
    %6105 = vmatmul.f32.gmra.mxu0 %v6053
    %v6106 = vpop.f32.mrf.mxu0
    %v6107 = vadd.f32 %v6004, %v6106
    %6108 = vmatmul.f32.gmra.mxu0 %v6055
    %v6109 = vpop.f32.mrf.mxu0
    %v6110 = vadd.f32 %v6004, %v6109
    %6111 = vmatmul.f32.gmra.mxu0 %v6057
    %v6112 = vpop.f32.mrf.mxu0
    %v6113 = vadd.f32 %v6004, %v6112
    %6114 = vmatmul.f32.gmra.mxu0 %v6059
    %v6115 = vpop.f32.mrf.mxu0
    %v6116 = vadd.f32 %v6004, %v6115
    %6117 = vdwg.mxu0
    %6118 = vmatpush.msra.mxu0 %v6001
    %6119 = vmatpush.msra.mxu0 %v6000
    %6120 = vmatpush.msra.mxu0 %v5999
    %6121 = vmatpush.msra.mxu0 %v5998
    %6122 = vmatpush.msra.mxu0 %v5997
    %6123 = vmatpush.msra.mxu0 %v5996
    %6124 = vmatpush.msra.mxu0 %v5995
    %6125 = vmatpush.msra.mxu0 %v5994
    %6126 = vmatpush.msra.mxu0 %v5993
    %6127 = vmatpush.msra.mxu0 %v5992
    %6128 = vmatpush.msra.mxu0 %v5991
    %6129 = vmatpush.msra.mxu0 %v5990
    %6130 = vmatpush.msra.mxu0 %v5989
    %6131 = vmatpush.msra.mxu0 %v5988
    %6132 = vmatpush.msra.mxu0 %v5987
    %6133 = vmatpush.msra.mxu0 %v5986
    %6134 = vmatmul.f32.gmra.mxu0 %v6038
    %v6135 = vpop.f32.mrf.mxu0
    %v6136 = vadd.f32 %v6095, %v6135
    %6137 = vmatmul.f32.gmra.mxu0 %v6040
    %v6138 = vpop.f32.mrf.mxu0
    %v6139 = vadd.f32 %v6098, %v6138
    %6140 = vmatmul.f32.gmra.mxu0 %v6042
    %v6141 = vpop.f32.mrf.mxu0
    %v6142 = vadd.f32 %v6101, %v6141
    %6143 = vmatmul.f32.gmra.mxu0 %v6044
    %v6144 = vpop.f32.mrf.mxu0
    %v6145 = vadd.f32 %v6104, %v6144
    %6146 = vmatmul.f32.gmra.mxu0 %v6054
    %v6147 = vpop.f32.mrf.mxu0
    %v6148 = vadd.f32 %v6107, %v6147
    %6149 = vmatmul.f32.gmra.mxu0 %v6056
    %v6150 = vpop.f32.mrf.mxu0
    %v6151 = vadd.f32 %v6110, %v6150
    %6152 = vmatmul.f32.gmra.mxu0 %v6058
    %v6153 = vpop.f32.mrf.mxu0
    %v6154 = vadd.f32 %v6113, %v6153
    %6155 = vmatmul.f32.gmra.mxu0 %v6060
    %v6156 = vpop.f32.mrf.mxu0
    %v6157 = vadd.f32 %v6116, %v6156
    %6158 = vdwg.mxu0
    %v6159 = vld [vmem:[%s33] sm:$0x1]
    %v6160 = vld [vmem:[%s35] sm:$0x1]
    %v6161 = vadd.f32 %v6136, %v6139
    %v6162 = vadd.f32 %v6161, %v6142
    %v6163 = vadd.f32 %v6162, %v6145
    %v6164 = vadd.f32 %v6163, %v6148
    %v6165 = vadd.f32 %v6164, %v6151
    %v6166 = vadd.f32 %v6165, %v6154
    %v6167 = vadd.f32 %v6166, %v6157
    %v6168 = vrot.slane %v6167, 4
    %v6169 = vadd.f32 %v6167, %v6168
    %v6170 = vrot.slane %v6169, 2
    %v6171 = vadd.f32 %v6169, %v6170
    %v6172 = vrot.slane %v6171, 1
    %v6173 = vadd.f32 %v6171, %v6172
    %v6174 = vmul.f32 %v6173, %v5742
    %v6175 = vmul.f32 %v6136, %v6136
    %v6176 = vmul.f32 %v6139, %v6139
    %v6177 = vmul.f32 %v6142, %v6142
    %v6178 = vmul.f32 %v6145, %v6145
    %v6179 = vmul.f32 %v6148, %v6148
    %v6180 = vmul.f32 %v6151, %v6151
    %v6181 = vmul.f32 %v6154, %v6154
    %v6182 = vmul.f32 %v6157, %v6157
    %v6183 = vadd.f32 %v6175, %v6176
    %v6184 = vadd.f32 %v6183, %v6177
    %v6185 = vadd.f32 %v6184, %v6178
    %v6186 = vadd.f32 %v6185, %v6179
    %v6187 = vadd.f32 %v6186, %v6180
    %v6188 = vadd.f32 %v6187, %v6181
    %v6189 = vadd.f32 %v6188, %v6182
    %v6190 = vrot.slane %v6189, 4
    %v6191 = vadd.f32 %v6189, %v6190
    %v6192 = vrot.slane %v6191, 2
    %v6193 = vadd.f32 %v6191, %v6192
    %v6194 = vrot.slane %v6193, 1
    %v6195 = vadd.f32 %v6193, %v6194
    %v6196 = vmul.f32 %v6195, %v5742
    %v6197 = vmul.f32 %v6174, %v6174
    %v6198 = vsub.f32 %v6196, %v6197
    %v6199 = vmax.f32 %v6198, 0.0
    %v6200 = vadd.f32 %v6199, 1e-05
    %v6201 = vrsqrt.pop %v6200
    %v6202 = vmul.f32 %v6201, %v6200
    %v6203 = vmul.f32 %v6202, %v6201
    %v6204 = vmul.f32 0.5, %v6203
    %v6205 = vsub.f32 1.5, %v6204
    %v6206 = vmul.f32 %v6201, %v6205
    %vm6207 = vweird.f32 %v6200
    %vm6208 = vweird.f32 %v6201
    %vm6209 = vmor %vm6207, %vm6208
    %v6210 = vsel %vm6209, %v6201, %v6206
    %v6211 = vmul.f32 %v6159, %v6210
    %v6212 = vmul.f32 %v6174, %v6211
    %v6213 = vsub.f32 %v6160, %v6212
    %v6215 = vperm.slane %v6211, 0
    %v6217 = vmul.f32 %v6136, %v6215
    %v6218 = vmul.f32 %v6139, %v6215
    %v6219 = vmul.f32 %v6142, %v6215
    %v6220 = vmul.f32 %v6145, %v6215
    %v6221 = vmul.f32 %v6148, %v6215
    %v6222 = vmul.f32 %v6151, %v6215
    %v6223 = vmul.f32 %v6154, %v6215
    %v6224 = vmul.f32 %v6157, %v6215
    %v6226 = vperm.slane %v6213, 0
    %v6228 = vadd.f32 %v6217, %v6226
    %v6229 = vadd.f32 %v6218, %v6226
    %v6230 = vadd.f32 %v6219, %v6226
    %v6231 = vadd.f32 %v6220, %v6226
    %v6232 = vadd.f32 %v6221, %v6226
    %v6233 = vadd.f32 %v6222, %v6226
    %v6234 = vadd.f32 %v6223, %v6226
    %v6235 = vadd.f32 %v6224, %v6226
    %v6236 = vmax.f32 %v6228, 0.0
    %v6237 = vmax.f32 %v6229, 0.0
    %v6238 = vmax.f32 %v6230, 0.0
    %v6239 = vmax.f32 %v6231, 0.0
    %v6240 = vmax.f32 %v6232, 0.0
    %v6241 = vmax.f32 %v6233, 0.0
    %v6242 = vmax.f32 %v6234, 0.0
    %v6243 = vmax.f32 %v6235, 0.0
    %v6244 = vlaneseq
    %v6245 = vshrl.u32 %v6244, 7
    %v6246 = vadd.s32 %v6245, 8
    %v6247 = vadd.s32 %v6245, 16
    %v6248 = vadd.s32 %v6245, 24
    %v6249 = vadd.s32 %v6245, 32
    %v6250 = vadd.s32 %v6245, 40
    %v6251 = vadd.s32 %v6245, 48
    %v6252 = vadd.s32 %v6245, 56
    %vm6253 = vcmp.lt.s32.totalorder %v6245, 0
    %v6254 = vsub.s32 0, %v6245
    %v6255 = vsel %vm6253, %v6254, %v6245
    %v6256 = vshrl.u32 %v6255, 5
    %v6257 = vand.u32 %v6255, 31
    %v6258 = vsub.s32 0, %v6257
    %v6259 = vsel %vm6253, %v6258, %v6257
    %vm6260 = vcmp.lt.s32.totalorder %v6246, 0
    %v6261 = vsub.s32 0, %v6246
    %v6262 = vsel %vm6260, %v6261, %v6246
    %v6263 = vshrl.u32 %v6262, 5
    %v6264 = vand.u32 %v6262, 31
    %v6265 = vsub.s32 0, %v6264
    %v6266 = vsel %vm6260, %v6265, %v6264
    %vm6267 = vcmp.lt.s32.totalorder %v6247, 0
    %v6268 = vsub.s32 0, %v6247
    %v6269 = vsel %vm6267, %v6268, %v6247
    %v6270 = vshrl.u32 %v6269, 5
    %v6271 = vand.u32 %v6269, 31
    %v6272 = vsub.s32 0, %v6271
    %v6273 = vsel %vm6267, %v6272, %v6271
    %vm6274 = vcmp.lt.s32.totalorder %v6248, 0
    %v6275 = vsub.s32 0, %v6248
    %v6276 = vsel %vm6274, %v6275, %v6248
    %v6277 = vshrl.u32 %v6276, 5
    %v6278 = vand.u32 %v6276, 31
    %v6279 = vsub.s32 0, %v6278
    %v6280 = vsel %vm6274, %v6279, %v6278
    %vm6281 = vcmp.lt.s32.totalorder %v6249, 0
    %v6282 = vsub.s32 0, %v6249
    %v6283 = vsel %vm6281, %v6282, %v6249
    %v6284 = vshrl.u32 %v6283, 5
    %v6285 = vand.u32 %v6283, 31
    %v6286 = vsub.s32 0, %v6285
    %v6287 = vsel %vm6281, %v6286, %v6285
    %vm6288 = vcmp.lt.s32.totalorder %v6250, 0
    %v6289 = vsub.s32 0, %v6250
    %v6290 = vsel %vm6288, %v6289, %v6250
    %v6291 = vshrl.u32 %v6290, 5
    %v6292 = vand.u32 %v6290, 31
    %v6293 = vsub.s32 0, %v6292
    %v6294 = vsel %vm6288, %v6293, %v6292
    %vm6295 = vcmp.lt.s32.totalorder %v6251, 0
    %v6296 = vsub.s32 0, %v6251
    %v6297 = vsel %vm6295, %v6296, %v6251
    %v6298 = vshrl.u32 %v6297, 5
    %v6299 = vand.u32 %v6297, 31
    %v6300 = vsub.s32 0, %v6299
    %v6301 = vsel %vm6295, %v6300, %v6299
    %vm6302 = vcmp.lt.s32.totalorder %v6252, 0
    %v6303 = vsub.s32 0, %v6252
    %v6304 = vsel %vm6302, %v6303, %v6252
    %v6305 = vshrl.u32 %v6304, 5
    %v6306 = vand.u32 %v6304, 31
    %v6307 = vsub.s32 0, %v6306
    %v6308 = vsel %vm6302, %v6307, %v6306
    %vm6309 = vcmp.ne.s32.totalorder %v6259, 0
    %vm6310 = vcmp.ne.s32.totalorder %v6266, 0
    %vm6311 = vcmp.ne.s32.totalorder %v6273, 0
    %vm6312 = vcmp.ne.s32.totalorder %v6280, 0
    %vm6313 = vcmp.ne.s32.totalorder %v6287, 0
    %vm6314 = vcmp.ne.s32.totalorder %v6294, 0
    %vm6315 = vcmp.ne.s32.totalorder %v6301, 0
    %vm6316 = vcmp.ne.s32.totalorder %v6308, 0
    %vm6317 = vcmp.lt.s32.totalorder %v6259, 0
    %vm6318 = vcmp.lt.s32.totalorder %v6266, 0
    %vm6319 = vcmp.lt.s32.totalorder %v6273, 0
    %vm6320 = vcmp.lt.s32.totalorder %v6280, 0
    %vm6321 = vcmp.lt.s32.totalorder %v6287, 0
    %vm6322 = vcmp.lt.s32.totalorder %v6294, 0
    %vm6323 = vcmp.lt.s32.totalorder %v6301, 0
    %vm6324 = vcmp.lt.s32.totalorder %v6308, 0
    %vm6325 = vmand %vm6317, %vm6309
    %vm6326 = vmand %vm6318, %vm6310
    %vm6327 = vmand %vm6319, %vm6311
    %vm6328 = vmand %vm6320, %vm6312
    %vm6329 = vmand %vm6321, %vm6313
    %vm6330 = vmand %vm6322, %vm6314
    %vm6331 = vmand %vm6323, %vm6315
    %vm6332 = vmand %vm6324, %vm6316
    %v6333 = vadd.s32 %v6259, 32
    %v6334 = vadd.s32 %v6266, 32
    %v6335 = vadd.s32 %v6273, 32
    %v6336 = vadd.s32 %v6280, 32
    %v6337 = vadd.s32 %v6287, 32
    %v6338 = vadd.s32 %v6294, 32
    %v6339 = vadd.s32 %v6301, 32
    %v6340 = vadd.s32 %v6308, 32
    %v6341 = vsel %vm6325, %v6333, %v6259
    %v6342 = vsel %vm6326, %v6334, %v6266
    %v6343 = vsel %vm6327, %v6335, %v6273
    %v6344 = vsel %vm6328, %v6336, %v6280
    %v6345 = vsel %vm6329, %v6337, %v6287
    %v6346 = vsel %vm6330, %v6338, %v6294
    %v6347 = vsel %vm6331, %v6339, %v6301
    %v6348 = vsel %vm6332, %v6340, %v6308
    %vm6349 = vcmp.ne.s32.totalorder %v6341, 0
    %vm6350 = vcmp.ne.s32.totalorder %v6342, 0
    %vm6351 = vcmp.ne.s32.totalorder %v6343, 0
    %vm6352 = vcmp.ne.s32.totalorder %v6344, 0
    %vm6353 = vcmp.ne.s32.totalorder %v6345, 0
    %vm6354 = vcmp.ne.s32.totalorder %v6346, 0
    %vm6355 = vcmp.ne.s32.totalorder %v6347, 0
    %vm6356 = vcmp.ne.s32.totalorder %v6348, 0
    %vm6357 = vcmp.ne.s32.totalorder %v6341, 31
    %vm6358 = vcmp.ne.s32.totalorder %v6342, 31
    %vm6359 = vcmp.ne.s32.totalorder %v6343, 31
    %vm6360 = vcmp.ne.s32.totalorder %v6344, 31
    %vm6361 = vcmp.ne.s32.totalorder %v6345, 31
    %vm6362 = vcmp.ne.s32.totalorder %v6346, 31
    %vm6363 = vcmp.ne.s32.totalorder %v6347, 31
    %vm6364 = vcmp.ne.s32.totalorder %v6348, 31
    %v6365 = vld [vmem:[%s39] sm:$0x1]
    %6366 = vst [vmem:[#allocation2 + $0x8] sm:$0xff] %v6236
    %6367 = vst [vmem:[#allocation2 + $0x10] sm:$0xff] %v6237
    %6368 = vst [vmem:[#allocation2 + $0x18] sm:$0xff] %v6238
    %6369 = vst [vmem:[#allocation2 + $0x20] sm:$0xff] %v6239
    %6370 = vst [vmem:[#allocation2 + $0x28] sm:$0xff] %v6240
    %6371 = vst [vmem:[#allocation2 + $0x30] sm:$0xff] %v6241
    %6372 = vst [vmem:[#allocation2 + $0x38] sm:$0xff] %v6242
    %6373 = vst [vmem:[#allocation2 + $0x40] sm:$0xff] %v6243
    %v6374 = vld [vmem:[#allocation2 + $0x7] sm:$0xff]
    %v6375 = vld [vmem:[#allocation2 + $0xf] sm:$0xff]
    %v6376 = vld [vmem:[#allocation2 + $0x17] sm:$0xff]
    %v6377 = vld [vmem:[#allocation2 + $0x1f] sm:$0xff]
    %v6378 = vld [vmem:[#allocation2 + $0x27] sm:$0xff]
    %v6379 = vld [vmem:[#allocation2 + $0x2f] sm:$0xff]
    %v6380 = vld [vmem:[#allocation2 + $0x37] sm:$0xff]
    %v6381 = vld [vmem:[#allocation2 + $0x3f] sm:$0xff]
    %v6382 = vsel %vm6349, 1, 0
    %v6383 = vsel %vm6350, 1, 0
    %v6384 = vsel %vm6351, 1, 0
    %v6385 = vsel %vm6352, 1, 0
    %v6386 = vsel %vm6353, 1, 0
    %v6387 = vsel %vm6354, 1, 0
    %v6388 = vsel %vm6355, 1, 0
    %v6389 = vsel %vm6356, 1, 0
    %vm6390 = vcmp.eq.s32.totalorder %v6382, 1
    %vm6391 = vcmp.eq.s32.totalorder %v6383, 1
    %vm6392 = vcmp.eq.s32.totalorder %v6384, 1
    %vm6393 = vcmp.eq.s32.totalorder %v6385, 1
    %vm6394 = vcmp.eq.s32.totalorder %v6386, 1
    %vm6395 = vcmp.eq.s32.totalorder %v6387, 1
    %vm6396 = vcmp.eq.s32.totalorder %v6388, 1
    %vm6397 = vcmp.eq.s32.totalorder %v6389, 1
    %v6398 = vsel %vm6390, %v6374, 0.0
    %v6399 = vsel %vm6391, %v6375, 0.0
    %v6400 = vsel %vm6392, %v6376, 0.0
    %v6401 = vsel %vm6393, %v6377, 0.0
    %v6402 = vsel %vm6394, %v6378, 0.0
    %v6403 = vsel %vm6395, %v6379, 0.0
    %v6404 = vsel %vm6396, %v6380, 0.0
    %v6405 = vsel %vm6397, %v6381, 0.0
    %v6406 = vld [vmem:[#allocation2 + $0x9] sm:$0xff]
    %v6407 = vld [vmem:[#allocation2 + $0x11] sm:$0xff]
    %v6408 = vld [vmem:[#allocation2 + $0x19] sm:$0xff]
    %v6409 = vld [vmem:[#allocation2 + $0x21] sm:$0xff]
    %v6410 = vld [vmem:[#allocation2 + $0x29] sm:$0xff]
    %v6411 = vld [vmem:[#allocation2 + $0x31] sm:$0xff]
    %v6412 = vld [vmem:[#allocation2 + $0x39] sm:$0xff]
    %v6413 = vld [vmem:[#allocation2 + $0x41] sm:$0xff]
    %v6414 = vsel %vm6357, 1, 0
    %v6415 = vsel %vm6358, 1, 0
    %v6416 = vsel %vm6359, 1, 0
    %v6417 = vsel %vm6360, 1, 0
    %v6418 = vsel %vm6361, 1, 0
    %v6419 = vsel %vm6362, 1, 0
    %v6420 = vsel %vm6363, 1, 0
    %v6421 = vsel %vm6364, 1, 0
    %vm6422 = vcmp.eq.s32.totalorder %v6414, 1
    %vm6423 = vcmp.eq.s32.totalorder %v6415, 1
    %vm6424 = vcmp.eq.s32.totalorder %v6416, 1
    %vm6425 = vcmp.eq.s32.totalorder %v6417, 1
    %vm6426 = vcmp.eq.s32.totalorder %v6418, 1
    %vm6427 = vcmp.eq.s32.totalorder %v6419, 1
    %vm6428 = vcmp.eq.s32.totalorder %v6420, 1
    %vm6429 = vcmp.eq.s32.totalorder %v6421, 1
    %v6430 = vsel %vm6422, %v6406, 0.0
    %v6431 = vsel %vm6423, %v6407, 0.0
    %v6432 = vsel %vm6424, %v6408, 0.0
    %v6433 = vsel %vm6425, %v6409, 0.0
    %v6434 = vsel %vm6426, %v6410, 0.0
    %v6435 = vsel %vm6427, %v6411, 0.0
    %v6436 = vsel %vm6428, %v6412, 0.0
    %v6437 = vsel %vm6429, %v6413, 0.0
    %v6438 = vld [vmem:[%s37] sm:$0xff]
    %v6439 = vld [vmem:[%s37 + $0x8] sm:$0xff]
    %v6440 = vld [vmem:[%s37 + $0x10] sm:$0xff]
    %v6441 = vld [vmem:[%s37 + $0x18] sm:$0xff]
    %v6442 = vld [vmem:[%s37 + $0x20] sm:$0xff]
    %v6443 = vld [vmem:[%s37 + $0x28] sm:$0xff]
    %v6444 = vld [vmem:[%s37 + $0x30] sm:$0xff]
    %v6445 = vld [vmem:[%s37 + $0x38] sm:$0xff]
    %v6446 = vld [vmem:[%s37 + $0x40] sm:$0xff]
    %v6447 = vld [vmem:[%s37 + $0x48] sm:$0xff]
    %v6448 = vld [vmem:[%s37 + $0x50] sm:$0xff]
    %v6449 = vld [vmem:[%s37 + $0x58] sm:$0xff]
    %v6450 = vld [vmem:[%s37 + $0x60] sm:$0xff]
    %v6451 = vld [vmem:[%s37 + $0x68] sm:$0xff]
    %v6452 = vld [vmem:[%s37 + $0x70] sm:$0xff]
    %v6453 = vld [vmem:[%s37 + $0x78] sm:$0xff]
    %s6454 = scalar_lea.vmem %s37, 128
    %v6455 = vld [vmem:[%s6454] sm:$0xff]
    %v6456 = vld [vmem:[%s6454 + $0x8] sm:$0xff]
    %v6457 = vld [vmem:[%s6454 + $0x10] sm:$0xff]
    %v6458 = vld [vmem:[%s6454 + $0x18] sm:$0xff]
    %v6459 = vld [vmem:[%s6454 + $0x20] sm:$0xff]
    %v6460 = vld [vmem:[%s6454 + $0x28] sm:$0xff]
    %v6461 = vld [vmem:[%s6454 + $0x30] sm:$0xff]
    %v6462 = vld [vmem:[%s6454 + $0x38] sm:$0xff]
    %v6463 = vld [vmem:[%s6454 + $0x40] sm:$0xff]
    %v6464 = vld [vmem:[%s6454 + $0x48] sm:$0xff]
    %v6465 = vld [vmem:[%s6454 + $0x50] sm:$0xff]
    %v6466 = vld [vmem:[%s6454 + $0x58] sm:$0xff]
    %v6467 = vld [vmem:[%s6454 + $0x60] sm:$0xff]
    %v6468 = vld [vmem:[%s6454 + $0x68] sm:$0xff]
    %v6469 = vld [vmem:[%s6454 + $0x70] sm:$0xff]
    %v6470 = vld [vmem:[%s6454 + $0x78] sm:$0xff]
    %6471 = vmatpush.msra.mxu0 %v6470
    %6472 = vmatpush.msra.mxu0 %v6469
    %6473 = vmatpush.msra.mxu0 %v6468
    %6474 = vmatpush.msra.mxu0 %v6467
    %6475 = vmatpush.msra.mxu0 %v6466
    %6476 = vmatpush.msra.mxu0 %v6465
    %6477 = vmatpush.msra.mxu0 %v6464
    %6478 = vmatpush.msra.mxu0 %v6463
    %6479 = vmatpush.msra.mxu0 %v6462
    %6480 = vmatpush.msra.mxu0 %v6461
    %6481 = vmatpush.msra.mxu0 %v6460
    %6482 = vmatpush.msra.mxu0 %v6459
    %6483 = vmatpush.msra.mxu0 %v6458
    %6484 = vmatpush.msra.mxu0 %v6457
    %6485 = vmatpush.msra.mxu0 %v6456
    %6486 = vmatpush.msra.mxu0 %v6455
    %6487 = vmatmul.f32.gmra.mxu0 %v6236
    %v6488 = vpop.f32.mrf.mxu0
    %v6489 = vadd.f32 0.0, %v6488
    %6490 = vmatmul.f32.gmra.mxu0 %v6237
    %v6491 = vpop.f32.mrf.mxu0
    %v6492 = vadd.f32 0.0, %v6491
    %6493 = vmatmul.f32.gmra.mxu0 %v6238
    %v6494 = vpop.f32.mrf.mxu0
    %v6495 = vadd.f32 0.0, %v6494
    %6496 = vmatmul.f32.gmra.mxu0 %v6239
    %v6497 = vpop.f32.mrf.mxu0
    %v6498 = vadd.f32 0.0, %v6497
    %6499 = vmatmul.f32.gmra.mxu0 %v6240
    %v6500 = vpop.f32.mrf.mxu0
    %v6501 = vadd.f32 0.0, %v6500
    %6502 = vmatmul.f32.gmra.mxu0 %v6241
    %v6503 = vpop.f32.mrf.mxu0
    %v6504 = vadd.f32 0.0, %v6503
    %6505 = vmatmul.f32.gmra.mxu0 %v6242
    %v6506 = vpop.f32.mrf.mxu0
    %v6507 = vadd.f32 0.0, %v6506
    %6508 = vmatmul.f32.gmra.mxu0 %v6243
    %v6509 = vpop.f32.mrf.mxu0
    %v6510 = vadd.f32 0.0, %v6509
    %6511 = vdwg.mxu0
    %6512 = vmatpush.msra.mxu0 %v6453
    %6513 = vmatpush.msra.mxu0 %v6452
    %6514 = vmatpush.msra.mxu0 %v6451
    %6515 = vmatpush.msra.mxu0 %v6450
    %6516 = vmatpush.msra.mxu0 %v6449
    %6517 = vmatpush.msra.mxu0 %v6448
    %6518 = vmatpush.msra.mxu0 %v6447
    %6519 = vmatpush.msra.mxu0 %v6446
    %6520 = vmatpush.msra.mxu0 %v6445
    %6521 = vmatpush.msra.mxu0 %v6444
    %6522 = vmatpush.msra.mxu0 %v6443
    %6523 = vmatpush.msra.mxu0 %v6442
    %6524 = vmatpush.msra.mxu0 %v6441
    %6525 = vmatpush.msra.mxu0 %v6440
    %6526 = vmatpush.msra.mxu0 %v6439
    %6527 = vmatpush.msra.mxu0 %v6438
    %6528 = vmatmul.f32.gmra.mxu0 %v6398
    %v6529 = vpop.f32.mrf.mxu0
    %v6530 = vadd.f32 %v6489, %v6529
    %6531 = vmatmul.f32.gmra.mxu0 %v6399
    %v6532 = vpop.f32.mrf.mxu0
    %v6533 = vadd.f32 %v6492, %v6532
    %6534 = vmatmul.f32.gmra.mxu0 %v6400
    %v6535 = vpop.f32.mrf.mxu0
    %v6536 = vadd.f32 %v6495, %v6535
    %6537 = vmatmul.f32.gmra.mxu0 %v6401
    %v6538 = vpop.f32.mrf.mxu0
    %v6539 = vadd.f32 %v6498, %v6538
    %6540 = vmatmul.f32.gmra.mxu0 %v6402
    %v6541 = vpop.f32.mrf.mxu0
    %v6542 = vadd.f32 %v6501, %v6541
    %6543 = vmatmul.f32.gmra.mxu0 %v6403
    %v6544 = vpop.f32.mrf.mxu0
    %v6545 = vadd.f32 %v6504, %v6544
    %6546 = vmatmul.f32.gmra.mxu0 %v6404
    %v6547 = vpop.f32.mrf.mxu0
    %v6548 = vadd.f32 %v6507, %v6547
    %6549 = vmatmul.f32.gmra.mxu0 %v6405
    %v6550 = vpop.f32.mrf.mxu0
    %v6551 = vadd.f32 %v6510, %v6550
    %6552 = vdwg.mxu0
    %s6553 = scalar_lea.vmem %s37, 256
    %v6554 = vld [vmem:[%s6553] sm:$0xff]
    %v6555 = vld [vmem:[%s6553 + $0x8] sm:$0xff]
    %v6556 = vld [vmem:[%s6553 + $0x10] sm:$0xff]
    %v6557 = vld [vmem:[%s6553 + $0x18] sm:$0xff]
    %v6558 = vld [vmem:[%s6553 + $0x20] sm:$0xff]
    %v6559 = vld [vmem:[%s6553 + $0x28] sm:$0xff]
    %v6560 = vld [vmem:[%s6553 + $0x30] sm:$0xff]
    %v6561 = vld [vmem:[%s6553 + $0x38] sm:$0xff]
    %v6562 = vld [vmem:[%s6553 + $0x40] sm:$0xff]
    %v6563 = vld [vmem:[%s6553 + $0x48] sm:$0xff]
    %v6564 = vld [vmem:[%s6553 + $0x50] sm:$0xff]
    %v6565 = vld [vmem:[%s6553 + $0x58] sm:$0xff]
    %v6566 = vld [vmem:[%s6553 + $0x60] sm:$0xff]
    %v6567 = vld [vmem:[%s6553 + $0x68] sm:$0xff]
    %v6568 = vld [vmem:[%s6553 + $0x70] sm:$0xff]
    %v6569 = vld [vmem:[%s6553 + $0x78] sm:$0xff]
    %6570 = vmatpush.msra.mxu0 %v6569
    %6571 = vmatpush.msra.mxu0 %v6568
    %6572 = vmatpush.msra.mxu0 %v6567
    %6573 = vmatpush.msra.mxu0 %v6566
    %6574 = vmatpush.msra.mxu0 %v6565
    %6575 = vmatpush.msra.mxu0 %v6564
    %6576 = vmatpush.msra.mxu0 %v6563
    %6577 = vmatpush.msra.mxu0 %v6562
    %6578 = vmatpush.msra.mxu0 %v6561
    %6579 = vmatpush.msra.mxu0 %v6560
    %6580 = vmatpush.msra.mxu0 %v6559
    %6581 = vmatpush.msra.mxu0 %v6558
    %6582 = vmatpush.msra.mxu0 %v6557
    %6583 = vmatpush.msra.mxu0 %v6556
    %6584 = vmatpush.msra.mxu0 %v6555
    %6585 = vmatpush.msra.mxu0 %v6554
    %6586 = vmatmul.f32.gmra.mxu0 %v6430
    %v6587 = vpop.f32.mrf.mxu0
    %v6588 = vadd.f32 0.0, %v6587
    %6589 = vmatmul.f32.gmra.mxu0 %v6431
    %v6590 = vpop.f32.mrf.mxu0
    %v6591 = vadd.f32 0.0, %v6590
    %6592 = vmatmul.f32.gmra.mxu0 %v6432
    %v6593 = vpop.f32.mrf.mxu0
    %v6594 = vadd.f32 0.0, %v6593
    %6595 = vmatmul.f32.gmra.mxu0 %v6433
    %v6596 = vpop.f32.mrf.mxu0
    %v6597 = vadd.f32 0.0, %v6596
    %6598 = vmatmul.f32.gmra.mxu0 %v6434
    %v6599 = vpop.f32.mrf.mxu0
    %v6600 = vadd.f32 0.0, %v6599
    %6601 = vmatmul.f32.gmra.mxu0 %v6435
    %v6602 = vpop.f32.mrf.mxu0
    %v6603 = vadd.f32 0.0, %v6602
    %6604 = vmatmul.f32.gmra.mxu0 %v6436
    %v6605 = vpop.f32.mrf.mxu0
    %v6606 = vadd.f32 0.0, %v6605
    %6607 = vmatmul.f32.gmra.mxu0 %v6437
    %v6608 = vpop.f32.mrf.mxu0
    %v6609 = vadd.f32 0.0, %v6608
    %6610 = vdwg.mxu0
    %v6611 = vadd.f32 %v6530, %v6588
    %v6612 = vadd.f32 %v6533, %v6591
    %v6613 = vadd.f32 %v6536, %v6594
    %v6614 = vadd.f32 %v6539, %v6597
    %v6615 = vadd.f32 %v6542, %v6600
    %v6616 = vadd.f32 %v6545, %v6603
    %v6617 = vadd.f32 %v6548, %v6606
    %v6618 = vadd.f32 %v6551, %v6609
    %v6620 = vperm.slane %v6365, 0
    %v6622 = vadd.f32 %v6611, %v6620
    %v6623 = vadd.f32 %v6612, %v6620
    %v6624 = vadd.f32 %v6613, %v6620
    %v6625 = vadd.f32 %v6614, %v6620
    %v6626 = vadd.f32 %v6615, %v6620
    %v6627 = vadd.f32 %v6616, %v6620
    %v6628 = vadd.f32 %v6617, %v6620
    %v6629 = vadd.f32 %v6618, %v6620
    %v6630 = vld [vmem:[%s41] sm:$0x1]
    %v6631 = vld [vmem:[%s43] sm:$0x1]
    %v6632 = vadd.f32 %v6622, %v6623
    %v6633 = vadd.f32 %v6632, %v6624
    %v6634 = vadd.f32 %v6633, %v6625
    %v6635 = vadd.f32 %v6634, %v6626
    %v6636 = vadd.f32 %v6635, %v6627
    %v6637 = vadd.f32 %v6636, %v6628
    %v6638 = vadd.f32 %v6637, %v6629
    %v6639 = vrot.slane %v6638, 4
    %v6640 = vadd.f32 %v6638, %v6639
    %v6641 = vrot.slane %v6640, 2
    %v6642 = vadd.f32 %v6640, %v6641
    %v6643 = vrot.slane %v6642, 1
    %v6644 = vadd.f32 %v6642, %v6643
    %v6645 = vmul.f32 %v6644, %v5742
    %v6646 = vmul.f32 %v6622, %v6622
    %v6647 = vmul.f32 %v6623, %v6623
    %v6648 = vmul.f32 %v6624, %v6624
    %v6649 = vmul.f32 %v6625, %v6625
    %v6650 = vmul.f32 %v6626, %v6626
    %v6651 = vmul.f32 %v6627, %v6627
    %v6652 = vmul.f32 %v6628, %v6628
    %v6653 = vmul.f32 %v6629, %v6629
    %v6654 = vadd.f32 %v6646, %v6647
    %v6655 = vadd.f32 %v6654, %v6648
    %v6656 = vadd.f32 %v6655, %v6649
    %v6657 = vadd.f32 %v6656, %v6650
    %v6658 = vadd.f32 %v6657, %v6651
    %v6659 = vadd.f32 %v6658, %v6652
    %v6660 = vadd.f32 %v6659, %v6653
    %v6661 = vrot.slane %v6660, 4
    %v6662 = vadd.f32 %v6660, %v6661
    %v6663 = vrot.slane %v6662, 2
    %v6664 = vadd.f32 %v6662, %v6663
    %v6665 = vrot.slane %v6664, 1
    %v6666 = vadd.f32 %v6664, %v6665
    %v6667 = vmul.f32 %v6666, %v5742
    %v6668 = vmul.f32 %v6645, %v6645
    %v6669 = vsub.f32 %v6667, %v6668
    %v6670 = vmax.f32 %v6669, 0.0
    %v6671 = vadd.f32 %v6670, 1e-05
    %v6672 = vrsqrt.pop %v6671
    %v6673 = vmul.f32 %v6672, %v6671
    %v6674 = vmul.f32 %v6673, %v6672
    %v6675 = vmul.f32 0.5, %v6674
    %v6676 = vsub.f32 1.5, %v6675
    %v6677 = vmul.f32 %v6672, %v6676
    %vm6678 = vweird.f32 %v6671
    %vm6679 = vweird.f32 %v6672
    %vm6680 = vmor %vm6678, %vm6679
    %v6681 = vsel %vm6680, %v6672, %v6677
    %v6682 = vmul.f32 %v6630, %v6681
    %v6683 = vmul.f32 %v6645, %v6682
    %v6684 = vsub.f32 %v6631, %v6683
    %v6686 = vperm.slane %v6682, 0
    %v6688 = vmul.f32 %v6622, %v6686
    %v6689 = vmul.f32 %v6623, %v6686
    %v6690 = vmul.f32 %v6624, %v6686
    %v6691 = vmul.f32 %v6625, %v6686
    %v6692 = vmul.f32 %v6626, %v6686
    %v6693 = vmul.f32 %v6627, %v6686
    %v6694 = vmul.f32 %v6628, %v6686
    %v6695 = vmul.f32 %v6629, %v6686
    %v6697 = vperm.slane %v6684, 0
    %v6699 = vadd.f32 %v6688, %v6697
    %v6700 = vadd.f32 %v6689, %v6697
    %v6701 = vadd.f32 %v6690, %v6697
    %v6702 = vadd.f32 %v6691, %v6697
    %v6703 = vadd.f32 %v6692, %v6697
    %v6704 = vadd.f32 %v6693, %v6697
    %v6705 = vadd.f32 %v6694, %v6697
    %v6706 = vadd.f32 %v6695, %v6697
    %v6707 = vmax.f32 %v6699, 0.0
    %v6708 = vmax.f32 %v6700, 0.0
    %v6709 = vmax.f32 %v6701, 0.0
    %v6710 = vmax.f32 %v6702, 0.0
    %v6711 = vmax.f32 %v6703, 0.0
    %v6712 = vmax.f32 %v6704, 0.0
    %v6713 = vmax.f32 %v6705, 0.0
    %v6714 = vmax.f32 %v6706, 0.0
    %v6715 = vld [vmem:[%s47] sm:$0x1]
    %6716 = vst [vmem:[#allocation2 + $0x8] sm:$0xff] %v6707
    %6717 = vst [vmem:[#allocation2 + $0x10] sm:$0xff] %v6708
    %6718 = vst [vmem:[#allocation2 + $0x18] sm:$0xff] %v6709
    %6719 = vst [vmem:[#allocation2 + $0x20] sm:$0xff] %v6710
    %6720 = vst [vmem:[#allocation2 + $0x28] sm:$0xff] %v6711
    %6721 = vst [vmem:[#allocation2 + $0x30] sm:$0xff] %v6712
    %6722 = vst [vmem:[#allocation2 + $0x38] sm:$0xff] %v6713
    %6723 = vst [vmem:[#allocation2 + $0x40] sm:$0xff] %v6714
    %v6724 = vld [vmem:[#allocation2 + $0x7] sm:$0xff]
    %v6725 = vld [vmem:[#allocation2 + $0xf] sm:$0xff]
    %v6726 = vld [vmem:[#allocation2 + $0x17] sm:$0xff]
    %v6727 = vld [vmem:[#allocation2 + $0x1f] sm:$0xff]
    %v6728 = vld [vmem:[#allocation2 + $0x27] sm:$0xff]
    %v6729 = vld [vmem:[#allocation2 + $0x2f] sm:$0xff]
    %v6730 = vld [vmem:[#allocation2 + $0x37] sm:$0xff]
    %v6731 = vld [vmem:[#allocation2 + $0x3f] sm:$0xff]
    %v6732 = vsel %vm6390, %v6724, 0.0
    %v6733 = vsel %vm6391, %v6725, 0.0
    %v6734 = vsel %vm6392, %v6726, 0.0
    %v6735 = vsel %vm6393, %v6727, 0.0
    %v6736 = vsel %vm6394, %v6728, 0.0
    %v6737 = vsel %vm6395, %v6729, 0.0
    %v6738 = vsel %vm6396, %v6730, 0.0
    %v6739 = vsel %vm6397, %v6731, 0.0
    %v6740 = vld [vmem:[#allocation2 + $0x9] sm:$0xff]
    %v6741 = vld [vmem:[#allocation2 + $0x11] sm:$0xff]
    %v6742 = vld [vmem:[#allocation2 + $0x19] sm:$0xff]
    %v6743 = vld [vmem:[#allocation2 + $0x21] sm:$0xff]
    %v6744 = vld [vmem:[#allocation2 + $0x29] sm:$0xff]
    %v6745 = vld [vmem:[#allocation2 + $0x31] sm:$0xff]
    %v6746 = vld [vmem:[#allocation2 + $0x39] sm:$0xff]
    %v6747 = vld [vmem:[#allocation2 + $0x41] sm:$0xff]
    %v6748 = vsel %vm6422, %v6740, 0.0
    %v6749 = vsel %vm6423, %v6741, 0.0
    %v6750 = vsel %vm6424, %v6742, 0.0
    %v6751 = vsel %vm6425, %v6743, 0.0
    %v6752 = vsel %vm6426, %v6744, 0.0
    %v6753 = vsel %vm6427, %v6745, 0.0
    %v6754 = vsel %vm6428, %v6746, 0.0
    %v6755 = vsel %vm6429, %v6747, 0.0
    %v6756 = vld [vmem:[%s45] sm:$0xff]
    %v6757 = vld [vmem:[%s45 + $0x8] sm:$0xff]
    %v6758 = vld [vmem:[%s45 + $0x10] sm:$0xff]
    %v6759 = vld [vmem:[%s45 + $0x18] sm:$0xff]
    %v6760 = vld [vmem:[%s45 + $0x20] sm:$0xff]
    %v6761 = vld [vmem:[%s45 + $0x28] sm:$0xff]
    %v6762 = vld [vmem:[%s45 + $0x30] sm:$0xff]
    %v6763 = vld [vmem:[%s45 + $0x38] sm:$0xff]
    %v6764 = vld [vmem:[%s45 + $0x40] sm:$0xff]
    %v6765 = vld [vmem:[%s45 + $0x48] sm:$0xff]
    %v6766 = vld [vmem:[%s45 + $0x50] sm:$0xff]
    %v6767 = vld [vmem:[%s45 + $0x58] sm:$0xff]
    %v6768 = vld [vmem:[%s45 + $0x60] sm:$0xff]
    %v6769 = vld [vmem:[%s45 + $0x68] sm:$0xff]
    %v6770 = vld [vmem:[%s45 + $0x70] sm:$0xff]
    %v6771 = vld [vmem:[%s45 + $0x78] sm:$0xff]
    %s6772 = scalar_lea.vmem %s45, 128
    %v6773 = vld [vmem:[%s6772] sm:$0xff]
    %v6774 = vld [vmem:[%s6772 + $0x8] sm:$0xff]
    %v6775 = vld [vmem:[%s6772 + $0x10] sm:$0xff]
    %v6776 = vld [vmem:[%s6772 + $0x18] sm:$0xff]
    %v6777 = vld [vmem:[%s6772 + $0x20] sm:$0xff]
    %v6778 = vld [vmem:[%s6772 + $0x28] sm:$0xff]
    %v6779 = vld [vmem:[%s6772 + $0x30] sm:$0xff]
    %v6780 = vld [vmem:[%s6772 + $0x38] sm:$0xff]
    %v6781 = vld [vmem:[%s6772 + $0x40] sm:$0xff]
    %v6782 = vld [vmem:[%s6772 + $0x48] sm:$0xff]
    %v6783 = vld [vmem:[%s6772 + $0x50] sm:$0xff]
    %v6784 = vld [vmem:[%s6772 + $0x58] sm:$0xff]
    %v6785 = vld [vmem:[%s6772 + $0x60] sm:$0xff]
    %v6786 = vld [vmem:[%s6772 + $0x68] sm:$0xff]
    %v6787 = vld [vmem:[%s6772 + $0x70] sm:$0xff]
    %v6788 = vld [vmem:[%s6772 + $0x78] sm:$0xff]
    %6789 = vmatpush.msra.mxu0 %v6788
    %6790 = vmatpush.msra.mxu0 %v6787
    %6791 = vmatpush.msra.mxu0 %v6786
    %6792 = vmatpush.msra.mxu0 %v6785
    %6793 = vmatpush.msra.mxu0 %v6784
    %6794 = vmatpush.msra.mxu0 %v6783
    %6795 = vmatpush.msra.mxu0 %v6782
    %6796 = vmatpush.msra.mxu0 %v6781
    %6797 = vmatpush.msra.mxu0 %v6780
    %6798 = vmatpush.msra.mxu0 %v6779
    %6799 = vmatpush.msra.mxu0 %v6778
    %6800 = vmatpush.msra.mxu0 %v6777
    %6801 = vmatpush.msra.mxu0 %v6776
    %6802 = vmatpush.msra.mxu0 %v6775
    %6803 = vmatpush.msra.mxu0 %v6774
    %6804 = vmatpush.msra.mxu0 %v6773
    %6805 = vmatmul.f32.gmra.mxu0 %v6707
    %v6806 = vpop.f32.mrf.mxu0
    %v6807 = vadd.f32 0.0, %v6806
    %6808 = vmatmul.f32.gmra.mxu0 %v6708
    %v6809 = vpop.f32.mrf.mxu0
    %v6810 = vadd.f32 0.0, %v6809
    %6811 = vmatmul.f32.gmra.mxu0 %v6709
    %v6812 = vpop.f32.mrf.mxu0
    %v6813 = vadd.f32 0.0, %v6812
    %6814 = vmatmul.f32.gmra.mxu0 %v6710
    %v6815 = vpop.f32.mrf.mxu0
    %v6816 = vadd.f32 0.0, %v6815
    %6817 = vmatmul.f32.gmra.mxu0 %v6711
    %v6818 = vpop.f32.mrf.mxu0
    %v6819 = vadd.f32 0.0, %v6818
    %6820 = vmatmul.f32.gmra.mxu0 %v6712
    %v6821 = vpop.f32.mrf.mxu0
    %v6822 = vadd.f32 0.0, %v6821
    %6823 = vmatmul.f32.gmra.mxu0 %v6713
    %v6824 = vpop.f32.mrf.mxu0
    %v6825 = vadd.f32 0.0, %v6824
    %6826 = vmatmul.f32.gmra.mxu0 %v6714
    %v6827 = vpop.f32.mrf.mxu0
    %v6828 = vadd.f32 0.0, %v6827
    %6829 = vdwg.mxu0
    %6830 = vmatpush.msra.mxu0 %v6771
    %6831 = vmatpush.msra.mxu0 %v6770
    %6832 = vmatpush.msra.mxu0 %v6769
    %6833 = vmatpush.msra.mxu0 %v6768
    %6834 = vmatpush.msra.mxu0 %v6767
    %6835 = vmatpush.msra.mxu0 %v6766
    %6836 = vmatpush.msra.mxu0 %v6765
    %6837 = vmatpush.msra.mxu0 %v6764
    %6838 = vmatpush.msra.mxu0 %v6763
    %6839 = vmatpush.msra.mxu0 %v6762
    %6840 = vmatpush.msra.mxu0 %v6761
    %6841 = vmatpush.msra.mxu0 %v6760
    %6842 = vmatpush.msra.mxu0 %v6759
    %6843 = vmatpush.msra.mxu0 %v6758
    %6844 = vmatpush.msra.mxu0 %v6757
    %6845 = vmatpush.msra.mxu0 %v6756
    %6846 = vmatmul.f32.gmra.mxu0 %v6732
    %v6847 = vpop.f32.mrf.mxu0
    %v6848 = vadd.f32 %v6807, %v6847
    %6849 = vmatmul.f32.gmra.mxu0 %v6733
    %v6850 = vpop.f32.mrf.mxu0
    %v6851 = vadd.f32 %v6810, %v6850
    %6852 = vmatmul.f32.gmra.mxu0 %v6734
    %v6853 = vpop.f32.mrf.mxu0
    %v6854 = vadd.f32 %v6813, %v6853
    %6855 = vmatmul.f32.gmra.mxu0 %v6735
    %v6856 = vpop.f32.mrf.mxu0
    %v6857 = vadd.f32 %v6816, %v6856
    %6858 = vmatmul.f32.gmra.mxu0 %v6736
    %v6859 = vpop.f32.mrf.mxu0
    %v6860 = vadd.f32 %v6819, %v6859
    %6861 = vmatmul.f32.gmra.mxu0 %v6737
    %v6862 = vpop.f32.mrf.mxu0
    %v6863 = vadd.f32 %v6822, %v6862
    %6864 = vmatmul.f32.gmra.mxu0 %v6738
    %v6865 = vpop.f32.mrf.mxu0
    %v6866 = vadd.f32 %v6825, %v6865
    %6867 = vmatmul.f32.gmra.mxu0 %v6739
    %v6868 = vpop.f32.mrf.mxu0
    %v6869 = vadd.f32 %v6828, %v6868
    %6870 = vdwg.mxu0
    %s6871 = scalar_lea.vmem %s45, 256
    %v6872 = vld [vmem:[%s6871] sm:$0xff]
    %v6873 = vld [vmem:[%s6871 + $0x8] sm:$0xff]
    %v6874 = vld [vmem:[%s6871 + $0x10] sm:$0xff]
    %v6875 = vld [vmem:[%s6871 + $0x18] sm:$0xff]
    %v6876 = vld [vmem:[%s6871 + $0x20] sm:$0xff]
    %v6877 = vld [vmem:[%s6871 + $0x28] sm:$0xff]
    %v6878 = vld [vmem:[%s6871 + $0x30] sm:$0xff]
    %v6879 = vld [vmem:[%s6871 + $0x38] sm:$0xff]
    %v6880 = vld [vmem:[%s6871 + $0x40] sm:$0xff]
    %v6881 = vld [vmem:[%s6871 + $0x48] sm:$0xff]
    %v6882 = vld [vmem:[%s6871 + $0x50] sm:$0xff]
    %v6883 = vld [vmem:[%s6871 + $0x58] sm:$0xff]
    %v6884 = vld [vmem:[%s6871 + $0x60] sm:$0xff]
    %v6885 = vld [vmem:[%s6871 + $0x68] sm:$0xff]
    %v6886 = vld [vmem:[%s6871 + $0x70] sm:$0xff]
    %v6887 = vld [vmem:[%s6871 + $0x78] sm:$0xff]
    %6888 = vmatpush.msra.mxu0 %v6887
    %6889 = vmatpush.msra.mxu0 %v6886
    %6890 = vmatpush.msra.mxu0 %v6885
    %6891 = vmatpush.msra.mxu0 %v6884
    %6892 = vmatpush.msra.mxu0 %v6883
    %6893 = vmatpush.msra.mxu0 %v6882
    %6894 = vmatpush.msra.mxu0 %v6881
    %6895 = vmatpush.msra.mxu0 %v6880
    %6896 = vmatpush.msra.mxu0 %v6879
    %6897 = vmatpush.msra.mxu0 %v6878
    %6898 = vmatpush.msra.mxu0 %v6877
    %6899 = vmatpush.msra.mxu0 %v6876
    %6900 = vmatpush.msra.mxu0 %v6875
    %6901 = vmatpush.msra.mxu0 %v6874
    %6902 = vmatpush.msra.mxu0 %v6873
    %6903 = vmatpush.msra.mxu0 %v6872
    %6904 = vmatmul.f32.gmra.mxu0 %v6748
    %v6905 = vpop.f32.mrf.mxu0
    %v6906 = vadd.f32 0.0, %v6905
    %6907 = vmatmul.f32.gmra.mxu0 %v6749
    %v6908 = vpop.f32.mrf.mxu0
    %v6909 = vadd.f32 0.0, %v6908
    %6910 = vmatmul.f32.gmra.mxu0 %v6750
    %v6911 = vpop.f32.mrf.mxu0
    %v6912 = vadd.f32 0.0, %v6911
    %6913 = vmatmul.f32.gmra.mxu0 %v6751
    %v6914 = vpop.f32.mrf.mxu0
    %v6915 = vadd.f32 0.0, %v6914
    %6916 = vmatmul.f32.gmra.mxu0 %v6752
    %v6917 = vpop.f32.mrf.mxu0
    %v6918 = vadd.f32 0.0, %v6917
    %6919 = vmatmul.f32.gmra.mxu0 %v6753
    %v6920 = vpop.f32.mrf.mxu0
    %v6921 = vadd.f32 0.0, %v6920
    %6922 = vmatmul.f32.gmra.mxu0 %v6754
    %v6923 = vpop.f32.mrf.mxu0
    %v6924 = vadd.f32 0.0, %v6923
    %6925 = vmatmul.f32.gmra.mxu0 %v6755
    %v6926 = vpop.f32.mrf.mxu0
    %v6927 = vadd.f32 0.0, %v6926
    %6928 = vdwg.mxu0
    %v6929 = vadd.f32 %v6848, %v6906
    %v6930 = vadd.f32 %v6851, %v6909
    %v6931 = vadd.f32 %v6854, %v6912
    %v6932 = vadd.f32 %v6857, %v6915
    %v6933 = vadd.f32 %v6860, %v6918
    %v6934 = vadd.f32 %v6863, %v6921
    %v6935 = vadd.f32 %v6866, %v6924
    %v6936 = vadd.f32 %v6869, %v6927
    %v6938 = vperm.slane %v6715, 0
    %v6940 = vadd.f32 %v6929, %v6938
    %v6941 = vadd.f32 %v6930, %v6938
    %v6942 = vadd.f32 %v6931, %v6938
    %v6943 = vadd.f32 %v6932, %v6938
    %v6944 = vadd.f32 %v6933, %v6938
    %v6945 = vadd.f32 %v6934, %v6938
    %v6946 = vadd.f32 %v6935, %v6938
    %v6947 = vadd.f32 %v6936, %v6938
    %v6948 = vld [vmem:[%s49] sm:$0x1]
    %v6949 = vld [vmem:[%s51] sm:$0x1]
    %v6950 = vadd.f32 %v6940, %v6941
    %v6951 = vadd.f32 %v6950, %v6942
    %v6952 = vadd.f32 %v6951, %v6943
    %v6953 = vadd.f32 %v6952, %v6944
    %v6954 = vadd.f32 %v6953, %v6945
    %v6955 = vadd.f32 %v6954, %v6946
    %v6956 = vadd.f32 %v6955, %v6947
    %v6957 = vrot.slane %v6956, 4
    %v6958 = vadd.f32 %v6956, %v6957
    %v6959 = vrot.slane %v6958, 2
    %v6960 = vadd.f32 %v6958, %v6959
    %v6961 = vrot.slane %v6960, 1
    %v6962 = vadd.f32 %v6960, %v6961
    %v6963 = vmul.f32 %v6962, %v5742
    %v6964 = vmul.f32 %v6940, %v6940
    %v6965 = vmul.f32 %v6941, %v6941
    %v6966 = vmul.f32 %v6942, %v6942
    %v6967 = vmul.f32 %v6943, %v6943
    %v6968 = vmul.f32 %v6944, %v6944
    %v6969 = vmul.f32 %v6945, %v6945
    %v6970 = vmul.f32 %v6946, %v6946
    %v6971 = vmul.f32 %v6947, %v6947
    %v6972 = vadd.f32 %v6964, %v6965
    %v6973 = vadd.f32 %v6972, %v6966
    %v6974 = vadd.f32 %v6973, %v6967
    %v6975 = vadd.f32 %v6974, %v6968
    %v6976 = vadd.f32 %v6975, %v6969
    %v6977 = vadd.f32 %v6976, %v6970
    %v6978 = vadd.f32 %v6977, %v6971
    %v6979 = vrot.slane %v6978, 4
    %v6980 = vadd.f32 %v6978, %v6979
    %v6981 = vrot.slane %v6980, 2
    %v6982 = vadd.f32 %v6980, %v6981
    %v6983 = vrot.slane %v6982, 1
    %v6984 = vadd.f32 %v6982, %v6983
    %v6985 = vmul.f32 %v6984, %v5742
    %v6986 = vmul.f32 %v6963, %v6963
    %v6987 = vsub.f32 %v6985, %v6986
    %v6988 = vmax.f32 %v6987, 0.0
    %v6989 = vadd.f32 %v6988, 1e-05
    %v6990 = vrsqrt.pop %v6989
    %v6991 = vmul.f32 %v6990, %v6989
    %v6992 = vmul.f32 %v6991, %v6990
    %v6993 = vmul.f32 0.5, %v6992
    %v6994 = vsub.f32 1.5, %v6993
    %v6995 = vmul.f32 %v6990, %v6994
    %vm6996 = vweird.f32 %v6989
    %vm6997 = vweird.f32 %v6990
    %vm6998 = vmor %vm6996, %vm6997
    %v6999 = vsel %vm6998, %v6990, %v6995
    %v7000 = vmul.f32 %v6948, %v6999
    %v7001 = vmul.f32 %v6963, %v7000
    %v7002 = vsub.f32 %v6949, %v7001
    %v7004 = vperm.slane %v7000, 0
    %v7006 = vmul.f32 %v6940, %v7004
    %v7007 = vmul.f32 %v6941, %v7004
    %v7008 = vmul.f32 %v6942, %v7004
    %v7009 = vmul.f32 %v6943, %v7004
    %v7010 = vmul.f32 %v6944, %v7004
    %v7011 = vmul.f32 %v6945, %v7004
    %v7012 = vmul.f32 %v6946, %v7004
    %v7013 = vmul.f32 %v6947, %v7004
    %v7015 = vperm.slane %v7002, 0
    %v7017 = vadd.f32 %v7006, %v7015
    %v7018 = vadd.f32 %v7007, %v7015
    %v7019 = vadd.f32 %v7008, %v7015
    %v7020 = vadd.f32 %v7009, %v7015
    %v7021 = vadd.f32 %v7010, %v7015
    %v7022 = vadd.f32 %v7011, %v7015
    %v7023 = vadd.f32 %v7012, %v7015
    %v7024 = vadd.f32 %v7013, %v7015
    %v7025 = vmax.f32 %v7017, 0.0
    %v7026 = vmax.f32 %v7018, 0.0
    %v7027 = vmax.f32 %v7019, 0.0
    %v7028 = vmax.f32 %v7020, 0.0
    %v7029 = vmax.f32 %v7021, 0.0
    %v7030 = vmax.f32 %v7022, 0.0
    %v7031 = vmax.f32 %v7023, 0.0
    %v7032 = vmax.f32 %v7024, 0.0
    %v7033 = vpack.c.bf16 %v7026, %v7025
    %v7034 = vpack.c.bf16 %v7028, %v7027
    %v7035 = vpack.c.bf16 %v7030, %v7029
    %v7036 = vpack.c.bf16 %v7032, %v7031
    %v7037 = vld [vmem:[%s53] sm:$0xff]
    %v7038 = vld [vmem:[%s53 + $0x8] sm:$0xff]
    %v7039 = vld [vmem:[%s53 + $0x10] sm:$0xff]
    %v7040 = vld [vmem:[%s53 + $0x18] sm:$0xff]
    %v7041 = vld [vmem:[%s53 + $0x20] sm:$0xff]
    %v7042 = vld [vmem:[%s53 + $0x28] sm:$0xff]
    %v7043 = vld [vmem:[%s53 + $0x30] sm:$0xff]
    %v7044 = vld [vmem:[%s53 + $0x38] sm:$0xff]
    %v7045 = vld [vmem:[%s53 + $0x40] sm:$0xff]
    %v7046 = vld [vmem:[%s53 + $0x48] sm:$0xff]
    %v7047 = vld [vmem:[%s53 + $0x50] sm:$0xff]
    %v7048 = vld [vmem:[%s53 + $0x58] sm:$0xff]
    %v7049 = vld [vmem:[%s53 + $0x60] sm:$0xff]
    %v7050 = vld [vmem:[%s53 + $0x68] sm:$0xff]
    %v7051 = vld [vmem:[%s53 + $0x70] sm:$0xf]
    %v7052 = vld [vmem:[%s53 + $0x74] sm:$0xff]
    %v7053 = vld [vmem:[%s53 + $0x7c] sm:$0xff]
    %v7054 = vld [vmem:[%s53 + $0x84] sm:$0xff]
    %v7055 = vld [vmem:[%s53 + $0x8c] sm:$0xff]
    %v7056 = vld [vmem:[%s53 + $0x94] sm:$0xff]
    %v7057 = vld [vmem:[%s53 + $0x9c] sm:$0xff]
    %v7058 = vld [vmem:[%s53 + $0xa4] sm:$0xff]
    %v7059 = vld [vmem:[%s53 + $0xac] sm:$0xff]
    %v7060 = vld [vmem:[%s53 + $0xb4] sm:$0xff]
    %v7061 = vld [vmem:[%s53 + $0xbc] sm:$0xff]
    %v7062 = vld [vmem:[%s53 + $0xc4] sm:$0xff]
    %v7063 = vld [vmem:[%s53 + $0xcc] sm:$0xff]
    %v7064 = vld [vmem:[%s53 + $0xd4] sm:$0xff]
    %v7065 = vld [vmem:[%s53 + $0xdc] sm:$0xff]
    %v7066 = vld [vmem:[%s53 + $0xe4] sm:$0xf]
    %v7067 = vld [vmem:[%s53 + $0xe8] sm:$0xff]
    %v7068 = vld [vmem:[%s53 + $0xf0] sm:$0xff]
    %v7069 = vld [vmem:[%s53 + $0xf8] sm:$0xff]
    %v7070 = vld [vmem:[%s53 + $0x100] sm:$0xff]
    %v7071 = vld [vmem:[%s53 + $0x108] sm:$0xff]
    %v7072 = vld [vmem:[%s53 + $0x110] sm:$0xff]
    %v7073 = vld [vmem:[%s53 + $0x118] sm:$0xff]
    %v7074 = vld [vmem:[%s53 + $0x120] sm:$0xff]
    %v7075 = vld [vmem:[%s53 + $0x128] sm:$0xff]
    %v7076 = vld [vmem:[%s53 + $0x130] sm:$0xff]
    %v7077 = vld [vmem:[%s53 + $0x138] sm:$0xff]
    %v7078 = vld [vmem:[%s53 + $0x140] sm:$0xff]
    %v7079 = vld [vmem:[%s53 + $0x148] sm:$0xff]
    %v7080 = vld [vmem:[%s53 + $0x150] sm:$0xff]
    %v7081 = vld [vmem:[%s53 + $0x158] sm:$0xf]
    %v7082 = vld [vmem:[%s53 + $0x15c] sm:$0xff]
    %v7083 = vld [vmem:[%s53 + $0x164] sm:$0xff]
    %v7084 = vld [vmem:[%s53 + $0x16c] sm:$0xff]
    %v7085 = vld [vmem:[%s53 + $0x174] sm:$0xff]
    %v7086 = vld [vmem:[%s53 + $0x17c] sm:$0xff]
    %v7087 = vld [vmem:[%s53 + $0x184] sm:$0xff]
    %v7088 = vld [vmem:[%s53 + $0x18c] sm:$0xff]
    %v7089 = vld [vmem:[%s53 + $0x194] sm:$0xff]
    %v7090 = vld [vmem:[%s53 + $0x19c] sm:$0xff]
    %v7091 = vld [vmem:[%s53 + $0x1a4] sm:$0xff]
    %v7092 = vld [vmem:[%s53 + $0x1ac] sm:$0xff]
    %v7093 = vld [vmem:[%s53 + $0x1b4] sm:$0xff]
    %v7094 = vld [vmem:[%s53 + $0x1bc] sm:$0xff]
    %v7095 = vld [vmem:[%s53 + $0x1c4] sm:$0xff]
    %v7096 = vld [vmem:[%s53 + $0x1cc] sm:$0xf]
    %v7097 = vld [vmem:[%s53 + $0x1d0] sm:$0xff]
    %v7098 = vld [vmem:[%s53 + $0x1d8] sm:$0xff]
    %v7099 = vld [vmem:[%s53 + $0x1e0] sm:$0xff]
    %v7100 = vld [vmem:[%s53 + $0x1e8] sm:$0xff]
    %v7101 = vld [vmem:[%s53 + $0x1f0] sm:$0xff]
    %v7102 = vld [vmem:[%s53 + $0x1f8] sm:$0xff]
    %v7103 = vld [vmem:[%s53 + $0x200] sm:$0xff]
    %v7104 = vld [vmem:[%s53 + $0x208] sm:$0xff]
    %v7105 = vld [vmem:[%s53 + $0x210] sm:$0xff]
    %v7106 = vld [vmem:[%s53 + $0x218] sm:$0xff]
    %v7107 = vld [vmem:[%s53 + $0x220] sm:$0xff]
    %v7108 = vld [vmem:[%s53 + $0x228] sm:$0xff]
    %v7109 = vld [vmem:[%s53 + $0x230] sm:$0xff]
    %v7110 = vld [vmem:[%s53 + $0x238] sm:$0xff]
    %v7111 = vld [vmem:[%s53 + $0x240] sm:$0xf]
    %v7112 = vld [vmem:[%s53 + $0x244] sm:$0xff]
    %v7113 = vld [vmem:[%s53 + $0x24c] sm:$0xff]
    %v7114 = vld [vmem:[%s53 + $0x254] sm:$0xff]
    %v7115 = vld [vmem:[%s53 + $0x25c] sm:$0xff]
    %v7116 = vld [vmem:[%s53 + $0x264] sm:$0xff]
    %v7117 = vld [vmem:[%s53 + $0x26c] sm:$0xff]
    %v7118 = vld [vmem:[%s53 + $0x274] sm:$0xff]
    %v7119 = vld [vmem:[%s53 + $0x27c] sm:$0xff]
    %v7120 = vld [vmem:[%s53 + $0x284] sm:$0xff]
    %v7121 = vld [vmem:[%s53 + $0x28c] sm:$0xff]
    %v7122 = vld [vmem:[%s53 + $0x294] sm:$0xff]
    %v7123 = vld [vmem:[%s53 + $0x29c] sm:$0xff]
    %v7124 = vld [vmem:[%s53 + $0x2a4] sm:$0xff]
    %v7125 = vld [vmem:[%s53 + $0x2ac] sm:$0xff]
    %v7126 = vld [vmem:[%s53 + $0x2b4] sm:$0xf]
    %v7127 = vld [vmem:[%s53 + $0x2b8] sm:$0xff]
    %v7128 = vld [vmem:[%s53 + $0x2c0] sm:$0xff]
    %v7129 = vld [vmem:[%s53 + $0x2c8] sm:$0xff]
    %v7130 = vld [vmem:[%s53 + $0x2d0] sm:$0xff]
    %v7131 = vld [vmem:[%s53 + $0x2d8] sm:$0xff]
    %v7132 = vld [vmem:[%s53 + $0x2e0] sm:$0xff]
    %v7133 = vld [vmem:[%s53 + $0x2e8] sm:$0xff]
    %v7134 = vld [vmem:[%s53 + $0x2f0] sm:$0xff]
    %v7135 = vld [vmem:[%s53 + $0x2f8] sm:$0xff]
    %v7136 = vld [vmem:[%s53 + $0x300] sm:$0xff]
    %v7137 = vld [vmem:[%s53 + $0x308] sm:$0xff]
    %v7138 = vld [vmem:[%s53 + $0x310] sm:$0xff]
    %v7139 = vld [vmem:[%s53 + $0x318] sm:$0xff]
    %v7140 = vld [vmem:[%s53 + $0x320] sm:$0xff]
    %v7141 = vld [vmem:[%s53 + $0x328] sm:$0xf]
    %v7142 = vld [vmem:[%s53 + $0x32c] sm:$0xff]
    %v7143 = vld [vmem:[%s53 + $0x334] sm:$0xff]
    %v7144 = vld [vmem:[%s53 + $0x33c] sm:$0xff]
    %v7145 = vld [vmem:[%s53 + $0x344] sm:$0xff]
    %v7146 = vld [vmem:[%s53 + $0x34c] sm:$0xff]
    %v7147 = vld [vmem:[%s53 + $0x354] sm:$0xff]
    %v7148 = vld [vmem:[%s53 + $0x35c] sm:$0xff]
    %v7149 = vld [vmem:[%s53 + $0x364] sm:$0xff]
    %v7150 = vld [vmem:[%s53 + $0x36c] sm:$0xff]
    %v7151 = vld [vmem:[%s53 + $0x374] sm:$0xff]
    %v7152 = vld [vmem:[%s53 + $0x37c] sm:$0xff]
    %v7153 = vld [vmem:[%s53 + $0x384] sm:$0xff]
    %v7154 = vld [vmem:[%s53 + $0x38c] sm:$0xff]
    %v7155 = vld [vmem:[%s53 + $0x394] sm:$0xff]
    %v7156 = vld [vmem:[%s53 + $0x39c] sm:$0xf]
    %v7157 = vld [vmem:[%s53 + $0x3a0] sm:$0xff]
    %v7158 = vld [vmem:[%s53 + $0x3a8] sm:$0xff]
    %v7159 = vld [vmem:[%s53 + $0x3b0] sm:$0xff]
    %v7160 = vld [vmem:[%s53 + $0x3b8] sm:$0xff]
    %v7161 = vld [vmem:[%s53 + $0x3c0] sm:$0xff]
    %v7162 = vld [vmem:[%s53 + $0x3c8] sm:$0xff]
    %v7163 = vld [vmem:[%s53 + $0x3d0] sm:$0xff]
    %v7164 = vld [vmem:[%s53 + $0x3d8] sm:$0xff]
    %v7165 = vld [vmem:[%s53 + $0x3e0] sm:$0xff]
    %v7166 = vld [vmem:[%s53 + $0x3e8] sm:$0xff]
    %v7167 = vld [vmem:[%s53 + $0x3f0] sm:$0xff]
    %v7168 = vld [vmem:[%s53 + $0x3f8] sm:$0xff]
    %v7169 = vld [vmem:[%s53 + $0x400] sm:$0xff]
    %v7170 = vld [vmem:[%s53 + $0x408] sm:$0xff]
    %v7171 = vld [vmem:[%s53 + $0x410] sm:$0xf]
    %v7172 = vld [vmem:[%s53 + $0x414] sm:$0xff]
    %v7173 = vld [vmem:[%s53 + $0x41c] sm:$0xff]
    %v7174 = vld [vmem:[%s53 + $0x424] sm:$0xff]
    %v7175 = vld [vmem:[%s53 + $0x42c] sm:$0xff]
    %v7176 = vld [vmem:[%s53 + $0x434] sm:$0xff]
    %v7177 = vld [vmem:[%s53 + $0x43c] sm:$0xff]
    %v7178 = vld [vmem:[%s53 + $0x444] sm:$0xff]
    %v7179 = vld [vmem:[%s53 + $0x44c] sm:$0xff]
    %v7180 = vld [vmem:[%s53 + $0x454] sm:$0xff]
    %v7181 = vld [vmem:[%s53 + $0x45c] sm:$0xff]
    %v7182 = vld [vmem:[%s53 + $0x464] sm:$0xff]
    %v7183 = vld [vmem:[%s53 + $0x46c] sm:$0xff]
    %v7184 = vld [vmem:[%s53 + $0x474] sm:$0xff]
    %v7185 = vld [vmem:[%s53 + $0x47c] sm:$0xff]
    %v7186 = vld [vmem:[%s53 + $0x484] sm:$0xf]
    %v7187 = vld [vmem:[%s53 + $0x488] sm:$0xff]
    %v7188 = vld [vmem:[%s53 + $0x490] sm:$0xff]
    %v7189 = vld [vmem:[%s53 + $0x498] sm:$0xff]
    %v7190 = vld [vmem:[%s53 + $0x4a0] sm:$0xff]
    %v7191 = vld [vmem:[%s53 + $0x4a8] sm:$0xff]
    %v7192 = vld [vmem:[%s53 + $0x4b0] sm:$0xff]
    %v7193 = vld [vmem:[%s53 + $0x4b8] sm:$0xff]
    %v7194 = vld [vmem:[%s53 + $0x4c0] sm:$0xff]
    %v7195 = vld [vmem:[%s53 + $0x4c8] sm:$0xff]
    %v7196 = vld [vmem:[%s53 + $0x4d0] sm:$0xff]
    %v7197 = vld [vmem:[%s53 + $0x4d8] sm:$0xff]
    %v7198 = vld [vmem:[%s53 + $0x4e0] sm:$0xff]
    %v7199 = vld [vmem:[%s53 + $0x4e8] sm:$0xff]
    %v7200 = vld [vmem:[%s53 + $0x4f0] sm:$0xff]
    %v7201 = vld [vmem:[%s53 + $0x4f8] sm:$0xf]
    %v7202 = vld [vmem:[%s53 + $0x4fc] sm:$0xff]
    %v7203 = vld [vmem:[%s53 + $0x504] sm:$0xff]
    %v7204 = vld [vmem:[%s53 + $0x50c] sm:$0xff]
    %v7205 = vld [vmem:[%s53 + $0x514] sm:$0xff]
    %v7206 = vld [vmem:[%s53 + $0x51c] sm:$0xff]
    %v7207 = vld [vmem:[%s53 + $0x524] sm:$0xff]
    %v7208 = vld [vmem:[%s53 + $0x52c] sm:$0xff]
    %v7209 = vld [vmem:[%s53 + $0x534] sm:$0xff]
    %v7210 = vld [vmem:[%s53 + $0x53c] sm:$0xff]
    %v7211 = vld [vmem:[%s53 + $0x544] sm:$0xff]
    %v7212 = vld [vmem:[%s53 + $0x54c] sm:$0xff]
    %v7213 = vld [vmem:[%s53 + $0x554] sm:$0xff]
    %v7214 = vld [vmem:[%s53 + $0x55c] sm:$0xff]
    %v7215 = vld [vmem:[%s53 + $0x564] sm:$0xff]
    %v7216 = vld [vmem:[%s53 + $0x56c] sm:$0xf]
    %v7217 = vld [vmem:[%s53 + $0x570] sm:$0xff]
    %v7218 = vld [vmem:[%s53 + $0x578] sm:$0xff]
    %v7219 = vld [vmem:[%s53 + $0x580] sm:$0xff]
    %v7220 = vld [vmem:[%s53 + $0x588] sm:$0xff]
    %v7221 = vld [vmem:[%s53 + $0x590] sm:$0xff]
    %v7222 = vld [vmem:[%s53 + $0x598] sm:$0xff]
    %v7223 = vld [vmem:[%s53 + $0x5a0] sm:$0xff]
    %v7224 = vld [vmem:[%s53 + $0x5a8] sm:$0xff]
    %v7225 = vld [vmem:[%s53 + $0x5b0] sm:$0xff]
    %v7226 = vld [vmem:[%s53 + $0x5b8] sm:$0xff]
    %v7227 = vld [vmem:[%s53 + $0x5c0] sm:$0xff]
    %v7228 = vld [vmem:[%s53 + $0x5c8] sm:$0xff]
    %v7229 = vld [vmem:[%s53 + $0x5d0] sm:$0xff]
    %v7230 = vld [vmem:[%s53 + $0x5d8] sm:$0xff]
    %v7231 = vld [vmem:[%s53 + $0x5e0] sm:$0xf]
    %v7232 = vld [vmem:[%s53 + $0x5e4] sm:$0xff]
    %v7233 = vld [vmem:[%s53 + $0x5ec] sm:$0xff]
    %v7234 = vld [vmem:[%s53 + $0x5f4] sm:$0xff]
    %v7235 = vld [vmem:[%s53 + $0x5fc] sm:$0xff]
    %v7236 = vld [vmem:[%s53 + $0x604] sm:$0xff]
    %v7237 = vld [vmem:[%s53 + $0x60c] sm:$0xff]
    %v7238 = vld [vmem:[%s53 + $0x614] sm:$0xff]
    %v7239 = vld [vmem:[%s53 + $0x61c] sm:$0xff]
    %v7240 = vld [vmem:[%s53 + $0x624] sm:$0xff]
    %v7241 = vld [vmem:[%s53 + $0x62c] sm:$0xff]
    %v7242 = vld [vmem:[%s53 + $0x634] sm:$0xff]
    %v7243 = vld [vmem:[%s53 + $0x63c] sm:$0xff]
    %v7244 = vld [vmem:[%s53 + $0x644] sm:$0xff]
    %v7245 = vld [vmem:[%s53 + $0x64c] sm:$0xff]
    %v7246 = vld [vmem:[%s53 + $0x654] sm:$0xf]
    %v7247 = vld [vmem:[%s53 + $0x658] sm:$0xff]
    %v7248 = vld [vmem:[%s53 + $0x660] sm:$0xff]
    %v7249 = vld [vmem:[%s53 + $0x668] sm:$0xff]
    %v7250 = vld [vmem:[%s53 + $0x670] sm:$0xff]
    %v7251 = vld [vmem:[%s53 + $0x678] sm:$0xff]
    %v7252 = vld [vmem:[%s53 + $0x680] sm:$0xff]
    %v7253 = vld [vmem:[%s53 + $0x688] sm:$0xff]
    %v7254 = vld [vmem:[%s53 + $0x690] sm:$0xff]
    %v7255 = vld [vmem:[%s53 + $0x698] sm:$0xff]
    %v7256 = vld [vmem:[%s53 + $0x6a0] sm:$0xff]
    %v7257 = vld [vmem:[%s53 + $0x6a8] sm:$0xff]
    %v7258 = vld [vmem:[%s53 + $0x6b0] sm:$0xff]
    %v7259 = vld [vmem:[%s53 + $0x6b8] sm:$0xff]
    %v7260 = vld [vmem:[%s53 + $0x6c0] sm:$0xff]
    %v7261 = vld [vmem:[%s53 + $0x6c8] sm:$0xf]
    %v7262 = vld [vmem:[%s53 + $0x6cc] sm:$0xff]
    %v7263 = vld [vmem:[%s53 + $0x6d4] sm:$0xff]
    %v7264 = vld [vmem:[%s53 + $0x6dc] sm:$0xff]
    %v7265 = vld [vmem:[%s53 + $0x6e4] sm:$0xff]
    %v7266 = vld [vmem:[%s53 + $0x6ec] sm:$0xff]
    %v7267 = vld [vmem:[%s53 + $0x6f4] sm:$0xff]
    %v7268 = vld [vmem:[%s53 + $0x6fc] sm:$0xff]
    %v7269 = vld [vmem:[%s53 + $0x704] sm:$0xff]
    %v7270 = vld [vmem:[%s53 + $0x70c] sm:$0xff]
    %v7271 = vld [vmem:[%s53 + $0x714] sm:$0xff]
    %v7272 = vld [vmem:[%s53 + $0x71c] sm:$0xff]
    %v7273 = vld [vmem:[%s53 + $0x724] sm:$0xff]
    %v7274 = vld [vmem:[%s53 + $0x72c] sm:$0xff]
    %v7275 = vld [vmem:[%s53 + $0x734] sm:$0xff]
    %v7276 = vld [vmem:[%s53 + $0x73c] sm:$0xf]
    %v7277 = vld [vmem:[%s1] sm:$0xff]
    %v7278 = vld [vmem:[%s1 + $0x8] sm:$0xff]
    %v7279 = vld [vmem:[%s1 + $0x10] sm:$0xff]
    %v7280 = vld [vmem:[%s1 + $0x18] sm:$0xff]
    %v7281 = vld [vmem:[%s1 + $0x20] sm:$0xff]
    %v7282 = vld [vmem:[%s1 + $0x28] sm:$0xff]
    %v7283 = vld [vmem:[%s1 + $0x30] sm:$0xff]
    %v7284 = vld [vmem:[%s1 + $0x38] sm:$0xff]
    %v7285 = vld [vmem:[%s1 + $0x40] sm:$0xff]
    %v7286 = vld [vmem:[%s1 + $0x48] sm:$0xff]
    %v7287 = vld [vmem:[%s1 + $0x50] sm:$0xff]
    %v7288 = vld [vmem:[%s1 + $0x58] sm:$0xff]
    %v7289 = vld [vmem:[%s1 + $0x60] sm:$0xff]
    %v7290 = vld [vmem:[%s1 + $0x68] sm:$0xff]
    %v7291 = vld [vmem:[%s1 + $0x70] sm:$0xff]
    %v7292 = vld [vmem:[%s1 + $0x78] sm:$0xff]
    %v7293 = vld [vmem:[%s1 + $0x80] sm:$0xff]
    %v7294 = vld [vmem:[%s1 + $0x88] sm:$0xff]
    %v7295 = vld [vmem:[%s1 + $0x90] sm:$0xff]
    %v7296 = vld [vmem:[%s1 + $0x98] sm:$0xff]
    %v7297 = vld [vmem:[%s1 + $0xa0] sm:$0xff]
    %v7298 = vld [vmem:[%s1 + $0xa8] sm:$0xff]
    %v7299 = vld [vmem:[%s1 + $0xb0] sm:$0xff]
    %v7300 = vld [vmem:[%s1 + $0xb8] sm:$0xff]
    %v7301 = vld [vmem:[%s1 + $0xc0] sm:$0xff]
    %v7302 = vld [vmem:[%s1 + $0xc8] sm:$0xff]
    %v7303 = vld [vmem:[%s1 + $0xd0] sm:$0xff]
    %v7304 = vld [vmem:[%s1 + $0xd8] sm:$0xff]
    %v7305 = vld [vmem:[%s1 + $0xe0] sm:$0xff]
    %v7306 = vld [vmem:[%s1 + $0xe8] sm:$0xff]
    %v7307 = vld [vmem:[%s1 + $0xf0] sm:$0xff]
    %v7308 = vld [vmem:[%s1 + $0xf8] sm:$0xff]
    %v7309 = vld [vmem:[%s1 + $0x100] sm:$0xff]
    %v7310 = vld [vmem:[%s1 + $0x108] sm:$0xff]
    %v7311 = vld [vmem:[%s1 + $0x110] sm:$0xff]
    %v7312 = vld [vmem:[%s1 + $0x118] sm:$0xff]
    %v7313 = vld [vmem:[%s1 + $0x120] sm:$0xff]
    %v7314 = vld [vmem:[%s1 + $0x128] sm:$0xff]
    %v7315 = vld [vmem:[%s1 + $0x130] sm:$0xff]
    %v7316 = vld [vmem:[%s1 + $0x138] sm:$0xff]
    %v7317 = vld [vmem:[%s1 + $0x140] sm:$0xff]
    %v7318 = vld [vmem:[%s1 + $0x148] sm:$0xff]
    %v7319 = vld [vmem:[%s1 + $0x150] sm:$0xff]
    %v7320 = vld [vmem:[%s1 + $0x158] sm:$0xff]
    %v7321 = vld [vmem:[%s1 + $0x160] sm:$0xff]
    %v7322 = vld [vmem:[%s1 + $0x168] sm:$0xff]
    %v7323 = vld [vmem:[%s1 + $0x170] sm:$0xff]
    %v7324 = vld [vmem:[%s1 + $0x178] sm:$0xff]
    %v7325 = vld [vmem:[%s1 + $0x180] sm:$0xff]
    %v7326 = vld [vmem:[%s1 + $0x188] sm:$0xff]
    %v7327 = vld [vmem:[%s1 + $0x190] sm:$0xff]
    %v7328 = vld [vmem:[%s1 + $0x198] sm:$0xff]
    %v7329 = vld [vmem:[%s1 + $0x1a0] sm:$0xff]
    %v7330 = vld [vmem:[%s1 + $0x1a8] sm:$0xff]
    %v7331 = vld [vmem:[%s1 + $0x1b0] sm:$0xff]
    %v7332 = vld [vmem:[%s1 + $0x1b8] sm:$0xff]
    %v7333 = vld [vmem:[%s1 + $0x1c0] sm:$0xff]
    %v7334 = vld [vmem:[%s1 + $0x1c8] sm:$0xff]
    %v7335 = vld [vmem:[%s1 + $0x1d0] sm:$0xff]
    %v7336 = vld [vmem:[%s1 + $0x1d8] sm:$0xff]
    %v7337 = vld [vmem:[%s1 + $0x1e0] sm:$0xff]
    %v7338 = vld [vmem:[%s1 + $0x1e8] sm:$0xff]
    %v7339 = vld [vmem:[%s1 + $0x1f0] sm:$0xff]
    %v7340 = vld [vmem:[%s1 + $0x1f8] sm:$0xff]
    %v7341 = vld [vmem:[%s1 + $0x200] sm:$0xff]
    %v7342 = vld [vmem:[%s1 + $0x208] sm:$0xff]
    %v7343 = vld [vmem:[%s1 + $0x210] sm:$0xff]
    %v7344 = vld [vmem:[%s1 + $0x218] sm:$0xff]
    %v7345 = vld [vmem:[%s1 + $0x220] sm:$0xff]
    %v7346 = vld [vmem:[%s1 + $0x228] sm:$0xff]
    %v7347 = vld [vmem:[%s1 + $0x230] sm:$0xff]
    %v7348 = vld [vmem:[%s1 + $0x238] sm:$0xff]
    %v7349 = vld [vmem:[%s1 + $0x240] sm:$0xff]
    %v7350 = vld [vmem:[%s1 + $0x248] sm:$0xff]
    %v7351 = vld [vmem:[%s1 + $0x250] sm:$0xff]
    %v7352 = vld [vmem:[%s1 + $0x258] sm:$0xff]
    %v7353 = vld [vmem:[%s1 + $0x260] sm:$0xff]
    %v7354 = vld [vmem:[%s1 + $0x268] sm:$0xff]
    %v7355 = vld [vmem:[%s1 + $0x270] sm:$0xff]
    %v7356 = vld [vmem:[%s1 + $0x278] sm:$0xff]
    %v7357 = vld [vmem:[%s1 + $0x280] sm:$0xff]
    %v7358 = vld [vmem:[%s1 + $0x288] sm:$0xff]
    %v7359 = vld [vmem:[%s1 + $0x290] sm:$0xff]
    %v7360 = vld [vmem:[%s1 + $0x298] sm:$0xff]
    %v7361 = vld [vmem:[%s1 + $0x2a0] sm:$0xff]
    %v7362 = vld [vmem:[%s1 + $0x2a8] sm:$0xff]
    %v7363 = vld [vmem:[%s1 + $0x2b0] sm:$0xff]
    %v7364 = vld [vmem:[%s1 + $0x2b8] sm:$0xff]
    %v7365 = vld [vmem:[%s1 + $0x2c0] sm:$0xff]
    %v7366 = vld [vmem:[%s1 + $0x2c8] sm:$0xff]
    %v7367 = vld [vmem:[%s1 + $0x2d0] sm:$0xff]
    %v7368 = vld [vmem:[%s1 + $0x2d8] sm:$0xff]
    %v7369 = vld [vmem:[%s1 + $0x2e0] sm:$0xff]
    %v7370 = vld [vmem:[%s1 + $0x2e8] sm:$0xff]
    %v7371 = vld [vmem:[%s1 + $0x2f0] sm:$0xff]
    %v7372 = vld [vmem:[%s1 + $0x2f8] sm:$0xff]
    %v7373 = vld [vmem:[%s1 + $0x300] sm:$0xff]
    %v7374 = vld [vmem:[%s1 + $0x308] sm:$0xff]
    %v7375 = vld [vmem:[%s1 + $0x310] sm:$0xff]
    %v7376 = vld [vmem:[%s1 + $0x318] sm:$0xff]
    %v7377 = vld [vmem:[%s1 + $0x320] sm:$0xff]
    %v7378 = vld [vmem:[%s1 + $0x328] sm:$0xff]
    %v7379 = vld [vmem:[%s1 + $0x330] sm:$0xff]
    %v7380 = vld [vmem:[%s1 + $0x338] sm:$0xff]
    %v7381 = vld [vmem:[%s1 + $0x340] sm:$0xff]
    %v7382 = vld [vmem:[%s1 + $0x348] sm:$0xff]
    %v7383 = vld [vmem:[%s1 + $0x350] sm:$0xff]
    %v7384 = vld [vmem:[%s1 + $0x358] sm:$0xff]
    %v7385 = vld [vmem:[%s1 + $0x360] sm:$0xff]
    %v7386 = vld [vmem:[%s1 + $0x368] sm:$0xff]
    %v7387 = vld [vmem:[%s1 + $0x370] sm:$0xff]
    %v7388 = vld [vmem:[%s1 + $0x378] sm:$0xff]
    %v7389 = vld [vmem:[%s1 + $0x380] sm:$0xff]
    %v7390 = vld [vmem:[%s1 + $0x388] sm:$0xff]
    %v7391 = vld [vmem:[%s1 + $0x390] sm:$0xff]
    %v7392 = vld [vmem:[%s1 + $0x398] sm:$0xff]
    %v7393 = vld [vmem:[%s1 + $0x3a0] sm:$0xff]
    %v7394 = vld [vmem:[%s1 + $0x3a8] sm:$0xff]
    %v7395 = vld [vmem:[%s1 + $0x3b0] sm:$0xff]
    %v7396 = vld [vmem:[%s1 + $0x3b8] sm:$0xff]
    %v7397 = vld [vmem:[%s1 + $0x3c0] sm:$0xff]
    %v7398 = vld [vmem:[%s1 + $0x3c8] sm:$0xff]
    %v7399 = vld [vmem:[%s1 + $0x3d0] sm:$0xff]
    %v7400 = vld [vmem:[%s1 + $0x3d8] sm:$0xff]
    %v7401 = vld [vmem:[%s1 + $0x3e0] sm:$0xff]
    %v7402 = vld [vmem:[%s1 + $0x3e8] sm:$0xff]
    %v7403 = vld [vmem:[%s1 + $0x3f0] sm:$0xff]
    %v7404 = vld [vmem:[%s1 + $0x3f8] sm:$0xff]
    %v7405 = vld [vmem:[%s1 + $0x400] sm:$0xff]
    %v7406 = vld [vmem:[%s1 + $0x408] sm:$0xff]
    %v7407 = vld [vmem:[%s1 + $0x410] sm:$0xff]
    %v7408 = vld [vmem:[%s1 + $0x418] sm:$0xff]
    %v7409 = vld [vmem:[%s1 + $0x420] sm:$0xff]
    %v7410 = vld [vmem:[%s1 + $0x428] sm:$0xff]
    %v7411 = vld [vmem:[%s1 + $0x430] sm:$0xff]
    %v7412 = vld [vmem:[%s1 + $0x438] sm:$0xff]
    %v7413 = vld [vmem:[%s1 + $0x440] sm:$0xff]
    %v7414 = vld [vmem:[%s1 + $0x448] sm:$0xff]
    %v7415 = vld [vmem:[%s1 + $0x450] sm:$0xff]
    %v7416 = vld [vmem:[%s1 + $0x458] sm:$0xff]
    %v7417 = vld [vmem:[%s1 + $0x460] sm:$0xff]
    %v7418 = vld [vmem:[%s1 + $0x468] sm:$0xff]
    %v7419 = vld [vmem:[%s1 + $0x470] sm:$0xff]
    %v7420 = vld [vmem:[%s1 + $0x478] sm:$0xff]
    %v7421 = vld [vmem:[%s1 + $0x480] sm:$0xff]
    %v7422 = vld [vmem:[%s1 + $0x488] sm:$0xff]
    %v7423 = vld [vmem:[%s1 + $0x490] sm:$0xff]
    %v7424 = vld [vmem:[%s1 + $0x498] sm:$0xff]
    %v7425 = vld [vmem:[%s1 + $0x4a0] sm:$0xff]
    %v7426 = vld [vmem:[%s1 + $0x4a8] sm:$0xff]
    %v7427 = vld [vmem:[%s1 + $0x4b0] sm:$0xff]
    %v7428 = vld [vmem:[%s1 + $0x4b8] sm:$0xff]
    %v7429 = vld [vmem:[%s1 + $0x4c0] sm:$0xff]
    %v7430 = vld [vmem:[%s1 + $0x4c8] sm:$0xff]
    %v7431 = vld [vmem:[%s1 + $0x4d0] sm:$0xff]
    %v7432 = vld [vmem:[%s1 + $0x4d8] sm:$0xff]
    %v7433 = vld [vmem:[%s1 + $0x4e0] sm:$0xff]
    %v7434 = vld [vmem:[%s1 + $0x4e8] sm:$0xff]
    %v7435 = vld [vmem:[%s1 + $0x4f0] sm:$0xff]
    %v7436 = vld [vmem:[%s1 + $0x4f8] sm:$0xff]
    %v7437 = vld [vmem:[%s1 + $0x500] sm:$0xff]
    %v7438 = vld [vmem:[%s1 + $0x508] sm:$0xff]
    %v7439 = vld [vmem:[%s1 + $0x510] sm:$0xff]
    %v7440 = vld [vmem:[%s1 + $0x518] sm:$0xff]
    %v7441 = vld [vmem:[%s1 + $0x520] sm:$0xff]
    %v7442 = vld [vmem:[%s1 + $0x528] sm:$0xff]
    %v7443 = vld [vmem:[%s1 + $0x530] sm:$0xff]
    %v7444 = vld [vmem:[%s1 + $0x538] sm:$0xff]
    %v7445 = vld [vmem:[%s1 + $0x540] sm:$0xff]
    %v7446 = vld [vmem:[%s1 + $0x548] sm:$0xff]
    %v7447 = vld [vmem:[%s1 + $0x550] sm:$0xff]
    %v7448 = vld [vmem:[%s1 + $0x558] sm:$0xff]
    %v7449 = vld [vmem:[%s1 + $0x560] sm:$0xff]
    %v7450 = vld [vmem:[%s1 + $0x568] sm:$0xff]
    %v7451 = vld [vmem:[%s1 + $0x570] sm:$0xff]
    %v7452 = vld [vmem:[%s1 + $0x578] sm:$0xff]
    %v7453 = vld [vmem:[%s1 + $0x580] sm:$0xff]
    %v7454 = vld [vmem:[%s1 + $0x588] sm:$0xff]
    %v7455 = vld [vmem:[%s1 + $0x590] sm:$0xff]
    %v7456 = vld [vmem:[%s1 + $0x598] sm:$0xff]
    %v7457 = vld [vmem:[%s1 + $0x5a0] sm:$0xff]
    %v7458 = vld [vmem:[%s1 + $0x5a8] sm:$0xff]
    %v7459 = vld [vmem:[%s1 + $0x5b0] sm:$0xff]
    %v7460 = vld [vmem:[%s1 + $0x5b8] sm:$0xff]
    %v7461 = vld [vmem:[%s1 + $0x5c0] sm:$0xff]
    %v7462 = vld [vmem:[%s1 + $0x5c8] sm:$0xff]
    %v7463 = vld [vmem:[%s1 + $0x5d0] sm:$0xff]
    %v7464 = vld [vmem:[%s1 + $0x5d8] sm:$0xff]
    %v7465 = vld [vmem:[%s1 + $0x5e0] sm:$0xff]
    %v7466 = vld [vmem:[%s1 + $0x5e8] sm:$0xff]
    %v7467 = vld [vmem:[%s1 + $0x5f0] sm:$0xff]
    %v7468 = vld [vmem:[%s1 + $0x5f8] sm:$0xff]
    %v7469 = vld [vmem:[%s1 + $0x600] sm:$0xff]
    %v7470 = vld [vmem:[%s1 + $0x608] sm:$0xff]
    %v7471 = vld [vmem:[%s1 + $0x610] sm:$0xff]
    %v7472 = vld [vmem:[%s1 + $0x618] sm:$0xff]
    %v7473 = vld [vmem:[%s1 + $0x620] sm:$0xff]
    %v7474 = vld [vmem:[%s1 + $0x628] sm:$0xff]
    %v7475 = vld [vmem:[%s1 + $0x630] sm:$0xff]
    %v7476 = vld [vmem:[%s1 + $0x638] sm:$0xff]
    %v7477 = vld [vmem:[%s1 + $0x640] sm:$0xff]
    %v7478 = vld [vmem:[%s1 + $0x648] sm:$0xff]
    %v7479 = vld [vmem:[%s1 + $0x650] sm:$0xff]
    %v7480 = vld [vmem:[%s1 + $0x658] sm:$0xff]
    %v7481 = vld [vmem:[%s1 + $0x660] sm:$0xff]
    %v7482 = vld [vmem:[%s1 + $0x668] sm:$0xff]
    %v7483 = vld [vmem:[%s1 + $0x670] sm:$0xff]
    %v7484 = vld [vmem:[%s1 + $0x678] sm:$0xff]
    %v7485 = vld [vmem:[%s1 + $0x680] sm:$0xff]
    %v7486 = vld [vmem:[%s1 + $0x688] sm:$0xff]
    %v7487 = vld [vmem:[%s1 + $0x690] sm:$0xff]
    %v7488 = vld [vmem:[%s1 + $0x698] sm:$0xff]
    %v7489 = vld [vmem:[%s1 + $0x6a0] sm:$0xff]
    %v7490 = vld [vmem:[%s1 + $0x6a8] sm:$0xff]
    %v7491 = vld [vmem:[%s1 + $0x6b0] sm:$0xff]
    %v7492 = vld [vmem:[%s1 + $0x6b8] sm:$0xff]
    %v7493 = vld [vmem:[%s1 + $0x6c0] sm:$0xff]
    %v7494 = vld [vmem:[%s1 + $0x6c8] sm:$0xff]
    %v7495 = vld [vmem:[%s1 + $0x6d0] sm:$0xff]
    %v7496 = vld [vmem:[%s1 + $0x6d8] sm:$0xff]
    %v7497 = vld [vmem:[%s1 + $0x6e0] sm:$0xff]
    %v7498 = vld [vmem:[%s1 + $0x6e8] sm:$0xff]
    %v7499 = vld [vmem:[%s1 + $0x6f0] sm:$0xff]
    %v7500 = vld [vmem:[%s1 + $0x6f8] sm:$0xff]
    %v7501 = vld [vmem:[%s1 + $0x700] sm:$0xff]
    %v7502 = vld [vmem:[%s1 + $0x708] sm:$0xff]
    %v7503 = vld [vmem:[%s1 + $0x710] sm:$0xff]
    %v7504 = vld [vmem:[%s1 + $0x718] sm:$0xff]
    %v7505 = vld [vmem:[%s1 + $0x720] sm:$0xff]
    %v7506 = vld [vmem:[%s1 + $0x728] sm:$0xff]
    %v7507 = vld [vmem:[%s1 + $0x730] sm:$0xff]
    %v7508 = vld [vmem:[%s1 + $0x738] sm:$0xff]
    %v7749 = vunpack.c.l.b16 %v7037
    %v7750 = vunpack.c.h.b16 %v7037
    %v7751 = vunpack.c.l.b16 %v7038
    %v7752 = vunpack.c.h.b16 %v7038
    %v7753 = vunpack.c.l.b16 %v7039
    %v7754 = vunpack.c.h.b16 %v7039
    %v7755 = vunpack.c.l.b16 %v7040
    %v7756 = vunpack.c.h.b16 %v7040
    %v7757 = vunpack.c.l.b16 %v7041
    %v7758 = vunpack.c.h.b16 %v7041
    %v7759 = vunpack.c.l.b16 %v7042
    %v7760 = vunpack.c.h.b16 %v7042
    %v7761 = vunpack.c.l.b16 %v7043
    %v7762 = vunpack.c.h.b16 %v7043
    %v7763 = vunpack.c.l.b16 %v7044
    %v7764 = vunpack.c.h.b16 %v7044
    %v7765 = vunpack.c.l.b16 %v7045
    %v7766 = vunpack.c.h.b16 %v7045
    %v7767 = vunpack.c.l.b16 %v7046
    %v7768 = vunpack.c.h.b16 %v7046
    %v7769 = vunpack.c.l.b16 %v7047
    %v7770 = vunpack.c.h.b16 %v7047
    %v7771 = vunpack.c.l.b16 %v7048
    %v7772 = vunpack.c.h.b16 %v7048
    %v7773 = vunpack.c.l.b16 %v7049
    %v7774 = vunpack.c.h.b16 %v7049
    %v7775 = vunpack.c.l.b16 %v7050
    %v7776 = vunpack.c.h.b16 %v7050
    %v7777 = vunpack.c.l.b16 %v7051
    %v7778 = vunpack.c.l.b16 %v7052
    %v7779 = vunpack.c.h.b16 %v7052
    %v7780 = vunpack.c.l.b16 %v7053
    %v7781 = vunpack.c.h.b16 %v7053
    %v7782 = vunpack.c.l.b16 %v7054
    %v7783 = vunpack.c.h.b16 %v7054
    %v7784 = vunpack.c.l.b16 %v7055
    %v7785 = vunpack.c.h.b16 %v7055
    %v7786 = vunpack.c.l.b16 %v7056
    %v7787 = vunpack.c.h.b16 %v7056
    %v7788 = vunpack.c.l.b16 %v7057
    %v7789 = vunpack.c.h.b16 %v7057
    %v7790 = vunpack.c.l.b16 %v7058
    %v7791 = vunpack.c.h.b16 %v7058
    %v7792 = vunpack.c.l.b16 %v7059
    %v7793 = vunpack.c.h.b16 %v7059
    %v7794 = vunpack.c.l.b16 %v7060
    %v7795 = vunpack.c.h.b16 %v7060
    %v7796 = vunpack.c.l.b16 %v7061
    %v7797 = vunpack.c.h.b16 %v7061
    %v7798 = vunpack.c.l.b16 %v7062
    %v7799 = vunpack.c.h.b16 %v7062
    %v7800 = vunpack.c.l.b16 %v7063
    %v7801 = vunpack.c.h.b16 %v7063
    %v7802 = vunpack.c.l.b16 %v7064
    %v7803 = vunpack.c.h.b16 %v7064
    %v7804 = vunpack.c.l.b16 %v7065
    %v7805 = vunpack.c.h.b16 %v7065
    %v7806 = vunpack.c.l.b16 %v7066
    %v7807 = vunpack.c.l.b16 %v7067
    %v7808 = vunpack.c.h.b16 %v7067
    %v7809 = vunpack.c.l.b16 %v7068
    %v7810 = vunpack.c.h.b16 %v7068
    %v7811 = vunpack.c.l.b16 %v7069
    %v7812 = vunpack.c.h.b16 %v7069
    %v7813 = vunpack.c.l.b16 %v7070
    %v7814 = vunpack.c.h.b16 %v7070
    %v7815 = vunpack.c.l.b16 %v7071
    %v7816 = vunpack.c.h.b16 %v7071
    %v7817 = vunpack.c.l.b16 %v7072
    %v7818 = vunpack.c.h.b16 %v7072
    %v7819 = vunpack.c.l.b16 %v7073
    %v7820 = vunpack.c.h.b16 %v7073
    %v7821 = vunpack.c.l.b16 %v7074
    %v7822 = vunpack.c.h.b16 %v7074
    %v7823 = vunpack.c.l.b16 %v7075
    %v7824 = vunpack.c.h.b16 %v7075
    %v7825 = vunpack.c.l.b16 %v7076
    %v7826 = vunpack.c.h.b16 %v7076
    %v7827 = vunpack.c.l.b16 %v7077
    %v7828 = vunpack.c.h.b16 %v7077
    %v7829 = vunpack.c.l.b16 %v7078
    %v7830 = vunpack.c.h.b16 %v7078
    %v7831 = vunpack.c.l.b16 %v7079
    %v7832 = vunpack.c.h.b16 %v7079
    %v7833 = vunpack.c.l.b16 %v7080
    %v7834 = vunpack.c.h.b16 %v7080
    %v7835 = vunpack.c.l.b16 %v7081
    %v7836 = vunpack.c.l.b16 %v7082
    %v7837 = vunpack.c.h.b16 %v7082
    %v7838 = vunpack.c.l.b16 %v7083
    %v7839 = vunpack.c.h.b16 %v7083
    %v7840 = vunpack.c.l.b16 %v7084
    %v7841 = vunpack.c.h.b16 %v7084
    %v7842 = vunpack.c.l.b16 %v7085
    %v7843 = vunpack.c.h.b16 %v7085
    %v7844 = vunpack.c.l.b16 %v7086
    %v7845 = vunpack.c.h.b16 %v7086
    %v7846 = vunpack.c.l.b16 %v7087
    %v7847 = vunpack.c.h.b16 %v7087
    %v7848 = vunpack.c.l.b16 %v7088
    %v7849 = vunpack.c.h.b16 %v7088
    %v7850 = vunpack.c.l.b16 %v7089
    %v7851 = vunpack.c.h.b16 %v7089
    %v7852 = vunpack.c.l.b16 %v7090
    %v7853 = vunpack.c.h.b16 %v7090
    %v7854 = vunpack.c.l.b16 %v7091
    %v7855 = vunpack.c.h.b16 %v7091
    %v7856 = vunpack.c.l.b16 %v7092
    %v7857 = vunpack.c.h.b16 %v7092
    %v7858 = vunpack.c.l.b16 %v7093
    %v7859 = vunpack.c.h.b16 %v7093
    %v7860 = vunpack.c.l.b16 %v7094
    %v7861 = vunpack.c.h.b16 %v7094
    %v7862 = vunpack.c.l.b16 %v7095
    %v7863 = vunpack.c.h.b16 %v7095
    %v7864 = vunpack.c.l.b16 %v7096
    %v7865 = vunpack.c.l.b16 %v7097
    %v7866 = vunpack.c.h.b16 %v7097
    %v7867 = vunpack.c.l.b16 %v7098
    %v7868 = vunpack.c.h.b16 %v7098
    %v7869 = vunpack.c.l.b16 %v7099
    %v7870 = vunpack.c.h.b16 %v7099
    %v7871 = vunpack.c.l.b16 %v7100
    %v7872 = vunpack.c.h.b16 %v7100
    %v7873 = vunpack.c.l.b16 %v7101
    %v7874 = vunpack.c.h.b16 %v7101
    %v7875 = vunpack.c.l.b16 %v7102
    %v7876 = vunpack.c.h.b16 %v7102
    %v7877 = vunpack.c.l.b16 %v7103
    %v7878 = vunpack.c.h.b16 %v7103
    %v7879 = vunpack.c.l.b16 %v7104
    %v7880 = vunpack.c.h.b16 %v7104
    %v7881 = vunpack.c.l.b16 %v7105
    %v7882 = vunpack.c.h.b16 %v7105
    %v7883 = vunpack.c.l.b16 %v7106
    %v7884 = vunpack.c.h.b16 %v7106
    %v7885 = vunpack.c.l.b16 %v7107
    %v7886 = vunpack.c.h.b16 %v7107
    %v7887 = vunpack.c.l.b16 %v7108
    %v7888 = vunpack.c.h.b16 %v7108
    %v7889 = vunpack.c.l.b16 %v7109
    %v7890 = vunpack.c.h.b16 %v7109
    %v7891 = vunpack.c.l.b16 %v7110
    %v7892 = vunpack.c.h.b16 %v7110
    %v7893 = vunpack.c.l.b16 %v7111
    %v7894 = vunpack.c.l.b16 %v7112
    %v7895 = vunpack.c.h.b16 %v7112
    %v7896 = vunpack.c.l.b16 %v7113
    %v7897 = vunpack.c.h.b16 %v7113
    %v7898 = vunpack.c.l.b16 %v7114
    %v7899 = vunpack.c.h.b16 %v7114
    %v7900 = vunpack.c.l.b16 %v7115
    %v7901 = vunpack.c.h.b16 %v7115
    %v7902 = vunpack.c.l.b16 %v7116
    %v7903 = vunpack.c.h.b16 %v7116
    %v7904 = vunpack.c.l.b16 %v7117
    %v7905 = vunpack.c.h.b16 %v7117
    %v7906 = vunpack.c.l.b16 %v7118
    %v7907 = vunpack.c.h.b16 %v7118
    %v7908 = vunpack.c.l.b16 %v7119
    %v7909 = vunpack.c.h.b16 %v7119
    %v7910 = vunpack.c.l.b16 %v7120
    %v7911 = vunpack.c.h.b16 %v7120
    %v7912 = vunpack.c.l.b16 %v7121
    %v7913 = vunpack.c.h.b16 %v7121
    %v7914 = vunpack.c.l.b16 %v7122
    %v7915 = vunpack.c.h.b16 %v7122
    %v7916 = vunpack.c.l.b16 %v7123
    %v7917 = vunpack.c.h.b16 %v7123
    %v7918 = vunpack.c.l.b16 %v7124
    %v7919 = vunpack.c.h.b16 %v7124
    %v7920 = vunpack.c.l.b16 %v7125
    %v7921 = vunpack.c.h.b16 %v7125
    %v7922 = vunpack.c.l.b16 %v7126
    %v7923 = vunpack.c.l.b16 %v7127
    %v7924 = vunpack.c.h.b16 %v7127
    %v7925 = vunpack.c.l.b16 %v7128
    %v7926 = vunpack.c.h.b16 %v7128
    %v7927 = vunpack.c.l.b16 %v7129
    %v7928 = vunpack.c.h.b16 %v7129
    %v7929 = vunpack.c.l.b16 %v7130
    %v7930 = vunpack.c.h.b16 %v7130
    %v7931 = vunpack.c.l.b16 %v7131
    %v7932 = vunpack.c.h.b16 %v7131
    %v7933 = vunpack.c.l.b16 %v7132
    %v7934 = vunpack.c.h.b16 %v7132
    %v7935 = vunpack.c.l.b16 %v7133
    %v7936 = vunpack.c.h.b16 %v7133
    %v7937 = vunpack.c.l.b16 %v7134
    %v7938 = vunpack.c.h.b16 %v7134
    %v7939 = vunpack.c.l.b16 %v7135
    %v7940 = vunpack.c.h.b16 %v7135
    %v7941 = vunpack.c.l.b16 %v7136
    %v7942 = vunpack.c.h.b16 %v7136
    %v7943 = vunpack.c.l.b16 %v7137
    %v7944 = vunpack.c.h.b16 %v7137
    %v7945 = vunpack.c.l.b16 %v7138
    %v7946 = vunpack.c.h.b16 %v7138
    %v7947 = vunpack.c.l.b16 %v7139
    %v7948 = vunpack.c.h.b16 %v7139
    %v7949 = vunpack.c.l.b16 %v7140
    %v7950 = vunpack.c.h.b16 %v7140
    %v7951 = vunpack.c.l.b16 %v7141
    %v7952 = vunpack.c.l.b16 %v7142
    %v7953 = vunpack.c.h.b16 %v7142
    %v7954 = vunpack.c.l.b16 %v7143
    %v7955 = vunpack.c.h.b16 %v7143
    %v7956 = vunpack.c.l.b16 %v7144
    %v7957 = vunpack.c.h.b16 %v7144
    %v7958 = vunpack.c.l.b16 %v7145
    %v7959 = vunpack.c.h.b16 %v7145
    %v7960 = vunpack.c.l.b16 %v7146
    %v7961 = vunpack.c.h.b16 %v7146
    %v7962 = vunpack.c.l.b16 %v7147
    %v7963 = vunpack.c.h.b16 %v7147
    %v7964 = vunpack.c.l.b16 %v7148
    %v7965 = vunpack.c.h.b16 %v7148
    %v7966 = vunpack.c.l.b16 %v7149
    %v7967 = vunpack.c.h.b16 %v7149
    %v7968 = vunpack.c.l.b16 %v7150
    %v7969 = vunpack.c.h.b16 %v7150
    %v7970 = vunpack.c.l.b16 %v7151
    %v7971 = vunpack.c.h.b16 %v7151
    %v7972 = vunpack.c.l.b16 %v7152
    %v7973 = vunpack.c.h.b16 %v7152
    %v7974 = vunpack.c.l.b16 %v7153
    %v7975 = vunpack.c.h.b16 %v7153
    %v7976 = vunpack.c.l.b16 %v7154
    %v7977 = vunpack.c.h.b16 %v7154
    %v7978 = vunpack.c.l.b16 %v7155
    %v7979 = vunpack.c.h.b16 %v7155
    %v7980 = vunpack.c.l.b16 %v7156
    %v7981 = vunpack.c.l.b16 %v7157
    %v7982 = vunpack.c.h.b16 %v7157
    %v7983 = vunpack.c.l.b16 %v7158
    %v7984 = vunpack.c.h.b16 %v7158
    %v7985 = vunpack.c.l.b16 %v7159
    %v7986 = vunpack.c.h.b16 %v7159
    %v7987 = vunpack.c.l.b16 %v7160
    %v7988 = vunpack.c.h.b16 %v7160
    %v7989 = vunpack.c.l.b16 %v7161
    %v7990 = vunpack.c.h.b16 %v7161
    %v7991 = vunpack.c.l.b16 %v7162
    %v7992 = vunpack.c.h.b16 %v7162
    %v7993 = vunpack.c.l.b16 %v7163
    %v7994 = vunpack.c.h.b16 %v7163
    %v7995 = vunpack.c.l.b16 %v7164
    %v7996 = vunpack.c.h.b16 %v7164
    %v7997 = vunpack.c.l.b16 %v7165
    %v7998 = vunpack.c.h.b16 %v7165
    %v7999 = vunpack.c.l.b16 %v7166
    %v8000 = vunpack.c.h.b16 %v7166
    %v8001 = vunpack.c.l.b16 %v7167
    %v8002 = vunpack.c.h.b16 %v7167
    %v8003 = vunpack.c.l.b16 %v7168
    %v8004 = vunpack.c.h.b16 %v7168
    %v8005 = vunpack.c.l.b16 %v7169
    %v8006 = vunpack.c.h.b16 %v7169
    %v8007 = vunpack.c.l.b16 %v7170
    %v8008 = vunpack.c.h.b16 %v7170
    %v8009 = vunpack.c.l.b16 %v7171
    %v8010 = vunpack.c.l.b16 %v7172
    %v8011 = vunpack.c.h.b16 %v7172
    %v8012 = vunpack.c.l.b16 %v7173
    %v8013 = vunpack.c.h.b16 %v7173
    %v8014 = vunpack.c.l.b16 %v7174
    %v8015 = vunpack.c.h.b16 %v7174
    %v8016 = vunpack.c.l.b16 %v7175
    %v8017 = vunpack.c.h.b16 %v7175
    %v8018 = vunpack.c.l.b16 %v7176
    %v8019 = vunpack.c.h.b16 %v7176
    %v8020 = vunpack.c.l.b16 %v7177
    %v8021 = vunpack.c.h.b16 %v7177
    %v8022 = vunpack.c.l.b16 %v7178
    %v8023 = vunpack.c.h.b16 %v7178
    %v8024 = vunpack.c.l.b16 %v7179
    %v8025 = vunpack.c.h.b16 %v7179
    %v8026 = vunpack.c.l.b16 %v7180
    %v8027 = vunpack.c.h.b16 %v7180
    %v8028 = vunpack.c.l.b16 %v7181
    %v8029 = vunpack.c.h.b16 %v7181
    %v8030 = vunpack.c.l.b16 %v7182
    %v8031 = vunpack.c.h.b16 %v7182
    %v8032 = vunpack.c.l.b16 %v7183
    %v8033 = vunpack.c.h.b16 %v7183
    %v8034 = vunpack.c.l.b16 %v7184
    %v8035 = vunpack.c.h.b16 %v7184
    %v8036 = vunpack.c.l.b16 %v7185
    %v8037 = vunpack.c.h.b16 %v7185
    %v8038 = vunpack.c.l.b16 %v7186
    %v8039 = vunpack.c.l.b16 %v7187
    %v8040 = vunpack.c.h.b16 %v7187
    %v8041 = vunpack.c.l.b16 %v7188
    %v8042 = vunpack.c.h.b16 %v7188
    %v8043 = vunpack.c.l.b16 %v7189
    %v8044 = vunpack.c.h.b16 %v7189
    %v8045 = vunpack.c.l.b16 %v7190
    %v8046 = vunpack.c.h.b16 %v7190
    %v8047 = vunpack.c.l.b16 %v7191
    %v8048 = vunpack.c.h.b16 %v7191
    %v8049 = vunpack.c.l.b16 %v7192
    %v8050 = vunpack.c.h.b16 %v7192
    %v8051 = vunpack.c.l.b16 %v7193
    %v8052 = vunpack.c.h.b16 %v7193
    %v8053 = vunpack.c.l.b16 %v7194
    %v8054 = vunpack.c.h.b16 %v7194
    %v8055 = vunpack.c.l.b16 %v7195
    %v8056 = vunpack.c.h.b16 %v7195
    %v8057 = vunpack.c.l.b16 %v7196
    %v8058 = vunpack.c.h.b16 %v7196
    %v8059 = vunpack.c.l.b16 %v7197
    %v8060 = vunpack.c.h.b16 %v7197
    %v8061 = vunpack.c.l.b16 %v7198
    %v8062 = vunpack.c.h.b16 %v7198
    %v8063 = vunpack.c.l.b16 %v7199
    %v8064 = vunpack.c.h.b16 %v7199
    %v8065 = vunpack.c.l.b16 %v7200
    %v8066 = vunpack.c.h.b16 %v7200
    %v8067 = vunpack.c.l.b16 %v7201
    %v8068 = vunpack.c.l.b16 %v7202
    %v8069 = vunpack.c.h.b16 %v7202
    %v8070 = vunpack.c.l.b16 %v7203
    %v8071 = vunpack.c.h.b16 %v7203
    %v8072 = vunpack.c.l.b16 %v7204
    %v8073 = vunpack.c.h.b16 %v7204
    %v8074 = vunpack.c.l.b16 %v7205
    %v8075 = vunpack.c.h.b16 %v7205
    %v8076 = vunpack.c.l.b16 %v7206
    %v8077 = vunpack.c.h.b16 %v7206
    %v8078 = vunpack.c.l.b16 %v7207
    %v8079 = vunpack.c.h.b16 %v7207
    %v8080 = vunpack.c.l.b16 %v7208
    %v8081 = vunpack.c.h.b16 %v7208
    %v8082 = vunpack.c.l.b16 %v7209
    %v8083 = vunpack.c.h.b16 %v7209
    %v8084 = vunpack.c.l.b16 %v7210
    %v8085 = vunpack.c.h.b16 %v7210
    %v8086 = vunpack.c.l.b16 %v7211
    %v8087 = vunpack.c.h.b16 %v7211
    %v8088 = vunpack.c.l.b16 %v7212
    %v8089 = vunpack.c.h.b16 %v7212
    %v8090 = vunpack.c.l.b16 %v7213
    %v8091 = vunpack.c.h.b16 %v7213
    %v8092 = vunpack.c.l.b16 %v7214
    %v8093 = vunpack.c.h.b16 %v7214
    %v8094 = vunpack.c.l.b16 %v7215
    %v8095 = vunpack.c.h.b16 %v7215
    %v8096 = vunpack.c.l.b16 %v7216
    %v8097 = vunpack.c.l.b16 %v7217
    %v8098 = vunpack.c.h.b16 %v7217
    %v8099 = vunpack.c.l.b16 %v7218
    %v8100 = vunpack.c.h.b16 %v7218
    %v8101 = vunpack.c.l.b16 %v7219
    %v8102 = vunpack.c.h.b16 %v7219
    %v8103 = vunpack.c.l.b16 %v7220
    %v8104 = vunpack.c.h.b16 %v7220
    %v8105 = vunpack.c.l.b16 %v7221
    %v8106 = vunpack.c.h.b16 %v7221
    %v8107 = vunpack.c.l.b16 %v7222
    %v8108 = vunpack.c.h.b16 %v7222
    %v8109 = vunpack.c.l.b16 %v7223
    %v8110 = vunpack.c.h.b16 %v7223
    %v8111 = vunpack.c.l.b16 %v7224
    %v8112 = vunpack.c.h.b16 %v7224
    %v8113 = vunpack.c.l.b16 %v7225
    %v8114 = vunpack.c.h.b16 %v7225
    %v8115 = vunpack.c.l.b16 %v7226
    %v8116 = vunpack.c.h.b16 %v7226
    %v8117 = vunpack.c.l.b16 %v7227
    %v8118 = vunpack.c.h.b16 %v7227
    %v8119 = vunpack.c.l.b16 %v7228
    %v8120 = vunpack.c.h.b16 %v7228
    %v8121 = vunpack.c.l.b16 %v7229
    %v8122 = vunpack.c.h.b16 %v7229
    %v8123 = vunpack.c.l.b16 %v7230
    %v8124 = vunpack.c.h.b16 %v7230
    %v8125 = vunpack.c.l.b16 %v7231
    %v8126 = vunpack.c.l.b16 %v7232
    %v8127 = vunpack.c.h.b16 %v7232
    %v8128 = vunpack.c.l.b16 %v7233
    %v8129 = vunpack.c.h.b16 %v7233
    %v8130 = vunpack.c.l.b16 %v7234
    %v8131 = vunpack.c.h.b16 %v7234
    %v8132 = vunpack.c.l.b16 %v7235
    %v8133 = vunpack.c.h.b16 %v7235
    %v8134 = vunpack.c.l.b16 %v7236
    %v8135 = vunpack.c.h.b16 %v7236
    %v8136 = vunpack.c.l.b16 %v7237
    %v8137 = vunpack.c.h.b16 %v7237
    %v8138 = vunpack.c.l.b16 %v7238
    %v8139 = vunpack.c.h.b16 %v7238
    %v8140 = vunpack.c.l.b16 %v7239
    %v8141 = vunpack.c.h.b16 %v7239
    %v8142 = vunpack.c.l.b16 %v7240
    %v8143 = vunpack.c.h.b16 %v7240
    %v8144 = vunpack.c.l.b16 %v7241
    %v8145 = vunpack.c.h.b16 %v7241
    %v8146 = vunpack.c.l.b16 %v7242
    %v8147 = vunpack.c.h.b16 %v7242
    %v8148 = vunpack.c.l.b16 %v7243
    %v8149 = vunpack.c.h.b16 %v7243
    %v8150 = vunpack.c.l.b16 %v7244
    %v8151 = vunpack.c.h.b16 %v7244
    %v8152 = vunpack.c.l.b16 %v7245
    %v8153 = vunpack.c.h.b16 %v7245
    %v8154 = vunpack.c.l.b16 %v7246
    %v8155 = vunpack.c.l.b16 %v7247
    %v8156 = vunpack.c.h.b16 %v7247
    %v8157 = vunpack.c.l.b16 %v7248
    %v8158 = vunpack.c.h.b16 %v7248
    %v8159 = vunpack.c.l.b16 %v7249
    %v8160 = vunpack.c.h.b16 %v7249
    %v8161 = vunpack.c.l.b16 %v7250
    %v8162 = vunpack.c.h.b16 %v7250
    %v8163 = vunpack.c.l.b16 %v7251
    %v8164 = vunpack.c.h.b16 %v7251
    %v8165 = vunpack.c.l.b16 %v7252
    %v8166 = vunpack.c.h.b16 %v7252
    %v8167 = vunpack.c.l.b16 %v7253
    %v8168 = vunpack.c.h.b16 %v7253
    %v8169 = vunpack.c.l.b16 %v7254
    %v8170 = vunpack.c.h.b16 %v7254
    %v8171 = vunpack.c.l.b16 %v7255
    %v8172 = vunpack.c.h.b16 %v7255
    %v8173 = vunpack.c.l.b16 %v7256
    %v8174 = vunpack.c.h.b16 %v7256
    %v8175 = vunpack.c.l.b16 %v7257
    %v8176 = vunpack.c.h.b16 %v7257
    %v8177 = vunpack.c.l.b16 %v7258
    %v8178 = vunpack.c.h.b16 %v7258
    %v8179 = vunpack.c.l.b16 %v7259
    %v8180 = vunpack.c.h.b16 %v7259
    %v8181 = vunpack.c.l.b16 %v7260
    %v8182 = vunpack.c.h.b16 %v7260
    %v8183 = vunpack.c.l.b16 %v7261
    %v8184 = vunpack.c.l.b16 %v7262
    %v8185 = vunpack.c.h.b16 %v7262
    %v8186 = vunpack.c.l.b16 %v7263
    %v8187 = vunpack.c.h.b16 %v7263
    %v8188 = vunpack.c.l.b16 %v7264
    %v8189 = vunpack.c.h.b16 %v7264
    %v8190 = vunpack.c.l.b16 %v7265
    %v8191 = vunpack.c.h.b16 %v7265
    %v8192 = vunpack.c.l.b16 %v7266
    %v8193 = vunpack.c.h.b16 %v7266
    %v8194 = vunpack.c.l.b16 %v7267
    %v8195 = vunpack.c.h.b16 %v7267
    %v8196 = vunpack.c.l.b16 %v7268
    %v8197 = vunpack.c.h.b16 %v7268
    %v8198 = vunpack.c.l.b16 %v7269
    %v8199 = vunpack.c.h.b16 %v7269
    %v8200 = vunpack.c.l.b16 %v7270
    %v8201 = vunpack.c.h.b16 %v7270
    %v8202 = vunpack.c.l.b16 %v7271
    %v8203 = vunpack.c.h.b16 %v7271
    %v8204 = vunpack.c.l.b16 %v7272
    %v8205 = vunpack.c.h.b16 %v7272
    %v8206 = vunpack.c.l.b16 %v7273
    %v8207 = vunpack.c.h.b16 %v7273
    %v8208 = vunpack.c.l.b16 %v7274
    %v8209 = vunpack.c.h.b16 %v7274
    %v8210 = vunpack.c.l.b16 %v7275
    %v8211 = vunpack.c.h.b16 %v7275
    %v8212 = vunpack.c.l.b16 %v7276
    %v8213 = vpack.c.b16 %v7778, %v7749
    %v8214 = vpack.c.b16 %v7779, %v7750
    %v8215 = vpack.c.b16 %v7780, %v7751
    %v8216 = vpack.c.b16 %v7781, %v7752
    %v8217 = vpack.c.b16 %v7782, %v7753
    %v8218 = vpack.c.b16 %v7783, %v7754
    %v8219 = vpack.c.b16 %v7784, %v7755
    %v8220 = vpack.c.b16 %v7785, %v7756
    %v8221 = vpack.c.b16 %v7786, %v7757
    %v8222 = vpack.c.b16 %v7787, %v7758
    %v8223 = vpack.c.b16 %v7788, %v7759
    %v8224 = vpack.c.b16 %v7789, %v7760
    %v8225 = vpack.c.b16 %v7790, %v7761
    %v8226 = vpack.c.b16 %v7791, %v7762
    %v8227 = vpack.c.b16 %v7792, %v7763
    %v8228 = vpack.c.b16 %v7793, %v7764
    %v8229 = vpack.c.b16 %v7794, %v7765
    %v8230 = vpack.c.b16 %v7795, %v7766
    %v8231 = vpack.c.b16 %v7796, %v7767
    %v8232 = vpack.c.b16 %v7797, %v7768
    %v8233 = vpack.c.b16 %v7798, %v7769
    %v8234 = vpack.c.b16 %v7799, %v7770
    %v8235 = vpack.c.b16 %v7800, %v7771
    %v8236 = vpack.c.b16 %v7801, %v7772
    %v8237 = vpack.c.b16 %v7802, %v7773
    %v8238 = vpack.c.b16 %v7803, %v7774
    %v8239 = vpack.c.b16 %v7804, %v7775
    %v8240 = vpack.c.b16 %v7805, %v7776
    %v8241 = vpack.c.b16 %v7806, %v7777
    %v8242 = vpack.c.b16 %v7836, %v7807
    %v8243 = vpack.c.b16 %v7837, %v7808
    %v8244 = vpack.c.b16 %v7838, %v7809
    %v8245 = vpack.c.b16 %v7839, %v7810
    %v8246 = vpack.c.b16 %v7840, %v7811
    %v8247 = vpack.c.b16 %v7841, %v7812
    %v8248 = vpack.c.b16 %v7842, %v7813
    %v8249 = vpack.c.b16 %v7843, %v7814
    %v8250 = vpack.c.b16 %v7844, %v7815
    %v8251 = vpack.c.b16 %v7845, %v7816
    %v8252 = vpack.c.b16 %v7846, %v7817
    %v8253 = vpack.c.b16 %v7847, %v7818
    %v8254 = vpack.c.b16 %v7848, %v7819
    %v8255 = vpack.c.b16 %v7849, %v7820
    %v8256 = vpack.c.b16 %v7850, %v7821
    %v8257 = vpack.c.b16 %v7851, %v7822
    %v8258 = vpack.c.b16 %v7852, %v7823
    %v8259 = vpack.c.b16 %v7853, %v7824
    %v8260 = vpack.c.b16 %v7854, %v7825
    %v8261 = vpack.c.b16 %v7855, %v7826
    %v8262 = vpack.c.b16 %v7856, %v7827
    %v8263 = vpack.c.b16 %v7857, %v7828
    %v8264 = vpack.c.b16 %v7858, %v7829
    %v8265 = vpack.c.b16 %v7859, %v7830
    %v8266 = vpack.c.b16 %v7860, %v7831
    %v8267 = vpack.c.b16 %v7861, %v7832
    %v8268 = vpack.c.b16 %v7862, %v7833
    %v8269 = vpack.c.b16 %v7863, %v7834
    %v8270 = vpack.c.b16 %v7864, %v7835
    %v8271 = vpack.c.b16 %v7894, %v7865
    %v8272 = vpack.c.b16 %v7895, %v7866
    %v8273 = vpack.c.b16 %v7896, %v7867
    %v8274 = vpack.c.b16 %v7897, %v7868
    %v8275 = vpack.c.b16 %v7898, %v7869
    %v8276 = vpack.c.b16 %v7899, %v7870
    %v8277 = vpack.c.b16 %v7900, %v7871
    %v8278 = vpack.c.b16 %v7901, %v7872
    %v8279 = vpack.c.b16 %v7902, %v7873
    %v8280 = vpack.c.b16 %v7903, %v7874
    %v8281 = vpack.c.b16 %v7904, %v7875
    %v8282 = vpack.c.b16 %v7905, %v7876
    %v8283 = vpack.c.b16 %v7906, %v7877
    %v8284 = vpack.c.b16 %v7907, %v7878
    %v8285 = vpack.c.b16 %v7908, %v7879
    %v8286 = vpack.c.b16 %v7909, %v7880
    %v8287 = vpack.c.b16 %v7910, %v7881
    %v8288 = vpack.c.b16 %v7911, %v7882
    %v8289 = vpack.c.b16 %v7912, %v7883
    %v8290 = vpack.c.b16 %v7913, %v7884
    %v8291 = vpack.c.b16 %v7914, %v7885
    %v8292 = vpack.c.b16 %v7915, %v7886
    %v8293 = vpack.c.b16 %v7916, %v7887
    %v8294 = vpack.c.b16 %v7917, %v7888
    %v8295 = vpack.c.b16 %v7918, %v7889
    %v8296 = vpack.c.b16 %v7919, %v7890
    %v8297 = vpack.c.b16 %v7920, %v7891
    %v8298 = vpack.c.b16 %v7921, %v7892
    %v8299 = vpack.c.b16 %v7922, %v7893
    %v8300 = vpack.c.b16 %v7952, %v7923
    %v8301 = vpack.c.b16 %v7953, %v7924
    %v8302 = vpack.c.b16 %v7954, %v7925
    %v8303 = vpack.c.b16 %v7955, %v7926
    %v8304 = vpack.c.b16 %v7956, %v7927
    %v8305 = vpack.c.b16 %v7957, %v7928
    %v8306 = vpack.c.b16 %v7958, %v7929
    %v8307 = vpack.c.b16 %v7959, %v7930
    %v8308 = vpack.c.b16 %v7960, %v7931
    %v8309 = vpack.c.b16 %v7961, %v7932
    %v8310 = vpack.c.b16 %v7962, %v7933
    %v8311 = vpack.c.b16 %v7963, %v7934
    %v8312 = vpack.c.b16 %v7964, %v7935
    %v8313 = vpack.c.b16 %v7965, %v7936
    %v8314 = vpack.c.b16 %v7966, %v7937
    %v8315 = vpack.c.b16 %v7967, %v7938
    %v8316 = vpack.c.b16 %v7968, %v7939
    %v8317 = vpack.c.b16 %v7969, %v7940
    %v8318 = vpack.c.b16 %v7970, %v7941
    %v8319 = vpack.c.b16 %v7971, %v7942
    %v8320 = vpack.c.b16 %v7972, %v7943
    %v8321 = vpack.c.b16 %v7973, %v7944
    %v8322 = vpack.c.b16 %v7974, %v7945
    %v8323 = vpack.c.b16 %v7975, %v7946
    %v8324 = vpack.c.b16 %v7976, %v7947
    %v8325 = vpack.c.b16 %v7977, %v7948
    %v8326 = vpack.c.b16 %v7978, %v7949
    %v8327 = vpack.c.b16 %v7979, %v7950
    %v8328 = vpack.c.b16 %v7980, %v7951
    %v8329 = vpack.c.b16 %v8010, %v7981
    %v8330 = vpack.c.b16 %v8011, %v7982
    %v8331 = vpack.c.b16 %v8012, %v7983
    %v8332 = vpack.c.b16 %v8013, %v7984
    %v8333 = vpack.c.b16 %v8014, %v7985
    %v8334 = vpack.c.b16 %v8015, %v7986
    %v8335 = vpack.c.b16 %v8016, %v7987
    %v8336 = vpack.c.b16 %v8017, %v7988
    %v8337 = vpack.c.b16 %v8018, %v7989
    %v8338 = vpack.c.b16 %v8019, %v7990
    %v8339 = vpack.c.b16 %v8020, %v7991
    %v8340 = vpack.c.b16 %v8021, %v7992
    %v8341 = vpack.c.b16 %v8022, %v7993
    %v8342 = vpack.c.b16 %v8023, %v7994
    %v8343 = vpack.c.b16 %v8024, %v7995
    %v8344 = vpack.c.b16 %v8025, %v7996
    %v8345 = vpack.c.b16 %v8026, %v7997
    %v8346 = vpack.c.b16 %v8027, %v7998
    %v8347 = vpack.c.b16 %v8028, %v7999
    %v8348 = vpack.c.b16 %v8029, %v8000
    %v8349 = vpack.c.b16 %v8030, %v8001
    %v8350 = vpack.c.b16 %v8031, %v8002
    %v8351 = vpack.c.b16 %v8032, %v8003
    %v8352 = vpack.c.b16 %v8033, %v8004
    %v8353 = vpack.c.b16 %v8034, %v8005
    %v8354 = vpack.c.b16 %v8035, %v8006
    %v8355 = vpack.c.b16 %v8036, %v8007
    %v8356 = vpack.c.b16 %v8037, %v8008
    %v8357 = vpack.c.b16 %v8038, %v8009
    %v8358 = vpack.c.b16 %v8068, %v8039
    %v8359 = vpack.c.b16 %v8069, %v8040
    %v8360 = vpack.c.b16 %v8070, %v8041
    %v8361 = vpack.c.b16 %v8071, %v8042
    %v8362 = vpack.c.b16 %v8072, %v8043
    %v8363 = vpack.c.b16 %v8073, %v8044
    %v8364 = vpack.c.b16 %v8074, %v8045
    %v8365 = vpack.c.b16 %v8075, %v8046
    %v8366 = vpack.c.b16 %v8076, %v8047
    %v8367 = vpack.c.b16 %v8077, %v8048
    %v8368 = vpack.c.b16 %v8078, %v8049
    %v8369 = vpack.c.b16 %v8079, %v8050
    %v8370 = vpack.c.b16 %v8080, %v8051
    %v8371 = vpack.c.b16 %v8081, %v8052
    %v8372 = vpack.c.b16 %v8082, %v8053
    %v8373 = vpack.c.b16 %v8083, %v8054
    %v8374 = vpack.c.b16 %v8084, %v8055
    %v8375 = vpack.c.b16 %v8085, %v8056
    %v8376 = vpack.c.b16 %v8086, %v8057
    %v8377 = vpack.c.b16 %v8087, %v8058
    %v8378 = vpack.c.b16 %v8088, %v8059
    %v8379 = vpack.c.b16 %v8089, %v8060
    %v8380 = vpack.c.b16 %v8090, %v8061
    %v8381 = vpack.c.b16 %v8091, %v8062
    %v8382 = vpack.c.b16 %v8092, %v8063
    %v8383 = vpack.c.b16 %v8093, %v8064
    %v8384 = vpack.c.b16 %v8094, %v8065
    %v8385 = vpack.c.b16 %v8095, %v8066
    %v8386 = vpack.c.b16 %v8096, %v8067
    %v8387 = vpack.c.b16 %v8126, %v8097
    %v8388 = vpack.c.b16 %v8127, %v8098
    %v8389 = vpack.c.b16 %v8128, %v8099
    %v8390 = vpack.c.b16 %v8129, %v8100
    %v8391 = vpack.c.b16 %v8130, %v8101
    %v8392 = vpack.c.b16 %v8131, %v8102
    %v8393 = vpack.c.b16 %v8132, %v8103
    %v8394 = vpack.c.b16 %v8133, %v8104
    %v8395 = vpack.c.b16 %v8134, %v8105
    %v8396 = vpack.c.b16 %v8135, %v8106
    %v8397 = vpack.c.b16 %v8136, %v8107
    %v8398 = vpack.c.b16 %v8137, %v8108
    %v8399 = vpack.c.b16 %v8138, %v8109
    %v8400 = vpack.c.b16 %v8139, %v8110
    %v8401 = vpack.c.b16 %v8140, %v8111
    %v8402 = vpack.c.b16 %v8141, %v8112
    %v8403 = vpack.c.b16 %v8142, %v8113
    %v8404 = vpack.c.b16 %v8143, %v8114
    %v8405 = vpack.c.b16 %v8144, %v8115
    %v8406 = vpack.c.b16 %v8145, %v8116
    %v8407 = vpack.c.b16 %v8146, %v8117
    %v8408 = vpack.c.b16 %v8147, %v8118
    %v8409 = vpack.c.b16 %v8148, %v8119
    %v8410 = vpack.c.b16 %v8149, %v8120
    %v8411 = vpack.c.b16 %v8150, %v8121
    %v8412 = vpack.c.b16 %v8151, %v8122
    %v8413 = vpack.c.b16 %v8152, %v8123
    %v8414 = vpack.c.b16 %v8153, %v8124
    %v8415 = vpack.c.b16 %v8154, %v8125
    %v8416 = vpack.c.b16 %v8184, %v8155
    %v8417 = vpack.c.b16 %v8185, %v8156
    %v8418 = vpack.c.b16 %v8186, %v8157
    %v8419 = vpack.c.b16 %v8187, %v8158
    %v8420 = vpack.c.b16 %v8188, %v8159
    %v8421 = vpack.c.b16 %v8189, %v8160
    %v8422 = vpack.c.b16 %v8190, %v8161
    %v8423 = vpack.c.b16 %v8191, %v8162
    %v8424 = vpack.c.b16 %v8192, %v8163
    %v8425 = vpack.c.b16 %v8193, %v8164
    %v8426 = vpack.c.b16 %v8194, %v8165
    %v8427 = vpack.c.b16 %v8195, %v8166
    %v8428 = vpack.c.b16 %v8196, %v8167
    %v8429 = vpack.c.b16 %v8197, %v8168
    %v8430 = vpack.c.b16 %v8198, %v8169
    %v8431 = vpack.c.b16 %v8199, %v8170
    %v8432 = vpack.c.b16 %v8200, %v8171
    %v8433 = vpack.c.b16 %v8201, %v8172
    %v8434 = vpack.c.b16 %v8202, %v8173
    %v8435 = vpack.c.b16 %v8203, %v8174
    %v8436 = vpack.c.b16 %v8204, %v8175
    %v8437 = vpack.c.b16 %v8205, %v8176
    %v8438 = vpack.c.b16 %v8206, %v8177
    %v8439 = vpack.c.b16 %v8207, %v8178
    %v8440 = vpack.c.b16 %v8208, %v8179
    %v8441 = vpack.c.b16 %v8209, %v8180
    %v8442 = vpack.c.b16 %v8210, %v8181
    %v8443 = vpack.c.b16 %v8211, %v8182
    %v8444 = vpack.c.b16 %v8212, %v8183
    %8677 = vmatpush.bf16.msra.mxu0 %v8416
    %8678 = vmatpush.bf16.msra.mxu0 %v8387
    %8679 = vmatpush.bf16.msra.mxu0 %v8358
    %8680 = vmatpush.bf16.msra.mxu0 %v8329
    %8681 = vmatpush.bf16.msra.mxu0 %v8300
    %8682 = vmatpush.bf16.msra.mxu0 %v8271
    %8683 = vmatpush.bf16.msra.mxu0 %v8242
    %8684 = vmatpush.bf16.msra.mxu0 %v8213
    %8685 = vmatmul.bf16.gmra.mxu0 %v7033
    %v8686 = vpop.f32.mrf.mxu0
    %v8687 = vadd.f32 %v7277, %v8686
    %v8688 = vpop.f32.mrf.mxu0
    %v8689 = vadd.f32 %v7306, %v8688
    %8690 = vmatmul.bf16.gmra.mxu0 %v7034
    %v8691 = vpop.f32.mrf.mxu0
    %v8692 = vadd.f32 %v7335, %v8691
    %v8693 = vpop.f32.mrf.mxu0
    %v8694 = vadd.f32 %v7364, %v8693
    %8695 = vmatmul.bf16.gmra.mxu0 %v7035
    %v8696 = vpop.f32.mrf.mxu0
    %v8697 = vadd.f32 %v7393, %v8696
    %v8698 = vpop.f32.mrf.mxu0
    %v8699 = vadd.f32 %v7422, %v8698
    %8700 = vmatmul.bf16.gmra.mxu0 %v7036
    %v8701 = vpop.f32.mrf.mxu0
    %v8702 = vadd.f32 %v7451, %v8701
    %v8703 = vpop.f32.mrf.mxu0
    %v8704 = vadd.f32 %v7480, %v8703
    %8705 = vdwg.mxu0
    %8706 = vmatpush.bf16.msra.mxu0 %v8417
    %8707 = vmatpush.bf16.msra.mxu0 %v8388
    %8708 = vmatpush.bf16.msra.mxu0 %v8359
    %8709 = vmatpush.bf16.msra.mxu0 %v8330
    %8710 = vmatpush.bf16.msra.mxu0 %v8301
    %8711 = vmatpush.bf16.msra.mxu0 %v8272
    %8712 = vmatpush.bf16.msra.mxu0 %v8243
    %8713 = vmatpush.bf16.msra.mxu0 %v8214
    %8714 = vmatmul.bf16.gmra.mxu0 %v7033
    %v8715 = vpop.f32.mrf.mxu0
    %v8716 = vadd.f32 %v7278, %v8715
    %v8717 = vpop.f32.mrf.mxu0
    %v8718 = vadd.f32 %v7307, %v8717
    %8719 = vmatmul.bf16.gmra.mxu0 %v7034
    %v8720 = vpop.f32.mrf.mxu0
    %v8721 = vadd.f32 %v7336, %v8720
    %v8722 = vpop.f32.mrf.mxu0
    %v8723 = vadd.f32 %v7365, %v8722
    %8724 = vmatmul.bf16.gmra.mxu0 %v7035
    %v8725 = vpop.f32.mrf.mxu0
    %v8726 = vadd.f32 %v7394, %v8725
    %v8727 = vpop.f32.mrf.mxu0
    %v8728 = vadd.f32 %v7423, %v8727
    %8729 = vmatmul.bf16.gmra.mxu0 %v7036
    %v8730 = vpop.f32.mrf.mxu0
    %v8731 = vadd.f32 %v7452, %v8730
    %v8732 = vpop.f32.mrf.mxu0
    %v8733 = vadd.f32 %v7481, %v8732
    %8734 = vdwg.mxu0
    %8735 = vmatpush.bf16.msra.mxu0 %v8418
    %8736 = vmatpush.bf16.msra.mxu0 %v8389
    %8737 = vmatpush.bf16.msra.mxu0 %v8360
    %8738 = vmatpush.bf16.msra.mxu0 %v8331
    %8739 = vmatpush.bf16.msra.mxu0 %v8302
    %8740 = vmatpush.bf16.msra.mxu0 %v8273
    %8741 = vmatpush.bf16.msra.mxu0 %v8244
    %8742 = vmatpush.bf16.msra.mxu0 %v8215
    %8743 = vmatmul.bf16.gmra.mxu0 %v7033
    %v8744 = vpop.f32.mrf.mxu0
    %v8745 = vadd.f32 %v7279, %v8744
    %v8746 = vpop.f32.mrf.mxu0
    %v8747 = vadd.f32 %v7308, %v8746
    %8748 = vmatmul.bf16.gmra.mxu0 %v7034
    %v8749 = vpop.f32.mrf.mxu0
    %v8750 = vadd.f32 %v7337, %v8749
    %v8751 = vpop.f32.mrf.mxu0
    %v8752 = vadd.f32 %v7366, %v8751
    %8753 = vmatmul.bf16.gmra.mxu0 %v7035
    %v8754 = vpop.f32.mrf.mxu0
    %v8755 = vadd.f32 %v7395, %v8754
    %v8756 = vpop.f32.mrf.mxu0
    %v8757 = vadd.f32 %v7424, %v8756
    %8758 = vmatmul.bf16.gmra.mxu0 %v7036
    %v8759 = vpop.f32.mrf.mxu0
    %v8760 = vadd.f32 %v7453, %v8759
    %v8761 = vpop.f32.mrf.mxu0
    %v8762 = vadd.f32 %v7482, %v8761
    %8763 = vdwg.mxu0
    %8764 = vmatpush.bf16.msra.mxu0 %v8419
    %8765 = vmatpush.bf16.msra.mxu0 %v8390
    %8766 = vmatpush.bf16.msra.mxu0 %v8361
    %8767 = vmatpush.bf16.msra.mxu0 %v8332
    %8768 = vmatpush.bf16.msra.mxu0 %v8303
    %8769 = vmatpush.bf16.msra.mxu0 %v8274
    %8770 = vmatpush.bf16.msra.mxu0 %v8245
    %8771 = vmatpush.bf16.msra.mxu0 %v8216
    %8772 = vmatmul.bf16.gmra.mxu0 %v7033
    %v8773 = vpop.f32.mrf.mxu0
    %v8774 = vadd.f32 %v7280, %v8773
    %v8775 = vpop.f32.mrf.mxu0
    %v8776 = vadd.f32 %v7309, %v8775
    %8777 = vmatmul.bf16.gmra.mxu0 %v7034
    %v8778 = vpop.f32.mrf.mxu0
    %v8779 = vadd.f32 %v7338, %v8778
    %v8780 = vpop.f32.mrf.mxu0
    %v8781 = vadd.f32 %v7367, %v8780
    %8782 = vmatmul.bf16.gmra.mxu0 %v7035
    %v8783 = vpop.f32.mrf.mxu0
    %v8784 = vadd.f32 %v7396, %v8783
    %v8785 = vpop.f32.mrf.mxu0
    %v8786 = vadd.f32 %v7425, %v8785
    %8787 = vmatmul.bf16.gmra.mxu0 %v7036
    %v8788 = vpop.f32.mrf.mxu0
    %v8789 = vadd.f32 %v7454, %v8788
    %v8790 = vpop.f32.mrf.mxu0
    %v8791 = vadd.f32 %v7483, %v8790
    %8792 = vdwg.mxu0
    %8793 = vmatpush.bf16.msra.mxu0 %v8420
    %8794 = vmatpush.bf16.msra.mxu0 %v8391
    %8795 = vmatpush.bf16.msra.mxu0 %v8362
    %8796 = vmatpush.bf16.msra.mxu0 %v8333
    %8797 = vmatpush.bf16.msra.mxu0 %v8304
    %8798 = vmatpush.bf16.msra.mxu0 %v8275
    %8799 = vmatpush.bf16.msra.mxu0 %v8246
    %8800 = vmatpush.bf16.msra.mxu0 %v8217
    %8801 = vmatmul.bf16.gmra.mxu0 %v7033
    %v8802 = vpop.f32.mrf.mxu0
    %v8803 = vadd.f32 %v7281, %v8802
    %v8804 = vpop.f32.mrf.mxu0
    %v8805 = vadd.f32 %v7310, %v8804
    %8806 = vmatmul.bf16.gmra.mxu0 %v7034
    %v8807 = vpop.f32.mrf.mxu0
    %v8808 = vadd.f32 %v7339, %v8807
    %v8809 = vpop.f32.mrf.mxu0
    %v8810 = vadd.f32 %v7368, %v8809
    %8811 = vmatmul.bf16.gmra.mxu0 %v7035
    %v8812 = vpop.f32.mrf.mxu0
    %v8813 = vadd.f32 %v7397, %v8812
    %v8814 = vpop.f32.mrf.mxu0
    %v8815 = vadd.f32 %v7426, %v8814
    %8816 = vmatmul.bf16.gmra.mxu0 %v7036
    %v8817 = vpop.f32.mrf.mxu0
    %v8818 = vadd.f32 %v7455, %v8817
    %v8819 = vpop.f32.mrf.mxu0
    %v8820 = vadd.f32 %v7484, %v8819
    %8821 = vdwg.mxu0
    %8822 = vmatpush.bf16.msra.mxu0 %v8421
    %8823 = vmatpush.bf16.msra.mxu0 %v8392
    %8824 = vmatpush.bf16.msra.mxu0 %v8363
    %8825 = vmatpush.bf16.msra.mxu0 %v8334
    %8826 = vmatpush.bf16.msra.mxu0 %v8305
    %8827 = vmatpush.bf16.msra.mxu0 %v8276
    %8828 = vmatpush.bf16.msra.mxu0 %v8247
    %8829 = vmatpush.bf16.msra.mxu0 %v8218
    %8830 = vmatmul.bf16.gmra.mxu0 %v7033
    %v8831 = vpop.f32.mrf.mxu0
    %v8832 = vadd.f32 %v7282, %v8831
    %v8833 = vpop.f32.mrf.mxu0
    %v8834 = vadd.f32 %v7311, %v8833
    %8835 = vmatmul.bf16.gmra.mxu0 %v7034
    %v8836 = vpop.f32.mrf.mxu0
    %v8837 = vadd.f32 %v7340, %v8836
    %v8838 = vpop.f32.mrf.mxu0
    %v8839 = vadd.f32 %v7369, %v8838
    %8840 = vmatmul.bf16.gmra.mxu0 %v7035
    %v8841 = vpop.f32.mrf.mxu0
    %v8842 = vadd.f32 %v7398, %v8841
    %v8843 = vpop.f32.mrf.mxu0
    %v8844 = vadd.f32 %v7427, %v8843
    %8845 = vmatmul.bf16.gmra.mxu0 %v7036
    %v8846 = vpop.f32.mrf.mxu0
    %v8847 = vadd.f32 %v7456, %v8846
    %v8848 = vpop.f32.mrf.mxu0
    %v8849 = vadd.f32 %v7485, %v8848
    %8850 = vdwg.mxu0
    %8851 = vmatpush.bf16.msra.mxu0 %v8422
    %8852 = vmatpush.bf16.msra.mxu0 %v8393
    %8853 = vmatpush.bf16.msra.mxu0 %v8364
    %8854 = vmatpush.bf16.msra.mxu0 %v8335
    %8855 = vmatpush.bf16.msra.mxu0 %v8306
    %8856 = vmatpush.bf16.msra.mxu0 %v8277
    %8857 = vmatpush.bf16.msra.mxu0 %v8248
    %8858 = vmatpush.bf16.msra.mxu0 %v8219
    %8859 = vmatmul.bf16.gmra.mxu0 %v7033
    %v8860 = vpop.f32.mrf.mxu0
    %v8861 = vadd.f32 %v7283, %v8860
    %v8862 = vpop.f32.mrf.mxu0
    %v8863 = vadd.f32 %v7312, %v8862
    %8864 = vmatmul.bf16.gmra.mxu0 %v7034
    %v8865 = vpop.f32.mrf.mxu0
    %v8866 = vadd.f32 %v7341, %v8865
    %v8867 = vpop.f32.mrf.mxu0
    %v8868 = vadd.f32 %v7370, %v8867
    %8869 = vmatmul.bf16.gmra.mxu0 %v7035
    %v8870 = vpop.f32.mrf.mxu0
    %v8871 = vadd.f32 %v7399, %v8870
    %v8872 = vpop.f32.mrf.mxu0
    %v8873 = vadd.f32 %v7428, %v8872
    %8874 = vmatmul.bf16.gmra.mxu0 %v7036
    %v8875 = vpop.f32.mrf.mxu0
    %v8876 = vadd.f32 %v7457, %v8875
    %v8877 = vpop.f32.mrf.mxu0
    %v8878 = vadd.f32 %v7486, %v8877
    %8879 = vdwg.mxu0
    %8880 = vmatpush.bf16.msra.mxu0 %v8423
    %8881 = vmatpush.bf16.msra.mxu0 %v8394
    %8882 = vmatpush.bf16.msra.mxu0 %v8365
    %8883 = vmatpush.bf16.msra.mxu0 %v8336
    %8884 = vmatpush.bf16.msra.mxu0 %v8307
    %8885 = vmatpush.bf16.msra.mxu0 %v8278
    %8886 = vmatpush.bf16.msra.mxu0 %v8249
    %8887 = vmatpush.bf16.msra.mxu0 %v8220
    %8888 = vmatmul.bf16.gmra.mxu0 %v7033
    %v8889 = vpop.f32.mrf.mxu0
    %v8890 = vadd.f32 %v7284, %v8889
    %v8891 = vpop.f32.mrf.mxu0
    %v8892 = vadd.f32 %v7313, %v8891
    %8893 = vmatmul.bf16.gmra.mxu0 %v7034
    %v8894 = vpop.f32.mrf.mxu0
    %v8895 = vadd.f32 %v7342, %v8894
    %v8896 = vpop.f32.mrf.mxu0
    %v8897 = vadd.f32 %v7371, %v8896
    %8898 = vmatmul.bf16.gmra.mxu0 %v7035
    %v8899 = vpop.f32.mrf.mxu0
    %v8900 = vadd.f32 %v7400, %v8899
    %v8901 = vpop.f32.mrf.mxu0
    %v8902 = vadd.f32 %v7429, %v8901
    %8903 = vmatmul.bf16.gmra.mxu0 %v7036
    %v8904 = vpop.f32.mrf.mxu0
    %v8905 = vadd.f32 %v7458, %v8904
    %v8906 = vpop.f32.mrf.mxu0
    %v8907 = vadd.f32 %v7487, %v8906
    %8908 = vdwg.mxu0
    %8909 = vmatpush.bf16.msra.mxu0 %v8424
    %8910 = vmatpush.bf16.msra.mxu0 %v8395
    %8911 = vmatpush.bf16.msra.mxu0 %v8366
    %8912 = vmatpush.bf16.msra.mxu0 %v8337
    %8913 = vmatpush.bf16.msra.mxu0 %v8308
    %8914 = vmatpush.bf16.msra.mxu0 %v8279
    %8915 = vmatpush.bf16.msra.mxu0 %v8250
    %8916 = vmatpush.bf16.msra.mxu0 %v8221
    %8917 = vmatmul.bf16.gmra.mxu0 %v7033
    %v8918 = vpop.f32.mrf.mxu0
    %v8919 = vadd.f32 %v7285, %v8918
    %v8920 = vpop.f32.mrf.mxu0
    %v8921 = vadd.f32 %v7314, %v8920
    %8922 = vmatmul.bf16.gmra.mxu0 %v7034
    %v8923 = vpop.f32.mrf.mxu0
    %v8924 = vadd.f32 %v7343, %v8923
    %v8925 = vpop.f32.mrf.mxu0
    %v8926 = vadd.f32 %v7372, %v8925
    %8927 = vmatmul.bf16.gmra.mxu0 %v7035
    %v8928 = vpop.f32.mrf.mxu0
    %v8929 = vadd.f32 %v7401, %v8928
    %v8930 = vpop.f32.mrf.mxu0
    %v8931 = vadd.f32 %v7430, %v8930
    %8932 = vmatmul.bf16.gmra.mxu0 %v7036
    %v8933 = vpop.f32.mrf.mxu0
    %v8934 = vadd.f32 %v7459, %v8933
    %v8935 = vpop.f32.mrf.mxu0
    %v8936 = vadd.f32 %v7488, %v8935
    %8937 = vdwg.mxu0
    %8938 = vmatpush.bf16.msra.mxu0 %v8425
    %8939 = vmatpush.bf16.msra.mxu0 %v8396
    %8940 = vmatpush.bf16.msra.mxu0 %v8367
    %8941 = vmatpush.bf16.msra.mxu0 %v8338
    %8942 = vmatpush.bf16.msra.mxu0 %v8309
    %8943 = vmatpush.bf16.msra.mxu0 %v8280
    %8944 = vmatpush.bf16.msra.mxu0 %v8251
    %8945 = vmatpush.bf16.msra.mxu0 %v8222
    %8946 = vmatmul.bf16.gmra.mxu0 %v7033
    %v8947 = vpop.f32.mrf.mxu0
    %v8948 = vadd.f32 %v7286, %v8947
    %v8949 = vpop.f32.mrf.mxu0
    %v8950 = vadd.f32 %v7315, %v8949
    %8951 = vmatmul.bf16.gmra.mxu0 %v7034
    %v8952 = vpop.f32.mrf.mxu0
    %v8953 = vadd.f32 %v7344, %v8952
    %v8954 = vpop.f32.mrf.mxu0
    %v8955 = vadd.f32 %v7373, %v8954
    %8956 = vmatmul.bf16.gmra.mxu0 %v7035
    %v8957 = vpop.f32.mrf.mxu0
    %v8958 = vadd.f32 %v7402, %v8957
    %v8959 = vpop.f32.mrf.mxu0
    %v8960 = vadd.f32 %v7431, %v8959
    %8961 = vmatmul.bf16.gmra.mxu0 %v7036
    %v8962 = vpop.f32.mrf.mxu0
    %v8963 = vadd.f32 %v7460, %v8962
    %v8964 = vpop.f32.mrf.mxu0
    %v8965 = vadd.f32 %v7489, %v8964
    %8966 = vdwg.mxu0
    %8967 = vmatpush.bf16.msra.mxu0 %v8426
    %8968 = vmatpush.bf16.msra.mxu0 %v8397
    %8969 = vmatpush.bf16.msra.mxu0 %v8368
    %8970 = vmatpush.bf16.msra.mxu0 %v8339
    %8971 = vmatpush.bf16.msra.mxu0 %v8310
    %8972 = vmatpush.bf16.msra.mxu0 %v8281
    %8973 = vmatpush.bf16.msra.mxu0 %v8252
    %8974 = vmatpush.bf16.msra.mxu0 %v8223
    %8975 = vmatmul.bf16.gmra.mxu0 %v7033
    %v8976 = vpop.f32.mrf.mxu0
    %v8977 = vadd.f32 %v7287, %v8976
    %v8978 = vpop.f32.mrf.mxu0
    %v8979 = vadd.f32 %v7316, %v8978
    %8980 = vmatmul.bf16.gmra.mxu0 %v7034
    %v8981 = vpop.f32.mrf.mxu0
    %v8982 = vadd.f32 %v7345, %v8981
    %v8983 = vpop.f32.mrf.mxu0
    %v8984 = vadd.f32 %v7374, %v8983
    %8985 = vmatmul.bf16.gmra.mxu0 %v7035
    %v8986 = vpop.f32.mrf.mxu0
    %v8987 = vadd.f32 %v7403, %v8986
    %v8988 = vpop.f32.mrf.mxu0
    %v8989 = vadd.f32 %v7432, %v8988
    %8990 = vmatmul.bf16.gmra.mxu0 %v7036
    %v8991 = vpop.f32.mrf.mxu0
    %v8992 = vadd.f32 %v7461, %v8991
    %v8993 = vpop.f32.mrf.mxu0
    %v8994 = vadd.f32 %v7490, %v8993
    %8995 = vdwg.mxu0
    %8996 = vmatpush.bf16.msra.mxu0 %v8427
    %8997 = vmatpush.bf16.msra.mxu0 %v8398
    %8998 = vmatpush.bf16.msra.mxu0 %v8369
    %8999 = vmatpush.bf16.msra.mxu0 %v8340
    %9000 = vmatpush.bf16.msra.mxu0 %v8311
    %9001 = vmatpush.bf16.msra.mxu0 %v8282
    %9002 = vmatpush.bf16.msra.mxu0 %v8253
    %9003 = vmatpush.bf16.msra.mxu0 %v8224
    %9004 = vmatmul.bf16.gmra.mxu0 %v7033
    %v9005 = vpop.f32.mrf.mxu0
    %v9006 = vadd.f32 %v7288, %v9005
    %v9007 = vpop.f32.mrf.mxu0
    %v9008 = vadd.f32 %v7317, %v9007
    %9009 = vmatmul.bf16.gmra.mxu0 %v7034
    %v9010 = vpop.f32.mrf.mxu0
    %v9011 = vadd.f32 %v7346, %v9010
    %v9012 = vpop.f32.mrf.mxu0
    %v9013 = vadd.f32 %v7375, %v9012
    %9014 = vmatmul.bf16.gmra.mxu0 %v7035
    %v9015 = vpop.f32.mrf.mxu0
    %v9016 = vadd.f32 %v7404, %v9015
    %v9017 = vpop.f32.mrf.mxu0
    %v9018 = vadd.f32 %v7433, %v9017
    %9019 = vmatmul.bf16.gmra.mxu0 %v7036
    %v9020 = vpop.f32.mrf.mxu0
    %v9021 = vadd.f32 %v7462, %v9020
    %v9022 = vpop.f32.mrf.mxu0
    %v9023 = vadd.f32 %v7491, %v9022
    %9024 = vdwg.mxu0
    %9025 = vmatpush.bf16.msra.mxu0 %v8428
    %9026 = vmatpush.bf16.msra.mxu0 %v8399
    %9027 = vmatpush.bf16.msra.mxu0 %v8370
    %9028 = vmatpush.bf16.msra.mxu0 %v8341
    %9029 = vmatpush.bf16.msra.mxu0 %v8312
    %9030 = vmatpush.bf16.msra.mxu0 %v8283
    %9031 = vmatpush.bf16.msra.mxu0 %v8254
    %9032 = vmatpush.bf16.msra.mxu0 %v8225
    %9033 = vmatmul.bf16.gmra.mxu0 %v7033
    %v9034 = vpop.f32.mrf.mxu0
    %v9035 = vadd.f32 %v7289, %v9034
    %v9036 = vpop.f32.mrf.mxu0
    %v9037 = vadd.f32 %v7318, %v9036
    %9038 = vmatmul.bf16.gmra.mxu0 %v7034
    %v9039 = vpop.f32.mrf.mxu0
    %v9040 = vadd.f32 %v7347, %v9039
    %v9041 = vpop.f32.mrf.mxu0
    %v9042 = vadd.f32 %v7376, %v9041
    %9043 = vmatmul.bf16.gmra.mxu0 %v7035
    %v9044 = vpop.f32.mrf.mxu0
    %v9045 = vadd.f32 %v7405, %v9044
    %v9046 = vpop.f32.mrf.mxu0
    %v9047 = vadd.f32 %v7434, %v9046
    %9048 = vmatmul.bf16.gmra.mxu0 %v7036
    %v9049 = vpop.f32.mrf.mxu0
    %v9050 = vadd.f32 %v7463, %v9049
    %v9051 = vpop.f32.mrf.mxu0
    %v9052 = vadd.f32 %v7492, %v9051
    %9053 = vdwg.mxu0
    %9054 = vmatpush.bf16.msra.mxu0 %v8429
    %9055 = vmatpush.bf16.msra.mxu0 %v8400
    %9056 = vmatpush.bf16.msra.mxu0 %v8371
    %9057 = vmatpush.bf16.msra.mxu0 %v8342
    %9058 = vmatpush.bf16.msra.mxu0 %v8313
    %9059 = vmatpush.bf16.msra.mxu0 %v8284
    %9060 = vmatpush.bf16.msra.mxu0 %v8255
    %9061 = vmatpush.bf16.msra.mxu0 %v8226
    %9062 = vmatmul.bf16.gmra.mxu0 %v7033
    %v9063 = vpop.f32.mrf.mxu0
    %v9064 = vadd.f32 %v7290, %v9063
    %v9065 = vpop.f32.mrf.mxu0
    %v9066 = vadd.f32 %v7319, %v9065
    %9067 = vmatmul.bf16.gmra.mxu0 %v7034
    %v9068 = vpop.f32.mrf.mxu0
    %v9069 = vadd.f32 %v7348, %v9068
    %v9070 = vpop.f32.mrf.mxu0
    %v9071 = vadd.f32 %v7377, %v9070
    %9072 = vmatmul.bf16.gmra.mxu0 %v7035
    %v9073 = vpop.f32.mrf.mxu0
    %v9074 = vadd.f32 %v7406, %v9073
    %v9075 = vpop.f32.mrf.mxu0
    %v9076 = vadd.f32 %v7435, %v9075
    %9077 = vmatmul.bf16.gmra.mxu0 %v7036
    %v9078 = vpop.f32.mrf.mxu0
    %v9079 = vadd.f32 %v7464, %v9078
    %v9080 = vpop.f32.mrf.mxu0
    %v9081 = vadd.f32 %v7493, %v9080
    %9082 = vdwg.mxu0
    %9083 = vmatpush.bf16.msra.mxu0 %v8430
    %9084 = vmatpush.bf16.msra.mxu0 %v8401
    %9085 = vmatpush.bf16.msra.mxu0 %v8372
    %9086 = vmatpush.bf16.msra.mxu0 %v8343
    %9087 = vmatpush.bf16.msra.mxu0 %v8314
    %9088 = vmatpush.bf16.msra.mxu0 %v8285
    %9089 = vmatpush.bf16.msra.mxu0 %v8256
    %9090 = vmatpush.bf16.msra.mxu0 %v8227
    %9091 = vmatmul.bf16.gmra.mxu0 %v7033
    %v9092 = vpop.f32.mrf.mxu0
    %v9093 = vadd.f32 %v7291, %v9092
    %v9094 = vpop.f32.mrf.mxu0
    %v9095 = vadd.f32 %v7320, %v9094
    %9096 = vmatmul.bf16.gmra.mxu0 %v7034
    %v9097 = vpop.f32.mrf.mxu0
    %v9098 = vadd.f32 %v7349, %v9097
    %v9099 = vpop.f32.mrf.mxu0
    %v9100 = vadd.f32 %v7378, %v9099
    %9101 = vmatmul.bf16.gmra.mxu0 %v7035
    %v9102 = vpop.f32.mrf.mxu0
    %v9103 = vadd.f32 %v7407, %v9102
    %v9104 = vpop.f32.mrf.mxu0
    %v9105 = vadd.f32 %v7436, %v9104
    %9106 = vmatmul.bf16.gmra.mxu0 %v7036
    %v9107 = vpop.f32.mrf.mxu0
    %v9108 = vadd.f32 %v7465, %v9107
    %v9109 = vpop.f32.mrf.mxu0
    %v9110 = vadd.f32 %v7494, %v9109
    %9111 = vdwg.mxu0
    %9112 = vmatpush.bf16.msra.mxu0 %v8431
    %9113 = vmatpush.bf16.msra.mxu0 %v8402
    %9114 = vmatpush.bf16.msra.mxu0 %v8373
    %9115 = vmatpush.bf16.msra.mxu0 %v8344
    %9116 = vmatpush.bf16.msra.mxu0 %v8315
    %9117 = vmatpush.bf16.msra.mxu0 %v8286
    %9118 = vmatpush.bf16.msra.mxu0 %v8257
    %9119 = vmatpush.bf16.msra.mxu0 %v8228
    %9120 = vmatmul.bf16.gmra.mxu0 %v7033
    %v9121 = vpop.f32.mrf.mxu0
    %v9122 = vadd.f32 %v7292, %v9121
    %v9123 = vpop.f32.mrf.mxu0
    %v9124 = vadd.f32 %v7321, %v9123
    %9125 = vmatmul.bf16.gmra.mxu0 %v7034
    %v9126 = vpop.f32.mrf.mxu0
    %v9127 = vadd.f32 %v7350, %v9126
    %v9128 = vpop.f32.mrf.mxu0
    %v9129 = vadd.f32 %v7379, %v9128
    %9130 = vmatmul.bf16.gmra.mxu0 %v7035
    %v9131 = vpop.f32.mrf.mxu0
    %v9132 = vadd.f32 %v7408, %v9131
    %v9133 = vpop.f32.mrf.mxu0
    %v9134 = vadd.f32 %v7437, %v9133
    %9135 = vmatmul.bf16.gmra.mxu0 %v7036
    %v9136 = vpop.f32.mrf.mxu0
    %v9137 = vadd.f32 %v7466, %v9136
    %v9138 = vpop.f32.mrf.mxu0
    %v9139 = vadd.f32 %v7495, %v9138
    %9140 = vdwg.mxu0
    %9141 = vmatpush.bf16.msra.mxu0 %v8432
    %9142 = vmatpush.bf16.msra.mxu0 %v8403
    %9143 = vmatpush.bf16.msra.mxu0 %v8374
    %9144 = vmatpush.bf16.msra.mxu0 %v8345
    %9145 = vmatpush.bf16.msra.mxu0 %v8316
    %9146 = vmatpush.bf16.msra.mxu0 %v8287
    %9147 = vmatpush.bf16.msra.mxu0 %v8258
    %9148 = vmatpush.bf16.msra.mxu0 %v8229
    %9149 = vmatmul.bf16.gmra.mxu0 %v7033
    %v9150 = vpop.f32.mrf.mxu0
    %v9151 = vadd.f32 %v7293, %v9150
    %v9152 = vpop.f32.mrf.mxu0
    %v9153 = vadd.f32 %v7322, %v9152
    %9154 = vmatmul.bf16.gmra.mxu0 %v7034
    %v9155 = vpop.f32.mrf.mxu0
    %v9156 = vadd.f32 %v7351, %v9155
    %v9157 = vpop.f32.mrf.mxu0
    %v9158 = vadd.f32 %v7380, %v9157
    %9159 = vmatmul.bf16.gmra.mxu0 %v7035
    %v9160 = vpop.f32.mrf.mxu0
    %v9161 = vadd.f32 %v7409, %v9160
    %v9162 = vpop.f32.mrf.mxu0
    %v9163 = vadd.f32 %v7438, %v9162
    %9164 = vmatmul.bf16.gmra.mxu0 %v7036
    %v9165 = vpop.f32.mrf.mxu0
    %v9166 = vadd.f32 %v7467, %v9165
    %v9167 = vpop.f32.mrf.mxu0
    %v9168 = vadd.f32 %v7496, %v9167
    %9169 = vdwg.mxu0
    %9170 = vmatpush.bf16.msra.mxu0 %v8433
    %9171 = vmatpush.bf16.msra.mxu0 %v8404
    %9172 = vmatpush.bf16.msra.mxu0 %v8375
    %9173 = vmatpush.bf16.msra.mxu0 %v8346
    %9174 = vmatpush.bf16.msra.mxu0 %v8317
    %9175 = vmatpush.bf16.msra.mxu0 %v8288
    %9176 = vmatpush.bf16.msra.mxu0 %v8259
    %9177 = vmatpush.bf16.msra.mxu0 %v8230
    %9178 = vmatmul.bf16.gmra.mxu0 %v7033
    %v9179 = vpop.f32.mrf.mxu0
    %v9180 = vadd.f32 %v7294, %v9179
    %v9181 = vpop.f32.mrf.mxu0
    %v9182 = vadd.f32 %v7323, %v9181
    %9183 = vmatmul.bf16.gmra.mxu0 %v7034
    %v9184 = vpop.f32.mrf.mxu0
    %v9185 = vadd.f32 %v7352, %v9184
    %v9186 = vpop.f32.mrf.mxu0
    %v9187 = vadd.f32 %v7381, %v9186
    %9188 = vmatmul.bf16.gmra.mxu0 %v7035
    %v9189 = vpop.f32.mrf.mxu0
    %v9190 = vadd.f32 %v7410, %v9189
    %v9191 = vpop.f32.mrf.mxu0
    %v9192 = vadd.f32 %v7439, %v9191
    %9193 = vmatmul.bf16.gmra.mxu0 %v7036
    %v9194 = vpop.f32.mrf.mxu0
    %v9195 = vadd.f32 %v7468, %v9194
    %v9196 = vpop.f32.mrf.mxu0
    %v9197 = vadd.f32 %v7497, %v9196
    %9198 = vdwg.mxu0
    %9199 = vmatpush.bf16.msra.mxu0 %v8434
    %9200 = vmatpush.bf16.msra.mxu0 %v8405
    %9201 = vmatpush.bf16.msra.mxu0 %v8376
    %9202 = vmatpush.bf16.msra.mxu0 %v8347
    %9203 = vmatpush.bf16.msra.mxu0 %v8318
    %9204 = vmatpush.bf16.msra.mxu0 %v8289
    %9205 = vmatpush.bf16.msra.mxu0 %v8260
    %9206 = vmatpush.bf16.msra.mxu0 %v8231
    %9207 = vmatmul.bf16.gmra.mxu0 %v7033
    %v9208 = vpop.f32.mrf.mxu0
    %v9209 = vadd.f32 %v7295, %v9208
    %v9210 = vpop.f32.mrf.mxu0
    %v9211 = vadd.f32 %v7324, %v9210
    %9212 = vmatmul.bf16.gmra.mxu0 %v7034
    %v9213 = vpop.f32.mrf.mxu0
    %v9214 = vadd.f32 %v7353, %v9213
    %v9215 = vpop.f32.mrf.mxu0
    %v9216 = vadd.f32 %v7382, %v9215
    %9217 = vmatmul.bf16.gmra.mxu0 %v7035
    %v9218 = vpop.f32.mrf.mxu0
    %v9219 = vadd.f32 %v7411, %v9218
    %v9220 = vpop.f32.mrf.mxu0
    %v9221 = vadd.f32 %v7440, %v9220
    %9222 = vmatmul.bf16.gmra.mxu0 %v7036
    %v9223 = vpop.f32.mrf.mxu0
    %v9224 = vadd.f32 %v7469, %v9223
    %v9225 = vpop.f32.mrf.mxu0
    %v9226 = vadd.f32 %v7498, %v9225
    %9227 = vdwg.mxu0
    %9228 = vmatpush.bf16.msra.mxu0 %v8435
    %9229 = vmatpush.bf16.msra.mxu0 %v8406
    %9230 = vmatpush.bf16.msra.mxu0 %v8377
    %9231 = vmatpush.bf16.msra.mxu0 %v8348
    %9232 = vmatpush.bf16.msra.mxu0 %v8319
    %9233 = vmatpush.bf16.msra.mxu0 %v8290
    %9234 = vmatpush.bf16.msra.mxu0 %v8261
    %9235 = vmatpush.bf16.msra.mxu0 %v8232
    %9236 = vmatmul.bf16.gmra.mxu0 %v7033
    %v9237 = vpop.f32.mrf.mxu0
    %v9238 = vadd.f32 %v7296, %v9237
    %v9239 = vpop.f32.mrf.mxu0
    %v9240 = vadd.f32 %v7325, %v9239
    %9241 = vmatmul.bf16.gmra.mxu0 %v7034
    %v9242 = vpop.f32.mrf.mxu0
    %v9243 = vadd.f32 %v7354, %v9242
    %v9244 = vpop.f32.mrf.mxu0
    %v9245 = vadd.f32 %v7383, %v9244
    %9246 = vmatmul.bf16.gmra.mxu0 %v7035
    %v9247 = vpop.f32.mrf.mxu0
    %v9248 = vadd.f32 %v7412, %v9247
    %v9249 = vpop.f32.mrf.mxu0
    %v9250 = vadd.f32 %v7441, %v9249
    %9251 = vmatmul.bf16.gmra.mxu0 %v7036
    %v9252 = vpop.f32.mrf.mxu0
    %v9253 = vadd.f32 %v7470, %v9252
    %v9254 = vpop.f32.mrf.mxu0
    %v9255 = vadd.f32 %v7499, %v9254
    %9256 = vdwg.mxu0
    %9257 = vmatpush.bf16.msra.mxu0 %v8436
    %9258 = vmatpush.bf16.msra.mxu0 %v8407
    %9259 = vmatpush.bf16.msra.mxu0 %v8378
    %9260 = vmatpush.bf16.msra.mxu0 %v8349
    %9261 = vmatpush.bf16.msra.mxu0 %v8320
    %9262 = vmatpush.bf16.msra.mxu0 %v8291
    %9263 = vmatpush.bf16.msra.mxu0 %v8262
    %9264 = vmatpush.bf16.msra.mxu0 %v8233
    %9265 = vmatmul.bf16.gmra.mxu0 %v7033
    %v9266 = vpop.f32.mrf.mxu0
    %v9267 = vadd.f32 %v7297, %v9266
    %v9268 = vpop.f32.mrf.mxu0
    %v9269 = vadd.f32 %v7326, %v9268
    %9270 = vmatmul.bf16.gmra.mxu0 %v7034
    %v9271 = vpop.f32.mrf.mxu0
    %v9272 = vadd.f32 %v7355, %v9271
    %v9273 = vpop.f32.mrf.mxu0
    %v9274 = vadd.f32 %v7384, %v9273
    %9275 = vmatmul.bf16.gmra.mxu0 %v7035
    %v9276 = vpop.f32.mrf.mxu0
    %v9277 = vadd.f32 %v7413, %v9276
    %v9278 = vpop.f32.mrf.mxu0
    %v9279 = vadd.f32 %v7442, %v9278
    %9280 = vmatmul.bf16.gmra.mxu0 %v7036
    %v9281 = vpop.f32.mrf.mxu0
    %v9282 = vadd.f32 %v7471, %v9281
    %v9283 = vpop.f32.mrf.mxu0
    %v9284 = vadd.f32 %v7500, %v9283
    %9285 = vdwg.mxu0
    %9286 = vmatpush.bf16.msra.mxu0 %v8437
    %9287 = vmatpush.bf16.msra.mxu0 %v8408
    %9288 = vmatpush.bf16.msra.mxu0 %v8379
    %9289 = vmatpush.bf16.msra.mxu0 %v8350
    %9290 = vmatpush.bf16.msra.mxu0 %v8321
    %9291 = vmatpush.bf16.msra.mxu0 %v8292
    %9292 = vmatpush.bf16.msra.mxu0 %v8263
    %9293 = vmatpush.bf16.msra.mxu0 %v8234
    %9294 = vmatmul.bf16.gmra.mxu0 %v7033
    %v9295 = vpop.f32.mrf.mxu0
    %v9296 = vadd.f32 %v7298, %v9295
    %v9297 = vpop.f32.mrf.mxu0
    %v9298 = vadd.f32 %v7327, %v9297
    %9299 = vmatmul.bf16.gmra.mxu0 %v7034
    %v9300 = vpop.f32.mrf.mxu0
    %v9301 = vadd.f32 %v7356, %v9300
    %v9302 = vpop.f32.mrf.mxu0
    %v9303 = vadd.f32 %v7385, %v9302
    %9304 = vmatmul.bf16.gmra.mxu0 %v7035
    %v9305 = vpop.f32.mrf.mxu0
    %v9306 = vadd.f32 %v7414, %v9305
    %v9307 = vpop.f32.mrf.mxu0
    %v9308 = vadd.f32 %v7443, %v9307
    %9309 = vmatmul.bf16.gmra.mxu0 %v7036
    %v9310 = vpop.f32.mrf.mxu0
    %v9311 = vadd.f32 %v7472, %v9310
    %v9312 = vpop.f32.mrf.mxu0
    %v9313 = vadd.f32 %v7501, %v9312
    %9314 = vdwg.mxu0
    %9315 = vmatpush.bf16.msra.mxu0 %v8438
    %9316 = vmatpush.bf16.msra.mxu0 %v8409
    %9317 = vmatpush.bf16.msra.mxu0 %v8380
    %9318 = vmatpush.bf16.msra.mxu0 %v8351
    %9319 = vmatpush.bf16.msra.mxu0 %v8322
    %9320 = vmatpush.bf16.msra.mxu0 %v8293
    %9321 = vmatpush.bf16.msra.mxu0 %v8264
    %9322 = vmatpush.bf16.msra.mxu0 %v8235
    %9323 = vmatmul.bf16.gmra.mxu0 %v7033
    %v9324 = vpop.f32.mrf.mxu0
    %v9325 = vadd.f32 %v7299, %v9324
    %v9326 = vpop.f32.mrf.mxu0
    %v9327 = vadd.f32 %v7328, %v9326
    %9328 = vmatmul.bf16.gmra.mxu0 %v7034
    %v9329 = vpop.f32.mrf.mxu0
    %v9330 = vadd.f32 %v7357, %v9329
    %v9331 = vpop.f32.mrf.mxu0
    %v9332 = vadd.f32 %v7386, %v9331
    %9333 = vmatmul.bf16.gmra.mxu0 %v7035
    %v9334 = vpop.f32.mrf.mxu0
    %v9335 = vadd.f32 %v7415, %v9334
    %v9336 = vpop.f32.mrf.mxu0
    %v9337 = vadd.f32 %v7444, %v9336
    %9338 = vmatmul.bf16.gmra.mxu0 %v7036
    %v9339 = vpop.f32.mrf.mxu0
    %v9340 = vadd.f32 %v7473, %v9339
    %v9341 = vpop.f32.mrf.mxu0
    %v9342 = vadd.f32 %v7502, %v9341
    %9343 = vdwg.mxu0
    %9344 = vmatpush.bf16.msra.mxu0 %v8439
    %9345 = vmatpush.bf16.msra.mxu0 %v8410
    %9346 = vmatpush.bf16.msra.mxu0 %v8381
    %9347 = vmatpush.bf16.msra.mxu0 %v8352
    %9348 = vmatpush.bf16.msra.mxu0 %v8323
    %9349 = vmatpush.bf16.msra.mxu0 %v8294
    %9350 = vmatpush.bf16.msra.mxu0 %v8265
    %9351 = vmatpush.bf16.msra.mxu0 %v8236
    %9352 = vmatmul.bf16.gmra.mxu0 %v7033
    %v9353 = vpop.f32.mrf.mxu0
    %v9354 = vadd.f32 %v7300, %v9353
    %v9355 = vpop.f32.mrf.mxu0
    %v9356 = vadd.f32 %v7329, %v9355
    %9357 = vmatmul.bf16.gmra.mxu0 %v7034
    %v9358 = vpop.f32.mrf.mxu0
    %v9359 = vadd.f32 %v7358, %v9358
    %v9360 = vpop.f32.mrf.mxu0
    %v9361 = vadd.f32 %v7387, %v9360
    %9362 = vmatmul.bf16.gmra.mxu0 %v7035
    %v9363 = vpop.f32.mrf.mxu0
    %v9364 = vadd.f32 %v7416, %v9363
    %v9365 = vpop.f32.mrf.mxu0
    %v9366 = vadd.f32 %v7445, %v9365
    %9367 = vmatmul.bf16.gmra.mxu0 %v7036
    %v9368 = vpop.f32.mrf.mxu0
    %v9369 = vadd.f32 %v7474, %v9368
    %v9370 = vpop.f32.mrf.mxu0
    %v9371 = vadd.f32 %v7503, %v9370
    %9372 = vdwg.mxu0
    %9373 = vmatpush.bf16.msra.mxu0 %v8440
    %9374 = vmatpush.bf16.msra.mxu0 %v8411
    %9375 = vmatpush.bf16.msra.mxu0 %v8382
    %9376 = vmatpush.bf16.msra.mxu0 %v8353
    %9377 = vmatpush.bf16.msra.mxu0 %v8324
    %9378 = vmatpush.bf16.msra.mxu0 %v8295
    %9379 = vmatpush.bf16.msra.mxu0 %v8266
    %9380 = vmatpush.bf16.msra.mxu0 %v8237
    %9381 = vmatmul.bf16.gmra.mxu0 %v7033
    %v9382 = vpop.f32.mrf.mxu0
    %v9383 = vadd.f32 %v7301, %v9382
    %v9384 = vpop.f32.mrf.mxu0
    %v9385 = vadd.f32 %v7330, %v9384
    %9386 = vmatmul.bf16.gmra.mxu0 %v7034
    %v9387 = vpop.f32.mrf.mxu0
    %v9388 = vadd.f32 %v7359, %v9387
    %v9389 = vpop.f32.mrf.mxu0
    %v9390 = vadd.f32 %v7388, %v9389
    %9391 = vmatmul.bf16.gmra.mxu0 %v7035
    %v9392 = vpop.f32.mrf.mxu0
    %v9393 = vadd.f32 %v7417, %v9392
    %v9394 = vpop.f32.mrf.mxu0
    %v9395 = vadd.f32 %v7446, %v9394
    %9396 = vmatmul.bf16.gmra.mxu0 %v7036
    %v9397 = vpop.f32.mrf.mxu0
    %v9398 = vadd.f32 %v7475, %v9397
    %v9399 = vpop.f32.mrf.mxu0
    %v9400 = vadd.f32 %v7504, %v9399
    %9401 = vdwg.mxu0
    %9402 = vmatpush.bf16.msra.mxu0 %v8441
    %9403 = vmatpush.bf16.msra.mxu0 %v8412
    %9404 = vmatpush.bf16.msra.mxu0 %v8383
    %9405 = vmatpush.bf16.msra.mxu0 %v8354
    %9406 = vmatpush.bf16.msra.mxu0 %v8325
    %9407 = vmatpush.bf16.msra.mxu0 %v8296
    %9408 = vmatpush.bf16.msra.mxu0 %v8267
    %9409 = vmatpush.bf16.msra.mxu0 %v8238
    %9410 = vmatmul.bf16.gmra.mxu0 %v7033
    %v9411 = vpop.f32.mrf.mxu0
    %v9412 = vadd.f32 %v7302, %v9411
    %v9413 = vpop.f32.mrf.mxu0
    %v9414 = vadd.f32 %v7331, %v9413
    %9415 = vmatmul.bf16.gmra.mxu0 %v7034
    %v9416 = vpop.f32.mrf.mxu0
    %v9417 = vadd.f32 %v7360, %v9416
    %v9418 = vpop.f32.mrf.mxu0
    %v9419 = vadd.f32 %v7389, %v9418
    %9420 = vmatmul.bf16.gmra.mxu0 %v7035
    %v9421 = vpop.f32.mrf.mxu0
    %v9422 = vadd.f32 %v7418, %v9421
    %v9423 = vpop.f32.mrf.mxu0
    %v9424 = vadd.f32 %v7447, %v9423
    %9425 = vmatmul.bf16.gmra.mxu0 %v7036
    %v9426 = vpop.f32.mrf.mxu0
    %v9427 = vadd.f32 %v7476, %v9426
    %v9428 = vpop.f32.mrf.mxu0
    %v9429 = vadd.f32 %v7505, %v9428
    %9430 = vdwg.mxu0
    %9431 = vmatpush.bf16.msra.mxu0 %v8442
    %9432 = vmatpush.bf16.msra.mxu0 %v8413
    %9433 = vmatpush.bf16.msra.mxu0 %v8384
    %9434 = vmatpush.bf16.msra.mxu0 %v8355
    %9435 = vmatpush.bf16.msra.mxu0 %v8326
    %9436 = vmatpush.bf16.msra.mxu0 %v8297
    %9437 = vmatpush.bf16.msra.mxu0 %v8268
    %9438 = vmatpush.bf16.msra.mxu0 %v8239
    %9439 = vmatmul.bf16.gmra.mxu0 %v7033
    %v9440 = vpop.f32.mrf.mxu0
    %v9441 = vadd.f32 %v7303, %v9440
    %v9442 = vpop.f32.mrf.mxu0
    %v9443 = vadd.f32 %v7332, %v9442
    %9444 = vmatmul.bf16.gmra.mxu0 %v7034
    %v9445 = vpop.f32.mrf.mxu0
    %v9446 = vadd.f32 %v7361, %v9445
    %v9447 = vpop.f32.mrf.mxu0
    %v9448 = vadd.f32 %v7390, %v9447
    %9449 = vmatmul.bf16.gmra.mxu0 %v7035
    %v9450 = vpop.f32.mrf.mxu0
    %v9451 = vadd.f32 %v7419, %v9450
    %v9452 = vpop.f32.mrf.mxu0
    %v9453 = vadd.f32 %v7448, %v9452
    %9454 = vmatmul.bf16.gmra.mxu0 %v7036
    %v9455 = vpop.f32.mrf.mxu0
    %v9456 = vadd.f32 %v7477, %v9455
    %v9457 = vpop.f32.mrf.mxu0
    %v9458 = vadd.f32 %v7506, %v9457
    %9459 = vdwg.mxu0
    %9460 = vmatpush.bf16.msra.mxu0 %v8443
    %9461 = vmatpush.bf16.msra.mxu0 %v8414
    %9462 = vmatpush.bf16.msra.mxu0 %v8385
    %9463 = vmatpush.bf16.msra.mxu0 %v8356
    %9464 = vmatpush.bf16.msra.mxu0 %v8327
    %9465 = vmatpush.bf16.msra.mxu0 %v8298
    %9466 = vmatpush.bf16.msra.mxu0 %v8269
    %9467 = vmatpush.bf16.msra.mxu0 %v8240
    %9468 = vmatmul.bf16.gmra.mxu0 %v7033
    %v9469 = vpop.f32.mrf.mxu0
    %v9470 = vadd.f32 %v7304, %v9469
    %v9471 = vpop.f32.mrf.mxu0
    %v9472 = vadd.f32 %v7333, %v9471
    %9473 = vmatmul.bf16.gmra.mxu0 %v7034
    %v9474 = vpop.f32.mrf.mxu0
    %v9475 = vadd.f32 %v7362, %v9474
    %v9476 = vpop.f32.mrf.mxu0
    %v9477 = vadd.f32 %v7391, %v9476
    %9478 = vmatmul.bf16.gmra.mxu0 %v7035
    %v9479 = vpop.f32.mrf.mxu0
    %v9480 = vadd.f32 %v7420, %v9479
    %v9481 = vpop.f32.mrf.mxu0
    %v9482 = vadd.f32 %v7449, %v9481
    %9483 = vmatmul.bf16.gmra.mxu0 %v7036
    %v9484 = vpop.f32.mrf.mxu0
    %v9485 = vadd.f32 %v7478, %v9484
    %v9486 = vpop.f32.mrf.mxu0
    %v9487 = vadd.f32 %v7507, %v9486
    %9488 = vdwg.mxu0
    %9489 = vmatpush.bf16.msra.mxu0 %v8444
    %9490 = vmatpush.bf16.msra.mxu0 %v8415
    %9491 = vmatpush.bf16.msra.mxu0 %v8386
    %9492 = vmatpush.bf16.msra.mxu0 %v8357
    %9493 = vmatpush.bf16.msra.mxu0 %v8328
    %9494 = vmatpush.bf16.msra.mxu0 %v8299
    %9495 = vmatpush.bf16.msra.mxu0 %v8270
    %9496 = vmatpush.bf16.msra.mxu0 %v8241
    %9497 = vmatmul.bf16.gmra.mxu0 %v7033
    %v9498 = vpop.f32.mrf.mxu0
    %v9499 = vadd.f32 %v7305, %v9498
    %v9500 = vpop.f32.mrf.mxu0
    %v9501 = vadd.f32 %v7334, %v9500
    %9502 = vmatmul.bf16.gmra.mxu0 %v7034
    %v9503 = vpop.f32.mrf.mxu0
    %v9504 = vadd.f32 %v7363, %v9503
    %v9505 = vpop.f32.mrf.mxu0
    %v9506 = vadd.f32 %v7392, %v9505
    %9507 = vmatmul.bf16.gmra.mxu0 %v7035
    %v9508 = vpop.f32.mrf.mxu0
    %v9509 = vadd.f32 %v7421, %v9508
    %v9510 = vpop.f32.mrf.mxu0
    %v9511 = vadd.f32 %v7450, %v9510
    %9512 = vmatmul.bf16.gmra.mxu0 %v7036
    %v9513 = vpop.f32.mrf.mxu0
    %v9514 = vadd.f32 %v7479, %v9513
    %v9515 = vpop.f32.mrf.mxu0
    %v9516 = vadd.f32 %v7508, %v9515
    %9517 = vdwg.mxu0
    %v9518 = vlaneseq
    %v9519 = vand.u32 %v9518, 127
    %v9520 = vadd.s32 %v9519, 128
    %v9521 = vadd.s32 %v9519, 256
    %v9522 = vadd.s32 %v9519, 384
    %v9523 = vadd.s32 %v9519, 512
    %v9524 = vadd.s32 %v9519, 640
    %v9525 = vadd.s32 %v9519, 768
    %v9526 = vadd.s32 %v9519, 896
    %v9527 = vadd.s32 %v9519, 1024
    %v9528 = vadd.s32 %v9519, 1152
    %v9529 = vadd.s32 %v9519, 1280
    %v9530 = vadd.s32 %v9519, 1408
    %v9531 = vadd.s32 %v9519, 1536
    %v9532 = vadd.s32 %v9519, 1664
    %v9533 = vadd.s32 %v9519, 1792
    %v9534 = vadd.s32 %v9519, 1920
    %v9535 = vadd.s32 %v9519, 2048
    %v9536 = vadd.s32 %v9519, 2176
    %v9537 = vadd.s32 %v9519, 2304
    %v9538 = vadd.s32 %v9519, 2432
    %v9539 = vadd.s32 %v9519, 2560
    %v9540 = vadd.s32 %v9519, 2688
    %v9541 = vadd.s32 %v9519, 2816
    %v9542 = vadd.s32 %v9519, 2944
    %v9543 = vadd.s32 %v9519, 3072
    %v9544 = vadd.s32 %v9519, 3200
    %v9545 = vadd.s32 %v9519, 3328
    %v9546 = vadd.s32 %v9519, 3456
    %v9547 = vadd.s32 %v9519, 3584
    %v9548 = vmax.f32 %v8687, %v8716
    %v9549 = vmax.f32 %v9548, %v8745
    %v9550 = vmax.f32 %v9549, %v8774
    %v9551 = vmax.f32 %v9550, %v8803
    %v9552 = vmax.f32 %v9551, %v8832
    %v9553 = vmax.f32 %v9552, %v8861
    %v9554 = vmax.f32 %v9553, %v8890
    %v9555 = vmax.f32 %v9554, %v8919
    %v9556 = vmax.f32 %v9555, %v8948
    %v9557 = vmax.f32 %v9556, %v8977
    %v9558 = vmax.f32 %v9557, %v9006
    %v9559 = vmax.f32 %v9558, %v9035
    %v9560 = vmax.f32 %v9559, %v9064
    %v9561 = vmax.f32 %v9560, %v9093
    %v9562 = vmax.f32 %v9561, %v9122
    %v9563 = vmax.f32 %v9562, %v9151
    %v9564 = vmax.f32 %v9563, %v9180
    %v9565 = vmax.f32 %v9564, %v9209
    %v9566 = vmax.f32 %v9565, %v9238
    %v9567 = vmax.f32 %v9566, %v9267
    %v9568 = vmax.f32 %v9567, %v9296
    %v9569 = vmax.f32 %v9568, %v9325
    %v9570 = vmax.f32 %v9569, %v9354
    %v9571 = vmax.f32 %v9570, %v9383
    %v9572 = vmax.f32 %v9571, %v9412
    %v9573 = vmax.f32 %v9572, %v9441
    %v9574 = vmax.f32 %v9573, %v9470
    %v9575 = vmax.f32 %v9574, %v9499
    %9576 = vmax.xlane.f32.xlu0 %v9575
    %v9577 = vpop.xlane.xlu0 %9576
    %v9578 = vmax.f32 %v8689, %v8718
    %v9579 = vmax.f32 %v9578, %v8747
    %v9580 = vmax.f32 %v9579, %v8776
    %v9581 = vmax.f32 %v9580, %v8805
    %v9582 = vmax.f32 %v9581, %v8834
    %v9583 = vmax.f32 %v9582, %v8863
    %v9584 = vmax.f32 %v9583, %v8892
    %v9585 = vmax.f32 %v9584, %v8921
    %v9586 = vmax.f32 %v9585, %v8950
    %v9587 = vmax.f32 %v9586, %v8979
    %v9588 = vmax.f32 %v9587, %v9008
    %v9589 = vmax.f32 %v9588, %v9037
    %v9590 = vmax.f32 %v9589, %v9066
    %v9591 = vmax.f32 %v9590, %v9095
    %v9592 = vmax.f32 %v9591, %v9124
    %v9593 = vmax.f32 %v9592, %v9153
    %v9594 = vmax.f32 %v9593, %v9182
    %v9595 = vmax.f32 %v9594, %v9211
    %v9596 = vmax.f32 %v9595, %v9240
    %v9597 = vmax.f32 %v9596, %v9269
    %v9598 = vmax.f32 %v9597, %v9298
    %v9599 = vmax.f32 %v9598, %v9327
    %v9600 = vmax.f32 %v9599, %v9356
    %v9601 = vmax.f32 %v9600, %v9385
    %v9602 = vmax.f32 %v9601, %v9414
    %v9603 = vmax.f32 %v9602, %v9443
    %v9604 = vmax.f32 %v9603, %v9472
    %v9605 = vmax.f32 %v9604, %v9501
    %9606 = vmax.xlane.f32.xlu0 %v9605
    %v9607 = vpop.xlane.xlu0 %9606
    %v9608 = vmax.f32 %v8692, %v8721
    %v9609 = vmax.f32 %v9608, %v8750
    %v9610 = vmax.f32 %v9609, %v8779
    %v9611 = vmax.f32 %v9610, %v8808
    %v9612 = vmax.f32 %v9611, %v8837
    %v9613 = vmax.f32 %v9612, %v8866
    %v9614 = vmax.f32 %v9613, %v8895
    %v9615 = vmax.f32 %v9614, %v8924
    %v9616 = vmax.f32 %v9615, %v8953
    %v9617 = vmax.f32 %v9616, %v8982
    %v9618 = vmax.f32 %v9617, %v9011
    %v9619 = vmax.f32 %v9618, %v9040
    %v9620 = vmax.f32 %v9619, %v9069
    %v9621 = vmax.f32 %v9620, %v9098
    %v9622 = vmax.f32 %v9621, %v9127
    %v9623 = vmax.f32 %v9622, %v9156
    %v9624 = vmax.f32 %v9623, %v9185
    %v9625 = vmax.f32 %v9624, %v9214
    %v9626 = vmax.f32 %v9625, %v9243
    %v9627 = vmax.f32 %v9626, %v9272
    %v9628 = vmax.f32 %v9627, %v9301
    %v9629 = vmax.f32 %v9628, %v9330
    %v9630 = vmax.f32 %v9629, %v9359
    %v9631 = vmax.f32 %v9630, %v9388
    %v9632 = vmax.f32 %v9631, %v9417
    %v9633 = vmax.f32 %v9632, %v9446
    %v9634 = vmax.f32 %v9633, %v9475
    %v9635 = vmax.f32 %v9634, %v9504
    %9636 = vmax.xlane.f32.xlu0 %v9635
    %v9637 = vpop.xlane.xlu0 %9636
    %v9638 = vmax.f32 %v8694, %v8723
    %v9639 = vmax.f32 %v9638, %v8752
    %v9640 = vmax.f32 %v9639, %v8781
    %v9641 = vmax.f32 %v9640, %v8810
    %v9642 = vmax.f32 %v9641, %v8839
    %v9643 = vmax.f32 %v9642, %v8868
    %v9644 = vmax.f32 %v9643, %v8897
    %v9645 = vmax.f32 %v9644, %v8926
    %v9646 = vmax.f32 %v9645, %v8955
    %v9647 = vmax.f32 %v9646, %v8984
    %v9648 = vmax.f32 %v9647, %v9013
    %v9649 = vmax.f32 %v9648, %v9042
    %v9650 = vmax.f32 %v9649, %v9071
    %v9651 = vmax.f32 %v9650, %v9100
    %v9652 = vmax.f32 %v9651, %v9129
    %v9653 = vmax.f32 %v9652, %v9158
    %v9654 = vmax.f32 %v9653, %v9187
    %v9655 = vmax.f32 %v9654, %v9216
    %v9656 = vmax.f32 %v9655, %v9245
    %v9657 = vmax.f32 %v9656, %v9274
    %v9658 = vmax.f32 %v9657, %v9303
    %v9659 = vmax.f32 %v9658, %v9332
    %v9660 = vmax.f32 %v9659, %v9361
    %v9661 = vmax.f32 %v9660, %v9390
    %v9662 = vmax.f32 %v9661, %v9419
    %v9663 = vmax.f32 %v9662, %v9448
    %v9664 = vmax.f32 %v9663, %v9477
    %v9665 = vmax.f32 %v9664, %v9506
    %9666 = vmax.xlane.f32.xlu0 %v9665
    %v9667 = vpop.xlane.xlu0 %9666
    %v9668 = vmax.f32 %v8697, %v8726
    %v9669 = vmax.f32 %v9668, %v8755
    %v9670 = vmax.f32 %v9669, %v8784
    %v9671 = vmax.f32 %v9670, %v8813
    %v9672 = vmax.f32 %v9671, %v8842
    %v9673 = vmax.f32 %v9672, %v8871
    %v9674 = vmax.f32 %v9673, %v8900
    %v9675 = vmax.f32 %v9674, %v8929
    %v9676 = vmax.f32 %v9675, %v8958
    %v9677 = vmax.f32 %v9676, %v8987
    %v9678 = vmax.f32 %v9677, %v9016
    %v9679 = vmax.f32 %v9678, %v9045
    %v9680 = vmax.f32 %v9679, %v9074
    %v9681 = vmax.f32 %v9680, %v9103
    %v9682 = vmax.f32 %v9681, %v9132
    %v9683 = vmax.f32 %v9682, %v9161
    %v9684 = vmax.f32 %v9683, %v9190
    %v9685 = vmax.f32 %v9684, %v9219
    %v9686 = vmax.f32 %v9685, %v9248
    %v9687 = vmax.f32 %v9686, %v9277
    %v9688 = vmax.f32 %v9687, %v9306
    %v9689 = vmax.f32 %v9688, %v9335
    %v9690 = vmax.f32 %v9689, %v9364
    %v9691 = vmax.f32 %v9690, %v9393
    %v9692 = vmax.f32 %v9691, %v9422
    %v9693 = vmax.f32 %v9692, %v9451
    %v9694 = vmax.f32 %v9693, %v9480
    %v9695 = vmax.f32 %v9694, %v9509
    %9696 = vmax.xlane.f32.xlu0 %v9695
    %v9697 = vpop.xlane.xlu0 %9696
    %v9698 = vmax.f32 %v8699, %v8728
    %v9699 = vmax.f32 %v9698, %v8757
    %v9700 = vmax.f32 %v9699, %v8786
    %v9701 = vmax.f32 %v9700, %v8815
    %v9702 = vmax.f32 %v9701, %v8844
    %v9703 = vmax.f32 %v9702, %v8873
    %v9704 = vmax.f32 %v9703, %v8902
    %v9705 = vmax.f32 %v9704, %v8931
    %v9706 = vmax.f32 %v9705, %v8960
    %v9707 = vmax.f32 %v9706, %v8989
    %v9708 = vmax.f32 %v9707, %v9018
    %v9709 = vmax.f32 %v9708, %v9047
    %v9710 = vmax.f32 %v9709, %v9076
    %v9711 = vmax.f32 %v9710, %v9105
    %v9712 = vmax.f32 %v9711, %v9134
    %v9713 = vmax.f32 %v9712, %v9163
    %v9714 = vmax.f32 %v9713, %v9192
    %v9715 = vmax.f32 %v9714, %v9221
    %v9716 = vmax.f32 %v9715, %v9250
    %v9717 = vmax.f32 %v9716, %v9279
    %v9718 = vmax.f32 %v9717, %v9308
    %v9719 = vmax.f32 %v9718, %v9337
    %v9720 = vmax.f32 %v9719, %v9366
    %v9721 = vmax.f32 %v9720, %v9395
    %v9722 = vmax.f32 %v9721, %v9424
    %v9723 = vmax.f32 %v9722, %v9453
    %v9724 = vmax.f32 %v9723, %v9482
    %v9725 = vmax.f32 %v9724, %v9511
    %9726 = vmax.xlane.f32.xlu0 %v9725
    %v9727 = vpop.xlane.xlu0 %9726
    %v9728 = vmax.f32 %v8702, %v8731
    %v9729 = vmax.f32 %v9728, %v8760
    %v9730 = vmax.f32 %v9729, %v8789
    %v9731 = vmax.f32 %v9730, %v8818
    %v9732 = vmax.f32 %v9731, %v8847
    %v9733 = vmax.f32 %v9732, %v8876
    %v9734 = vmax.f32 %v9733, %v8905
    %v9735 = vmax.f32 %v9734, %v8934
    %v9736 = vmax.f32 %v9735, %v8963
    %v9737 = vmax.f32 %v9736, %v8992
    %v9738 = vmax.f32 %v9737, %v9021
    %v9739 = vmax.f32 %v9738, %v9050
    %v9740 = vmax.f32 %v9739, %v9079
    %v9741 = vmax.f32 %v9740, %v9108
    %v9742 = vmax.f32 %v9741, %v9137
    %v9743 = vmax.f32 %v9742, %v9166
    %v9744 = vmax.f32 %v9743, %v9195
    %v9745 = vmax.f32 %v9744, %v9224
    %v9746 = vmax.f32 %v9745, %v9253
    %v9747 = vmax.f32 %v9746, %v9282
    %v9748 = vmax.f32 %v9747, %v9311
    %v9749 = vmax.f32 %v9748, %v9340
    %v9750 = vmax.f32 %v9749, %v9369
    %v9751 = vmax.f32 %v9750, %v9398
    %v9752 = vmax.f32 %v9751, %v9427
    %v9753 = vmax.f32 %v9752, %v9456
    %v9754 = vmax.f32 %v9753, %v9485
    %v9755 = vmax.f32 %v9754, %v9514
    %9756 = vmax.xlane.f32.xlu0 %v9755
    %v9757 = vpop.xlane.xlu0 %9756
    %v9758 = vmax.f32 %v8704, %v8733
    %v9759 = vmax.f32 %v9758, %v8762
    %v9760 = vmax.f32 %v9759, %v8791
    %v9761 = vmax.f32 %v9760, %v8820
    %v9762 = vmax.f32 %v9761, %v8849
    %v9763 = vmax.f32 %v9762, %v8878
    %v9764 = vmax.f32 %v9763, %v8907
    %v9765 = vmax.f32 %v9764, %v8936
    %v9766 = vmax.f32 %v9765, %v8965
    %v9767 = vmax.f32 %v9766, %v8994
    %v9768 = vmax.f32 %v9767, %v9023
    %v9769 = vmax.f32 %v9768, %v9052
    %v9770 = vmax.f32 %v9769, %v9081
    %v9771 = vmax.f32 %v9770, %v9110
    %v9772 = vmax.f32 %v9771, %v9139
    %v9773 = vmax.f32 %v9772, %v9168
    %v9774 = vmax.f32 %v9773, %v9197
    %v9775 = vmax.f32 %v9774, %v9226
    %v9776 = vmax.f32 %v9775, %v9255
    %v9777 = vmax.f32 %v9776, %v9284
    %v9778 = vmax.f32 %v9777, %v9313
    %v9779 = vmax.f32 %v9778, %v9342
    %v9780 = vmax.f32 %v9779, %v9371
    %v9781 = vmax.f32 %v9780, %v9400
    %v9782 = vmax.f32 %v9781, %v9429
    %v9783 = vmax.f32 %v9782, %v9458
    %v9784 = vmax.f32 %v9783, %v9487
    %v9785 = vmax.f32 %v9784, %v9516
    %9786 = vmax.xlane.f32.xlu0 %v9785
    %v9787 = vpop.xlane.xlu0 %9786
    %vm9788 = vcmp.eq.f32.partialorder %v8687, %v9577
    %vm9789 = vcmp.eq.f32.partialorder %v8716, %v9577
    %vm9790 = vcmp.eq.f32.partialorder %v8745, %v9577
    %vm9791 = vcmp.eq.f32.partialorder %v8774, %v9577
    %vm9792 = vcmp.eq.f32.partialorder %v8803, %v9577
    %vm9793 = vcmp.eq.f32.partialorder %v8832, %v9577
    %vm9794 = vcmp.eq.f32.partialorder %v8861, %v9577
    %vm9795 = vcmp.eq.f32.partialorder %v8890, %v9577
    %vm9796 = vcmp.eq.f32.partialorder %v8919, %v9577
    %vm9797 = vcmp.eq.f32.partialorder %v8948, %v9577
    %vm9798 = vcmp.eq.f32.partialorder %v8977, %v9577
    %vm9799 = vcmp.eq.f32.partialorder %v9006, %v9577
    %vm9800 = vcmp.eq.f32.partialorder %v9035, %v9577
    %vm9801 = vcmp.eq.f32.partialorder %v9064, %v9577
    %vm9802 = vcmp.eq.f32.partialorder %v9093, %v9577
    %vm9803 = vcmp.eq.f32.partialorder %v9122, %v9577
    %vm9804 = vcmp.eq.f32.partialorder %v9151, %v9577
    %vm9805 = vcmp.eq.f32.partialorder %v9180, %v9577
    %vm9806 = vcmp.eq.f32.partialorder %v9209, %v9577
    %vm9807 = vcmp.eq.f32.partialorder %v9238, %v9577
    %vm9808 = vcmp.eq.f32.partialorder %v9267, %v9577
    %vm9809 = vcmp.eq.f32.partialorder %v9296, %v9577
    %vm9810 = vcmp.eq.f32.partialorder %v9325, %v9577
    %vm9811 = vcmp.eq.f32.partialorder %v9354, %v9577
    %vm9812 = vcmp.eq.f32.partialorder %v9383, %v9577
    %vm9813 = vcmp.eq.f32.partialorder %v9412, %v9577
    %vm9814 = vcmp.eq.f32.partialorder %v9441, %v9577
    %vm9815 = vcmp.eq.f32.partialorder %v9470, %v9577
    %vm9816 = vcmp.eq.f32.partialorder %v9499, %v9577
    %vm9817 = vcmp.eq.f32.partialorder %v8689, %v9607
    %vm9818 = vcmp.eq.f32.partialorder %v8718, %v9607
    %vm9819 = vcmp.eq.f32.partialorder %v8747, %v9607
    %vm9820 = vcmp.eq.f32.partialorder %v8776, %v9607
    %vm9821 = vcmp.eq.f32.partialorder %v8805, %v9607
    %vm9822 = vcmp.eq.f32.partialorder %v8834, %v9607
    %vm9823 = vcmp.eq.f32.partialorder %v8863, %v9607
    %vm9824 = vcmp.eq.f32.partialorder %v8892, %v9607
    %vm9825 = vcmp.eq.f32.partialorder %v8921, %v9607
    %vm9826 = vcmp.eq.f32.partialorder %v8950, %v9607
    %vm9827 = vcmp.eq.f32.partialorder %v8979, %v9607
    %vm9828 = vcmp.eq.f32.partialorder %v9008, %v9607
    %vm9829 = vcmp.eq.f32.partialorder %v9037, %v9607
    %vm9830 = vcmp.eq.f32.partialorder %v9066, %v9607
    %vm9831 = vcmp.eq.f32.partialorder %v9095, %v9607
    %vm9832 = vcmp.eq.f32.partialorder %v9124, %v9607
    %vm9833 = vcmp.eq.f32.partialorder %v9153, %v9607
    %vm9834 = vcmp.eq.f32.partialorder %v9182, %v9607
    %vm9835 = vcmp.eq.f32.partialorder %v9211, %v9607
    %vm9836 = vcmp.eq.f32.partialorder %v9240, %v9607
    %vm9837 = vcmp.eq.f32.partialorder %v9269, %v9607
    %vm9838 = vcmp.eq.f32.partialorder %v9298, %v9607
    %vm9839 = vcmp.eq.f32.partialorder %v9327, %v9607
    %vm9840 = vcmp.eq.f32.partialorder %v9356, %v9607
    %vm9841 = vcmp.eq.f32.partialorder %v9385, %v9607
    %vm9842 = vcmp.eq.f32.partialorder %v9414, %v9607
    %vm9843 = vcmp.eq.f32.partialorder %v9443, %v9607
    %vm9844 = vcmp.eq.f32.partialorder %v9472, %v9607
    %vm9845 = vcmp.eq.f32.partialorder %v9501, %v9607
    %vm9846 = vcmp.eq.f32.partialorder %v8692, %v9637
    %vm9847 = vcmp.eq.f32.partialorder %v8721, %v9637
    %vm9848 = vcmp.eq.f32.partialorder %v8750, %v9637
    %vm9849 = vcmp.eq.f32.partialorder %v8779, %v9637
    %vm9850 = vcmp.eq.f32.partialorder %v8808, %v9637
    %vm9851 = vcmp.eq.f32.partialorder %v8837, %v9637
    %vm9852 = vcmp.eq.f32.partialorder %v8866, %v9637
    %vm9853 = vcmp.eq.f32.partialorder %v8895, %v9637
    %vm9854 = vcmp.eq.f32.partialorder %v8924, %v9637
    %vm9855 = vcmp.eq.f32.partialorder %v8953, %v9637
    %vm9856 = vcmp.eq.f32.partialorder %v8982, %v9637
    %vm9857 = vcmp.eq.f32.partialorder %v9011, %v9637
    %vm9858 = vcmp.eq.f32.partialorder %v9040, %v9637
    %vm9859 = vcmp.eq.f32.partialorder %v9069, %v9637
    %vm9860 = vcmp.eq.f32.partialorder %v9098, %v9637
    %vm9861 = vcmp.eq.f32.partialorder %v9127, %v9637
    %vm9862 = vcmp.eq.f32.partialorder %v9156, %v9637
    %vm9863 = vcmp.eq.f32.partialorder %v9185, %v9637
    %vm9864 = vcmp.eq.f32.partialorder %v9214, %v9637
    %vm9865 = vcmp.eq.f32.partialorder %v9243, %v9637
    %vm9866 = vcmp.eq.f32.partialorder %v9272, %v9637
    %vm9867 = vcmp.eq.f32.partialorder %v9301, %v9637
    %vm9868 = vcmp.eq.f32.partialorder %v9330, %v9637
    %vm9869 = vcmp.eq.f32.partialorder %v9359, %v9637
    %vm9870 = vcmp.eq.f32.partialorder %v9388, %v9637
    %vm9871 = vcmp.eq.f32.partialorder %v9417, %v9637
    %vm9872 = vcmp.eq.f32.partialorder %v9446, %v9637
    %vm9873 = vcmp.eq.f32.partialorder %v9475, %v9637
    %vm9874 = vcmp.eq.f32.partialorder %v9504, %v9637
    %vm9875 = vcmp.eq.f32.partialorder %v8694, %v9667
    %vm9876 = vcmp.eq.f32.partialorder %v8723, %v9667
    %vm9877 = vcmp.eq.f32.partialorder %v8752, %v9667
    %vm9878 = vcmp.eq.f32.partialorder %v8781, %v9667
    %vm9879 = vcmp.eq.f32.partialorder %v8810, %v9667
    %vm9880 = vcmp.eq.f32.partialorder %v8839, %v9667
    %vm9881 = vcmp.eq.f32.partialorder %v8868, %v9667
    %vm9882 = vcmp.eq.f32.partialorder %v8897, %v9667
    %vm9883 = vcmp.eq.f32.partialorder %v8926, %v9667
    %vm9884 = vcmp.eq.f32.partialorder %v8955, %v9667
    %vm9885 = vcmp.eq.f32.partialorder %v8984, %v9667
    %vm9886 = vcmp.eq.f32.partialorder %v9013, %v9667
    %vm9887 = vcmp.eq.f32.partialorder %v9042, %v9667
    %vm9888 = vcmp.eq.f32.partialorder %v9071, %v9667
    %vm9889 = vcmp.eq.f32.partialorder %v9100, %v9667
    %vm9890 = vcmp.eq.f32.partialorder %v9129, %v9667
    %vm9891 = vcmp.eq.f32.partialorder %v9158, %v9667
    %vm9892 = vcmp.eq.f32.partialorder %v9187, %v9667
    %vm9893 = vcmp.eq.f32.partialorder %v9216, %v9667
    %vm9894 = vcmp.eq.f32.partialorder %v9245, %v9667
    %vm9895 = vcmp.eq.f32.partialorder %v9274, %v9667
    %vm9896 = vcmp.eq.f32.partialorder %v9303, %v9667
    %vm9897 = vcmp.eq.f32.partialorder %v9332, %v9667
    %vm9898 = vcmp.eq.f32.partialorder %v9361, %v9667
    %vm9899 = vcmp.eq.f32.partialorder %v9390, %v9667
    %vm9900 = vcmp.eq.f32.partialorder %v9419, %v9667
    %vm9901 = vcmp.eq.f32.partialorder %v9448, %v9667
    %vm9902 = vcmp.eq.f32.partialorder %v9477, %v9667
    %vm9903 = vcmp.eq.f32.partialorder %v9506, %v9667
    %vm9904 = vcmp.eq.f32.partialorder %v8697, %v9697
    %vm9905 = vcmp.eq.f32.partialorder %v8726, %v9697
    %vm9906 = vcmp.eq.f32.partialorder %v8755, %v9697
    %vm9907 = vcmp.eq.f32.partialorder %v8784, %v9697
    %vm9908 = vcmp.eq.f32.partialorder %v8813, %v9697
    %vm9909 = vcmp.eq.f32.partialorder %v8842, %v9697
    %vm9910 = vcmp.eq.f32.partialorder %v8871, %v9697
    %vm9911 = vcmp.eq.f32.partialorder %v8900, %v9697
    %vm9912 = vcmp.eq.f32.partialorder %v8929, %v9697
    %vm9913 = vcmp.eq.f32.partialorder %v8958, %v9697
    %vm9914 = vcmp.eq.f32.partialorder %v8987, %v9697
    %vm9915 = vcmp.eq.f32.partialorder %v9016, %v9697
    %vm9916 = vcmp.eq.f32.partialorder %v9045, %v9697
    %vm9917 = vcmp.eq.f32.partialorder %v9074, %v9697
    %vm9918 = vcmp.eq.f32.partialorder %v9103, %v9697
    %vm9919 = vcmp.eq.f32.partialorder %v9132, %v9697
    %vm9920 = vcmp.eq.f32.partialorder %v9161, %v9697
    %vm9921 = vcmp.eq.f32.partialorder %v9190, %v9697
    %vm9922 = vcmp.eq.f32.partialorder %v9219, %v9697
    %vm9923 = vcmp.eq.f32.partialorder %v9248, %v9697
    %vm9924 = vcmp.eq.f32.partialorder %v9277, %v9697
    %vm9925 = vcmp.eq.f32.partialorder %v9306, %v9697
    %vm9926 = vcmp.eq.f32.partialorder %v9335, %v9697
    %vm9927 = vcmp.eq.f32.partialorder %v9364, %v9697
    %vm9928 = vcmp.eq.f32.partialorder %v9393, %v9697
    %vm9929 = vcmp.eq.f32.partialorder %v9422, %v9697
    %vm9930 = vcmp.eq.f32.partialorder %v9451, %v9697
    %vm9931 = vcmp.eq.f32.partialorder %v9480, %v9697
    %vm9932 = vcmp.eq.f32.partialorder %v9509, %v9697
    %vm9933 = vcmp.eq.f32.partialorder %v8699, %v9727
    %vm9934 = vcmp.eq.f32.partialorder %v8728, %v9727
    %vm9935 = vcmp.eq.f32.partialorder %v8757, %v9727
    %vm9936 = vcmp.eq.f32.partialorder %v8786, %v9727
    %vm9937 = vcmp.eq.f32.partialorder %v8815, %v9727
    %vm9938 = vcmp.eq.f32.partialorder %v8844, %v9727
    %vm9939 = vcmp.eq.f32.partialorder %v8873, %v9727
    %vm9940 = vcmp.eq.f32.partialorder %v8902, %v9727
    %vm9941 = vcmp.eq.f32.partialorder %v8931, %v9727
    %vm9942 = vcmp.eq.f32.partialorder %v8960, %v9727
    %vm9943 = vcmp.eq.f32.partialorder %v8989, %v9727
    %vm9944 = vcmp.eq.f32.partialorder %v9018, %v9727
    %vm9945 = vcmp.eq.f32.partialorder %v9047, %v9727
    %vm9946 = vcmp.eq.f32.partialorder %v9076, %v9727
    %vm9947 = vcmp.eq.f32.partialorder %v9105, %v9727
    %vm9948 = vcmp.eq.f32.partialorder %v9134, %v9727
    %vm9949 = vcmp.eq.f32.partialorder %v9163, %v9727
    %vm9950 = vcmp.eq.f32.partialorder %v9192, %v9727
    %vm9951 = vcmp.eq.f32.partialorder %v9221, %v9727
    %vm9952 = vcmp.eq.f32.partialorder %v9250, %v9727
    %vm9953 = vcmp.eq.f32.partialorder %v9279, %v9727
    %vm9954 = vcmp.eq.f32.partialorder %v9308, %v9727
    %vm9955 = vcmp.eq.f32.partialorder %v9337, %v9727
    %vm9956 = vcmp.eq.f32.partialorder %v9366, %v9727
    %vm9957 = vcmp.eq.f32.partialorder %v9395, %v9727
    %vm9958 = vcmp.eq.f32.partialorder %v9424, %v9727
    %vm9959 = vcmp.eq.f32.partialorder %v9453, %v9727
    %vm9960 = vcmp.eq.f32.partialorder %v9482, %v9727
    %vm9961 = vcmp.eq.f32.partialorder %v9511, %v9727
    %vm9962 = vcmp.eq.f32.partialorder %v8702, %v9757
    %vm9963 = vcmp.eq.f32.partialorder %v8731, %v9757
    %vm9964 = vcmp.eq.f32.partialorder %v8760, %v9757
    %vm9965 = vcmp.eq.f32.partialorder %v8789, %v9757
    %vm9966 = vcmp.eq.f32.partialorder %v8818, %v9757
    %vm9967 = vcmp.eq.f32.partialorder %v8847, %v9757
    %vm9968 = vcmp.eq.f32.partialorder %v8876, %v9757
    %vm9969 = vcmp.eq.f32.partialorder %v8905, %v9757
    %vm9970 = vcmp.eq.f32.partialorder %v8934, %v9757
    %vm9971 = vcmp.eq.f32.partialorder %v8963, %v9757
    %vm9972 = vcmp.eq.f32.partialorder %v8992, %v9757
    %vm9973 = vcmp.eq.f32.partialorder %v9021, %v9757
    %vm9974 = vcmp.eq.f32.partialorder %v9050, %v9757
    %vm9975 = vcmp.eq.f32.partialorder %v9079, %v9757
    %vm9976 = vcmp.eq.f32.partialorder %v9108, %v9757
    %vm9977 = vcmp.eq.f32.partialorder %v9137, %v9757
    %vm9978 = vcmp.eq.f32.partialorder %v9166, %v9757
    %vm9979 = vcmp.eq.f32.partialorder %v9195, %v9757
    %vm9980 = vcmp.eq.f32.partialorder %v9224, %v9757
    %vm9981 = vcmp.eq.f32.partialorder %v9253, %v9757
    %vm9982 = vcmp.eq.f32.partialorder %v9282, %v9757
    %vm9983 = vcmp.eq.f32.partialorder %v9311, %v9757
    %vm9984 = vcmp.eq.f32.partialorder %v9340, %v9757
    %vm9985 = vcmp.eq.f32.partialorder %v9369, %v9757
    %vm9986 = vcmp.eq.f32.partialorder %v9398, %v9757
    %vm9987 = vcmp.eq.f32.partialorder %v9427, %v9757
    %vm9988 = vcmp.eq.f32.partialorder %v9456, %v9757
    %vm9989 = vcmp.eq.f32.partialorder %v9485, %v9757
    %vm9990 = vcmp.eq.f32.partialorder %v9514, %v9757
    %vm9991 = vcmp.eq.f32.partialorder %v8704, %v9787
    %vm9992 = vcmp.eq.f32.partialorder %v8733, %v9787
    %vm9993 = vcmp.eq.f32.partialorder %v8762, %v9787
    %vm9994 = vcmp.eq.f32.partialorder %v8791, %v9787
    %vm9995 = vcmp.eq.f32.partialorder %v8820, %v9787
    %vm9996 = vcmp.eq.f32.partialorder %v8849, %v9787
    %vm9997 = vcmp.eq.f32.partialorder %v8878, %v9787
    %vm9998 = vcmp.eq.f32.partialorder %v8907, %v9787
    %vm9999 = vcmp.eq.f32.partialorder %v8936, %v9787
    %vm10000 = vcmp.eq.f32.partialorder %v8965, %v9787
    %vm10001 = vcmp.eq.f32.partialorder %v8994, %v9787
    %vm10002 = vcmp.eq.f32.partialorder %v9023, %v9787
    %vm10003 = vcmp.eq.f32.partialorder %v9052, %v9787
    %vm10004 = vcmp.eq.f32.partialorder %v9081, %v9787
    %vm10005 = vcmp.eq.f32.partialorder %v9110, %v9787
    %vm10006 = vcmp.eq.f32.partialorder %v9139, %v9787
    %vm10007 = vcmp.eq.f32.partialorder %v9168, %v9787
    %vm10008 = vcmp.eq.f32.partialorder %v9197, %v9787
    %vm10009 = vcmp.eq.f32.partialorder %v9226, %v9787
    %vm10010 = vcmp.eq.f32.partialorder %v9255, %v9787
    %vm10011 = vcmp.eq.f32.partialorder %v9284, %v9787
    %vm10012 = vcmp.eq.f32.partialorder %v9313, %v9787
    %vm10013 = vcmp.eq.f32.partialorder %v9342, %v9787
    %vm10014 = vcmp.eq.f32.partialorder %v9371, %v9787
    %vm10015 = vcmp.eq.f32.partialorder %v9400, %v9787
    %vm10016 = vcmp.eq.f32.partialorder %v9429, %v9787
    %vm10017 = vcmp.eq.f32.partialorder %v9458, %v9787
    %vm10018 = vcmp.eq.f32.partialorder %v9487, %v9787
    %vm10019 = vcmp.eq.f32.partialorder %v9516, %v9787
    %v10020 = vsel %vm9788, %v9519, 3712
    %v10021 = vsel %vm9789, %v9520, 3712
    %v10022 = vsel %vm9790, %v9521, 3712
    %v10023 = vsel %vm9791, %v9522, 3712
    %v10024 = vsel %vm9792, %v9523, 3712
    %v10025 = vsel %vm9793, %v9524, 3712
    %v10026 = vsel %vm9794, %v9525, 3712
    %v10027 = vsel %vm9795, %v9526, 3712
    %v10028 = vsel %vm9796, %v9527, 3712
    %v10029 = vsel %vm9797, %v9528, 3712
    %v10030 = vsel %vm9798, %v9529, 3712
    %v10031 = vsel %vm9799, %v9530, 3712
    %v10032 = vsel %vm9800, %v9531, 3712
    %v10033 = vsel %vm9801, %v9532, 3712
    %v10034 = vsel %vm9802, %v9533, 3712
    %v10035 = vsel %vm9803, %v9534, 3712
    %v10036 = vsel %vm9804, %v9535, 3712
    %v10037 = vsel %vm9805, %v9536, 3712
    %v10038 = vsel %vm9806, %v9537, 3712
    %v10039 = vsel %vm9807, %v9538, 3712
    %v10040 = vsel %vm9808, %v9539, 3712
    %v10041 = vsel %vm9809, %v9540, 3712
    %v10042 = vsel %vm9810, %v9541, 3712
    %v10043 = vsel %vm9811, %v9542, 3712
    %v10044 = vsel %vm9812, %v9543, 3712
    %v10045 = vsel %vm9813, %v9544, 3712
    %v10046 = vsel %vm9814, %v9545, 3712
    %v10047 = vsel %vm9815, %v9546, 3712
    %v10048 = vsel %vm9816, %v9547, 3712
    %v10049 = vsel %vm9817, %v9519, 3712
    %v10050 = vsel %vm9818, %v9520, 3712
    %v10051 = vsel %vm9819, %v9521, 3712
    %v10052 = vsel %vm9820, %v9522, 3712
    %v10053 = vsel %vm9821, %v9523, 3712
    %v10054 = vsel %vm9822, %v9524, 3712
    %v10055 = vsel %vm9823, %v9525, 3712
    %v10056 = vsel %vm9824, %v9526, 3712
    %v10057 = vsel %vm9825, %v9527, 3712
    %v10058 = vsel %vm9826, %v9528, 3712
    %v10059 = vsel %vm9827, %v9529, 3712
    %v10060 = vsel %vm9828, %v9530, 3712
    %v10061 = vsel %vm9829, %v9531, 3712
    %v10062 = vsel %vm9830, %v9532, 3712
    %v10063 = vsel %vm9831, %v9533, 3712
    %v10064 = vsel %vm9832, %v9534, 3712
    %v10065 = vsel %vm9833, %v9535, 3712
    %v10066 = vsel %vm9834, %v9536, 3712
    %v10067 = vsel %vm9835, %v9537, 3712
    %v10068 = vsel %vm9836, %v9538, 3712
    %v10069 = vsel %vm9837, %v9539, 3712
    %v10070 = vsel %vm9838, %v9540, 3712
    %v10071 = vsel %vm9839, %v9541, 3712
    %v10072 = vsel %vm9840, %v9542, 3712
    %v10073 = vsel %vm9841, %v9543, 3712
    %v10074 = vsel %vm9842, %v9544, 3712
    %v10075 = vsel %vm9843, %v9545, 3712
    %v10076 = vsel %vm9844, %v9546, 3712
    %v10077 = vsel %vm9845, %v9547, 3712
    %v10078 = vsel %vm9846, %v9519, 3712
    %v10079 = vsel %vm9847, %v9520, 3712
    %v10080 = vsel %vm9848, %v9521, 3712
    %v10081 = vsel %vm9849, %v9522, 3712
    %v10082 = vsel %vm9850, %v9523, 3712
    %v10083 = vsel %vm9851, %v9524, 3712
    %v10084 = vsel %vm9852, %v9525, 3712
    %v10085 = vsel %vm9853, %v9526, 3712
    %v10086 = vsel %vm9854, %v9527, 3712
    %v10087 = vsel %vm9855, %v9528, 3712
    %v10088 = vsel %vm9856, %v9529, 3712
    %v10089 = vsel %vm9857, %v9530, 3712
    %v10090 = vsel %vm9858, %v9531, 3712
    %v10091 = vsel %vm9859, %v9532, 3712
    %v10092 = vsel %vm9860, %v9533, 3712
    %v10093 = vsel %vm9861, %v9534, 3712
    %v10094 = vsel %vm9862, %v9535, 3712
    %v10095 = vsel %vm9863, %v9536, 3712
    %v10096 = vsel %vm9864, %v9537, 3712
    %v10097 = vsel %vm9865, %v9538, 3712
    %v10098 = vsel %vm9866, %v9539, 3712
    %v10099 = vsel %vm9867, %v9540, 3712
    %v10100 = vsel %vm9868, %v9541, 3712
    %v10101 = vsel %vm9869, %v9542, 3712
    %v10102 = vsel %vm9870, %v9543, 3712
    %v10103 = vsel %vm9871, %v9544, 3712
    %v10104 = vsel %vm9872, %v9545, 3712
    %v10105 = vsel %vm9873, %v9546, 3712
    %v10106 = vsel %vm9874, %v9547, 3712
    %v10107 = vsel %vm9875, %v9519, 3712
    %v10108 = vsel %vm9876, %v9520, 3712
    %v10109 = vsel %vm9877, %v9521, 3712
    %v10110 = vsel %vm9878, %v9522, 3712
    %v10111 = vsel %vm9879, %v9523, 3712
    %v10112 = vsel %vm9880, %v9524, 3712
    %v10113 = vsel %vm9881, %v9525, 3712
    %v10114 = vsel %vm9882, %v9526, 3712
    %v10115 = vsel %vm9883, %v9527, 3712
    %v10116 = vsel %vm9884, %v9528, 3712
    %v10117 = vsel %vm9885, %v9529, 3712
    %v10118 = vsel %vm9886, %v9530, 3712
    %v10119 = vsel %vm9887, %v9531, 3712
    %v10120 = vsel %vm9888, %v9532, 3712
    %v10121 = vsel %vm9889, %v9533, 3712
    %v10122 = vsel %vm9890, %v9534, 3712
    %v10123 = vsel %vm9891, %v9535, 3712
    %v10124 = vsel %vm9892, %v9536, 3712
    %v10125 = vsel %vm9893, %v9537, 3712
    %v10126 = vsel %vm9894, %v9538, 3712
    %v10127 = vsel %vm9895, %v9539, 3712
    %v10128 = vsel %vm9896, %v9540, 3712
    %v10129 = vsel %vm9897, %v9541, 3712
    %v10130 = vsel %vm9898, %v9542, 3712
    %v10131 = vsel %vm9899, %v9543, 3712
    %v10132 = vsel %vm9900, %v9544, 3712
    %v10133 = vsel %vm9901, %v9545, 3712
    %v10134 = vsel %vm9902, %v9546, 3712
    %v10135 = vsel %vm9903, %v9547, 3712
    %v10136 = vsel %vm9904, %v9519, 3712
    %v10137 = vsel %vm9905, %v9520, 3712
    %v10138 = vsel %vm9906, %v9521, 3712
    %v10139 = vsel %vm9907, %v9522, 3712
    %v10140 = vsel %vm9908, %v9523, 3712
    %v10141 = vsel %vm9909, %v9524, 3712
    %v10142 = vsel %vm9910, %v9525, 3712
    %v10143 = vsel %vm9911, %v9526, 3712
    %v10144 = vsel %vm9912, %v9527, 3712
    %v10145 = vsel %vm9913, %v9528, 3712
    %v10146 = vsel %vm9914, %v9529, 3712
    %v10147 = vsel %vm9915, %v9530, 3712
    %v10148 = vsel %vm9916, %v9531, 3712
    %v10149 = vsel %vm9917, %v9532, 3712
    %v10150 = vsel %vm9918, %v9533, 3712
    %v10151 = vsel %vm9919, %v9534, 3712
    %v10152 = vsel %vm9920, %v9535, 3712
    %v10153 = vsel %vm9921, %v9536, 3712
    %v10154 = vsel %vm9922, %v9537, 3712
    %v10155 = vsel %vm9923, %v9538, 3712
    %v10156 = vsel %vm9924, %v9539, 3712
    %v10157 = vsel %vm9925, %v9540, 3712
    %v10158 = vsel %vm9926, %v9541, 3712
    %v10159 = vsel %vm9927, %v9542, 3712
    %v10160 = vsel %vm9928, %v9543, 3712
    %v10161 = vsel %vm9929, %v9544, 3712
    %v10162 = vsel %vm9930, %v9545, 3712
    %v10163 = vsel %vm9931, %v9546, 3712
    %v10164 = vsel %vm9932, %v9547, 3712
    %v10165 = vsel %vm9933, %v9519, 3712
    %v10166 = vsel %vm9934, %v9520, 3712
    %v10167 = vsel %vm9935, %v9521, 3712
    %v10168 = vsel %vm9936, %v9522, 3712
    %v10169 = vsel %vm9937, %v9523, 3712
    %v10170 = vsel %vm9938, %v9524, 3712
    %v10171 = vsel %vm9939, %v9525, 3712
    %v10172 = vsel %vm9940, %v9526, 3712
    %v10173 = vsel %vm9941, %v9527, 3712
    %v10174 = vsel %vm9942, %v9528, 3712
    %v10175 = vsel %vm9943, %v9529, 3712
    %v10176 = vsel %vm9944, %v9530, 3712
    %v10177 = vsel %vm9945, %v9531, 3712
    %v10178 = vsel %vm9946, %v9532, 3712
    %v10179 = vsel %vm9947, %v9533, 3712
    %v10180 = vsel %vm9948, %v9534, 3712
    %v10181 = vsel %vm9949, %v9535, 3712
    %v10182 = vsel %vm9950, %v9536, 3712
    %v10183 = vsel %vm9951, %v9537, 3712
    %v10184 = vsel %vm9952, %v9538, 3712
    %v10185 = vsel %vm9953, %v9539, 3712
    %v10186 = vsel %vm9954, %v9540, 3712
    %v10187 = vsel %vm9955, %v9541, 3712
    %v10188 = vsel %vm9956, %v9542, 3712
    %v10189 = vsel %vm9957, %v9543, 3712
    %v10190 = vsel %vm9958, %v9544, 3712
    %v10191 = vsel %vm9959, %v9545, 3712
    %v10192 = vsel %vm9960, %v9546, 3712
    %v10193 = vsel %vm9961, %v9547, 3712
    %v10194 = vsel %vm9962, %v9519, 3712
    %v10195 = vsel %vm9963, %v9520, 3712
    %v10196 = vsel %vm9964, %v9521, 3712
    %v10197 = vsel %vm9965, %v9522, 3712
    %v10198 = vsel %vm9966, %v9523, 3712
    %v10199 = vsel %vm9967, %v9524, 3712
    %v10200 = vsel %vm9968, %v9525, 3712
    %v10201 = vsel %vm9969, %v9526, 3712
    %v10202 = vsel %vm9970, %v9527, 3712
    %v10203 = vsel %vm9971, %v9528, 3712
    %v10204 = vsel %vm9972, %v9529, 3712
    %v10205 = vsel %vm9973, %v9530, 3712
    %v10206 = vsel %vm9974, %v9531, 3712
    %v10207 = vsel %vm9975, %v9532, 3712
    %v10208 = vsel %vm9976, %v9533, 3712
    %v10209 = vsel %vm9977, %v9534, 3712
    %v10210 = vsel %vm9978, %v9535, 3712
    %v10211 = vsel %vm9979, %v9536, 3712
    %v10212 = vsel %vm9980, %v9537, 3712
    %v10213 = vsel %vm9981, %v9538, 3712
    %v10214 = vsel %vm9982, %v9539, 3712
    %v10215 = vsel %vm9983, %v9540, 3712
    %v10216 = vsel %vm9984, %v9541, 3712
    %v10217 = vsel %vm9985, %v9542, 3712
    %v10218 = vsel %vm9986, %v9543, 3712
    %v10219 = vsel %vm9987, %v9544, 3712
    %v10220 = vsel %vm9988, %v9545, 3712
    %v10221 = vsel %vm9989, %v9546, 3712
    %v10222 = vsel %vm9990, %v9547, 3712
    %v10223 = vsel %vm9991, %v9519, 3712
    %v10224 = vsel %vm9992, %v9520, 3712
    %v10225 = vsel %vm9993, %v9521, 3712
    %v10226 = vsel %vm9994, %v9522, 3712
    %v10227 = vsel %vm9995, %v9523, 3712
    %v10228 = vsel %vm9996, %v9524, 3712
    %v10229 = vsel %vm9997, %v9525, 3712
    %v10230 = vsel %vm9998, %v9526, 3712
    %v10231 = vsel %vm9999, %v9527, 3712
    %v10232 = vsel %vm10000, %v9528, 3712
    %v10233 = vsel %vm10001, %v9529, 3712
    %v10234 = vsel %vm10002, %v9530, 3712
    %v10235 = vsel %vm10003, %v9531, 3712
    %v10236 = vsel %vm10004, %v9532, 3712
    %v10237 = vsel %vm10005, %v9533, 3712
    %v10238 = vsel %vm10006, %v9534, 3712
    %v10239 = vsel %vm10007, %v9535, 3712
    %v10240 = vsel %vm10008, %v9536, 3712
    %v10241 = vsel %vm10009, %v9537, 3712
    %v10242 = vsel %vm10010, %v9538, 3712
    %v10243 = vsel %vm10011, %v9539, 3712
    %v10244 = vsel %vm10012, %v9540, 3712
    %v10245 = vsel %vm10013, %v9541, 3712
    %v10246 = vsel %vm10014, %v9542, 3712
    %v10247 = vsel %vm10015, %v9543, 3712
    %v10248 = vsel %vm10016, %v9544, 3712
    %v10249 = vsel %vm10017, %v9545, 3712
    %v10250 = vsel %vm10018, %v9546, 3712
    %v10251 = vsel %vm10019, %v9547, 3712
    %vm10252 = vcmp.lt.s32.totalorder %v10020, %v10021
    %v10253 = vsel %vm10252, %v10020, %v10021
    %vm10254 = vcmp.lt.s32.totalorder %v10253, %v10022
    %v10255 = vsel %vm10254, %v10253, %v10022
    %vm10256 = vcmp.lt.s32.totalorder %v10255, %v10023
    %v10257 = vsel %vm10256, %v10255, %v10023
    %vm10258 = vcmp.lt.s32.totalorder %v10257, %v10024
    %v10259 = vsel %vm10258, %v10257, %v10024
    %vm10260 = vcmp.lt.s32.totalorder %v10259, %v10025
    %v10261 = vsel %vm10260, %v10259, %v10025
    %vm10262 = vcmp.lt.s32.totalorder %v10261, %v10026
    %v10263 = vsel %vm10262, %v10261, %v10026
    %vm10264 = vcmp.lt.s32.totalorder %v10263, %v10027
    %v10265 = vsel %vm10264, %v10263, %v10027
    %vm10266 = vcmp.lt.s32.totalorder %v10265, %v10028
    %v10267 = vsel %vm10266, %v10265, %v10028
    %vm10268 = vcmp.lt.s32.totalorder %v10267, %v10029
    %v10269 = vsel %vm10268, %v10267, %v10029
    %vm10270 = vcmp.lt.s32.totalorder %v10269, %v10030
    %v10271 = vsel %vm10270, %v10269, %v10030
    %vm10272 = vcmp.lt.s32.totalorder %v10271, %v10031
    %v10273 = vsel %vm10272, %v10271, %v10031
    %vm10274 = vcmp.lt.s32.totalorder %v10273, %v10032
    %v10275 = vsel %vm10274, %v10273, %v10032
    %vm10276 = vcmp.lt.s32.totalorder %v10275, %v10033
    %v10277 = vsel %vm10276, %v10275, %v10033
    %vm10278 = vcmp.lt.s32.totalorder %v10277, %v10034
    %v10279 = vsel %vm10278, %v10277, %v10034
    %vm10280 = vcmp.lt.s32.totalorder %v10279, %v10035
    %v10281 = vsel %vm10280, %v10279, %v10035
    %vm10282 = vcmp.lt.s32.totalorder %v10281, %v10036
    %v10283 = vsel %vm10282, %v10281, %v10036
    %vm10284 = vcmp.lt.s32.totalorder %v10283, %v10037
    %v10285 = vsel %vm10284, %v10283, %v10037
    %vm10286 = vcmp.lt.s32.totalorder %v10285, %v10038
    %v10287 = vsel %vm10286, %v10285, %v10038
    %vm10288 = vcmp.lt.s32.totalorder %v10287, %v10039
    %v10289 = vsel %vm10288, %v10287, %v10039
    %vm10290 = vcmp.lt.s32.totalorder %v10289, %v10040
    %v10291 = vsel %vm10290, %v10289, %v10040
    %vm10292 = vcmp.lt.s32.totalorder %v10291, %v10041
    %v10293 = vsel %vm10292, %v10291, %v10041
    %vm10294 = vcmp.lt.s32.totalorder %v10293, %v10042
    %v10295 = vsel %vm10294, %v10293, %v10042
    %vm10296 = vcmp.lt.s32.totalorder %v10295, %v10043
    %v10297 = vsel %vm10296, %v10295, %v10043
    %vm10298 = vcmp.lt.s32.totalorder %v10297, %v10044
    %v10299 = vsel %vm10298, %v10297, %v10044
    %vm10300 = vcmp.lt.s32.totalorder %v10299, %v10045
    %v10301 = vsel %vm10300, %v10299, %v10045
    %vm10302 = vcmp.lt.s32.totalorder %v10301, %v10046
    %v10303 = vsel %vm10302, %v10301, %v10046
    %vm10304 = vcmp.lt.s32.totalorder %v10303, %v10047
    %v10305 = vsel %vm10304, %v10303, %v10047
    %vm10306 = vcmp.lt.s32.totalorder %v10305, %v10048
    %v10307 = vsel %vm10306, %v10305, %v10048
    %v10308 = vand.u32 %v10307, 65535
    %v10309 = vshra.s32 %v10307, 16
    %v10310 = vcvt.s32.f32 %v10308
    %v10311 = vcvt.s32.f32 %v10309
    %10312 = vmin.xlane.f32.xlu0 %v10311
    %v10313 = vpop.xlane.xlu0 %10312
    %vm10314 = vcmp.eq.f32.partialorder %v10311, %v10313
    %v10315 = vsel %vm10314, %v10310, inf
    %10316 = vmin.xlane.f32.xlu0 %v10315
    %v10317 = vpop.xlane.xlu0 %10316
    %v10318 = vcvt.f32.s32 %v10317
    %v10319 = vcvt.f32.s32 %v10313
    %v10320 = vshll.u32 %v10319, 16
    %v10321 = vadd.s32 %v10320, %v10318
    %vm10322 = vcmp.lt.s32.totalorder %v10049, %v10050
    %v10323 = vsel %vm10322, %v10049, %v10050
    %vm10324 = vcmp.lt.s32.totalorder %v10323, %v10051
    %v10325 = vsel %vm10324, %v10323, %v10051
    %vm10326 = vcmp.lt.s32.totalorder %v10325, %v10052
    %v10327 = vsel %vm10326, %v10325, %v10052
    %vm10328 = vcmp.lt.s32.totalorder %v10327, %v10053
    %v10329 = vsel %vm10328, %v10327, %v10053
    %vm10330 = vcmp.lt.s32.totalorder %v10329, %v10054
    %v10331 = vsel %vm10330, %v10329, %v10054
    %vm10332 = vcmp.lt.s32.totalorder %v10331, %v10055
    %v10333 = vsel %vm10332, %v10331, %v10055
    %vm10334 = vcmp.lt.s32.totalorder %v10333, %v10056
    %v10335 = vsel %vm10334, %v10333, %v10056
    %vm10336 = vcmp.lt.s32.totalorder %v10335, %v10057
    %v10337 = vsel %vm10336, %v10335, %v10057
    %vm10338 = vcmp.lt.s32.totalorder %v10337, %v10058
    %v10339 = vsel %vm10338, %v10337, %v10058
    %vm10340 = vcmp.lt.s32.totalorder %v10339, %v10059
    %v10341 = vsel %vm10340, %v10339, %v10059
    %vm10342 = vcmp.lt.s32.totalorder %v10341, %v10060
    %v10343 = vsel %vm10342, %v10341, %v10060
    %vm10344 = vcmp.lt.s32.totalorder %v10343, %v10061
    %v10345 = vsel %vm10344, %v10343, %v10061
    %vm10346 = vcmp.lt.s32.totalorder %v10345, %v10062
    %v10347 = vsel %vm10346, %v10345, %v10062
    %vm10348 = vcmp.lt.s32.totalorder %v10347, %v10063
    %v10349 = vsel %vm10348, %v10347, %v10063
    %vm10350 = vcmp.lt.s32.totalorder %v10349, %v10064
    %v10351 = vsel %vm10350, %v10349, %v10064
    %vm10352 = vcmp.lt.s32.totalorder %v10351, %v10065
    %v10353 = vsel %vm10352, %v10351, %v10065
    %vm10354 = vcmp.lt.s32.totalorder %v10353, %v10066
    %v10355 = vsel %vm10354, %v10353, %v10066
    %vm10356 = vcmp.lt.s32.totalorder %v10355, %v10067
    %v10357 = vsel %vm10356, %v10355, %v10067
    %vm10358 = vcmp.lt.s32.totalorder %v10357, %v10068
    %v10359 = vsel %vm10358, %v10357, %v10068
    %vm10360 = vcmp.lt.s32.totalorder %v10359, %v10069
    %v10361 = vsel %vm10360, %v10359, %v10069
    %vm10362 = vcmp.lt.s32.totalorder %v10361, %v10070
    %v10363 = vsel %vm10362, %v10361, %v10070
    %vm10364 = vcmp.lt.s32.totalorder %v10363, %v10071
    %v10365 = vsel %vm10364, %v10363, %v10071
    %vm10366 = vcmp.lt.s32.totalorder %v10365, %v10072
    %v10367 = vsel %vm10366, %v10365, %v10072
    %vm10368 = vcmp.lt.s32.totalorder %v10367, %v10073
    %v10369 = vsel %vm10368, %v10367, %v10073
    %vm10370 = vcmp.lt.s32.totalorder %v10369, %v10074
    %v10371 = vsel %vm10370, %v10369, %v10074
    %vm10372 = vcmp.lt.s32.totalorder %v10371, %v10075
    %v10373 = vsel %vm10372, %v10371, %v10075
    %vm10374 = vcmp.lt.s32.totalorder %v10373, %v10076
    %v10375 = vsel %vm10374, %v10373, %v10076
    %vm10376 = vcmp.lt.s32.totalorder %v10375, %v10077
    %v10377 = vsel %vm10376, %v10375, %v10077
    %v10378 = vand.u32 %v10377, 65535
    %v10379 = vshra.s32 %v10377, 16
    %v10380 = vcvt.s32.f32 %v10378
    %v10381 = vcvt.s32.f32 %v10379
    %10382 = vmin.xlane.f32.xlu0 %v10381
    %v10383 = vpop.xlane.xlu0 %10382
    %vm10384 = vcmp.eq.f32.partialorder %v10381, %v10383
    %v10385 = vsel %vm10384, %v10380, inf
    %10386 = vmin.xlane.f32.xlu0 %v10385
    %v10387 = vpop.xlane.xlu0 %10386
    %v10388 = vcvt.f32.s32 %v10387
    %v10389 = vcvt.f32.s32 %v10383
    %v10390 = vshll.u32 %v10389, 16
    %v10391 = vadd.s32 %v10390, %v10388
    %vm10392 = vcmp.lt.s32.totalorder %v10078, %v10079
    %v10393 = vsel %vm10392, %v10078, %v10079
    %vm10394 = vcmp.lt.s32.totalorder %v10393, %v10080
    %v10395 = vsel %vm10394, %v10393, %v10080
    %vm10396 = vcmp.lt.s32.totalorder %v10395, %v10081
    %v10397 = vsel %vm10396, %v10395, %v10081
    %vm10398 = vcmp.lt.s32.totalorder %v10397, %v10082
    %v10399 = vsel %vm10398, %v10397, %v10082
    %vm10400 = vcmp.lt.s32.totalorder %v10399, %v10083
    %v10401 = vsel %vm10400, %v10399, %v10083
    %vm10402 = vcmp.lt.s32.totalorder %v10401, %v10084
    %v10403 = vsel %vm10402, %v10401, %v10084
    %vm10404 = vcmp.lt.s32.totalorder %v10403, %v10085
    %v10405 = vsel %vm10404, %v10403, %v10085
    %vm10406 = vcmp.lt.s32.totalorder %v10405, %v10086
    %v10407 = vsel %vm10406, %v10405, %v10086
    %vm10408 = vcmp.lt.s32.totalorder %v10407, %v10087
    %v10409 = vsel %vm10408, %v10407, %v10087
    %vm10410 = vcmp.lt.s32.totalorder %v10409, %v10088
    %v10411 = vsel %vm10410, %v10409, %v10088
    %vm10412 = vcmp.lt.s32.totalorder %v10411, %v10089
    %v10413 = vsel %vm10412, %v10411, %v10089
    %vm10414 = vcmp.lt.s32.totalorder %v10413, %v10090
    %v10415 = vsel %vm10414, %v10413, %v10090
    %vm10416 = vcmp.lt.s32.totalorder %v10415, %v10091
    %v10417 = vsel %vm10416, %v10415, %v10091
    %vm10418 = vcmp.lt.s32.totalorder %v10417, %v10092
    %v10419 = vsel %vm10418, %v10417, %v10092
    %vm10420 = vcmp.lt.s32.totalorder %v10419, %v10093
    %v10421 = vsel %vm10420, %v10419, %v10093
    %vm10422 = vcmp.lt.s32.totalorder %v10421, %v10094
    %v10423 = vsel %vm10422, %v10421, %v10094
    %vm10424 = vcmp.lt.s32.totalorder %v10423, %v10095
    %v10425 = vsel %vm10424, %v10423, %v10095
    %vm10426 = vcmp.lt.s32.totalorder %v10425, %v10096
    %v10427 = vsel %vm10426, %v10425, %v10096
    %vm10428 = vcmp.lt.s32.totalorder %v10427, %v10097
    %v10429 = vsel %vm10428, %v10427, %v10097
    %vm10430 = vcmp.lt.s32.totalorder %v10429, %v10098
    %v10431 = vsel %vm10430, %v10429, %v10098
    %vm10432 = vcmp.lt.s32.totalorder %v10431, %v10099
    %v10433 = vsel %vm10432, %v10431, %v10099
    %vm10434 = vcmp.lt.s32.totalorder %v10433, %v10100
    %v10435 = vsel %vm10434, %v10433, %v10100
    %vm10436 = vcmp.lt.s32.totalorder %v10435, %v10101
    %v10437 = vsel %vm10436, %v10435, %v10101
    %vm10438 = vcmp.lt.s32.totalorder %v10437, %v10102
    %v10439 = vsel %vm10438, %v10437, %v10102
    %vm10440 = vcmp.lt.s32.totalorder %v10439, %v10103
    %v10441 = vsel %vm10440, %v10439, %v10103
    %vm10442 = vcmp.lt.s32.totalorder %v10441, %v10104
    %v10443 = vsel %vm10442, %v10441, %v10104
    %vm10444 = vcmp.lt.s32.totalorder %v10443, %v10105
    %v10445 = vsel %vm10444, %v10443, %v10105
    %vm10446 = vcmp.lt.s32.totalorder %v10445, %v10106
    %v10447 = vsel %vm10446, %v10445, %v10106
    %v10448 = vand.u32 %v10447, 65535
    %v10449 = vshra.s32 %v10447, 16
    %v10450 = vcvt.s32.f32 %v10448
    %v10451 = vcvt.s32.f32 %v10449
    %10452 = vmin.xlane.f32.xlu0 %v10451
    %v10453 = vpop.xlane.xlu0 %10452
    %vm10454 = vcmp.eq.f32.partialorder %v10451, %v10453
    %v10455 = vsel %vm10454, %v10450, inf
    %10456 = vmin.xlane.f32.xlu0 %v10455
    %v10457 = vpop.xlane.xlu0 %10456
    %v10458 = vcvt.f32.s32 %v10457
    %v10459 = vcvt.f32.s32 %v10453
    %v10460 = vshll.u32 %v10459, 16
    %v10461 = vadd.s32 %v10460, %v10458
    %vm10462 = vcmp.lt.s32.totalorder %v10107, %v10108
    %v10463 = vsel %vm10462, %v10107, %v10108
    %vm10464 = vcmp.lt.s32.totalorder %v10463, %v10109
    %v10465 = vsel %vm10464, %v10463, %v10109
    %vm10466 = vcmp.lt.s32.totalorder %v10465, %v10110
    %v10467 = vsel %vm10466, %v10465, %v10110
    %vm10468 = vcmp.lt.s32.totalorder %v10467, %v10111
    %v10469 = vsel %vm10468, %v10467, %v10111
    %vm10470 = vcmp.lt.s32.totalorder %v10469, %v10112
    %v10471 = vsel %vm10470, %v10469, %v10112
    %vm10472 = vcmp.lt.s32.totalorder %v10471, %v10113
    %v10473 = vsel %vm10472, %v10471, %v10113
    %vm10474 = vcmp.lt.s32.totalorder %v10473, %v10114
    %v10475 = vsel %vm10474, %v10473, %v10114
    %vm10476 = vcmp.lt.s32.totalorder %v10475, %v10115
    %v10477 = vsel %vm10476, %v10475, %v10115
    %vm10478 = vcmp.lt.s32.totalorder %v10477, %v10116
    %v10479 = vsel %vm10478, %v10477, %v10116
    %vm10480 = vcmp.lt.s32.totalorder %v10479, %v10117
    %v10481 = vsel %vm10480, %v10479, %v10117
    %vm10482 = vcmp.lt.s32.totalorder %v10481, %v10118
    %v10483 = vsel %vm10482, %v10481, %v10118
    %vm10484 = vcmp.lt.s32.totalorder %v10483, %v10119
    %v10485 = vsel %vm10484, %v10483, %v10119
    %vm10486 = vcmp.lt.s32.totalorder %v10485, %v10120
    %v10487 = vsel %vm10486, %v10485, %v10120
    %vm10488 = vcmp.lt.s32.totalorder %v10487, %v10121
    %v10489 = vsel %vm10488, %v10487, %v10121
    %vm10490 = vcmp.lt.s32.totalorder %v10489, %v10122
    %v10491 = vsel %vm10490, %v10489, %v10122
    %vm10492 = vcmp.lt.s32.totalorder %v10491, %v10123
    %v10493 = vsel %vm10492, %v10491, %v10123
    %vm10494 = vcmp.lt.s32.totalorder %v10493, %v10124
    %v10495 = vsel %vm10494, %v10493, %v10124
    %vm10496 = vcmp.lt.s32.totalorder %v10495, %v10125
    %v10497 = vsel %vm10496, %v10495, %v10125
    %vm10498 = vcmp.lt.s32.totalorder %v10497, %v10126
    %v10499 = vsel %vm10498, %v10497, %v10126
    %vm10500 = vcmp.lt.s32.totalorder %v10499, %v10127
    %v10501 = vsel %vm10500, %v10499, %v10127
    %vm10502 = vcmp.lt.s32.totalorder %v10501, %v10128
    %v10503 = vsel %vm10502, %v10501, %v10128
    %vm10504 = vcmp.lt.s32.totalorder %v10503, %v10129
    %v10505 = vsel %vm10504, %v10503, %v10129
    %vm10506 = vcmp.lt.s32.totalorder %v10505, %v10130
    %v10507 = vsel %vm10506, %v10505, %v10130
    %vm10508 = vcmp.lt.s32.totalorder %v10507, %v10131
    %v10509 = vsel %vm10508, %v10507, %v10131
    %vm10510 = vcmp.lt.s32.totalorder %v10509, %v10132
    %v10511 = vsel %vm10510, %v10509, %v10132
    %vm10512 = vcmp.lt.s32.totalorder %v10511, %v10133
    %v10513 = vsel %vm10512, %v10511, %v10133
    %vm10514 = vcmp.lt.s32.totalorder %v10513, %v10134
    %v10515 = vsel %vm10514, %v10513, %v10134
    %vm10516 = vcmp.lt.s32.totalorder %v10515, %v10135
    %v10517 = vsel %vm10516, %v10515, %v10135
    %v10518 = vand.u32 %v10517, 65535
    %v10519 = vshra.s32 %v10517, 16
    %v10520 = vcvt.s32.f32 %v10518
    %v10521 = vcvt.s32.f32 %v10519
    %10522 = vmin.xlane.f32.xlu0 %v10521
    %v10523 = vpop.xlane.xlu0 %10522
    %vm10524 = vcmp.eq.f32.partialorder %v10521, %v10523
    %v10525 = vsel %vm10524, %v10520, inf
    %10526 = vmin.xlane.f32.xlu0 %v10525
    %v10527 = vpop.xlane.xlu0 %10526
    %v10528 = vcvt.f32.s32 %v10527
    %v10529 = vcvt.f32.s32 %v10523
    %v10530 = vshll.u32 %v10529, 16
    %v10531 = vadd.s32 %v10530, %v10528
    %vm10532 = vcmp.lt.s32.totalorder %v10136, %v10137
    %v10533 = vsel %vm10532, %v10136, %v10137
    %vm10534 = vcmp.lt.s32.totalorder %v10533, %v10138
    %v10535 = vsel %vm10534, %v10533, %v10138
    %vm10536 = vcmp.lt.s32.totalorder %v10535, %v10139
    %v10537 = vsel %vm10536, %v10535, %v10139
    %vm10538 = vcmp.lt.s32.totalorder %v10537, %v10140
    %v10539 = vsel %vm10538, %v10537, %v10140
    %vm10540 = vcmp.lt.s32.totalorder %v10539, %v10141
    %v10541 = vsel %vm10540, %v10539, %v10141
    %vm10542 = vcmp.lt.s32.totalorder %v10541, %v10142
    %v10543 = vsel %vm10542, %v10541, %v10142
    %vm10544 = vcmp.lt.s32.totalorder %v10543, %v10143
    %v10545 = vsel %vm10544, %v10543, %v10143
    %vm10546 = vcmp.lt.s32.totalorder %v10545, %v10144
    %v10547 = vsel %vm10546, %v10545, %v10144
    %vm10548 = vcmp.lt.s32.totalorder %v10547, %v10145
    %v10549 = vsel %vm10548, %v10547, %v10145
    %vm10550 = vcmp.lt.s32.totalorder %v10549, %v10146
    %v10551 = vsel %vm10550, %v10549, %v10146
    %vm10552 = vcmp.lt.s32.totalorder %v10551, %v10147
    %v10553 = vsel %vm10552, %v10551, %v10147
    %vm10554 = vcmp.lt.s32.totalorder %v10553, %v10148
    %v10555 = vsel %vm10554, %v10553, %v10148
    %vm10556 = vcmp.lt.s32.totalorder %v10555, %v10149
    %v10557 = vsel %vm10556, %v10555, %v10149
    %vm10558 = vcmp.lt.s32.totalorder %v10557, %v10150
    %v10559 = vsel %vm10558, %v10557, %v10150
    %vm10560 = vcmp.lt.s32.totalorder %v10559, %v10151
    %v10561 = vsel %vm10560, %v10559, %v10151
    %vm10562 = vcmp.lt.s32.totalorder %v10561, %v10152
    %v10563 = vsel %vm10562, %v10561, %v10152
    %vm10564 = vcmp.lt.s32.totalorder %v10563, %v10153
    %v10565 = vsel %vm10564, %v10563, %v10153
    %vm10566 = vcmp.lt.s32.totalorder %v10565, %v10154
    %v10567 = vsel %vm10566, %v10565, %v10154
    %vm10568 = vcmp.lt.s32.totalorder %v10567, %v10155
    %v10569 = vsel %vm10568, %v10567, %v10155
    %vm10570 = vcmp.lt.s32.totalorder %v10569, %v10156
    %v10571 = vsel %vm10570, %v10569, %v10156
    %vm10572 = vcmp.lt.s32.totalorder %v10571, %v10157
    %v10573 = vsel %vm10572, %v10571, %v10157
    %vm10574 = vcmp.lt.s32.totalorder %v10573, %v10158
    %v10575 = vsel %vm10574, %v10573, %v10158
    %vm10576 = vcmp.lt.s32.totalorder %v10575, %v10159
    %v10577 = vsel %vm10576, %v10575, %v10159
    %vm10578 = vcmp.lt.s32.totalorder %v10577, %v10160
    %v10579 = vsel %vm10578, %v10577, %v10160
    %vm10580 = vcmp.lt.s32.totalorder %v10579, %v10161
    %v10581 = vsel %vm10580, %v10579, %v10161
    %vm10582 = vcmp.lt.s32.totalorder %v10581, %v10162
    %v10583 = vsel %vm10582, %v10581, %v10162
    %vm10584 = vcmp.lt.s32.totalorder %v10583, %v10163
    %v10585 = vsel %vm10584, %v10583, %v10163
    %vm10586 = vcmp.lt.s32.totalorder %v10585, %v10164
    %v10587 = vsel %vm10586, %v10585, %v10164
    %v10588 = vand.u32 %v10587, 65535
    %v10589 = vshra.s32 %v10587, 16
    %v10590 = vcvt.s32.f32 %v10588
    %v10591 = vcvt.s32.f32 %v10589
    %10592 = vmin.xlane.f32.xlu0 %v10591
    %v10593 = vpop.xlane.xlu0 %10592
    %vm10594 = vcmp.eq.f32.partialorder %v10591, %v10593
    %v10595 = vsel %vm10594, %v10590, inf
    %10596 = vmin.xlane.f32.xlu0 %v10595
    %v10597 = vpop.xlane.xlu0 %10596
    %v10598 = vcvt.f32.s32 %v10597
    %v10599 = vcvt.f32.s32 %v10593
    %v10600 = vshll.u32 %v10599, 16
    %v10601 = vadd.s32 %v10600, %v10598
    %vm10602 = vcmp.lt.s32.totalorder %v10165, %v10166
    %v10603 = vsel %vm10602, %v10165, %v10166
    %vm10604 = vcmp.lt.s32.totalorder %v10603, %v10167
    %v10605 = vsel %vm10604, %v10603, %v10167
    %vm10606 = vcmp.lt.s32.totalorder %v10605, %v10168
    %v10607 = vsel %vm10606, %v10605, %v10168
    %vm10608 = vcmp.lt.s32.totalorder %v10607, %v10169
    %v10609 = vsel %vm10608, %v10607, %v10169
    %vm10610 = vcmp.lt.s32.totalorder %v10609, %v10170
    %v10611 = vsel %vm10610, %v10609, %v10170
    %vm10612 = vcmp.lt.s32.totalorder %v10611, %v10171
    %v10613 = vsel %vm10612, %v10611, %v10171
    %vm10614 = vcmp.lt.s32.totalorder %v10613, %v10172
    %v10615 = vsel %vm10614, %v10613, %v10172
    %vm10616 = vcmp.lt.s32.totalorder %v10615, %v10173
    %v10617 = vsel %vm10616, %v10615, %v10173
    %vm10618 = vcmp.lt.s32.totalorder %v10617, %v10174
    %v10619 = vsel %vm10618, %v10617, %v10174
    %vm10620 = vcmp.lt.s32.totalorder %v10619, %v10175
    %v10621 = vsel %vm10620, %v10619, %v10175
    %vm10622 = vcmp.lt.s32.totalorder %v10621, %v10176
    %v10623 = vsel %vm10622, %v10621, %v10176
    %vm10624 = vcmp.lt.s32.totalorder %v10623, %v10177
    %v10625 = vsel %vm10624, %v10623, %v10177
    %vm10626 = vcmp.lt.s32.totalorder %v10625, %v10178
    %v10627 = vsel %vm10626, %v10625, %v10178
    %vm10628 = vcmp.lt.s32.totalorder %v10627, %v10179
    %v10629 = vsel %vm10628, %v10627, %v10179
    %vm10630 = vcmp.lt.s32.totalorder %v10629, %v10180
    %v10631 = vsel %vm10630, %v10629, %v10180
    %vm10632 = vcmp.lt.s32.totalorder %v10631, %v10181
    %v10633 = vsel %vm10632, %v10631, %v10181
    %vm10634 = vcmp.lt.s32.totalorder %v10633, %v10182
    %v10635 = vsel %vm10634, %v10633, %v10182
    %vm10636 = vcmp.lt.s32.totalorder %v10635, %v10183
    %v10637 = vsel %vm10636, %v10635, %v10183
    %vm10638 = vcmp.lt.s32.totalorder %v10637, %v10184
    %v10639 = vsel %vm10638, %v10637, %v10184
    %vm10640 = vcmp.lt.s32.totalorder %v10639, %v10185
    %v10641 = vsel %vm10640, %v10639, %v10185
    %vm10642 = vcmp.lt.s32.totalorder %v10641, %v10186
    %v10643 = vsel %vm10642, %v10641, %v10186
    %vm10644 = vcmp.lt.s32.totalorder %v10643, %v10187
    %v10645 = vsel %vm10644, %v10643, %v10187
    %vm10646 = vcmp.lt.s32.totalorder %v10645, %v10188
    %v10647 = vsel %vm10646, %v10645, %v10188
    %vm10648 = vcmp.lt.s32.totalorder %v10647, %v10189
    %v10649 = vsel %vm10648, %v10647, %v10189
    %vm10650 = vcmp.lt.s32.totalorder %v10649, %v10190
    %v10651 = vsel %vm10650, %v10649, %v10190
    %vm10652 = vcmp.lt.s32.totalorder %v10651, %v10191
    %v10653 = vsel %vm10652, %v10651, %v10191
    %vm10654 = vcmp.lt.s32.totalorder %v10653, %v10192
    %v10655 = vsel %vm10654, %v10653, %v10192
    %vm10656 = vcmp.lt.s32.totalorder %v10655, %v10193
    %v10657 = vsel %vm10656, %v10655, %v10193
    %v10658 = vand.u32 %v10657, 65535
    %v10659 = vshra.s32 %v10657, 16
    %v10660 = vcvt.s32.f32 %v10658
    %v10661 = vcvt.s32.f32 %v10659
    %10662 = vmin.xlane.f32.xlu0 %v10661
    %v10663 = vpop.xlane.xlu0 %10662
    %vm10664 = vcmp.eq.f32.partialorder %v10661, %v10663
    %v10665 = vsel %vm10664, %v10660, inf
    %10666 = vmin.xlane.f32.xlu0 %v10665
    %v10667 = vpop.xlane.xlu0 %10666
    %v10668 = vcvt.f32.s32 %v10667
    %v10669 = vcvt.f32.s32 %v10663
    %v10670 = vshll.u32 %v10669, 16
    %v10671 = vadd.s32 %v10670, %v10668
    %vm10672 = vcmp.lt.s32.totalorder %v10194, %v10195
    %v10673 = vsel %vm10672, %v10194, %v10195
    %vm10674 = vcmp.lt.s32.totalorder %v10673, %v10196
    %v10675 = vsel %vm10674, %v10673, %v10196
    %vm10676 = vcmp.lt.s32.totalorder %v10675, %v10197
    %v10677 = vsel %vm10676, %v10675, %v10197
    %vm10678 = vcmp.lt.s32.totalorder %v10677, %v10198
    %v10679 = vsel %vm10678, %v10677, %v10198
    %vm10680 = vcmp.lt.s32.totalorder %v10679, %v10199
    %v10681 = vsel %vm10680, %v10679, %v10199
    %vm10682 = vcmp.lt.s32.totalorder %v10681, %v10200
    %v10683 = vsel %vm10682, %v10681, %v10200
    %vm10684 = vcmp.lt.s32.totalorder %v10683, %v10201
    %v10685 = vsel %vm10684, %v10683, %v10201
    %vm10686 = vcmp.lt.s32.totalorder %v10685, %v10202
    %v10687 = vsel %vm10686, %v10685, %v10202
    %vm10688 = vcmp.lt.s32.totalorder %v10687, %v10203
    %v10689 = vsel %vm10688, %v10687, %v10203
    %vm10690 = vcmp.lt.s32.totalorder %v10689, %v10204
    %v10691 = vsel %vm10690, %v10689, %v10204
    %vm10692 = vcmp.lt.s32.totalorder %v10691, %v10205
    %v10693 = vsel %vm10692, %v10691, %v10205
    %vm10694 = vcmp.lt.s32.totalorder %v10693, %v10206
    %v10695 = vsel %vm10694, %v10693, %v10206
    %vm10696 = vcmp.lt.s32.totalorder %v10695, %v10207
    %v10697 = vsel %vm10696, %v10695, %v10207
    %vm10698 = vcmp.lt.s32.totalorder %v10697, %v10208
    %v10699 = vsel %vm10698, %v10697, %v10208
    %vm10700 = vcmp.lt.s32.totalorder %v10699, %v10209
    %v10701 = vsel %vm10700, %v10699, %v10209
    %vm10702 = vcmp.lt.s32.totalorder %v10701, %v10210
    %v10703 = vsel %vm10702, %v10701, %v10210
    %vm10704 = vcmp.lt.s32.totalorder %v10703, %v10211
    %v10705 = vsel %vm10704, %v10703, %v10211
    %vm10706 = vcmp.lt.s32.totalorder %v10705, %v10212
    %v10707 = vsel %vm10706, %v10705, %v10212
    %vm10708 = vcmp.lt.s32.totalorder %v10707, %v10213
    %v10709 = vsel %vm10708, %v10707, %v10213
    %vm10710 = vcmp.lt.s32.totalorder %v10709, %v10214
    %v10711 = vsel %vm10710, %v10709, %v10214
    %vm10712 = vcmp.lt.s32.totalorder %v10711, %v10215
    %v10713 = vsel %vm10712, %v10711, %v10215
    %vm10714 = vcmp.lt.s32.totalorder %v10713, %v10216
    %v10715 = vsel %vm10714, %v10713, %v10216
    %vm10716 = vcmp.lt.s32.totalorder %v10715, %v10217
    %v10717 = vsel %vm10716, %v10715, %v10217
    %vm10718 = vcmp.lt.s32.totalorder %v10717, %v10218
    %v10719 = vsel %vm10718, %v10717, %v10218
    %vm10720 = vcmp.lt.s32.totalorder %v10719, %v10219
    %v10721 = vsel %vm10720, %v10719, %v10219
    %vm10722 = vcmp.lt.s32.totalorder %v10721, %v10220
    %v10723 = vsel %vm10722, %v10721, %v10220
    %vm10724 = vcmp.lt.s32.totalorder %v10723, %v10221
    %v10725 = vsel %vm10724, %v10723, %v10221
    %vm10726 = vcmp.lt.s32.totalorder %v10725, %v10222
    %v10727 = vsel %vm10726, %v10725, %v10222
    %v10728 = vand.u32 %v10727, 65535
    %v10729 = vshra.s32 %v10727, 16
    %v10730 = vcvt.s32.f32 %v10728
    %v10731 = vcvt.s32.f32 %v10729
    %10732 = vmin.xlane.f32.xlu0 %v10731
    %v10733 = vpop.xlane.xlu0 %10732
    %vm10734 = vcmp.eq.f32.partialorder %v10731, %v10733
    %v10735 = vsel %vm10734, %v10730, inf
    %10736 = vmin.xlane.f32.xlu0 %v10735
    %v10737 = vpop.xlane.xlu0 %10736
    %v10738 = vcvt.f32.s32 %v10737
    %v10739 = vcvt.f32.s32 %v10733
    %v10740 = vshll.u32 %v10739, 16
    %v10741 = vadd.s32 %v10740, %v10738
    %vm10742 = vcmp.lt.s32.totalorder %v10223, %v10224
    %v10743 = vsel %vm10742, %v10223, %v10224
    %vm10744 = vcmp.lt.s32.totalorder %v10743, %v10225
    %v10745 = vsel %vm10744, %v10743, %v10225
    %vm10746 = vcmp.lt.s32.totalorder %v10745, %v10226
    %v10747 = vsel %vm10746, %v10745, %v10226
    %vm10748 = vcmp.lt.s32.totalorder %v10747, %v10227
    %v10749 = vsel %vm10748, %v10747, %v10227
    %vm10750 = vcmp.lt.s32.totalorder %v10749, %v10228
    %v10751 = vsel %vm10750, %v10749, %v10228
    %vm10752 = vcmp.lt.s32.totalorder %v10751, %v10229
    %v10753 = vsel %vm10752, %v10751, %v10229
    %vm10754 = vcmp.lt.s32.totalorder %v10753, %v10230
    %v10755 = vsel %vm10754, %v10753, %v10230
    %vm10756 = vcmp.lt.s32.totalorder %v10755, %v10231
    %v10757 = vsel %vm10756, %v10755, %v10231
    %vm10758 = vcmp.lt.s32.totalorder %v10757, %v10232
    %v10759 = vsel %vm10758, %v10757, %v10232
    %vm10760 = vcmp.lt.s32.totalorder %v10759, %v10233
    %v10761 = vsel %vm10760, %v10759, %v10233
    %vm10762 = vcmp.lt.s32.totalorder %v10761, %v10234
    %v10763 = vsel %vm10762, %v10761, %v10234
    %vm10764 = vcmp.lt.s32.totalorder %v10763, %v10235
    %v10765 = vsel %vm10764, %v10763, %v10235
    %vm10766 = vcmp.lt.s32.totalorder %v10765, %v10236
    %v10767 = vsel %vm10766, %v10765, %v10236
    %vm10768 = vcmp.lt.s32.totalorder %v10767, %v10237
    %v10769 = vsel %vm10768, %v10767, %v10237
    %vm10770 = vcmp.lt.s32.totalorder %v10769, %v10238
    %v10771 = vsel %vm10770, %v10769, %v10238
    %vm10772 = vcmp.lt.s32.totalorder %v10771, %v10239
    %v10773 = vsel %vm10772, %v10771, %v10239
    %vm10774 = vcmp.lt.s32.totalorder %v10773, %v10240
    %v10775 = vsel %vm10774, %v10773, %v10240
    %vm10776 = vcmp.lt.s32.totalorder %v10775, %v10241
    %v10777 = vsel %vm10776, %v10775, %v10241
    %vm10778 = vcmp.lt.s32.totalorder %v10777, %v10242
    %v10779 = vsel %vm10778, %v10777, %v10242
    %vm10780 = vcmp.lt.s32.totalorder %v10779, %v10243
    %v10781 = vsel %vm10780, %v10779, %v10243
    %vm10782 = vcmp.lt.s32.totalorder %v10781, %v10244
    %v10783 = vsel %vm10782, %v10781, %v10244
    %vm10784 = vcmp.lt.s32.totalorder %v10783, %v10245
    %v10785 = vsel %vm10784, %v10783, %v10245
    %vm10786 = vcmp.lt.s32.totalorder %v10785, %v10246
    %v10787 = vsel %vm10786, %v10785, %v10246
    %vm10788 = vcmp.lt.s32.totalorder %v10787, %v10247
    %v10789 = vsel %vm10788, %v10787, %v10247
    %vm10790 = vcmp.lt.s32.totalorder %v10789, %v10248
    %v10791 = vsel %vm10790, %v10789, %v10248
    %vm10792 = vcmp.lt.s32.totalorder %v10791, %v10249
    %v10793 = vsel %vm10792, %v10791, %v10249
    %vm10794 = vcmp.lt.s32.totalorder %v10793, %v10250
    %v10795 = vsel %vm10794, %v10793, %v10250
    %vm10796 = vcmp.lt.s32.totalorder %v10795, %v10251
    %v10797 = vsel %vm10796, %v10795, %v10251
    %v10798 = vand.u32 %v10797, 65535
    %v10799 = vshra.s32 %v10797, 16
    %v10800 = vcvt.s32.f32 %v10798
    %v10801 = vcvt.s32.f32 %v10799
    %10802 = vmin.xlane.f32.xlu0 %v10801
    %v10803 = vpop.xlane.xlu0 %10802
    %vm10804 = vcmp.eq.f32.partialorder %v10801, %v10803
    %v10805 = vsel %vm10804, %v10800, inf
    %10806 = vmin.xlane.f32.xlu0 %v10805
    %v10807 = vpop.xlane.xlu0 %10806
    %v10808 = vcvt.f32.s32 %v10807
    %v10809 = vcvt.f32.s32 %v10803
    %v10810 = vshll.u32 %v10809, 16
    %v10811 = vadd.s32 %v10810, %v10808
    %vm10812 = vcmask 7168
    %10813 = vst.msk [vmem:[%s61] sm:$0xff] %vm10812, %v10321
    %10814 = vst.msk [vmem:[%s61 + $0x8] sm:$0xff] %vm10812, %v10391
    %10815 = vst.msk [vmem:[%s61 + $0x10] sm:$0xff] %vm10812, %v10461
    %10816 = vst.msk [vmem:[%s61 + $0x18] sm:$0xff] %vm10812, %v10531
    %10817 = vst.msk [vmem:[%s61 + $0x20] sm:$0xff] %vm10812, %v10601
    %10818 = vst.msk [vmem:[%s61 + $0x28] sm:$0xff] %vm10812, %v10671
    %10819 = vst.msk [vmem:[%s61 + $0x30] sm:$0xff] %vm10812, %v10741
    %10820 = vst.msk [vmem:[%s61 + $0x38] sm:$0xff] %vm10812, %v10811
    %v10821 = vld [vmem:[%s55] sm:$0xff]
    %v10822 = vld [vmem:[%s55 + $0x8] sm:$0xff]
    %v10823 = vld [vmem:[%s55 + $0x10] sm:$0xff]
    %v10824 = vld [vmem:[%s55 + $0x18] sm:$0xff]
    %v10825 = vld [vmem:[%s55 + $0x20] sm:$0xff]
    %v10826 = vld [vmem:[%s55 + $0x28] sm:$0xff]
    %v10827 = vld [vmem:[%s55 + $0x30] sm:$0xff]
    %v10828 = vld [vmem:[%s55 + $0x38] sm:$0xff]
    %v10829 = vld [vmem:[%s55 + $0x40] sm:$0xff]
    %v10830 = vld [vmem:[%s55 + $0x48] sm:$0xff]
    %v10831 = vld [vmem:[%s55 + $0x50] sm:$0xff]
    %v10832 = vld [vmem:[%s55 + $0x58] sm:$0xff]
    %v10833 = vld [vmem:[%s55 + $0x60] sm:$0xff]
    %v10834 = vld [vmem:[%s55 + $0x68] sm:$0xff]
    %v10835 = vld [vmem:[%s55 + $0x70] sm:$0xff]
    %v10836 = vld [vmem:[%s55 + $0x78] sm:$0xff]
    %v10837 = vld [vmem:[%s57] sm:$0x1]
    %v10839 = vperm.slane %v10837, 0
    %10841 = vmatpush.msra.mxu0 %v10836
    %10842 = vmatpush.msra.mxu0 %v10835
    %10843 = vmatpush.msra.mxu0 %v10834
    %10844 = vmatpush.msra.mxu0 %v10833
    %10845 = vmatpush.msra.mxu0 %v10832
    %10846 = vmatpush.msra.mxu0 %v10831
    %10847 = vmatpush.msra.mxu0 %v10830
    %10848 = vmatpush.msra.mxu0 %v10829
    %10849 = vmatpush.msra.mxu0 %v10828
    %10850 = vmatpush.msra.mxu0 %v10827
    %10851 = vmatpush.msra.mxu0 %v10826
    %10852 = vmatpush.msra.mxu0 %v10825
    %10853 = vmatpush.msra.mxu0 %v10824
    %10854 = vmatpush.msra.mxu0 %v10823
    %10855 = vmatpush.msra.mxu0 %v10822
    %10856 = vmatpush.msra.mxu0 %v10821
    %10857 = vmatmul.f32.gmra.mxu0 %v7025
    %v10858 = vpop.f32.mrf.mxu0
    %v10859 = vadd.f32 %v10839, %v10858
    %10860 = vmatmul.f32.gmra.mxu0 %v7026
    %v10861 = vpop.f32.mrf.mxu0
    %v10862 = vadd.f32 %v10839, %v10861
    %10863 = vmatmul.f32.gmra.mxu0 %v7027
    %v10864 = vpop.f32.mrf.mxu0
    %v10865 = vadd.f32 %v10839, %v10864
    %10866 = vmatmul.f32.gmra.mxu0 %v7028
    %v10867 = vpop.f32.mrf.mxu0
    %v10868 = vadd.f32 %v10839, %v10867
    %10869 = vmatmul.f32.gmra.mxu0 %v7029
    %v10870 = vpop.f32.mrf.mxu0
    %v10871 = vadd.f32 %v10839, %v10870
    %10872 = vmatmul.f32.gmra.mxu0 %v7030
    %v10873 = vpop.f32.mrf.mxu0
    %v10874 = vadd.f32 %v10839, %v10873
    %10875 = vmatmul.f32.gmra.mxu0 %v7031
    %v10876 = vpop.f32.mrf.mxu0
    %v10877 = vadd.f32 %v10839, %v10876
    %10878 = vmatmul.f32.gmra.mxu0 %v7032
    %v10879 = vpop.f32.mrf.mxu0
    %v10880 = vadd.f32 %v10839, %v10879
    %10881 = vdwg.mxu0
    %v10882 = vtanh.pop %v10859
    %v10883 = vtanh.pop %v10862
    %v10884 = vtanh.pop %v10865
    %v10885 = vtanh.pop %v10868
    %v10886 = vtanh.pop %v10871
    %v10887 = vtanh.pop %v10874
    %v10888 = vtanh.pop %v10877
    %v10889 = vtanh.pop %v10880
    %vm10890 = vcmask 23552
    %10891 = vst.msk [vmem:[%s59] sm:$0xff] %vm10890, %v10882
    %10892 = vst.msk [vmem:[%s59 + $0x8] sm:$0xff] %vm10890, %v10883
    %10893 = vst.msk [vmem:[%s59 + $0x10] sm:$0xff] %vm10890, %v10884
    %10894 = vst.msk [vmem:[%s59 + $0x18] sm:$0xff] %vm10890, %v10885
    %10895 = vst.msk [vmem:[%s59 + $0x20] sm:$0xff] %vm10890, %v10886
    %10896 = vst.msk [vmem:[%s59 + $0x28] sm:$0xff] %vm10890, %v10887
    %10897 = vst.msk [vmem:[%s59 + $0x30] sm:$0xff] %vm10890, %v10888
    %10898 = vst.msk [vmem:[%s59 + $0x38] sm:$0xff] %vm10890, %v10889
    // Predicated region
    $region130: #{gen_forward.1} parent=1 // pred_check
      _
    $region131: #{gen_forward.1} parent=1 // pred_check_branch
      %10900 = sbr.rel (0) target = $region133
    $region132: #{gen_forward.1} parent=1 // pred_region
      _
    $region133: #{gen_forward.1} parent=1 // pred_fallthru
      _
    // Predicated region
    $region134: #{gen_forward.1} parent=1 // pred_check
      _
    $region135: #{gen_forward.1} parent=1 // pred_check_branch
      %10902 = sbr.rel (0) target = $region137
    $region136: #{gen_forward.1} parent=1 // pred_region
      _
    $region137: #{gen_forward.1} parent=1 // pred_fallthru
      _
    // Predicated region
    $region138: #{gen_forward.1} parent=1 // pred_check
      _
    $region139: #{gen_forward.1} parent=1 // pred_check_branch
      %10904 = sbr.rel (0) target = $region141
    $region140: #{gen_forward.1} parent=1 // pred_region
      _
    $region141: #{gen_forward.1} parent=1 // pred_fallthru
      _
    // Predicated region
    $region142: #{gen_forward.1} parent=1 // pred_check
      _
    $region143: #{gen_forward.1} parent=1 // pred_check_branch
      %10906 = sbr.rel (0) target = $region145
    $region144: #{gen_forward.1} parent=1 // pred_region
      _
    $region145: #{gen_forward.1} parent=1 // pred_fallthru
      _
    %10907 = vsyncpa [#allocation4], 1
    %10908 = vsyncpa [#allocation6], 1

</llo_original>
